<compile_context>
chip_gen: v7x
topology: tpu7x:2x2x1
jax: 0.10.0
libtpu: 0.0.40
codegen_flags: <defaults>
</compile_context>

<pallas_src>
import jax
import jax.numpy as jnp
import numpy as np
from jax.experimental import pallas as pl
from jax.experimental.pallas import tpu as pltpu

EPS = 1e-5


# --------------------------------------------------------------------------
# In-kernel helpers
# --------------------------------------------------------------------------
def _im2col_conv3x3(src_ref, w_ref, patch_ref, H, W, C):
    """3x3 'same' conv of a zero-padded (H+2, W+2, C) bf16 ref as ONE MXU matmul.

    Builds the contiguous (H*W, 9*C) im2col patch in a VMEM scratch (9
    concatenated K-slices) and does a single jnp.dot against the (9*C, Cout)
    bf16 weight with f32 accumulation.
    """
    k = 0
    for dy in range(3):
        for dx in range(3):
            tap = src_ref[dy:dy + H, dx:dx + W, :]               # (H, W, C)
            patch_ref[:, k * C:(k + 1) * C] = tap.reshape(H * W, C)
            k += 1
    return jnp.dot(patch_ref[...], w_ref[...],
                   preferred_element_type=jnp.float32)           # (H*W, Cout) f32


def _store_lane_packed(h, H, W, C, out_ref):
    """Store an (H*W, C) f32 activation as a lane-dense (H, W*C) block.

    Lane index = w*C + c.  Uses W static masked sub-stores into the VMEM block
    so the HBM write-back DMA is a fully dense (H, W*C) tile.
    """
    h3 = h.reshape(H, W, C)
    for w in range(W):
        out_ref[:, w * C:(w + 1) * C] = h3[:, w, :]


def _partial_bn_stats(h):
    """One-pass per-channel [sum, sum_sq] of an (M, C) f32 activation."""
    return jnp.concatenate(
        [jnp.sum(h, axis=0, keepdims=True),
         jnp.sum(h * h, axis=0, keepdims=True)], axis=0)         # (2, C)


# --------------------------------------------------------------------------
# Kernels
# --------------------------------------------------------------------------
def _conv1_kernel(x_ref, w_ref, out_ref, stats_ref, patch_ref):
    """conv1 (no bias) + partial BN1 stats for one batch image."""
    Hp, Wp, Cin = x_ref.shape
    H, W = Hp - 2, Wp - 2
    Cout = w_ref.shape[-1]
    h = _im2col_conv3x3(x_ref, w_ref, patch_ref, H, W, Cin)      # (H*W, Cout) f32
    _store_lane_packed(h, H, W, Cout, out_ref)
    stats_ref[...] = _partial_bn_stats(h)


def _bn1_relu_conv2_kernel(h1_ref, scale_ref, shift_ref, w_ref,
                           out_ref, stats_ref, hpad_ref, patch_ref):
    """BN1(folded)+ReLU -> conv2 (no bias) + partial BN2 stats for one image."""
    H, WC = h1_ref.shape
    Cout = w_ref.shape[-1]
    W = WC // Cout

    # BN1 + ReLU on the lane-dense (H, W*C) block; pure f32 VPU work.
    y = jnp.maximum(h1_ref[...] * scale_ref[...] + shift_ref[...], 0.0)

    # Zero only the 1-pixel halo ring of the padded scratch; the interior is
    # fully overwritten below.
    zrow = jnp.zeros((1, W + 2, Cout), hpad_ref.dtype)
    zcol = jnp.zeros((H + 2, 1, Cout), hpad_ref.dtype)
    hpad_ref[0:1, :, :] = zrow
    hpad_ref[H + 1:H + 2, :, :] = zrow
    hpad_ref[:, 0:1, :] = zcol
    hpad_ref[:, W + 1:W + 2, :] = zcol

    # Unpack the lane-packed (w, c) columns into the NHWC padded scratch (bf16
    # MXU operand precision).
    yb = y.astype(hpad_ref.dtype)
    for w in range(W):
        hpad_ref[1:1 + H, 1 + w:2 + w, :] = (
            yb[:, w * Cout:(w + 1) * Cout].reshape(H, 1, Cout))

    h2 = _im2col_conv3x3(hpad_ref, w_ref, patch_ref, H, W, Cout)  # (H*W, Cout) f32
    _store_lane_packed(h2, H, W, Cout, out_ref)
    stats_ref[...] = _partial_bn_stats(h2)


def _bn2_relu_kernel(h_ref, scale_ref, shift_ref, out_ref):
    """Final BN2(folded)+ReLU, fully lane-dense element-wise work."""
    out_ref[...] = jnp.maximum(h_ref[...] * scale_ref[...] + shift_ref[...], 0.0)


# --------------------------------------------------------------------------
# Wrapper
# --------------------------------------------------------------------------
def _tpu_params(block_bytes, scratch_bytes=0):
    """Explicit VMEM budget: double-buffered blocks + scratch + headroom."""
    return pltpu.CompilerParams(
        dimension_semantics=("parallel",),            # batch axis -> megacore on v7x
        vmem_limit_bytes=int(2 * block_bytes + scratch_bytes + (4 << 20)),
    )


def _bn_fold(stats, gamma, beta, count):
    """Finalize one-pass BN stats and fold the affine: y = x*scale + shift."""
    tot = jnp.sum(stats, axis=0)                                 # (2, C)
    mean = tot[0] / count
    var = jnp.maximum(tot[1] / count - mean * mean, 0.0)         # E[x^2] - E[x]^2
    scale = gamma * jax.lax.rsqrt(var + EPS)
    shift = beta - mean * scale
    return scale, shift


def _tile_lanes(v, W):
    """Per-channel (C,) vector -> (1, W*C) matching the lane = w*C + c packing."""
    return jnp.tile(v, W).reshape(1, -1)


@jax.jit
def conv_block_forward(x_nchw, params):
    """Forward pass matching the PyTorch conv_block (training-mode BN). NCHW in/out."""
    N, Cin, H, W = x_nchw.shape
    Cout = params["w1"].shape[0]
    WC = W * Cout                      # 128 for the test shape -> lane-dense blocks
    count = N * H * W
    f32, bf16 = jnp.float32, jnp.bfloat16

    # NCHW -> NHWC, zero-pad (padding=1); MXU operands in bf16 (f32 accumulate).
    x = jnp.transpose(x_nchw, (0, 2, 3, 1)).astype(f32)
    xp = jnp.pad(x, ((0, 0), (1, 1), (1, 1), (0, 0))).astype(bf16)

    # (Cout, Cin, 3, 3) -> (3, 3, Cin, Cout) -> (9*Cin, Cout); K order = (dy, dx, cin).
    w1p = jnp.transpose(params["w1"], (2, 3, 1, 0)).reshape(9 * Cin, Cout).astype(bf16)
    w2p = jnp.transpose(params["w2"], (2, 3, 1, 0)).reshape(9 * Cout, Cout).astype(bf16)
    # Conv biases b1/b2 intentionally dropped: they cancel exactly under
    # training-mode BatchNorm.

    # ---- pass 1: conv1 (single K=9*Cin im2col matmul) + partial BN1 stats ----
    blk1 = ((H + 2) * (W + 2) * Cin * 2 + 9 * Cin * Cout * 2
            + H * WC * 4 + 2 * Cout * 4)
    scr1 = H * W * 9 * Cin * 2
    h1raw, stats1 = pl.pallas_call(
        _conv1_kernel,
        grid=(N,),
        in_specs=[
            pl.BlockSpec((None, H + 2, W + 2, Cin), lambda n: (n, 0, 0, 0)),
            pl.BlockSpec((9 * Cin, Cout), lambda n: (0, 0)),
        ],
        out_specs=(
            pl.BlockSpec((H, WC), lambda n: (n, 0)),              # lane-dense output
            pl.BlockSpec((None, 2, Cout), lambda n: (n, 0, 0)),
        ),
        out_shape=(
            jax.ShapeDtypeStruct((N * H, WC), f32),
            jax.ShapeDtypeStruct((N, 2, Cout), f32),
        ),
        scratch_shapes=[pltpu.VMEM((H * W, 9 * Cin), bf16)],
        compiler_params=_tpu_params(blk1, scr1),
    )(xp, w1p)

    scale1, shift1 = _bn_fold(stats1, params["g1"], params["be1"], count)

    # ---- pass 2: BN1+ReLU (folded) -> conv2 + partial BN2 stats ----
    blk2 = (H * WC * 4 + 2 * WC * 4 + 9 * Cout * Cout * 2
            + H * WC * 4 + 2 * Cout * 4)
    scr2 = (H + 2) * (W + 2) * Cout * 2 + H * W * 9 * Cout * 2
    h2raw, stats2 = pl.pallas_call(
        _bn1_relu_conv2_kernel,
        grid=(N,),
        in_specs=[
            pl.BlockSpec((H, WC), lambda n: (n, 0)),
            pl.BlockSpec((1, WC), lambda n: (0, 0)),
            pl.BlockSpec((1, WC), lambda n: (0, 0)),
            pl.BlockSpec((9 * Cout, Cout), lambda n: (0, 0)),
        ],
        out_specs=(
            pl.BlockSpec((H, WC), lambda n: (n, 0)),
            pl.BlockSpec((None, 2, Cout), lambda n: (n, 0, 0)),
        ),
        out_shape=(
            jax.ShapeDtypeStruct((N * H, WC), f32),
            jax.ShapeDtypeStruct((N, 2, Cout), f32),
        ),
        scratch_shapes=[
            pltpu.VMEM((H + 2, W + 2, Cout), bf16),              # padded conv2 input
            pltpu.VMEM((H * W, 9 * Cout), bf16),                 # im2col patch
        ],
        compiler_params=_tpu_params(blk2, scr2),
    )(h1raw, _tile_lanes(scale1, W), _tile_lanes(shift1, W), w2p)

    scale2, shift2 = _bn_fold(stats2, params["g2"], params["be2"], count)

    # ---- pass 3: BN2 + ReLU, lane-dense element-wise ----
    blk3 = H * WC * 4 + 2 * WC * 4 + H * WC * 4
    out = pl.pallas_call(
        _bn2_relu_kernel,
        grid=(N,),
        in_specs=[
            pl.BlockSpec((H, WC), lambda n: (n, 0)),
            pl.BlockSpec((1, WC), lambda n: (0, 0)),
            pl.BlockSpec((1, WC), lambda n: (0, 0)),
        ],
        out_specs=pl.BlockSpec((H, WC), lambda n: (n, 0)),
        out_shape=jax.ShapeDtypeStruct((N * H, WC), f32),
        compiler_params=_tpu_params(blk3),
    )(h2raw, _tile_lanes(scale2, W), _tile_lanes(shift2, W))

    # (N*H, W*C) lane-packed -> NHWC -> NCHW (glue only).
    return jnp.transpose(out.reshape(N, H, W, Cout), (0, 3, 1, 2))


# --------------------------------------------------------------------------
# Pure-JAX references + test harness
# --------------------------------------------------------------------------
def _ref_forward(x_nchw, p, *, mxu_bf16):
    """Mirrors the PyTorch module (training-mode BN).  With mxu_bf16=True the
    conv operands are rounded to bf16 first, i.e. the exact numerical contract
    used by the kernel's MXU matmuls (f32 accumulation)."""
    dn = ("NCHW", "OIHW", "NCHW")

    def conv(x, w, b):
        if mxu_bf16:
            x = x.astype(jnp.bfloat16).astype(jnp.float32)
            w = w.astype(jnp.bfloat16).astype(jnp.float32)
        y = jax.lax.conv_general_dilated(
            x, w, (1, 1), "SAME", dimension_numbers=dn,
            precision=jax.lax.Precision.HIGHEST)
        return y + b[None, :, None, None]

    def bn_relu(x, g, bt):
        m = x.mean(axis=(0, 2, 3), keepdims=True)
        v = ((x - m) ** 2).mean(axis=(0, 2, 3), keepdims=True)   # biased variance
        x = (x - m) / jnp.sqrt(v + EPS) * g[None, :, None, None] + bt[None, :, None, None]
        return jnp.maximum(x, 0.0)

    h = bn_relu(conv(x_nchw, p["w1"], p["b1"]), p["g1"], p["be1"])
    return bn_relu(conv(h, p["w2"], p["b2"]), p["g2"], p["be2"])


def _init_params(key, ch_in, ch_out):
    ks = jax.random.split(key, 8)
    s1 = 1.0 / np.sqrt(ch_in * 9)
    s2 = 1.0 / np.sqrt(ch_out * 9)
    return {
        "w1": jax.random.normal(ks[0], (ch_out, ch_in, 3, 3), jnp.float32) * s1,
        "b1": jax.random.normal(ks[1], (ch_out,), jnp.float32) * s1,
        "g1": 1.0 + 0.1 * jax.random.normal(ks[2], (ch_out,), jnp.float32),
        "be1": 0.1 * jax.random.normal(ks[3], (ch_out,), jnp.float32),
        "w2": jax.random.normal(ks[4], (ch_out, ch_out, 3, 3), jnp.float32) * s2,
        "b2": jax.random.normal(ks[5], (ch_out,), jnp.float32) * s2,
        "g2": 1.0 + 0.1 * jax.random.normal(ks[6], (ch_out,), jnp.float32),
        "be2": 0.1 * jax.random.normal(ks[7], (ch_out,), jnp.float32),
    }


if __name__ == "__main__":
    key = jax.random.PRNGKey(0)
    kx, kp = jax.random.split(key)

    N, ch_in, ch_out, H, W = 2, 4, 8, 16, 16
    x = jax.random.normal(kx, (N, ch_in, H, W), jnp.float32)
    params = _init_params(kp, ch_in, ch_out)

    y = jax.block_until_ready(conv_block_forward(x, params))
    assert y.shape == (N, ch_out, H, W), y.shape

    # (1) Tight check against a reference that uses the kernel's numerical
    #     contract (bf16 MXU operands, f32 accumulation, f32 BN/ReLU).
    y_bf16 = jax.block_until_ready(_ref_forward(x, params, mxu_bf16=True))
    np.testing.assert_allclose(np.asarray(y), np.asarray(y_bf16),
                               rtol=1e-2, atol=1e-2)

    # (2) Looser check against the full-f32 reference: the only gap is the
    #     bf16 rounding of the MXU operands (standard TPU practice).
    y_f32 = jax.block_until_ready(_ref_forward(x, params, mxu_bf16=False))
    np.testing.assert_allclose(np.asarray(y), np.asarray(y_f32),
                               rtol=5e-2, atol=5e-2)

    print("KERNEL_OK")
</pallas_src>

<mosaic_0001>
module attributes {stable_mosaic.version = 11 : i64} {
  func.func @_conv1_kernel(%arg0: i32, %arg1: memref<1x18x18x4xbf16, #tpu.memory_space<vmem>>, %arg2: memref<36x8xbf16, #tpu.memory_space<vmem>>, %arg3: memref<16x128xf32, #tpu.memory_space<vmem>>, %arg4: memref<1x2x8xf32, #tpu.memory_space<vmem>>, %arg5: memref<256x36xbf16, #tpu.memory_space<vmem>>) attributes {dimension_semantics = [#tpu.dimension_semantics<parallel>], iteration_bounds = array<i64: 2>, scalar_prefetch = 0 : i64, scratch_operands = 1 : i64, tpu.core_type = #tpu.core_type<tc>, window_params = [{transform_indices = @transform_0, window_bounds = array<i64: 1, 18, 18, 4>}, {pipeline_mode = #tpu.pipeline_mode<synchronous>, transform_indices = @transform_1, window_bounds = array<i64: 36, 8>}, {transform_indices = @transform_2, window_bounds = array<i64: 16, 128>}, {transform_indices = @transform_3, window_bounds = array<i64: 1, 2, 8>}]} {
    %c0 = arith.constant 0 : index
    %c0_0 = arith.constant 0 : index
    %c0_1 = arith.constant 0 : index
    %c0_2 = arith.constant 0 : index
    %0 = vector.load %arg1[%c0, %c0_0, %c0_1, %c0_2] : memref<1x18x18x4xbf16, #tpu.memory_space<vmem>>, vector<1x16x16x4xbf16>
    %1 = vector.shape_cast %0 : vector<1x16x16x4xbf16> to vector<16x16x4xbf16>
    %2 = vector.shape_cast %1 : vector<16x16x4xbf16> to vector<256x4xbf16>
    %c0_3 = arith.constant 0 : index
    %c0_4 = arith.constant 0 : index
    %3 = vector.load %arg5[%c0_3, %c0_4] : memref<256x36xbf16, #tpu.memory_space<vmem>>, vector<256x4xbf16>
    tpu.vector_store %arg5[%c0_3, %c0_4], %2 {strides = array<i32>} : memref<256x36xbf16, #tpu.memory_space<vmem>>, vector<256x4xbf16>,
    %c0_5 = arith.constant 0 : index
    %c0_6 = arith.constant 0 : index
    %c1 = arith.constant 1 : index
    %c0_7 = arith.constant 0 : index
    %4 = vector.load %arg1[%c0_5, %c0_6, %c1, %c0_7] : memref<1x18x18x4xbf16, #tpu.memory_space<vmem>>, vector<1x16x16x4xbf16>
    %5 = vector.shape_cast %4 : vector<1x16x16x4xbf16> to vector<16x16x4xbf16>
    %6 = vector.shape_cast %5 : vector<16x16x4xbf16> to vector<256x4xbf16>
    %c0_8 = arith.constant 0 : index
    %c4 = arith.constant 4 : index
    %7 = vector.load %arg5[%c0_8, %c4] : memref<256x36xbf16, #tpu.memory_space<vmem>>, vector<256x4xbf16>
    tpu.vector_store %arg5[%c0_8, %c4], %6 {strides = array<i32>} : memref<256x36xbf16, #tpu.memory_space<vmem>>, vector<256x4xbf16>,
    %c0_9 = arith.constant 0 : index
    %c0_10 = arith.constant 0 : index
    %c2 = arith.constant 2 : index
    %c0_11 = arith.constant 0 : index
    %8 = vector.load %arg1[%c0_9, %c0_10, %c2, %c0_11] : memref<1x18x18x4xbf16, #tpu.memory_space<vmem>>, vector<1x16x16x4xbf16>
    %9 = vector.shape_cast %8 : vector<1x16x16x4xbf16> to vector<16x16x4xbf16>
    %10 = vector.shape_cast %9 : vector<16x16x4xbf16> to vector<256x4xbf16>
    %c0_12 = arith.constant 0 : index
    %c8 = arith.constant 8 : index
    %11 = vector.load %arg5[%c0_12, %c8] : memref<256x36xbf16, #tpu.memory_space<vmem>>, vector<256x4xbf16>
    tpu.vector_store %arg5[%c0_12, %c8], %10 {strides = array<i32>} : memref<256x36xbf16, #tpu.memory_space<vmem>>, vector<256x4xbf16>,
    %c0_13 = arith.constant 0 : index
    %c1_14 = arith.constant 1 : index
    %c0_15 = arith.constant 0 : index
    %c0_16 = arith.constant 0 : index
    %12 = vector.load %arg1[%c0_13, %c1_14, %c0_15, %c0_16] : memref<1x18x18x4xbf16, #tpu.memory_space<vmem>>, vector<1x16x16x4xbf16>
    %13 = vector.shape_cast %12 : vector<1x16x16x4xbf16> to vector<16x16x4xbf16>
    %14 = vector.shape_cast %13 : vector<16x16x4xbf16> to vector<256x4xbf16>
    %c0_17 = arith.constant 0 : index
    %c12 = arith.constant 12 : index
    %15 = vector.load %arg5[%c0_17, %c12] : memref<256x36xbf16, #tpu.memory_space<vmem>>, vector<256x4xbf16>
    tpu.vector_store %arg5[%c0_17, %c12], %14 {strides = array<i32>} : memref<256x36xbf16, #tpu.memory_space<vmem>>, vector<256x4xbf16>,
    %c0_18 = arith.constant 0 : index
    %c1_19 = arith.constant 1 : index
    %c1_20 = arith.constant 1 : index
    %c0_21 = arith.constant 0 : index
    %16 = vector.load %arg1[%c0_18, %c1_19, %c1_20, %c0_21] : memref<1x18x18x4xbf16, #tpu.memory_space<vmem>>, vector<1x16x16x4xbf16>
    %17 = vector.shape_cast %16 : vector<1x16x16x4xbf16> to vector<16x16x4xbf16>
    %18 = vector.shape_cast %17 : vector<16x16x4xbf16> to vector<256x4xbf16>
    %c0_22 = arith.constant 0 : index
    %c16 = arith.constant 16 : index
    %19 = vector.load %arg5[%c0_22, %c16] : memref<256x36xbf16, #tpu.memory_space<vmem>>, vector<256x4xbf16>
    tpu.vector_store %arg5[%c0_22, %c16], %18 {strides = array<i32>} : memref<256x36xbf16, #tpu.memory_space<vmem>>, vector<256x4xbf16>,
    %c0_23 = arith.constant 0 : index
    %c1_24 = arith.constant 1 : index
    %c2_25 = arith.constant 2 : index
    %c0_26 = arith.constant 0 : index
    %20 = vector.load %arg1[%c0_23, %c1_24, %c2_25, %c0_26] : memref<1x18x18x4xbf16, #tpu.memory_space<vmem>>, vector<1x16x16x4xbf16>
    %21 = vector.shape_cast %20 : vector<1x16x16x4xbf16> to vector<16x16x4xbf16>
    %22 = vector.shape_cast %21 : vector<16x16x4xbf16> to vector<256x4xbf16>
    %c0_27 = arith.constant 0 : index
    %c20 = arith.constant 20 : index
    %23 = vector.load %arg5[%c0_27, %c20] : memref<256x36xbf16, #tpu.memory_space<vmem>>, vector<256x4xbf16>
    tpu.vector_store %arg5[%c0_27, %c20], %22 {strides = array<i32>} : memref<256x36xbf16, #tpu.memory_space<vmem>>, vector<256x4xbf16>,
    %c0_28 = arith.constant 0 : index
    %c2_29 = arith.constant 2 : index
    %c0_30 = arith.constant 0 : index
    %c0_31 = arith.constant 0 : index
    %24 = vector.load %arg1[%c0_28, %c2_29, %c0_30, %c0_31] : memref<1x18x18x4xbf16, #tpu.memory_space<vmem>>, vector<1x16x16x4xbf16>
    %25 = vector.shape_cast %24 : vector<1x16x16x4xbf16> to vector<16x16x4xbf16>
    %26 = vector.shape_cast %25 : vector<16x16x4xbf16> to vector<256x4xbf16>
    %c0_32 = arith.constant 0 : index
    %c24 = arith.constant 24 : index
    %27 = vector.load %arg5[%c0_32, %c24] : memref<256x36xbf16, #tpu.memory_space<vmem>>, vector<256x4xbf16>
    tpu.vector_store %arg5[%c0_32, %c24], %26 {strides = array<i32>} : memref<256x36xbf16, #tpu.memory_space<vmem>>, vector<256x4xbf16>,
    %c0_33 = arith.constant 0 : index
    %c2_34 = arith.constant 2 : index
    %c1_35 = arith.constant 1 : index
    %c0_36 = arith.constant 0 : index
    %28 = vector.load %arg1[%c0_33, %c2_34, %c1_35, %c0_36] : memref<1x18x18x4xbf16, #tpu.memory_space<vmem>>, vector<1x16x16x4xbf16>
    %29 = vector.shape_cast %28 : vector<1x16x16x4xbf16> to vector<16x16x4xbf16>
    %30 = vector.shape_cast %29 : vector<16x16x4xbf16> to vector<256x4xbf16>
    %c0_37 = arith.constant 0 : index
    %c28 = arith.constant 28 : index
    %31 = vector.load %arg5[%c0_37, %c28] : memref<256x36xbf16, #tpu.memory_space<vmem>>, vector<256x4xbf16>
    tpu.vector_store %arg5[%c0_37, %c28], %30 {strides = array<i32>} : memref<256x36xbf16, #tpu.memory_space<vmem>>, vector<256x4xbf16>,
    %c0_38 = arith.constant 0 : index
    %c2_39 = arith.constant 2 : index
    %c2_40 = arith.constant 2 : index
    %c0_41 = arith.constant 0 : index
    %32 = vector.load %arg1[%c0_38, %c2_39, %c2_40, %c0_41] : memref<1x18x18x4xbf16, #tpu.memory_space<vmem>>, vector<1x16x16x4xbf16>
    %33 = vector.shape_cast %32 : vector<1x16x16x4xbf16> to vector<16x16x4xbf16>
    %34 = vector.shape_cast %33 : vector<16x16x4xbf16> to vector<256x4xbf16>
    %c0_42 = arith.constant 0 : index
    %c32 = arith.constant 32 : index
    %35 = vector.load %arg5[%c0_42, %c32] : memref<256x36xbf16, #tpu.memory_space<vmem>>, vector<256x4xbf16>
    tpu.vector_store %arg5[%c0_42, %c32], %34 {strides = array<i32>} : memref<256x36xbf16, #tpu.memory_space<vmem>>, vector<256x4xbf16>,
    %c0_43 = arith.constant 0 : index
    %c0_44 = arith.constant 0 : index
    %36 = vector.load %arg5[%c0_43, %c0_44] : memref<256x36xbf16, #tpu.memory_space<vmem>>, vector<256x36xbf16>
    %c0_45 = arith.constant 0 : index
    %c0_46 = arith.constant 0 : index
    %37 = vector.load %arg2[%c0_45, %c0_46] : memref<36x8xbf16, #tpu.memory_space<vmem>>, vector<36x8xbf16>
    %cst = arith.constant dense<0.000000e+00> : vector<256x8xf32>
    %38 = tpu.matmul %36, %37, %cst {dimension_numbers = #tpu.dot_dimension_numbers<[1], [0], [0], [1], [0, 0, 1, 1], [], []>} : vector<256x36xbf16>, vector<36x8xbf16>, vector<256x8xf32> -> vector<256x8xf32>
    %39 = vector.shape_cast %38 : vector<256x8xf32> to vector<16x16x8xf32>
    %40 = vector.extract_strided_slice %39 {offsets = [0, 0, 0], sizes = [16, 1, 8], strides = [1, 1, 1]} : vector<16x16x8xf32> to vector<16x1x8xf32>
    %41 = vector.shape_cast %40 : vector<16x1x8xf32> to vector<16x8xf32>
    %c0_47 = arith.constant 0 : index
    %c0_48 = arith.constant 0 : index
    %42 = vector.load %arg3[%c0_47, %c0_48] : memref<16x128xf32, #tpu.memory_space<vmem>>, vector<16x8xf32>
    tpu.vector_store %arg3[%c0_47, %c0_48], %41 {strides = array<i32>} : memref<16x128xf32, #tpu.memory_space<vmem>>, vector<16x8xf32>,
    %43 = vector.extract_strided_slice %39 {offsets = [0, 1, 0], sizes = [16, 1, 8], strides = [1, 1, 1]} : vector<16x16x8xf32> to vector<16x1x8xf32>
    %44 = vector.shape_cast %43 : vector<16x1x8xf32> to vector<16x8xf32>
    %c0_49 = arith.constant 0 : index
    %c8_50 = arith.constant 8 : index
    %45 = vector.load %arg3[%c0_49, %c8_50] : memref<16x128xf32, #tpu.memory_space<vmem>>, vector<16x8xf32>
    tpu.vector_store %arg3[%c0_49, %c8_50], %44 {strides = array<i32>} : memref<16x128xf32, #tpu.memory_space<vmem>>, vector<16x8xf32>,
    %46 = vector.extract_strided_slice %39 {offsets = [0, 2, 0], sizes = [16, 1, 8], strides = [1, 1, 1]} : vector<16x16x8xf32> to vector<16x1x8xf32>
    %47 = vector.shape_cast %46 : vector<16x1x8xf32> to vector<16x8xf32>
    %c0_51 = arith.constant 0 : index
    %c16_52 = arith.constant 16 : index
    %48 = vector.load %arg3[%c0_51, %c16_52] : memref<16x128xf32, #tpu.memory_space<vmem>>, vector<16x8xf32>
    tpu.vector_store %arg3[%c0_51, %c16_52], %47 {strides = array<i32>} : memref<16x128xf32, #tpu.memory_space<vmem>>, vector<16x8xf32>,
    %49 = vector.extract_strided_slice %39 {offsets = [0, 3, 0], sizes = [16, 1, 8], strides = [1, 1, 1]} : vector<16x16x8xf32> to vector<16x1x8xf32>
    %50 = vector.shape_cast %49 : vector<16x1x8xf32> to vector<16x8xf32>
    %c0_53 = arith.constant 0 : index
    %c24_54 = arith.constant 24 : index
    %51 = vector.load %arg3[%c0_53, %c24_54] : memref<16x128xf32, #tpu.memory_space<vmem>>, vector<16x8xf32>
    tpu.vector_store %arg3[%c0_53, %c24_54], %50 {strides = array<i32>} : memref<16x128xf32, #tpu.memory_space<vmem>>, vector<16x8xf32>,
    %52 = vector.extract_strided_slice %39 {offsets = [0, 4, 0], sizes = [16, 1, 8], strides = [1, 1, 1]} : vector<16x16x8xf32> to vector<16x1x8xf32>
    %53 = vector.shape_cast %52 : vector<16x1x8xf32> to vector<16x8xf32>
    %c0_55 = arith.constant 0 : index
    %c32_56 = arith.constant 32 : index
    %54 = vector.load %arg3[%c0_55, %c32_56] : memref<16x128xf32, #tpu.memory_space<vmem>>, vector<16x8xf32>
    tpu.vector_store %arg3[%c0_55, %c32_56], %53 {strides = array<i32>} : memref<16x128xf32, #tpu.memory_space<vmem>>, vector<16x8xf32>,
    %55 = vector.extract_strided_slice %39 {offsets = [0, 5, 0], sizes = [16, 1, 8], strides = [1, 1, 1]} : vector<16x16x8xf32> to vector<16x1x8xf32>
    %56 = vector.shape_cast %55 : vector<16x1x8xf32> to vector<16x8xf32>
    %c0_57 = arith.constant 0 : index
    %c40 = arith.constant 40 : index
    %57 = vector.load %arg3[%c0_57, %c40] : memref<16x128xf32, #tpu.memory_space<vmem>>, vector<16x8xf32>
    tpu.vector_store %arg3[%c0_57, %c40], %56 {strides = array<i32>} : memref<16x128xf32, #tpu.memory_space<vmem>>, vector<16x8xf32>,
    %58 = vector.extract_strided_slice %39 {offsets = [0, 6, 0], sizes = [16, 1, 8], strides = [1, 1, 1]} : vector<16x16x8xf32> to vector<16x1x8xf32>
    %59 = vector.shape_cast %58 : vector<16x1x8xf32> to vector<16x8xf32>
    %c0_58 = arith.constant 0 : index
    %c48 = arith.constant 48 : index
    %60 = vector.load %arg3[%c0_58, %c48] : memref<16x128xf32, #tpu.memory_space<vmem>>, vector<16x8xf32>
    tpu.vector_store %arg3[%c0_58, %c48], %59 {strides = array<i32>} : memref<16x128xf32, #tpu.memory_space<vmem>>, vector<16x8xf32>,
    %61 = vector.extract_strided_slice %39 {offsets = [0, 7, 0], sizes = [16, 1, 8], strides = [1, 1, 1]} : vector<16x16x8xf32> to vector<16x1x8xf32>
    %62 = vector.shape_cast %61 : vector<16x1x8xf32> to vector<16x8xf32>
    %c0_59 = arith.constant 0 : index
    %c56 = arith.constant 56 : index
    %63 = vector.load %arg3[%c0_59, %c56] : memref<16x128xf32, #tpu.memory_space<vmem>>, vector<16x8xf32>
    tpu.vector_store %arg3[%c0_59, %c56], %62 {strides = array<i32>} : memref<16x128xf32, #tpu.memory_space<vmem>>, vector<16x8xf32>,
    %64 = vector.extract_strided_slice %39 {offsets = [0, 8, 0], sizes = [16, 1, 8], strides = [1, 1, 1]} : vector<16x16x8xf32> to vector<16x1x8xf32>
    %65 = vector.shape_cast %64 : vector<16x1x8xf32> to vector<16x8xf32>
    %c0_60 = arith.constant 0 : index
    %c64 = arith.constant 64 : index
    %66 = vector.load %arg3[%c0_60, %c64] : memref<16x128xf32, #tpu.memory_space<vmem>>, vector<16x8xf32>
    tpu.vector_store %arg3[%c0_60, %c64], %65 {strides = array<i32>} : memref<16x128xf32, #tpu.memory_space<vmem>>, vector<16x8xf32>,
    %67 = vector.extract_strided_slice %39 {offsets = [0, 9, 0], sizes = [16, 1, 8], strides = [1, 1, 1]} : vector<16x16x8xf32> to vector<16x1x8xf32>
    %68 = vector.shape_cast %67 : vector<16x1x8xf32> to vector<16x8xf32>
    %c0_61 = arith.constant 0 : index
    %c72 = arith.constant 72 : index
    %69 = vector.load %arg3[%c0_61, %c72] : memref<16x128xf32, #tpu.memory_space<vmem>>, vector<16x8xf32>
    tpu.vector_store %arg3[%c0_61, %c72], %68 {strides = array<i32>} : memref<16x128xf32, #tpu.memory_space<vmem>>, vector<16x8xf32>,
    %70 = vector.extract_strided_slice %39 {offsets = [0, 10, 0], sizes = [16, 1, 8], strides = [1, 1, 1]} : vector<16x16x8xf32> to vector<16x1x8xf32>
    %71 = vector.shape_cast %70 : vector<16x1x8xf32> to vector<16x8xf32>
    %c0_62 = arith.constant 0 : index
    %c80 = arith.constant 80 : index
    %72 = vector.load %arg3[%c0_62, %c80] : memref<16x128xf32, #tpu.memory_space<vmem>>, vector<16x8xf32>
    tpu.vector_store %arg3[%c0_62, %c80], %71 {strides = array<i32>} : memref<16x128xf32, #tpu.memory_space<vmem>>, vector<16x8xf32>,
    %73 = vector.extract_strided_slice %39 {offsets = [0, 11, 0], sizes = [16, 1, 8], strides = [1, 1, 1]} : vector<16x16x8xf32> to vector<16x1x8xf32>
    %74 = vector.shape_cast %73 : vector<16x1x8xf32> to vector<16x8xf32>
    %c0_63 = arith.constant 0 : index
    %c88 = arith.constant 88 : index
    %75 = vector.load %arg3[%c0_63, %c88] : memref<16x128xf32, #tpu.memory_space<vmem>>, vector<16x8xf32>
    tpu.vector_store %arg3[%c0_63, %c88], %74 {strides = array<i32>} : memref<16x128xf32, #tpu.memory_space<vmem>>, vector<16x8xf32>,
    %76 = vector.extract_strided_slice %39 {offsets = [0, 12, 0], sizes = [16, 1, 8], strides = [1, 1, 1]} : vector<16x16x8xf32> to vector<16x1x8xf32>
    %77 = vector.shape_cast %76 : vector<16x1x8xf32> to vector<16x8xf32>
    %c0_64 = arith.constant 0 : index
    %c96 = arith.constant 96 : index
    %78 = vector.load %arg3[%c0_64, %c96] : memref<16x128xf32, #tpu.memory_space<vmem>>, vector<16x8xf32>
    tpu.vector_store %arg3[%c0_64, %c96], %77 {strides = array<i32>} : memref<16x128xf32, #tpu.memory_space<vmem>>, vector<16x8xf32>,
    %79 = vector.extract_strided_slice %39 {offsets = [0, 13, 0], sizes = [16, 1, 8], strides = [1, 1, 1]} : vector<16x16x8xf32> to vector<16x1x8xf32>
    %80 = vector.shape_cast %79 : vector<16x1x8xf32> to vector<16x8xf32>
    %c0_65 = arith.constant 0 : index
    %c104 = arith.constant 104 : index
    %81 = vector.load %arg3[%c0_65, %c104] : memref<16x128xf32, #tpu.memory_space<vmem>>, vector<16x8xf32>
    tpu.vector_store %arg3[%c0_65, %c104], %80 {strides = array<i32>} : memref<16x128xf32, #tpu.memory_space<vmem>>, vector<16x8xf32>,
    %82 = vector.extract_strided_slice %39 {offsets = [0, 14, 0], sizes = [16, 1, 8], strides = [1, 1, 1]} : vector<16x16x8xf32> to vector<16x1x8xf32>
    %83 = vector.shape_cast %82 : vector<16x1x8xf32> to vector<16x8xf32>
    %c0_66 = arith.constant 0 : index
    %c112 = arith.constant 112 : index
    %84 = vector.load %arg3[%c0_66, %c112] : memref<16x128xf32, #tpu.memory_space<vmem>>, vector<16x8xf32>
    tpu.vector_store %arg3[%c0_66, %c112], %83 {strides = array<i32>} : memref<16x128xf32, #tpu.memory_space<vmem>>, vector<16x8xf32>,
    %85 = vector.extract_strided_slice %39 {offsets = [0, 15, 0], sizes = [16, 1, 8], strides = [1, 1, 1]} : vector<16x16x8xf32> to vector<16x1x8xf32>
    %86 = vector.shape_cast %85 : vector<16x1x8xf32> to vector<16x8xf32>
    %c0_67 = arith.constant 0 : index
    %c120 = arith.constant 120 : index
    %87 = vector.load %arg3[%c0_67, %c120] : memref<16x128xf32, #tpu.memory_space<vmem>>, vector<16x8xf32>
    tpu.vector_store %arg3[%c0_67, %c120], %86 {strides = array<i32>} : memref<16x128xf32, #tpu.memory_space<vmem>>, vector<16x8xf32>,
    %cst_68 = arith.constant dense<0.000000e+00> : vector<8xf32>
    %88 = vector.multi_reduction <add>, %38, %cst_68 [0] : vector<256x8xf32> to vector<8xf32>
    %89 = vector.shape_cast %88 : vector<8xf32> to vector<1x8xf32>
    %90 = arith.mulf %38, %38 : vector<256x8xf32>
    %cst_69 = arith.constant dense<0.000000e+00> : vector<8xf32>
    %91 = vector.multi_reduction <add>, %90, %cst_69 [0] : vector<256x8xf32> to vector<8xf32>
    %92 = vector.shape_cast %91 : vector<8xf32> to vector<1x8xf32>
    %93 = tpu.concatenate %89, %92 in 0 : vector<1x8xf32>, vector<1x8xf32> -> vector<2x8xf32>
    %c0_70 = arith.constant 0 : index
    %c0_71 = arith.constant 0 : index
    %c0_72 = arith.constant 0 : index
    %94 = vector.load %arg4[%c0_70, %c0_71, %c0_72] : memref<1x2x8xf32, #tpu.memory_space<vmem>>, vector<1x2x8xf32>
    %95 = vector.shape_cast %94 : vector<1x2x8xf32> to vector<2x8xf32>
    %96 = vector.shape_cast %93 : vector<2x8xf32> to vector<1x2x8xf32>
    tpu.vector_store %arg4[%c0_70, %c0_71, %c0_72], %96 {strides = array<i32>} : memref<1x2x8xf32, #tpu.memory_space<vmem>>, vector<1x2x8xf32>,
    return
  }
  func.func @transform_0(%arg0: i32) -> (i32, i32, i32, i32) {
    %c0_i32 = arith.constant 0 : i32
    %c0_i32_0 = arith.constant 0 : i32
    %c0_i32_1 = arith.constant 0 : i32
    %c0_i32_2 = arith.constant 0 : i32
    return %arg0, %c0_i32, %c0_i32_0, %c0_i32_1 : i32, i32, i32, i32
  }
  func.func @transform_1(%arg0: i32) -> (i32, i32) {
    %c0_i32 = arith.constant 0 : i32
    %c0_i32_0 = arith.constant 0 : i32
    %c0_i32_1 = arith.constant 0 : i32
    return %c0_i32, %c0_i32_0 : i32, i32
  }
  func.func @transform_2(%arg0: i32) -> (i32, i32) {
    %c0_i32 = arith.constant 0 : i32
    %c0_i32_0 = arith.constant 0 : i32
    return %arg0, %c0_i32 : i32, i32
  }
  func.func @transform_3(%arg0: i32) -> (i32, i32, i32) {
    %c0_i32 = arith.constant 0 : i32
    %c0_i32_0 = arith.constant 0 : i32
    %c0_i32_1 = arith.constant 0 : i32
    return %arg0, %c0_i32, %c0_i32_0 : i32, i32, i32
  }
}

module attributes {stable_mosaic.version = 11 : i64} {
  func.func @_bn2_relu_kernel(%arg0: i32, %arg1: memref<16x128xf32, #tpu.memory_space<vmem>>, %arg2: memref<1x128xf32, #tpu.memory_space<vmem>>, %arg3: memref<1x128xf32, #tpu.memory_space<vmem>>, %arg4: memref<16x128xf32, #tpu.memory_space<vmem>>) attributes {dimension_semantics = [#tpu.dimension_semantics<parallel>], iteration_bounds = array<i64: 2>, scalar_prefetch = 0 : i64, scratch_operands = 0 : i64, tpu.core_type = #tpu.core_type<tc>, window_params = [{transform_indices = @transform_0, window_bounds = array<i64: 16, 128>}, {pipeline_mode = #tpu.pipeline_mode<synchronous>, transform_indices = @transform_1, window_bounds = array<i64: 1, 128>}, {pipeline_mode = #tpu.pipeline_mode<synchronous>, transform_indices = @transform_2, window_bounds = array<i64: 1, 128>}, {transform_indices = @transform_3, window_bounds = array<i64: 16, 128>}]} {
    %c0 = arith.constant 0 : index
    %c0_0 = arith.constant 0 : index
    %0 = vector.load %arg1[%c0, %c0_0] : memref<16x128xf32, #tpu.memory_space<vmem>>, vector<16x128xf32>
    %c0_1 = arith.constant 0 : index
    %c0_2 = arith.constant 0 : index
    %1 = vector.load %arg2[%c0_1, %c0_2] : memref<1x128xf32, #tpu.memory_space<vmem>>, vector<1x128xf32>
    %2 = vector.broadcast %1 : vector<1x128xf32> to vector<16x128xf32>
    %3 = arith.mulf %0, %2 : vector<16x128xf32>
    %c0_3 = arith.constant 0 : index
    %c0_4 = arith.constant 0 : index
    %4 = vector.load %arg3[%c0_3, %c0_4] : memref<1x128xf32, #tpu.memory_space<vmem>>, vector<1x128xf32>
    %5 = vector.broadcast %4 : vector<1x128xf32> to vector<16x128xf32>
    %6 = arith.addf %3, %5 : vector<16x128xf32>
    %cst = arith.constant 0.000000e+00 : f32
    %7 = vector.broadcast %cst : f32 to vector<16x128xf32>
    %8 = arith.maximumf %6, %7 : vector<16x128xf32>
    %c0_5 = arith.constant 0 : index
    %c0_6 = arith.constant 0 : index
    %9 = vector.load %arg4[%c0_5, %c0_6] : memref<16x128xf32, #tpu.memory_space<vmem>>, vector<16x128xf32>
    tpu.vector_store %arg4[%c0_5, %c0_6], %8 {strides = array<i32>} : memref<16x128xf32, #tpu.memory_space<vmem>>, vector<16x128xf32>,
    return
  }
  func.func @transform_0(%arg0: i32) -> (i32, i32) {
    %c0_i32 = arith.constant 0 : i32
    %c0_i32_0 = arith.constant 0 : i32
    return %arg0, %c0_i32 : i32, i32
  }
  func.func @transform_1(%arg0: i32) -> (i32, i32) {
    %c0_i32 = arith.constant 0 : i32
    %c0_i32_0 = arith.constant 0 : i32
    %c0_i32_1 = arith.constant 0 : i32
    return %c0_i32, %c0_i32_0 : i32, i32
  }
  func.func @transform_2(%arg0: i32) -> (i32, i32) {
    %c0_i32 = arith.constant 0 : i32
    %c0_i32_0 = arith.constant 0 : i32
    %c0_i32_1 = arith.constant 0 : i32
    return %c0_i32, %c0_i32_0 : i32, i32
  }
  func.func @transform_3(%arg0: i32) -> (i32, i32) {
    %c0_i32 = arith.constant 0 : i32
    %c0_i32_0 = arith.constant 0 : i32
    return %arg0, %c0_i32 : i32, i32
  }
}

module attributes {stable_mosaic.version = 11 : i64} {
  func.func @_bn1_relu_conv2_kernel(%arg0: i32, %arg1: memref<16x128xf32, #tpu.memory_space<vmem>>, %arg2: memref<1x128xf32, #tpu.memory_space<vmem>>, %arg3: memref<1x128xf32, #tpu.memory_space<vmem>>, %arg4: memref<72x8xbf16, #tpu.memory_space<vmem>>, %arg5: memref<16x128xf32, #tpu.memory_space<vmem>>, %arg6: memref<1x2x8xf32, #tpu.memory_space<vmem>>, %arg7: memref<18x18x8xbf16, #tpu.memory_space<vmem>>, %arg8: memref<256x72xbf16, #tpu.memory_space<vmem>>) attributes {dimension_semantics = [#tpu.dimension_semantics<parallel>], iteration_bounds = array<i64: 2>, scalar_prefetch = 0 : i64, scratch_operands = 2 : i64, tpu.core_type = #tpu.core_type<tc>, window_params = [{transform_indices = @transform_0, window_bounds = array<i64: 16, 128>}, {pipeline_mode = #tpu.pipeline_mode<synchronous>, transform_indices = @transform_1, window_bounds = array<i64: 1, 128>}, {pipeline_mode = #tpu.pipeline_mode<synchronous>, transform_indices = @transform_2, window_bounds = array<i64: 1, 128>}, {pipeline_mode = #tpu.pipeline_mode<synchronous>, transform_indices = @transform_3, window_bounds = array<i64: 72, 8>}, {transform_indices = @transform_4, window_bounds = array<i64: 16, 128>}, {transform_indices = @transform_5, window_bounds = array<i64: 1, 2, 8>}]} {
    %c0 = arith.constant 0 : index
    %c0_0 = arith.constant 0 : index
    %0 = vector.load %arg1[%c0, %c0_0] : memref<16x128xf32, #tpu.memory_space<vmem>>, vector<16x128xf32>
    %c0_1 = arith.constant 0 : index
    %c0_2 = arith.constant 0 : index
    %1 = vector.load %arg2[%c0_1, %c0_2] : memref<1x128xf32, #tpu.memory_space<vmem>>, vector<1x128xf32>
    %2 = vector.broadcast %1 : vector<1x128xf32> to vector<16x128xf32>
    %3 = arith.mulf %0, %2 : vector<16x128xf32>
    %c0_3 = arith.constant 0 : index
    %c0_4 = arith.constant 0 : index
    %4 = vector.load %arg3[%c0_3, %c0_4] : memref<1x128xf32, #tpu.memory_space<vmem>>, vector<1x128xf32>
    %5 = vector.broadcast %4 : vector<1x128xf32> to vector<16x128xf32>
    %6 = arith.addf %3, %5 : vector<16x128xf32>
    %cst = arith.constant 0.000000e+00 : f32
    %7 = vector.broadcast %cst : f32 to vector<16x128xf32>
    %8 = arith.maximumf %6, %7 : vector<16x128xf32>
    %cst_5 = arith.constant 0.000000e+00 : bf16
    %9 = vector.broadcast %cst_5 : bf16 to vector<1x18x8xbf16>
    %cst_6 = arith.constant 0.000000e+00 : bf16
    %10 = vector.broadcast %cst_6 : bf16 to vector<18x1x8xbf16>
    %c0_7 = arith.constant 0 : index
    %c0_8 = arith.constant 0 : index
    %c0_9 = arith.constant 0 : index
    %11 = vector.load %arg7[%c0_7, %c0_8, %c0_9] : memref<18x18x8xbf16, #tpu.memory_space<vmem>>, vector<1x18x8xbf16>
    tpu.vector_store %arg7[%c0_7, %c0_8, %c0_9], %9 {strides = array<i32>} : memref<18x18x8xbf16, #tpu.memory_space<vmem>>, vector<1x18x8xbf16>,
    %c17 = arith.constant 17 : index
    %c0_10 = arith.constant 0 : index
    %c0_11 = arith.constant 0 : index
    %12 = vector.load %arg7[%c17, %c0_10, %c0_11] : memref<18x18x8xbf16, #tpu.memory_space<vmem>>, vector<1x18x8xbf16>
    tpu.vector_store %arg7[%c17, %c0_10, %c0_11], %9 {strides = array<i32>} : memref<18x18x8xbf16, #tpu.memory_space<vmem>>, vector<1x18x8xbf16>,
    %c0_12 = arith.constant 0 : index
    %c0_13 = arith.constant 0 : index
    %c0_14 = arith.constant 0 : index
    %13 = vector.load %arg7[%c0_12, %c0_13, %c0_14] : memref<18x18x8xbf16, #tpu.memory_space<vmem>>, vector<18x1x8xbf16>
    tpu.vector_store %arg7[%c0_12, %c0_13, %c0_14], %10 {strides = array<i32>} : memref<18x18x8xbf16, #tpu.memory_space<vmem>>, vector<18x1x8xbf16>,
    %c0_15 = arith.constant 0 : index
    %c17_16 = arith.constant 17 : index
    %c0_17 = arith.constant 0 : index
    %14 = vector.load %arg7[%c0_15, %c17_16, %c0_17] : memref<18x18x8xbf16, #tpu.memory_space<vmem>>, vector<18x1x8xbf16>
    tpu.vector_store %arg7[%c0_15, %c17_16, %c0_17], %10 {strides = array<i32>} : memref<18x18x8xbf16, #tpu.memory_space<vmem>>, vector<18x1x8xbf16>,
    %15 = arith.truncf %8 : vector<16x128xf32> to vector<16x128xbf16>
    %16 = vector.extract_strided_slice %15 {offsets = [0, 0], sizes = [16, 8], strides = [1, 1]} : vector<16x128xbf16> to vector<16x8xbf16>
    %17 = vector.shape_cast %16 : vector<16x8xbf16> to vector<16x1x8xbf16>
    %c1 = arith.constant 1 : index
    %c1_18 = arith.constant 1 : index
    %c0_19 = arith.constant 0 : index
    %18 = vector.load %arg7[%c1, %c1_18, %c0_19] : memref<18x18x8xbf16, #tpu.memory_space<vmem>>, vector<16x1x8xbf16>
    tpu.vector_store %arg7[%c1, %c1_18, %c0_19], %17 {strides = array<i32>} : memref<18x18x8xbf16, #tpu.memory_space<vmem>>, vector<16x1x8xbf16>,
    %19 = vector.extract_strided_slice %15 {offsets = [0, 8], sizes = [16, 8], strides = [1, 1]} : vector<16x128xbf16> to vector<16x8xbf16>
    %20 = vector.shape_cast %19 : vector<16x8xbf16> to vector<16x1x8xbf16>
    %c1_20 = arith.constant 1 : index
    %c2 = arith.constant 2 : index
    %c0_21 = arith.constant 0 : index
    %21 = vector.load %arg7[%c1_20, %c2, %c0_21] : memref<18x18x8xbf16, #tpu.memory_space<vmem>>, vector<16x1x8xbf16>
    tpu.vector_store %arg7[%c1_20, %c2, %c0_21], %20 {strides = array<i32>} : memref<18x18x8xbf16, #tpu.memory_space<vmem>>, vector<16x1x8xbf16>,
    %22 = vector.extract_strided_slice %15 {offsets = [0, 16], sizes = [16, 8], strides = [1, 1]} : vector<16x128xbf16> to vector<16x8xbf16>
    %23 = vector.shape_cast %22 : vector<16x8xbf16> to vector<16x1x8xbf16>
    %c1_22 = arith.constant 1 : index
    %c3 = arith.constant 3 : index
    %c0_23 = arith.constant 0 : index
    %24 = vector.load %arg7[%c1_22, %c3, %c0_23] : memref<18x18x8xbf16, #tpu.memory_space<vmem>>, vector<16x1x8xbf16>
    tpu.vector_store %arg7[%c1_22, %c3, %c0_23], %23 {strides = array<i32>} : memref<18x18x8xbf16, #tpu.memory_space<vmem>>, vector<16x1x8xbf16>,
    %25 = vector.extract_strided_slice %15 {offsets = [0, 24], sizes = [16, 8], strides = [1, 1]} : vector<16x128xbf16> to vector<16x8xbf16>
    %26 = vector.shape_cast %25 : vector<16x8xbf16> to vector<16x1x8xbf16>
    %c1_24 = arith.constant 1 : index
    %c4 = arith.constant 4 : index
    %c0_25 = arith.constant 0 : index
    %27 = vector.load %arg7[%c1_24, %c4, %c0_25] : memref<18x18x8xbf16, #tpu.memory_space<vmem>>, vector<16x1x8xbf16>
    tpu.vector_store %arg7[%c1_24, %c4, %c0_25], %26 {strides = array<i32>} : memref<18x18x8xbf16, #tpu.memory_space<vmem>>, vector<16x1x8xbf16>,
    %28 = vector.extract_strided_slice %15 {offsets = [0, 32], sizes = [16, 8], strides = [1, 1]} : vector<16x128xbf16> to vector<16x8xbf16>
    %29 = vector.shape_cast %28 : vector<16x8xbf16> to vector<16x1x8xbf16>
    %c1_26 = arith.constant 1 : index
    %c5 = arith.constant 5 : index
    %c0_27 = arith.constant 0 : index
    %30 = vector.load %arg7[%c1_26, %c5, %c0_27] : memref<18x18x8xbf16, #tpu.memory_space<vmem>>, vector<16x1x8xbf16>
    tpu.vector_store %arg7[%c1_26, %c5, %c0_27], %29 {strides = array<i32>} : memref<18x18x8xbf16, #tpu.memory_space<vmem>>, vector<16x1x8xbf16>,
    %31 = vector.extract_strided_slice %15 {offsets = [0, 40], sizes = [16, 8], strides = [1, 1]} : vector<16x128xbf16> to vector<16x8xbf16>
    %32 = vector.shape_cast %31 : vector<16x8xbf16> to vector<16x1x8xbf16>
    %c1_28 = arith.constant 1 : index
    %c6 = arith.constant 6 : index
    %c0_29 = arith.constant 0 : index
    %33 = vector.load %arg7[%c1_28, %c6, %c0_29] : memref<18x18x8xbf16, #tpu.memory_space<vmem>>, vector<16x1x8xbf16>
    tpu.vector_store %arg7[%c1_28, %c6, %c0_29], %32 {strides = array<i32>} : memref<18x18x8xbf16, #tpu.memory_space<vmem>>, vector<16x1x8xbf16>,
    %34 = vector.extract_strided_slice %15 {offsets = [0, 48], sizes = [16, 8], strides = [1, 1]} : vector<16x128xbf16> to vector<16x8xbf16>
    %35 = vector.shape_cast %34 : vector<16x8xbf16> to vector<16x1x8xbf16>
    %c1_30 = arith.constant 1 : index
    %c7 = arith.constant 7 : index
    %c0_31 = arith.constant 0 : index
    %36 = vector.load %arg7[%c1_30, %c7, %c0_31] : memref<18x18x8xbf16, #tpu.memory_space<vmem>>, vector<16x1x8xbf16>
    tpu.vector_store %arg7[%c1_30, %c7, %c0_31], %35 {strides = array<i32>} : memref<18x18x8xbf16, #tpu.memory_space<vmem>>, vector<16x1x8xbf16>,
    %37 = vector.extract_strided_slice %15 {offsets = [0, 56], sizes = [16, 8], strides = [1, 1]} : vector<16x128xbf16> to vector<16x8xbf16>
    %38 = vector.shape_cast %37 : vector<16x8xbf16> to vector<16x1x8xbf16>
    %c1_32 = arith.constant 1 : index
    %c8 = arith.constant 8 : index
    %c0_33 = arith.constant 0 : index
    %39 = vector.load %arg7[%c1_32, %c8, %c0_33] : memref<18x18x8xbf16, #tpu.memory_space<vmem>>, vector<16x1x8xbf16>
    tpu.vector_store %arg7[%c1_32, %c8, %c0_33], %38 {strides = array<i32>} : memref<18x18x8xbf16, #tpu.memory_space<vmem>>, vector<16x1x8xbf16>,
    %40 = vector.extract_strided_slice %15 {offsets = [0, 64], sizes = [16, 8], strides = [1, 1]} : vector<16x128xbf16> to vector<16x8xbf16>
    %41 = vector.shape_cast %40 : vector<16x8xbf16> to vector<16x1x8xbf16>
    %c1_34 = arith.constant 1 : index
    %c9 = arith.constant 9 : index
    %c0_35 = arith.constant 0 : index
    %42 = vector.load %arg7[%c1_34, %c9, %c0_35] : memref<18x18x8xbf16, #tpu.memory_space<vmem>>, vector<16x1x8xbf16>
    tpu.vector_store %arg7[%c1_34, %c9, %c0_35], %41 {strides = array<i32>} : memref<18x18x8xbf16, #tpu.memory_space<vmem>>, vector<16x1x8xbf16>,
    %43 = vector.extract_strided_slice %15 {offsets = [0, 72], sizes = [16, 8], strides = [1, 1]} : vector<16x128xbf16> to vector<16x8xbf16>
    %44 = vector.shape_cast %43 : vector<16x8xbf16> to vector<16x1x8xbf16>
    %c1_36 = arith.constant 1 : index
    %c10 = arith.constant 10 : index
    %c0_37 = arith.constant 0 : index
    %45 = vector.load %arg7[%c1_36, %c10, %c0_37] : memref<18x18x8xbf16, #tpu.memory_space<vmem>>, vector<16x1x8xbf16>
    tpu.vector_store %arg7[%c1_36, %c10, %c0_37], %44 {strides = array<i32>} : memref<18x18x8xbf16, #tpu.memory_space<vmem>>, vector<16x1x8xbf16>,
    %46 = vector.extract_strided_slice %15 {offsets = [0, 80], sizes = [16, 8], strides = [1, 1]} : vector<16x128xbf16> to vector<16x8xbf16>
    %47 = vector.shape_cast %46 : vector<16x8xbf16> to vector<16x1x8xbf16>
    %c1_38 = arith.constant 1 : index
    %c11 = arith.constant 11 : index
    %c0_39 = arith.constant 0 : index
    %48 = vector.load %arg7[%c1_38, %c11, %c0_39] : memref<18x18x8xbf16, #tpu.memory_space<vmem>>, vector<16x1x8xbf16>
    tpu.vector_store %arg7[%c1_38, %c11, %c0_39], %47 {strides = array<i32>} : memref<18x18x8xbf16, #tpu.memory_space<vmem>>, vector<16x1x8xbf16>,
    %49 = vector.extract_strided_slice %15 {offsets = [0, 88], sizes = [16, 8], strides = [1, 1]} : vector<16x128xbf16> to vector<16x8xbf16>
    %50 = vector.shape_cast %49 : vector<16x8xbf16> to vector<16x1x8xbf16>
    %c1_40 = arith.constant 1 : index
    %c12 = arith.constant 12 : index
    %c0_41 = arith.constant 0 : index
    %51 = vector.load %arg7[%c1_40, %c12, %c0_41] : memref<18x18x8xbf16, #tpu.memory_space<vmem>>, vector<16x1x8xbf16>
    tpu.vector_store %arg7[%c1_40, %c12, %c0_41], %50 {strides = array<i32>} : memref<18x18x8xbf16, #tpu.memory_space<vmem>>, vector<16x1x8xbf16>,
    %52 = vector.extract_strided_slice %15 {offsets = [0, 96], sizes = [16, 8], strides = [1, 1]} : vector<16x128xbf16> to vector<16x8xbf16>
    %53 = vector.shape_cast %52 : vector<16x8xbf16> to vector<16x1x8xbf16>
    %c1_42 = arith.constant 1 : index
    %c13 = arith.constant 13 : index
    %c0_43 = arith.constant 0 : index
    %54 = vector.load %arg7[%c1_42, %c13, %c0_43] : memref<18x18x8xbf16, #tpu.memory_space<vmem>>, vector<16x1x8xbf16>
    tpu.vector_store %arg7[%c1_42, %c13, %c0_43], %53 {strides = array<i32>} : memref<18x18x8xbf16, #tpu.memory_space<vmem>>, vector<16x1x8xbf16>,
    %55 = vector.extract_strided_slice %15 {offsets = [0, 104], sizes = [16, 8], strides = [1, 1]} : vector<16x128xbf16> to vector<16x8xbf16>
    %56 = vector.shape_cast %55 : vector<16x8xbf16> to vector<16x1x8xbf16>
    %c1_44 = arith.constant 1 : index
    %c14 = arith.constant 14 : index
    %c0_45 = arith.constant 0 : index
    %57 = vector.load %arg7[%c1_44, %c14, %c0_45] : memref<18x18x8xbf16, #tpu.memory_space<vmem>>, vector<16x1x8xbf16>
    tpu.vector_store %arg7[%c1_44, %c14, %c0_45], %56 {strides = array<i32>} : memref<18x18x8xbf16, #tpu.memory_space<vmem>>, vector<16x1x8xbf16>,
    %58 = vector.extract_strided_slice %15 {offsets = [0, 112], sizes = [16, 8], strides = [1, 1]} : vector<16x128xbf16> to vector<16x8xbf16>
    %59 = vector.shape_cast %58 : vector<16x8xbf16> to vector<16x1x8xbf16>
    %c1_46 = arith.constant 1 : index
    %c15 = arith.constant 15 : index
    %c0_47 = arith.constant 0 : index
    %60 = vector.load %arg7[%c1_46, %c15, %c0_47] : memref<18x18x8xbf16, #tpu.memory_space<vmem>>, vector<16x1x8xbf16>
    tpu.vector_store %arg7[%c1_46, %c15, %c0_47], %59 {strides = array<i32>} : memref<18x18x8xbf16, #tpu.memory_space<vmem>>, vector<16x1x8xbf16>,
    %61 = vector.extract_strided_slice %15 {offsets = [0, 120], sizes = [16, 8], strides = [1, 1]} : vector<16x128xbf16> to vector<16x8xbf16>
    %62 = vector.shape_cast %61 : vector<16x8xbf16> to vector<16x1x8xbf16>
    %c1_48 = arith.constant 1 : index
    %c16 = arith.constant 16 : index
    %c0_49 = arith.constant 0 : index
    %63 = vector.load %arg7[%c1_48, %c16, %c0_49] : memref<18x18x8xbf16, #tpu.memory_space<vmem>>, vector<16x1x8xbf16>
    tpu.vector_store %arg7[%c1_48, %c16, %c0_49], %62 {strides = array<i32>} : memref<18x18x8xbf16, #tpu.memory_space<vmem>>, vector<16x1x8xbf16>,
    %c0_50 = arith.constant 0 : index
    %c0_51 = arith.constant 0 : index
    %c0_52 = arith.constant 0 : index
    %64 = vector.load %arg7[%c0_50, %c0_51, %c0_52] : memref<18x18x8xbf16, #tpu.memory_space<vmem>>, vector<16x16x8xbf16>
    %65 = vector.shape_cast %64 : vector<16x16x8xbf16> to vector<256x8xbf16>
    %c0_53 = arith.constant 0 : index
    %c0_54 = arith.constant 0 : index
    %66 = vector.load %arg8[%c0_53, %c0_54] : memref<256x72xbf16, #tpu.memory_space<vmem>>, vector<256x8xbf16>
    tpu.vector_store %arg8[%c0_53, %c0_54], %65 {strides = array<i32>} : memref<256x72xbf16, #tpu.memory_space<vmem>>, vector<256x8xbf16>,
    %c0_55 = arith.constant 0 : index
    %c1_56 = arith.constant 1 : index
    %c0_57 = arith.constant 0 : index
    %67 = vector.load %arg7[%c0_55, %c1_56, %c0_57] : memref<18x18x8xbf16, #tpu.memory_space<vmem>>, vector<16x16x8xbf16>
    %68 = vector.shape_cast %67 : vector<16x16x8xbf16> to vector<256x8xbf16>
    %c0_58 = arith.constant 0 : index
    %c8_59 = arith.constant 8 : index
    %69 = vector.load %arg8[%c0_58, %c8_59] : memref<256x72xbf16, #tpu.memory_space<vmem>>, vector<256x8xbf16>
    tpu.vector_store %arg8[%c0_58, %c8_59], %68 {strides = array<i32>} : memref<256x72xbf16, #tpu.memory_space<vmem>>, vector<256x8xbf16>,
    %c0_60 = arith.constant 0 : index
    %c2_61 = arith.constant 2 : index
    %c0_62 = arith.constant 0 : index
    %70 = vector.load %arg7[%c0_60, %c2_61, %c0_62] : memref<18x18x8xbf16, #tpu.memory_space<vmem>>, vector<16x16x8xbf16>
    %71 = vector.shape_cast %70 : vector<16x16x8xbf16> to vector<256x8xbf16>
    %c0_63 = arith.constant 0 : index
    %c16_64 = arith.constant 16 : index
    %72 = vector.load %arg8[%c0_63, %c16_64] : memref<256x72xbf16, #tpu.memory_space<vmem>>, vector<256x8xbf16>
    tpu.vector_store %arg8[%c0_63, %c16_64], %71 {strides = array<i32>} : memref<256x72xbf16, #tpu.memory_space<vmem>>, vector<256x8xbf16>,
    %c1_65 = arith.constant 1 : index
    %c0_66 = arith.constant 0 : index
    %c0_67 = arith.constant 0 : index
    %73 = vector.load %arg7[%c1_65, %c0_66, %c0_67] : memref<18x18x8xbf16, #tpu.memory_space<vmem>>, vector<16x16x8xbf16>
    %74 = vector.shape_cast %73 : vector<16x16x8xbf16> to vector<256x8xbf16>
    %c0_68 = arith.constant 0 : index
    %c24 = arith.constant 24 : index
    %75 = vector.load %arg8[%c0_68, %c24] : memref<256x72xbf16, #tpu.memory_space<vmem>>, vector<256x8xbf16>
    tpu.vector_store %arg8[%c0_68, %c24], %74 {strides = array<i32>} : memref<256x72xbf16, #tpu.memory_space<vmem>>, vector<256x8xbf16>,
    %c1_69 = arith.constant 1 : index
    %c1_70 = arith.constant 1 : index
    %c0_71 = arith.constant 0 : index
    %76 = vector.load %arg7[%c1_69, %c1_70, %c0_71] : memref<18x18x8xbf16, #tpu.memory_space<vmem>>, vector<16x16x8xbf16>
    %77 = vector.shape_cast %76 : vector<16x16x8xbf16> to vector<256x8xbf16>
    %c0_72 = arith.constant 0 : index
    %c32 = arith.constant 32 : index
    %78 = vector.load %arg8[%c0_72, %c32] : memref<256x72xbf16, #tpu.memory_space<vmem>>, vector<256x8xbf16>
    tpu.vector_store %arg8[%c0_72, %c32], %77 {strides = array<i32>} : memref<256x72xbf16, #tpu.memory_space<vmem>>, vector<256x8xbf16>,
    %c1_73 = arith.constant 1 : index
    %c2_74 = arith.constant 2 : index
    %c0_75 = arith.constant 0 : index
    %79 = vector.load %arg7[%c1_73, %c2_74, %c0_75] : memref<18x18x8xbf16, #tpu.memory_space<vmem>>, vector<16x16x8xbf16>
    %80 = vector.shape_cast %79 : vector<16x16x8xbf16> to vector<256x8xbf16>
    %c0_76 = arith.constant 0 : index
    %c40 = arith.constant 40 : index
    %81 = vector.load %arg8[%c0_76, %c40] : memref<256x72xbf16, #tpu.memory_space<vmem>>, vector<256x8xbf16>
    tpu.vector_store %arg8[%c0_76, %c40], %80 {strides = array<i32>} : memref<256x72xbf16, #tpu.memory_space<vmem>>, vector<256x8xbf16>,
    %c2_77 = arith.constant 2 : index
    %c0_78 = arith.constant 0 : index
    %c0_79 = arith.constant 0 : index
    %82 = vector.load %arg7[%c2_77, %c0_78, %c0_79] : memref<18x18x8xbf16, #tpu.memory_space<vmem>>, vector<16x16x8xbf16>
    %83 = vector.shape_cast %82 : vector<16x16x8xbf16> to vector<256x8xbf16>
    %c0_80 = arith.constant 0 : index
    %c48 = arith.constant 48 : index
    %84 = vector.load %arg8[%c0_80, %c48] : memref<256x72xbf16, #tpu.memory_space<vmem>>, vector<256x8xbf16>
    tpu.vector_store %arg8[%c0_80, %c48], %83 {strides = array<i32>} : memref<256x72xbf16, #tpu.memory_space<vmem>>, vector<256x8xbf16>,
    %c2_81 = arith.constant 2 : index
    %c1_82 = arith.constant 1 : index
    %c0_83 = arith.constant 0 : index
    %85 = vector.load %arg7[%c2_81, %c1_82, %c0_83] : memref<18x18x8xbf16, #tpu.memory_space<vmem>>, vector<16x16x8xbf16>
    %86 = vector.shape_cast %85 : vector<16x16x8xbf16> to vector<256x8xbf16>
    %c0_84 = arith.constant 0 : index
    %c56 = arith.constant 56 : index
    %87 = vector.load %arg8[%c0_84, %c56] : memref<256x72xbf16, #tpu.memory_space<vmem>>, vector<256x8xbf16>
    tpu.vector_store %arg8[%c0_84, %c56], %86 {strides = array<i32>} : memref<256x72xbf16, #tpu.memory_space<vmem>>, vector<256x8xbf16>,
    %c2_85 = arith.constant 2 : index
    %c2_86 = arith.constant 2 : index
    %c0_87 = arith.constant 0 : index
    %88 = vector.load %arg7[%c2_85, %c2_86, %c0_87] : memref<18x18x8xbf16, #tpu.memory_space<vmem>>, vector<16x16x8xbf16>
    %89 = vector.shape_cast %88 : vector<16x16x8xbf16> to vector<256x8xbf16>
    %c0_88 = arith.constant 0 : index
    %c64 = arith.constant 64 : index
    %90 = vector.load %arg8[%c0_88, %c64] : memref<256x72xbf16, #tpu.memory_space<vmem>>, vector<256x8xbf16>
    tpu.vector_store %arg8[%c0_88, %c64], %89 {strides = array<i32>} : memref<256x72xbf16, #tpu.memory_space<vmem>>, vector<256x8xbf16>,
    %c0_89 = arith.constant 0 : index
    %c0_90 = arith.constant 0 : index
    %91 = vector.load %arg8[%c0_89, %c0_90] : memref<256x72xbf16, #tpu.memory_space<vmem>>, vector<256x72xbf16>
    %c0_91 = arith.constant 0 : index
    %c0_92 = arith.constant 0 : index
    %92 = vector.load %arg4[%c0_91, %c0_92] : memref<72x8xbf16, #tpu.memory_space<vmem>>, vector<72x8xbf16>
    %cst_93 = arith.constant dense<0.000000e+00> : vector<256x8xf32>
    %93 = tpu.matmul %91, %92, %cst_93 {dimension_numbers = #tpu.dot_dimension_numbers<[1], [0], [0], [1], [0, 0, 1, 1], [], []>} : vector<256x72xbf16>, vector<72x8xbf16>, vector<256x8xf32> -> vector<256x8xf32>
    %94 = vector.shape_cast %93 : vector<256x8xf32> to vector<16x16x8xf32>
    %95 = vector.extract_strided_slice %94 {offsets = [0, 0, 0], sizes = [16, 1, 8], strides = [1, 1, 1]} : vector<16x16x8xf32> to vector<16x1x8xf32>
    %96 = vector.shape_cast %95 : vector<16x1x8xf32> to vector<16x8xf32>
    %c0_94 = arith.constant 0 : index
    %c0_95 = arith.constant 0 : index
    %97 = vector.load %arg5[%c0_94, %c0_95] : memref<16x128xf32, #tpu.memory_space<vmem>>, vector<16x8xf32>
    tpu.vector_store %arg5[%c0_94, %c0_95], %96 {strides = array<i32>} : memref<16x128xf32, #tpu.memory_space<vmem>>, vector<16x8xf32>,
    %98 = vector.extract_strided_slice %94 {offsets = [0, 1, 0], sizes = [16, 1, 8], strides = [1, 1, 1]} : vector<16x16x8xf32> to vector<16x1x8xf32>
    %99 = vector.shape_cast %98 : vector<16x1x8xf32> to vector<16x8xf32>
    %c0_96 = arith.constant 0 : index
    %c8_97 = arith.constant 8 : index
    %100 = vector.load %arg5[%c0_96, %c8_97] : memref<16x128xf32, #tpu.memory_space<vmem>>, vector<16x8xf32>
    tpu.vector_store %arg5[%c0_96, %c8_97], %99 {strides = array<i32>} : memref<16x128xf32, #tpu.memory_space<vmem>>, vector<16x8xf32>,
    %101 = vector.extract_strided_slice %94 {offsets = [0, 2, 0], sizes = [16, 1, 8], strides = [1, 1, 1]} : vector<16x16x8xf32> to vector<16x1x8xf32>
    %102 = vector.shape_cast %101 : vector<16x1x8xf32> to vector<16x8xf32>
    %c0_98 = arith.constant 0 : index
    %c16_99 = arith.constant 16 : index
    %103 = vector.load %arg5[%c0_98, %c16_99] : memref<16x128xf32, #tpu.memory_space<vmem>>, vector<16x8xf32>
    tpu.vector_store %arg5[%c0_98, %c16_99], %102 {strides = array<i32>} : memref<16x128xf32, #tpu.memory_space<vmem>>, vector<16x8xf32>,
    %104 = vector.extract_strided_slice %94 {offsets = [0, 3, 0], sizes = [16, 1, 8], strides = [1, 1, 1]} : vector<16x16x8xf32> to vector<16x1x8xf32>
    %105 = vector.shape_cast %104 : vector<16x1x8xf32> to vector<16x8xf32>
    %c0_100 = arith.constant 0 : index
    %c24_101 = arith.constant 24 : index
    %106 = vector.load %arg5[%c0_100, %c24_101] : memref<16x128xf32, #tpu.memory_space<vmem>>, vector<16x8xf32>
    tpu.vector_store %arg5[%c0_100, %c24_101], %105 {strides = array<i32>} : memref<16x128xf32, #tpu.memory_space<vmem>>, vector<16x8xf32>,
    %107 = vector.extract_strided_slice %94 {offsets = [0, 4, 0], sizes = [16, 1, 8], strides = [1, 1, 1]} : vector<16x16x8xf32> to vector<16x1x8xf32>
    %108 = vector.shape_cast %107 : vector<16x1x8xf32> to vector<16x8xf32>
    %c0_102 = arith.constant 0 : index
    %c32_103 = arith.constant 32 : index
    %109 = vector.load %arg5[%c0_102, %c32_103] : memref<16x128xf32, #tpu.memory_space<vmem>>, vector<16x8xf32>
    tpu.vector_store %arg5[%c0_102, %c32_103], %108 {strides = array<i32>} : memref<16x128xf32, #tpu.memory_space<vmem>>, vector<16x8xf32>,
    %110 = vector.extract_strided_slice %94 {offsets = [0, 5, 0], sizes = [16, 1, 8], strides = [1, 1, 1]} : vector<16x16x8xf32> to vector<16x1x8xf32>
    %111 = vector.shape_cast %110 : vector<16x1x8xf32> to vector<16x8xf32>
    %c0_104 = arith.constant 0 : index
    %c40_105 = arith.constant 40 : index
    %112 = vector.load %arg5[%c0_104, %c40_105] : memref<16x128xf32, #tpu.memory_space<vmem>>, vector<16x8xf32>
    tpu.vector_store %arg5[%c0_104, %c40_105], %111 {strides = array<i32>} : memref<16x128xf32, #tpu.memory_space<vmem>>, vector<16x8xf32>,
    %113 = vector.extract_strided_slice %94 {offsets = [0, 6, 0], sizes = [16, 1, 8], strides = [1, 1, 1]} : vector<16x16x8xf32> to vector<16x1x8xf32>
    %114 = vector.shape_cast %113 : vector<16x1x8xf32> to vector<16x8xf32>
    %c0_106 = arith.constant 0 : index
    %c48_107 = arith.constant 48 : index
    %115 = vector.load %arg5[%c0_106, %c48_107] : memref<16x128xf32, #tpu.memory_space<vmem>>, vector<16x8xf32>
    tpu.vector_store %arg5[%c0_106, %c48_107], %114 {strides = array<i32>} : memref<16x128xf32, #tpu.memory_space<vmem>>, vector<16x8xf32>,
    %116 = vector.extract_strided_slice %94 {offsets = [0, 7, 0], sizes = [16, 1, 8], strides = [1, 1, 1]} : vector<16x16x8xf32> to vector<16x1x8xf32>
    %117 = vector.shape_cast %116 : vector<16x1x8xf32> to vector<16x8xf32>
    %c0_108 = arith.constant 0 : index
    %c56_109 = arith.constant 56 : index
    %118 = vector.load %arg5[%c0_108, %c56_109] : memref<16x128xf32, #tpu.memory_space<vmem>>, vector<16x8xf32>
    tpu.vector_store %arg5[%c0_108, %c56_109], %117 {strides = array<i32>} : memref<16x128xf32, #tpu.memory_space<vmem>>, vector<16x8xf32>,
    %119 = vector.extract_strided_slice %94 {offsets = [0, 8, 0], sizes = [16, 1, 8], strides = [1, 1, 1]} : vector<16x16x8xf32> to vector<16x1x8xf32>
    %120 = vector.shape_cast %119 : vector<16x1x8xf32> to vector<16x8xf32>
    %c0_110 = arith.constant 0 : index
    %c64_111 = arith.constant 64 : index
    %121 = vector.load %arg5[%c0_110, %c64_111] : memref<16x128xf32, #tpu.memory_space<vmem>>, vector<16x8xf32>
    tpu.vector_store %arg5[%c0_110, %c64_111], %120 {strides = array<i32>} : memref<16x128xf32, #tpu.memory_space<vmem>>, vector<16x8xf32>,
    %122 = vector.extract_strided_slice %94 {offsets = [0, 9, 0], sizes = [16, 1, 8], strides = [1, 1, 1]} : vector<16x16x8xf32> to vector<16x1x8xf32>
    %123 = vector.shape_cast %122 : vector<16x1x8xf32> to vector<16x8xf32>
    %c0_112 = arith.constant 0 : index
    %c72 = arith.constant 72 : index
    %124 = vector.load %arg5[%c0_112, %c72] : memref<16x128xf32, #tpu.memory_space<vmem>>, vector<16x8xf32>
    tpu.vector_store %arg5[%c0_112, %c72], %123 {strides = array<i32>} : memref<16x128xf32, #tpu.memory_space<vmem>>, vector<16x8xf32>,
    %125 = vector.extract_strided_slice %94 {offsets = [0, 10, 0], sizes = [16, 1, 8], strides = [1, 1, 1]} : vector<16x16x8xf32> to vector<16x1x8xf32>
    %126 = vector.shape_cast %125 : vector<16x1x8xf32> to vector<16x8xf32>
    %c0_113 = arith.constant 0 : index
    %c80 = arith.constant 80 : index
    %127 = vector.load %arg5[%c0_113, %c80] : memref<16x128xf32, #tpu.memory_space<vmem>>, vector<16x8xf32>
    tpu.vector_store %arg5[%c0_113, %c80], %126 {strides = array<i32>} : memref<16x128xf32, #tpu.memory_space<vmem>>, vector<16x8xf32>,
    %128 = vector.extract_strided_slice %94 {offsets = [0, 11, 0], sizes = [16, 1, 8], strides = [1, 1, 1]} : vector<16x16x8xf32> to vector<16x1x8xf32>
    %129 = vector.shape_cast %128 : vector<16x1x8xf32> to vector<16x8xf32>
    %c0_114 = arith.constant 0 : index
    %c88 = arith.constant 88 : index
    %130 = vector.load %arg5[%c0_114, %c88] : memref<16x128xf32, #tpu.memory_space<vmem>>, vector<16x8xf32>
    tpu.vector_store %arg5[%c0_114, %c88], %129 {strides = array<i32>} : memref<16x128xf32, #tpu.memory_space<vmem>>, vector<16x8xf32>,
    %131 = vector.extract_strided_slice %94 {offsets = [0, 12, 0], sizes = [16, 1, 8], strides = [1, 1, 1]} : vector<16x16x8xf32> to vector<16x1x8xf32>
    %132 = vector.shape_cast %131 : vector<16x1x8xf32> to vector<16x8xf32>
    %c0_115 = arith.constant 0 : index
    %c96 = arith.constant 96 : index
    %133 = vector.load %arg5[%c0_115, %c96] : memref<16x128xf32, #tpu.memory_space<vmem>>, vector<16x8xf32>
    tpu.vector_store %arg5[%c0_115, %c96], %132 {strides = array<i32>} : memref<16x128xf32, #tpu.memory_space<vmem>>, vector<16x8xf32>,
    %134 = vector.extract_strided_slice %94 {offsets = [0, 13, 0], sizes = [16, 1, 8], strides = [1, 1, 1]} : vector<16x16x8xf32> to vector<16x1x8xf32>
    %135 = vector.shape_cast %134 : vector<16x1x8xf32> to vector<16x8xf32>
    %c0_116 = arith.constant 0 : index
    %c104 = arith.constant 104 : index
    %136 = vector.load %arg5[%c0_116, %c104] : memref<16x128xf32, #tpu.memory_space<vmem>>, vector<16x8xf32>
    tpu.vector_store %arg5[%c0_116, %c104], %135 {strides = array<i32>} : memref<16x128xf32, #tpu.memory_space<vmem>>, vector<16x8xf32>,
    %137 = vector.extract_strided_slice %94 {offsets = [0, 14, 0], sizes = [16, 1, 8], strides = [1, 1, 1]} : vector<16x16x8xf32> to vector<16x1x8xf32>
    %138 = vector.shape_cast %137 : vector<16x1x8xf32> to vector<16x8xf32>
    %c0_117 = arith.constant 0 : index
    %c112 = arith.constant 112 : index
    %139 = vector.load %arg5[%c0_117, %c112] : memref<16x128xf32, #tpu.memory_space<vmem>>, vector<16x8xf32>
    tpu.vector_store %arg5[%c0_117, %c112], %138 {strides = array<i32>} : memref<16x128xf32, #tpu.memory_space<vmem>>, vector<16x8xf32>,
    %140 = vector.extract_strided_slice %94 {offsets = [0, 15, 0], sizes = [16, 1, 8], strides = [1, 1, 1]} : vector<16x16x8xf32> to vector<16x1x8xf32>
    %141 = vector.shape_cast %140 : vector<16x1x8xf32> to vector<16x8xf32>
    %c0_118 = arith.constant 0 : index
    %c120 = arith.constant 120 : index
    %142 = vector.load %arg5[%c0_118, %c120] : memref<16x128xf32, #tpu.memory_space<vmem>>, vector<16x8xf32>
    tpu.vector_store %arg5[%c0_118, %c120], %141 {strides = array<i32>} : memref<16x128xf32, #tpu.memory_space<vmem>>, vector<16x8xf32>,
    %cst_119 = arith.constant dense<0.000000e+00> : vector<8xf32>
    %143 = vector.multi_reduction <add>, %93, %cst_119 [0] : vector<256x8xf32> to vector<8xf32>
    %144 = vector.shape_cast %143 : vector<8xf32> to vector<1x8xf32>
    %145 = arith.mulf %93, %93 : vector<256x8xf32>
    %cst_120 = arith.constant dense<0.000000e+00> : vector<8xf32>
    %146 = vector.multi_reduction <add>, %145, %cst_120 [0] : vector<256x8xf32> to vector<8xf32>
    %147 = vector.shape_cast %146 : vector<8xf32> to vector<1x8xf32>
    %148 = tpu.concatenate %144, %147 in 0 : vector<1x8xf32>, vector<1x8xf32> -> vector<2x8xf32>
    %c0_121 = arith.constant 0 : index
    %c0_122 = arith.constant 0 : index
    %c0_123 = arith.constant 0 : index
    %149 = vector.load %arg6[%c0_121, %c0_122, %c0_123] : memref<1x2x8xf32, #tpu.memory_space<vmem>>, vector<1x2x8xf32>
    %150 = vector.shape_cast %149 : vector<1x2x8xf32> to vector<2x8xf32>
    %151 = vector.shape_cast %148 : vector<2x8xf32> to vector<1x2x8xf32>
    tpu.vector_store %arg6[%c0_121, %c0_122, %c0_123], %151 {strides = array<i32>} : memref<1x2x8xf32, #tpu.memory_space<vmem>>, vector<1x2x8xf32>,
    return
  }
  func.func @transform_0(%arg0: i32) -> (i32, i32) {
    %c0_i32 = arith.constant 0 : i32
    %c0_i32_0 = arith.constant 0 : i32
    return %arg0, %c0_i32 : i32, i32
  }
  func.func @transform_1(%arg0: i32) -> (i32, i32) {
    %c0_i32 = arith.constant 0 : i32
    %c0_i32_0 = arith.constant 0 : i32
    %c0_i32_1 = arith.constant 0 : i32
    return %c0_i32, %c0_i32_0 : i32, i32
  }
  func.func @transform_2(%arg0: i32) -> (i32, i32) {
    %c0_i32 = arith.constant 0 : i32
    %c0_i32_0 = arith.constant 0 : i32
    %c0_i32_1 = arith.constant 0 : i32
    return %c0_i32, %c0_i32_0 : i32, i32
  }
  func.func @transform_3(%arg0: i32) -> (i32, i32) {
    %c0_i32 = arith.constant 0 : i32
    %c0_i32_0 = arith.constant 0 : i32
    %c0_i32_1 = arith.constant 0 : i32
    return %c0_i32, %c0_i32_0 : i32, i32
  }
  func.func @transform_4(%arg0: i32) -> (i32, i32) {
    %c0_i32 = arith.constant 0 : i32
    %c0_i32_0 = arith.constant 0 : i32
    return %arg0, %c0_i32 : i32, i32
  }
  func.func @transform_5(%arg0: i32) -> (i32, i32, i32) {
    %c0_i32 = arith.constant 0 : i32
    %c0_i32_0 = arith.constant 0 : i32
    %c0_i32_1 = arith.constant 0 : i32
    return %arg0, %c0_i32, %c0_i32_0 : i32, i32, i32
  }
}

</mosaic_0001>

<llo_original>
// kernel: tile.23
$region0: #{tile.23}
  #allocation0 [shape = 's32[1]{0}', space=sflag, size = 0x4, scoped, tag = 'scoped memory for tile.23']
  %s0 = inlined_call_operand.vmem [shape: f32[8], index: 0, kind: input, shape index: {}]
  %s1 = inlined_call_operand.vmem [shape: f32[16,8], index: 1, kind: output, shape index: {}]
  // Predicated region
  $region2: #{tile.23} parent=0 // pred_check
    _
  $region3: #{tile.23} parent=0 // pred_check_branch
    %3 = sbr.rel (0) target = $region5
  $region4: #{tile.23} parent=0 // pred_region
    _
  $region5: #{tile.23} parent=0 // pred_fallthru
    _
  %v4 = vld [vmem:[%s0] ss:$0 sm:$0xff]
  %5 = vst [vmem:[%s1] sm:$0xff] %v4
  %s6 = scalar_lea.vmem %s1, 8
  %7 = vst [vmem:[%s6] sm:$0xff] %v4

// kernel: tile.24
$region0: #{tile.24}
  %s0 = inlined_call_operand.vmem [shape: f32[16,8], index: 0, kind: input, shape index: {}]
  %s1 = inlined_call_operand.vmem [shape: f32[1,128], index: 1, kind: output, shape index: {}]
  $region1: #{tile.24} parent=0
    #allocation0 [shape = 'u8[4096]{0}', space=vmem, size = 0x1000, scoped, tag = 'scoped mem for output reshape']
    %v2 = vld [vmem:[%s0] sm:$0x1]
    %vm3 = vcmask 64512
    %4 = vst.msk [vmem:[#allocation0] sm:$0x1] %vm3, %v2
    %s5 = scalar_lea.vmem %s0, 15
    %v6 = vld [vmem:[%s5] sm:$0x1]
    %7 = vrot.lane.b32.xlu0 %v6, 120
    %v8 = vpop.permute.xlu0 %7
    %vm9 = vcmask 1048512
    %10 = vst.msk [vmem:[#allocation0] sm:$0x1] %vm9, %v8
    %s11 = scalar_lea.vmem %s0, 14
    %v12 = vld [vmem:[%s11] sm:$0x1]
    %13 = vrot.lane.b32.xlu0 %v12, 112
    %v14 = vpop.permute.xlu0 %13
    %vm15 = vcmask 982912
    %16 = vst.msk [vmem:[#allocation0] sm:$0x1] %vm15, %v14
    %s17 = scalar_lea.vmem %s0, 13
    %v18 = vld [vmem:[%s17] sm:$0x1]
    %19 = vrot.lane.b32.xlu0 %v18, 104
    %v20 = vpop.permute.xlu0 %19
    %vm21 = vcmask 917312
    %22 = vst.msk [vmem:[#allocation0] sm:$0x1] %vm21, %v20
    %s23 = scalar_lea.vmem %s0, 12
    %v24 = vld [vmem:[%s23] sm:$0x1]
    %25 = vrot.lane.b32.xlu0 %v24, 96
    %v26 = vpop.permute.xlu0 %25
    %vm27 = vcmask 851712
    %28 = vst.msk [vmem:[#allocation0] sm:$0x1] %vm27, %v26
    %s29 = scalar_lea.vmem %s0, 11
    %v30 = vld [vmem:[%s29] sm:$0x1]
    %31 = vrot.lane.b32.xlu0 %v30, 88
    %v32 = vpop.permute.xlu0 %31
    %vm33 = vcmask 786112
    %34 = vst.msk [vmem:[#allocation0] sm:$0x1] %vm33, %v32
    %s35 = scalar_lea.vmem %s0, 10
    %v36 = vld [vmem:[%s35] sm:$0x1]
    %37 = vrot.lane.b32.xlu0 %v36, 80
    %v38 = vpop.permute.xlu0 %37
    %vm39 = vcmask 720512
    %40 = vst.msk [vmem:[#allocation0] sm:$0x1] %vm39, %v38
    %s41 = scalar_lea.vmem %s0, 9
    %v42 = vld [vmem:[%s41] sm:$0x1]
    %43 = vrot.lane.b32.xlu0 %v42, 72
    %v44 = vpop.permute.xlu0 %43
    %vm45 = vcmask 654912
    %46 = vst.msk [vmem:[#allocation0] sm:$0x1] %vm45, %v44
    %s47 = scalar_lea.vmem %s0, 8
    %v48 = vld [vmem:[%s47] sm:$0x1]
    %49 = vrot.lane.b32.xlu0 %v48, 64
    %v50 = vpop.permute.xlu0 %49
    %vm51 = vcmask 589312
    %52 = vst.msk [vmem:[#allocation0] sm:$0x1] %vm51, %v50
    %s53 = scalar_lea.vmem %s0, 7
    %v54 = vld [vmem:[%s53] sm:$0x1]
    %55 = vrot.lane.b32.xlu0 %v54, 56
    %v56 = vpop.permute.xlu0 %55
    %vm57 = vcmask 523712
    %58 = vst.msk [vmem:[#allocation0] sm:$0x1] %vm57, %v56
    %s59 = scalar_lea.vmem %s0, 6
    %v60 = vld [vmem:[%s59] sm:$0x1]
    %61 = vrot.lane.b32.xlu0 %v60, 48
    %v62 = vpop.permute.xlu0 %61
    %vm63 = vcmask 458112
    %64 = vst.msk [vmem:[#allocation0] sm:$0x1] %vm63, %v62
    %s65 = scalar_lea.vmem %s0, 5
    %v66 = vld [vmem:[%s65] sm:$0x1]
    %67 = vrot.lane.b32.xlu0 %v66, 40
    %v68 = vpop.permute.xlu0 %67
    %vm69 = vcmask 392512
    %70 = vst.msk [vmem:[#allocation0] sm:$0x1] %vm69, %v68
    %s71 = scalar_lea.vmem %s0, 4
    %v72 = vld [vmem:[%s71] sm:$0x1]
    %73 = vrot.lane.b32.xlu0 %v72, 32
    %v74 = vpop.permute.xlu0 %73
    %vm75 = vcmask 326912
    %76 = vst.msk [vmem:[#allocation0] sm:$0x1] %vm75, %v74
    %s77 = scalar_lea.vmem %s0, 3
    %v78 = vld [vmem:[%s77] sm:$0x1]
    %79 = vrot.lane.b32.xlu0 %v78, 24
    %v80 = vpop.permute.xlu0 %79
    %vm81 = vcmask 261312
    %82 = vst.msk [vmem:[#allocation0] sm:$0x1] %vm81, %v80
    %s83 = scalar_lea.vmem %s0, 2
    %v84 = vld [vmem:[%s83] sm:$0x1]
    %85 = vrot.lane.b32.xlu0 %v84, 16
    %v86 = vpop.permute.xlu0 %85
    %vm87 = vcmask 195712
    %88 = vst.msk [vmem:[#allocation0] sm:$0x1] %vm87, %v86
    %s89 = scalar_lea.vmem %s0, 1
    %v90 = vld [vmem:[%s89] sm:$0x1]
    %91 = vrot.lane.b32.xlu0 %v90, 8
    %v92 = vpop.permute.xlu0 %91
    %vm93 = vcmask 130112
    %94 = vst.msk [vmem:[#allocation0] sm:$0x1] %vm93, %v92
    %s96 = sshllo.u32 0, 1
    %v98 = vld [vmem:[#allocation0] sm:%s96]
    %s99 = sshllo.u32 0, 1
    %100 = vst [vmem:[%s1] sm:%s99] %v98

// kernel: conv_block_forward.5
$region0: #{conv_block_forward.5}
  #allocation0 [shape = 'u32[]', space=smem, size = 0x4, offset = 0x4, fixed_abs, tag = 'smem constant byte address 0x4 - core index']
  #allocation1 [shape = 'u32[144,128]{1,0:T(1,128)}', space=vmem, size = 0x12000, scoped, tag = 'internal scratch']
  %s0 = inlined_call_operand.vmem [shape: f32[32,128], index: 0, kind: input, shape index: {}]
  %s1 = inlined_call_operand.vmem [shape: f32[1,128], index: 1, kind: input, shape index: {}]
  %s2 = inlined_call_operand.vmem [shape: f32[1,128], index: 2, kind: input, shape index: {}]
  %s3 = inlined_call_operand.vmem [shape: f32[32,128], index: 3, kind: output, shape index: {}]
  %s4 = sld [smem:[#allocation0]]
  $region45: #{conv_block_forward.5} parent=0
    _
  %s6 = ssub.s32 1, %s4
  %s7 = scalar_select 0, %s6, %s4
  loop: start=0, step=1, limit=4
  $region2: #{conv_block_forward.5} parent=0 // loop_pre_header
    _
  $region3: #{conv_block_forward.5} parent=0 // loop_header
    %s9 = sphi 0, %s13
    %p10 = scmp.ge.s32.totalorder %s9, 4
    %s19 = sphi 0, %s21
    %s22 = sphi 0, %s19
    %s23 = sphi 0, %s22
    %s39 = sphi 0, %s23
    %s43 = sphi 0, %s43
    %s45 = sphi 0, %s43
    %s46 = sphi 0, %s45
    %s60 = sphi 0, %s46
    %s64 = sphi 0, %s64
    %s66 = sphi 0, %s64
    %s67 = sphi 0, %s66
    %s81 = sphi 0, %s67
    %s87 = sphi 0, %s89
    %s90 = sphi 0, %s87
    %s91 = sphi 0, %s90
    %s107 = sphi 0, %s91
  $region4: #{conv_block_forward.5} parent=0 // loop_header_branch
    %12 = sbr.rel (%p10) target = $region8
  $region5: #{conv_block_forward.5} parent=0 // loop_body
    %s14 = ssub.s32 %s9, 1
    %s15 = ssub.s32 %s9, 2
    %s16 = sadd.s32 %s9, 1
    %s17 = ssub.s32 %s9, %s16
    %p18 = scmp.eq.s32.totalorder %s17, 0
    %s20 = sadd.s32 %s19, 1
    %s21 = scalar_select %p18, %s19, %s20
    %p24 = pneg %p18
    %p25 = scmp.eq.s32.totalorder %s9, 1
    %p26 = por %p24, %p25
    %p27 = scmp.ne.s32.totalorder %s19, %s22
    %p28 = scmp.eq.s32.totalorder %s9, 0
    %p29 = por %p27, %p28
    %p30 = scmp.ne.s32.totalorder %s19, %s22
    %p31 = scmp.eq.s32.totalorder %s14, 1
    %p32 = por %p30, %p31
    %p33 = scmp.ne.s32.totalorder %s22, %s23
    %p34 = scmp.eq.s32.totalorder %s14, 0
    %p35 = por %p33, %p34
    %p36 = scmp.ne.s32.totalorder %s22, %s23
    %p37 = scmp.eq.s32.totalorder %s15, 1
    %p38 = por %p36, %p37
    %p40 = scmp.ne.s32.totalorder %s23, %s39
    %p41 = scmp.eq.s32.totalorder %s15, 0
    %p42 = por %p40, %p41
    %s44 = sadd.s32 %s43, 1
    %p47 = scmp.eq.s32.totalorder %s9, 1
    %p48 = scmp.ne.s32.totalorder %s43, %s45
    %p49 = scmp.eq.s32.totalorder %s9, 0
    %p50 = por %p48, %p49
    %p51 = scmp.ne.s32.totalorder %s43, %s45
    %p52 = scmp.eq.s32.totalorder %s14, 1
    %p53 = por %p51, %p52
    %p54 = scmp.ne.s32.totalorder %s45, %s46
    %p55 = scmp.eq.s32.totalorder %s14, 0
    %p56 = por %p54, %p55
    %p57 = scmp.ne.s32.totalorder %s45, %s46
    %p58 = scmp.eq.s32.totalorder %s15, 1
    %p59 = por %p57, %p58
    %p61 = scmp.ne.s32.totalorder %s46, %s60
    %p62 = scmp.eq.s32.totalorder %s15, 0
    %p63 = por %p61, %p62
    %s65 = sadd.s32 %s64, 1
    %p68 = scmp.eq.s32.totalorder %s9, 1
    %p69 = scmp.ne.s32.totalorder %s64, %s66
    %p70 = scmp.eq.s32.totalorder %s9, 0
    %p71 = por %p69, %p70
    %p72 = scmp.ne.s32.totalorder %s64, %s66
    %p73 = scmp.eq.s32.totalorder %s14, 1
    %p74 = por %p72, %p73
    %p75 = scmp.ne.s32.totalorder %s66, %s67
    %p76 = scmp.eq.s32.totalorder %s14, 0
    %p77 = por %p75, %p76
    %p78 = scmp.ne.s32.totalorder %s66, %s67
    %p79 = scmp.eq.s32.totalorder %s15, 1
    %p80 = por %p78, %p79
    %p82 = scmp.ne.s32.totalorder %s67, %s81
    %p83 = scmp.eq.s32.totalorder %s15, 0
    %p84 = por %p82, %p83
    %s85 = ssub.s32 %s9, %s16
    %p86 = scmp.eq.s32.totalorder %s85, 0
    %s88 = sadd.s32 %s87, 1
    %s89 = scalar_select %p86, %s87, %s88
    %p92 = pneg %p86
    %p93 = scmp.eq.s32.totalorder %s9, 1
    %p94 = por %p92, %p93
    %p95 = scmp.ne.s32.totalorder %s87, %s90
    %p96 = scmp.eq.s32.totalorder %s9, 0
    %p97 = por %p95, %p96
    %p98 = scmp.ne.s32.totalorder %s87, %s90
    %p99 = scmp.eq.s32.totalorder %s14, 1
    %p100 = por %p98, %p99
    %p101 = scmp.ne.s32.totalorder %s90, %s91
    %p102 = scmp.eq.s32.totalorder %s14, 0
    %p103 = por %p101, %p102
    %p104 = scmp.ne.s32.totalorder %s90, %s91
    %p105 = scmp.eq.s32.totalorder %s15, 1
    %p106 = por %p104, %p105
    %p108 = scmp.ne.s32.totalorder %s91, %s107
    %p109 = scmp.eq.s32.totalorder %s15, 0
    %p110 = por %p108, %p109
    %p111 = scmp.le.s32.totalorder 1, %s9
    %p112 = scmp.lt.s32.totalorder %s9, 3
    %p113 = pnand %p111, %p112
    %p114 = pneg %p113
    // Predicated region
    $region9: #{conv_block_forward.5} parent=5 // pred_check
      _
    $region10: #{conv_block_forward.5} parent=5 // pred_check_branch
      %116 = sbr.rel (%p113) target = $region12
    $region11: #{conv_block_forward.5} parent=5 // pred_region
      %s117 = ssub.s32 %s9, 1
      // Predicated region
      $region13: #{conv_block_forward.5} parent=11 // pred_check
        %p118 = pneg %p56
      $region14: #{conv_block_forward.5} parent=11 // pred_check_branch
        %120 = sbr.rel (%p118) target = $region16
      $region15: #{conv_block_forward.5} parent=11 // pred_region
        _
      $region16: #{conv_block_forward.5} parent=11 // pred_fallthru
        _
      // Predicated region
      $region17: #{conv_block_forward.5} parent=11 // pred_check
        %p121 = pneg %p77
      $region18: #{conv_block_forward.5} parent=11 // pred_check_branch
        %123 = sbr.rel (%p121) target = $region20
      $region19: #{conv_block_forward.5} parent=11 // pred_region
        _
      $region20: #{conv_block_forward.5} parent=11 // pred_fallthru
        _
    $region12: #{conv_block_forward.5} parent=5 // pred_fallthru
      _
    %p124 = scmp.lt.s32.totalorder %s9, 2
    // Predicated region
    $region21: #{conv_block_forward.5} parent=5 // pred_check
      %p125 = pneg %p124
    $region22: #{conv_block_forward.5} parent=5 // pred_check_branch
      %127 = sbr.rel (%p125) target = $region24
    $region23: #{conv_block_forward.5} parent=5 // pred_region
      // Predicated region
      $region25: #{conv_block_forward.5} parent=23 // pred_check
        %p128 = pneg %p29
      $region26: #{conv_block_forward.5} parent=23 // pred_check_branch
        %130 = sbr.rel (%p128) target = $region28
      $region27: #{conv_block_forward.5} parent=23 // pred_region
        %s131 = smul.u32 2, %s9
        %p132 = scmp.lt.s32.totalorder %s131, 3
        %s133 = scalar_select %p132, %s131, 3
        %s134 = smul.addr %s133, 8
        %s135 = scalar_lea.vmem %s0, %s134
        %s136 = smul.u32 2, %s9
      $region28: #{conv_block_forward.5} parent=23 // pred_fallthru
        _
    $region24: #{conv_block_forward.5} parent=5 // pred_fallthru
      _
    %p137 = scmp.le.s32.totalorder 1, %s9
    %p138 = scmp.lt.s32.totalorder %s9, 3
    %p139 = pnand %p137, %p138
    %p140 = pneg %p139
    // Predicated region
    $region29: #{conv_block_forward.5} parent=5 // pred_check
      _
    $region30: #{conv_block_forward.5} parent=5 // pred_check_branch
      %142 = sbr.rel (%p139) target = $region32
    $region31: #{conv_block_forward.5} parent=5 // pred_region
      %s143 = ssub.s32 %s9, 1
      %s144 = smul.u32 2, %s14
      %p145 = scmp.lt.s32.totalorder %s144, 3
      %s146 = scalar_select %p145, %s144, 3
      %s147 = smul.addr %s146, 8
      %s148 = scalar_lea.vmem %s0, %s147
      %p149 = pneg %p35
      %p150 = pneg %p32
      %p151 = pneg %p56
      %p152 = pneg %p53
      %p153 = pneg %p77
      %p154 = pneg %p74
      %p155 = pneg %p103
      %p156 = pneg %p100
      %s157 = smul.u32 2, %s14
      %p158 = scmp.lt.s32.totalorder %s157, 3
      %s159 = scalar_select %p158, %s157, 3
      %s160 = smul.addr %s159, 8
      %s161 = scalar_lea.vmem %s3, %s160
      %s162 = smul.u32 2, %s14
      %p163 = scmp.lt.s32.totalorder %s162, 3
      %s164 = scalar_select %p163, %s162, 3
      %s165 = smul.addr %s164, 8
      %s166 = scalar_lea.vmem %s0, %s165
      %s167 = smul.u32 2, %s14
      %s168 = smul.u32 2, %s14
      %p169 = scmp.lt.s32.totalorder %s168, 3
      %s170 = scalar_select %p169, %s168, 3
      %s171 = smul.addr %s170, 8
      %s172 = scalar_lea.vmem %s3, %s171
      %s173 = smul.u32 2, %s14
      %v174 = vld [vmem:[%s166] sm:$0xff]
      %v175 = vld [vmem:[%s166 + $0x8] sm:$0xff]
      %v176 = vld [vmem:[%s1] sm:$0x1]
      %v178 = vlaneseq
      %v179 = vshrl.u32 %v178, 7
      %v180 = vsub.s32 0, %v179
      %v181 = vrot.slane %v176, %v180
      %v183 = vmul.f32 %v174, %v181
      %v184 = vmul.f32 %v175, %v181
      %v185 = vld [vmem:[%s2] sm:$0x1]
      %v187 = vlaneseq
      %v188 = vshrl.u32 %v187, 7
      %v189 = vsub.s32 0, %v188
      %v190 = vrot.slane %v185, %v189
      %v192 = vadd.f32 %v183, %v190
      %v193 = vadd.f32 %v184, %v190
      %v194 = vmax.f32 %v192, 0.0
      %v195 = vmax.f32 %v193, 0.0
      %196 = vst [vmem:[%s172] sm:$0xff] %v194
      %197 = vst [vmem:[%s172 + $0x8] sm:$0xff] %v195
      %s198 = smul.u32 2, %s14
      %p199 = scmp.lt.s32.totalorder %s198, 3
      %s200 = scalar_select %p199, %s198, 3
      %s201 = smul.addr %s200, 8
      %s202 = scalar_lea.vmem %s3, %s201
      // Predicated region
      $region33: #{conv_block_forward.5} parent=31 // pred_check
        %p203 = pneg %p100
      $region34: #{conv_block_forward.5} parent=31 // pred_check_branch
        %205 = sbr.rel (%p203) target = $region36
      $region35: #{conv_block_forward.5} parent=31 // pred_region
        %s206 = smul.u32 2, %s14
      $region36: #{conv_block_forward.5} parent=31 // pred_fallthru
        _
    $region32: #{conv_block_forward.5} parent=5 // pred_fallthru
      _
    %p207 = scmp.le.s32.totalorder 2, %s9
    // Predicated region
    $region37: #{conv_block_forward.5} parent=5 // pred_check
      %p208 = pneg %p207
    $region38: #{conv_block_forward.5} parent=5 // pred_check_branch
      %210 = sbr.rel (%p208) target = $region40
    $region39: #{conv_block_forward.5} parent=5 // pred_region
      %s211 = ssub.s32 %s9, 2
      // Predicated region
      $region41: #{conv_block_forward.5} parent=39 // pred_check
        %p212 = pneg %p106
      $region42: #{conv_block_forward.5} parent=39 // pred_check_branch
        %214 = sbr.rel (%p212) target = $region44
      $region43: #{conv_block_forward.5} parent=39 // pred_region
        %s215 = smul.u32 2, %s15
        %p216 = scmp.lt.s32.totalorder %s215, 3
        %s217 = scalar_select %p216, %s215, 3
        %s218 = smul.addr %s217, 8
        %s219 = scalar_lea.vmem %s3, %s218
      $region44: #{conv_block_forward.5} parent=39 // pred_fallthru
        _
    $region40: #{conv_block_forward.5} parent=5 // pred_fallthru
      _
  $region6: #{conv_block_forward.5} parent=0 // loop_footer
    %s13 = sadd.s32 1, %s9
  $region7: #{conv_block_forward.5} parent=0 // loop_footer_branch
    %8 = sbr.rel target = $region3
  $region8: #{conv_block_forward.5} parent=0 // loop_exit
    _

// kernel: conv_block_forward.3
$region0: #{conv_block_forward.3}
  #allocation0 [shape = 'u32[]', space=smem, size = 0x4, offset = 0x4, fixed_abs, tag = 'smem constant byte address 0x4 - core index']
  #allocation1 [shape = 'u32[144,128]{1,0:T(1,128)}', space=vmem, size = 0x12000, scoped, tag = 'internal scratch']
  #allocation2 [shape = 'bf16[256,36]{1,0:T(16,128)(2,1)}', space=vmem, size = 0x10000, scoped, tag = 'scratch operand']
  %s0 = inlined_call_operand.vmem [shape: bf16[2,18,18,4], index: 0, kind: input, shape index: {}]
  %s1 = inlined_call_operand.vmem [shape: bf16[36,8], index: 1, kind: input, shape index: {}]
  %s2 = inlined_call_operand.vmem [shape: f32[32,128], index: 2, kind: output, shape index: {0}]
  %s3 = inlined_call_operand.vmem [shape: f32[2,2,8], index: 3, kind: output, shape index: {1}]
  %4 = xla_tuple %s2, %s3
  %s5 = sld [smem:[#allocation0]]
  $region49: #{conv_block_forward.3} parent=0
    _
  %s7 = ssub.s32 1, %s5
  %s8 = scalar_select 0, %s7, %s5
  loop: start=0, step=1, limit=4
  $region2: #{conv_block_forward.3} parent=0 // loop_pre_header
    _
  $region3: #{conv_block_forward.3} parent=0 // loop_header
    %s10 = sphi 0, %s14
    %p11 = scmp.ge.s32.totalorder %s10, 4
    %s20 = sphi 0, %s22
    %s23 = sphi 0, %s20
    %s24 = sphi 0, %s23
    %s40 = sphi 0, %s24
    %s44 = sphi 0, %s44
    %s46 = sphi 0, %s44
    %s47 = sphi 0, %s46
    %s61 = sphi 0, %s47
    %s67 = sphi 0, %s69
    %s70 = sphi 0, %s67
    %s71 = sphi 0, %s70
    %s87 = sphi 0, %s71
    %s93 = sphi 0, %s95
    %s96 = sphi 0, %s93
    %s97 = sphi 0, %s96
    %s113 = sphi 0, %s97
  $region4: #{conv_block_forward.3} parent=0 // loop_header_branch
    %13 = sbr.rel (%p11) target = $region8
  $region5: #{conv_block_forward.3} parent=0 // loop_body
    %s15 = ssub.s32 %s10, 1
    %s16 = ssub.s32 %s10, 2
    %s17 = sadd.s32 %s10, 1
    %s18 = ssub.s32 %s10, %s17
    %p19 = scmp.eq.s32.totalorder %s18, 0
    %s21 = sadd.s32 %s20, 1
    %s22 = scalar_select %p19, %s20, %s21
    %p25 = pneg %p19
    %p26 = scmp.eq.s32.totalorder %s10, 1
    %p27 = por %p25, %p26
    %p28 = scmp.ne.s32.totalorder %s20, %s23
    %p29 = scmp.eq.s32.totalorder %s10, 0
    %p30 = por %p28, %p29
    %p31 = scmp.ne.s32.totalorder %s20, %s23
    %p32 = scmp.eq.s32.totalorder %s15, 1
    %p33 = por %p31, %p32
    %p34 = scmp.ne.s32.totalorder %s23, %s24
    %p35 = scmp.eq.s32.totalorder %s15, 0
    %p36 = por %p34, %p35
    %p37 = scmp.ne.s32.totalorder %s23, %s24
    %p38 = scmp.eq.s32.totalorder %s16, 1
    %p39 = por %p37, %p38
    %p41 = scmp.ne.s32.totalorder %s24, %s40
    %p42 = scmp.eq.s32.totalorder %s16, 0
    %p43 = por %p41, %p42
    %s45 = sadd.s32 %s44, 1
    %p48 = scmp.eq.s32.totalorder %s10, 1
    %p49 = scmp.ne.s32.totalorder %s44, %s46
    %p50 = scmp.eq.s32.totalorder %s10, 0
    %p51 = por %p49, %p50
    %p52 = scmp.ne.s32.totalorder %s44, %s46
    %p53 = scmp.eq.s32.totalorder %s15, 1
    %p54 = por %p52, %p53
    %p55 = scmp.ne.s32.totalorder %s46, %s47
    %p56 = scmp.eq.s32.totalorder %s15, 0
    %p57 = por %p55, %p56
    %p58 = scmp.ne.s32.totalorder %s46, %s47
    %p59 = scmp.eq.s32.totalorder %s16, 1
    %p60 = por %p58, %p59
    %p62 = scmp.ne.s32.totalorder %s47, %s61
    %p63 = scmp.eq.s32.totalorder %s16, 0
    %p64 = por %p62, %p63
    %s65 = ssub.s32 %s10, %s17
    %p66 = scmp.eq.s32.totalorder %s65, 0
    %s68 = sadd.s32 %s67, 1
    %s69 = scalar_select %p66, %s67, %s68
    %p72 = pneg %p66
    %p73 = scmp.eq.s32.totalorder %s10, 1
    %p74 = por %p72, %p73
    %p75 = scmp.ne.s32.totalorder %s67, %s70
    %p76 = scmp.eq.s32.totalorder %s10, 0
    %p77 = por %p75, %p76
    %p78 = scmp.ne.s32.totalorder %s67, %s70
    %p79 = scmp.eq.s32.totalorder %s15, 1
    %p80 = por %p78, %p79
    %p81 = scmp.ne.s32.totalorder %s70, %s71
    %p82 = scmp.eq.s32.totalorder %s15, 0
    %p83 = por %p81, %p82
    %p84 = scmp.ne.s32.totalorder %s70, %s71
    %p85 = scmp.eq.s32.totalorder %s16, 1
    %p86 = por %p84, %p85
    %p88 = scmp.ne.s32.totalorder %s71, %s87
    %p89 = scmp.eq.s32.totalorder %s16, 0
    %p90 = por %p88, %p89
    %s91 = ssub.s32 %s10, %s17
    %p92 = scmp.eq.s32.totalorder %s91, 0
    %s94 = sadd.s32 %s93, 1
    %s95 = scalar_select %p92, %s93, %s94
    %p98 = pneg %p92
    %p99 = scmp.eq.s32.totalorder %s10, 1
    %p100 = por %p98, %p99
    %p101 = scmp.ne.s32.totalorder %s93, %s96
    %p102 = scmp.eq.s32.totalorder %s10, 0
    %p103 = por %p101, %p102
    %p104 = scmp.ne.s32.totalorder %s93, %s96
    %p105 = scmp.eq.s32.totalorder %s15, 1
    %p106 = por %p104, %p105
    %p107 = scmp.ne.s32.totalorder %s96, %s97
    %p108 = scmp.eq.s32.totalorder %s15, 0
    %p109 = por %p107, %p108
    %p110 = scmp.ne.s32.totalorder %s96, %s97
    %p111 = scmp.eq.s32.totalorder %s16, 1
    %p112 = por %p110, %p111
    %p114 = scmp.ne.s32.totalorder %s97, %s113
    %p115 = scmp.eq.s32.totalorder %s16, 0
    %p116 = por %p114, %p115
    %p117 = scmp.le.s32.totalorder 1, %s10
    %p118 = scmp.lt.s32.totalorder %s10, 3
    %p119 = pnand %p117, %p118
    %p120 = pneg %p119
    // Predicated region
    $region9: #{conv_block_forward.3} parent=5 // pred_check
      _
    $region10: #{conv_block_forward.3} parent=5 // pred_check_branch
      %122 = sbr.rel (%p119) target = $region12
    $region11: #{conv_block_forward.3} parent=5 // pred_region
      %s123 = ssub.s32 %s10, 1
      // Predicated region
      $region13: #{conv_block_forward.3} parent=11 // pred_check
        %p124 = pneg %p57
      $region14: #{conv_block_forward.3} parent=11 // pred_check_branch
        %126 = sbr.rel (%p124) target = $region16
      $region15: #{conv_block_forward.3} parent=11 // pred_region
        _
      $region16: #{conv_block_forward.3} parent=11 // pred_fallthru
        _
    $region12: #{conv_block_forward.3} parent=5 // pred_fallthru
      _
    %p127 = scmp.lt.s32.totalorder %s10, 2
    // Predicated region
    $region17: #{conv_block_forward.3} parent=5 // pred_check
      %p128 = pneg %p127
    $region18: #{conv_block_forward.3} parent=5 // pred_check_branch
      %130 = sbr.rel (%p128) target = $region20
    $region19: #{conv_block_forward.3} parent=5 // pred_region
      // Predicated region
      $region21: #{conv_block_forward.3} parent=19 // pred_check
        %p131 = pneg %p30
      $region22: #{conv_block_forward.3} parent=19 // pred_check_branch
        %133 = sbr.rel (%p131) target = $region24
      $region23: #{conv_block_forward.3} parent=19 // pred_region
        %p134 = scmp.lt.s32.totalorder %s10, 1
        %s135 = scalar_select %p134, %s10, 1
        %s136 = smul.addr %s135, 54
        %s137 = smul.addr %s136, 4
        %s138 = scalar_lea.vmem %s0, %s137
      $region24: #{conv_block_forward.3} parent=19 // pred_fallthru
        _
    $region20: #{conv_block_forward.3} parent=5 // pred_fallthru
      _
    %p139 = scmp.le.s32.totalorder 1, %s10
    %p140 = scmp.lt.s32.totalorder %s10, 3
    %p141 = pnand %p139, %p140
    %p142 = pneg %p141
    // Predicated region
    $region25: #{conv_block_forward.3} parent=5 // pred_check
      _
    $region26: #{conv_block_forward.3} parent=5 // pred_check_branch
      %144 = sbr.rel (%p141) target = $region28
    $region27: #{conv_block_forward.3} parent=5 // pred_region
      %s145 = ssub.s32 %s10, 1
      %p146 = scmp.lt.s32.totalorder %s15, 1
      %s147 = scalar_select %p146, %s15, 1
      %s148 = smul.addr %s147, 54
      %s149 = smul.addr %s148, 4
      %s150 = scalar_lea.vmem %s0, %s149
      %p151 = pneg %p36
      %p152 = pneg %p33
      %p153 = pneg %p57
      %p154 = pneg %p54
      %p155 = pneg %p83
      %p156 = pneg %p80
      %s157 = smul.u32 2, %s15
      %p158 = scmp.lt.s32.totalorder %s157, 3
      %s159 = scalar_select %p158, %s157, 3
      %s160 = smul.addr %s159, 8
      %s161 = scalar_lea.vmem %s2, %s160
      %p162 = pneg %p109
      %p163 = pneg %p106
      %p164 = scmp.lt.s32.totalorder %s15, 1
      %s165 = scalar_select %p164, %s15, 1
      %s166 = smul.addr %s165, 2
      %s167 = scalar_lea.vmem %s3, %s166
      %p168 = scmp.lt.s32.totalorder %s15, 1
      %s169 = scalar_select %p168, %s15, 1
      %s170 = smul.addr %s169, 54
      %s171 = smul.addr %s170, 4
      %s172 = scalar_lea.vmem %s0, %s171
      %s173 = smul.u32 2, %s15
      %p174 = scmp.lt.s32.totalorder %s173, 3
      %s175 = scalar_select %p174, %s173, 3
      %s176 = smul.addr %s175, 8
      %s177 = scalar_lea.vmem %s2, %s176
      %s178 = smul.u32 2, %s15
      %p179 = scmp.lt.s32.totalorder %s15, 1
      %s180 = scalar_select %p179, %s15, 1
      %s181 = smul.addr %s180, 2
      %s182 = scalar_lea.vmem %s3, %s181
      %v184 = vld [vmem:[%s172] sm:$0xf]
      %v185 = vld [vmem:[%s172 + $0x4] sm:$0xf]
      %v186 = vld [vmem:[%s172 + $0xc] sm:$0xf]
      %v187 = vld [vmem:[%s172 + $0x10] sm:$0xf]
      %v188 = vld [vmem:[%s172 + $0x18] sm:$0xf]
      %v189 = vld [vmem:[%s172 + $0x1c] sm:$0xf]
      %v190 = vld [vmem:[%s172 + $0x24] sm:$0xf]
      %v191 = vld [vmem:[%s172 + $0x28] sm:$0xf]
      %v192 = vld [vmem:[%s172 + $0x30] sm:$0xf]
      %v193 = vld [vmem:[%s172 + $0x34] sm:$0xf]
      %v194 = vld [vmem:[%s172 + $0x3c] sm:$0xf]
      %v195 = vld [vmem:[%s172 + $0x40] sm:$0xf]
      %v196 = vld [vmem:[%s172 + $0x48] sm:$0xf]
      %v197 = vld [vmem:[%s172 + $0x4c] sm:$0xf]
      %v198 = vld [vmem:[%s172 + $0x54] sm:$0xf]
      %v199 = vld [vmem:[%s172 + $0x58] sm:$0xf]
      %v200 = vld [vmem:[%s172 + $0x60] sm:$0xf]
      %v201 = vld [vmem:[%s172 + $0x64] sm:$0xf]
      %v202 = vld [vmem:[%s172 + $0x6c] sm:$0xf]
      %v203 = vld [vmem:[%s172 + $0x70] sm:$0xf]
      %v204 = vld [vmem:[%s172 + $0x78] sm:$0xf]
      %v205 = vld [vmem:[%s172 + $0x7c] sm:$0xf]
      %v206 = vld [vmem:[%s172 + $0x84] sm:$0xf]
      %v207 = vld [vmem:[%s172 + $0x88] sm:$0xf]
      %v208 = vld [vmem:[%s172 + $0x90] sm:$0xf]
      %v209 = vld [vmem:[%s172 + $0x94] sm:$0xf]
      %v210 = vld [vmem:[%s172 + $0x9c] sm:$0xf]
      %v211 = vld [vmem:[%s172 + $0xa0] sm:$0xf]
      %v212 = vld [vmem:[%s172 + $0xa8] sm:$0xf]
      %v213 = vld [vmem:[%s172 + $0xac] sm:$0xf]
      %v214 = vld [vmem:[%s172 + $0xb4] sm:$0xf]
      %v215 = vld [vmem:[%s172 + $0xb8] sm:$0xf]
      %v248 = vunpack.c.l.b16 %v184
      %v249 = vunpack.c.l.b16 %v185
      %v250 = vunpack.c.l.b16 %v186
      %v251 = vunpack.c.l.b16 %v187
      %v252 = vunpack.c.l.b16 %v188
      %v253 = vunpack.c.l.b16 %v189
      %v254 = vunpack.c.l.b16 %v190
      %v255 = vunpack.c.l.b16 %v191
      %v256 = vunpack.c.l.b16 %v192
      %v257 = vunpack.c.l.b16 %v193
      %v258 = vunpack.c.l.b16 %v194
      %v259 = vunpack.c.l.b16 %v195
      %v260 = vunpack.c.l.b16 %v196
      %v261 = vunpack.c.l.b16 %v197
      %v262 = vunpack.c.l.b16 %v198
      %v263 = vunpack.c.l.b16 %v199
      %v264 = vunpack.c.l.b16 %v200
      %v265 = vunpack.c.l.b16 %v201
      %v266 = vunpack.c.l.b16 %v202
      %v267 = vunpack.c.l.b16 %v203
      %v268 = vunpack.c.l.b16 %v204
      %v269 = vunpack.c.l.b16 %v205
      %v270 = vunpack.c.l.b16 %v206
      %v271 = vunpack.c.l.b16 %v207
      %v272 = vunpack.c.l.b16 %v208
      %v273 = vunpack.c.l.b16 %v209
      %v274 = vunpack.c.l.b16 %v210
      %v275 = vunpack.c.l.b16 %v211
      %v276 = vunpack.c.l.b16 %v212
      %v277 = vunpack.c.l.b16 %v213
      %v278 = vunpack.c.l.b16 %v214
      %v279 = vunpack.c.l.b16 %v215
      %v280 = vpack.c.b16 %v249, %v248
      %v281 = vpack.c.b16 %v251, %v250
      %v282 = vpack.c.b16 %v253, %v252
      %v283 = vpack.c.b16 %v255, %v254
      %v284 = vpack.c.b16 %v257, %v256
      %v285 = vpack.c.b16 %v259, %v258
      %v286 = vpack.c.b16 %v261, %v260
      %v287 = vpack.c.b16 %v263, %v262
      %v288 = vpack.c.b16 %v265, %v264
      %v289 = vpack.c.b16 %v267, %v266
      %v290 = vpack.c.b16 %v269, %v268
      %v291 = vpack.c.b16 %v271, %v270
      %v292 = vpack.c.b16 %v273, %v272
      %v293 = vpack.c.b16 %v275, %v274
      %v294 = vpack.c.b16 %v277, %v276
      %v295 = vpack.c.b16 %v279, %v278
      %vm312 = vcmask 31744
      %313 = vst.msk [vmem:[#allocation2] sm:$0xff] %vm312, %v280
      %314 = vst.msk [vmem:[#allocation2 + $0x8] sm:$0xff] %vm312, %v281
      %315 = vst.msk [vmem:[#allocation2 + $0x10] sm:$0xff] %vm312, %v282
      %316 = vst.msk [vmem:[#allocation2 + $0x18] sm:$0xff] %vm312, %v283
      %317 = vst.msk [vmem:[#allocation2 + $0x20] sm:$0xff] %vm312, %v284
      %318 = vst.msk [vmem:[#allocation2 + $0x28] sm:$0xff] %vm312, %v285
      %319 = vst.msk [vmem:[#allocation2 + $0x30] sm:$0xff] %vm312, %v286
      %320 = vst.msk [vmem:[#allocation2 + $0x38] sm:$0xff] %vm312, %v287
      %321 = vst.msk [vmem:[#allocation2 + $0x40] sm:$0xff] %vm312, %v288
      %322 = vst.msk [vmem:[#allocation2 + $0x48] sm:$0xff] %vm312, %v289
      %323 = vst.msk [vmem:[#allocation2 + $0x50] sm:$0xff] %vm312, %v290
      %324 = vst.msk [vmem:[#allocation2 + $0x58] sm:$0xff] %vm312, %v291
      %325 = vst.msk [vmem:[#allocation2 + $0x60] sm:$0xff] %vm312, %v292
      %326 = vst.msk [vmem:[#allocation2 + $0x68] sm:$0xff] %vm312, %v293
      %327 = vst.msk [vmem:[#allocation2 + $0x70] sm:$0xff] %vm312, %v294
      %328 = vst.msk [vmem:[#allocation2 + $0x78] sm:$0xff] %vm312, %v295
      %v329 = vld [vmem:[%s172] sm:$0xf]
      %v330 = vld [vmem:[%s172 + $0x4] sm:$0xf]
      %v331 = vld [vmem:[%s172 + $0x8] sm:$0x1]
      %v332 = vld [vmem:[%s172 + $0xc] sm:$0xf]
      %v333 = vld [vmem:[%s172 + $0x10] sm:$0xf]
      %v334 = vld [vmem:[%s172 + $0x14] sm:$0x1]
      %v335 = vld [vmem:[%s172 + $0x18] sm:$0xf]
      %v336 = vld [vmem:[%s172 + $0x1c] sm:$0xf]
      %v337 = vld [vmem:[%s172 + $0x20] sm:$0x1]
      %v338 = vld [vmem:[%s172 + $0x24] sm:$0xf]
      %v339 = vld [vmem:[%s172 + $0x28] sm:$0xf]
      %v340 = vld [vmem:[%s172 + $0x2c] sm:$0x1]
      %v341 = vld [vmem:[%s172 + $0x30] sm:$0xf]
      %v342 = vld [vmem:[%s172 + $0x34] sm:$0xf]
      %v343 = vld [vmem:[%s172 + $0x38] sm:$0x1]
      %v344 = vld [vmem:[%s172 + $0x3c] sm:$0xf]
      %v345 = vld [vmem:[%s172 + $0x40] sm:$0xf]
      %v346 = vld [vmem:[%s172 + $0x44] sm:$0x1]
      %v347 = vld [vmem:[%s172 + $0x48] sm:$0xf]
      %v348 = vld [vmem:[%s172 + $0x4c] sm:$0xf]
      %v349 = vld [vmem:[%s172 + $0x50] sm:$0x1]
      %v350 = vld [vmem:[%s172 + $0x54] sm:$0xf]
      %v351 = vld [vmem:[%s172 + $0x58] sm:$0xf]
      %v352 = vld [vmem:[%s172 + $0x5c] sm:$0x1]
      %v353 = vld [vmem:[%s172 + $0x60] sm:$0xf]
      %v354 = vld [vmem:[%s172 + $0x64] sm:$0xf]
      %v355 = vld [vmem:[%s172 + $0x68] sm:$0x1]
      %v356 = vld [vmem:[%s172 + $0x6c] sm:$0xf]
      %v357 = vld [vmem:[%s172 + $0x70] sm:$0xf]
      %v358 = vld [vmem:[%s172 + $0x74] sm:$0x1]
      %v359 = vld [vmem:[%s172 + $0x78] sm:$0xf]
      %v360 = vld [vmem:[%s172 + $0x7c] sm:$0xf]
      %v361 = vld [vmem:[%s172 + $0x80] sm:$0x1]
      %v362 = vld [vmem:[%s172 + $0x84] sm:$0xf]
      %v363 = vld [vmem:[%s172 + $0x88] sm:$0xf]
      %v364 = vld [vmem:[%s172 + $0x8c] sm:$0x1]
      %v365 = vld [vmem:[%s172 + $0x90] sm:$0xf]
      %v366 = vld [vmem:[%s172 + $0x94] sm:$0xf]
      %v367 = vld [vmem:[%s172 + $0x98] sm:$0x1]
      %v368 = vld [vmem:[%s172 + $0x9c] sm:$0xf]
      %v369 = vld [vmem:[%s172 + $0xa0] sm:$0xf]
      %v370 = vld [vmem:[%s172 + $0xa4] sm:$0x1]
      %v371 = vld [vmem:[%s172 + $0xa8] sm:$0xf]
      %v372 = vld [vmem:[%s172 + $0xac] sm:$0xf]
      %v373 = vld [vmem:[%s172 + $0xb0] sm:$0x1]
      %v374 = vld [vmem:[%s172 + $0xb4] sm:$0xf]
      %v375 = vld [vmem:[%s172 + $0xb8] sm:$0xf]
      %v376 = vld [vmem:[%s172 + $0xbc] sm:$0x1]
      %vm377 = vsmask.f32 3328
      %vm378 = vsmask.f32 7440
      %vm379 = vmor %vm377, %vm378
      %v381 = vshrl.u32 %v329, 16
      %v383 = vrot.slane %v381, 4
      %v384 = vshll.u32 %v329, 16
      %v386 = vrot.slane %v384, 5
      %v387 = vor.u32 %v383, %v386
      %v388 = vrot.slane %v387, 4
      %v390 = vshll.u32 %v330, 16
      %v392 = vrot.slane %v390, 5
      %v393 = vsel %vm379, %v388, %v392
      %v394 = vshrl.u32 %v330, 16
      %v396 = vrot.slane %v394, 4
      %v397 = vor.u32 %v396, %v392
      %v398 = vrot.slane %v397, 4
      %v400 = vshll.u32 %v331, 16
      %v402 = vrot.slane %v400, 5
      %v403 = vsel %vm379, %v398, %v402
      %v405 = vshrl.u32 %v332, 16
      %v407 = vrot.slane %v405, 4
      %v408 = vshll.u32 %v332, 16
      %v410 = vrot.slane %v408, 5
      %v411 = vor.u32 %v407, %v410
      %v412 = vrot.slane %v411, 4
      %v414 = vshll.u32 %v333, 16
      %v416 = vrot.slane %v414, 5
      %v417 = vsel %vm379, %v412, %v416
      %v418 = vshrl.u32 %v333, 16
      %v420 = vrot.slane %v418, 4
      %v421 = vor.u32 %v420, %v416
      %v422 = vrot.slane %v421, 4
      %v424 = vshll.u32 %v334, 16
      %v426 = vrot.slane %v424, 5
      %v427 = vsel %vm379, %v422, %v426
      %v429 = vshrl.u32 %v335, 16
      %v431 = vrot.slane %v429, 4
      %v432 = vshll.u32 %v335, 16
      %v434 = vrot.slane %v432, 5
      %v435 = vor.u32 %v431, %v434
      %v436 = vrot.slane %v435, 4
      %v438 = vshll.u32 %v336, 16
      %v440 = vrot.slane %v438, 5
      %v441 = vsel %vm379, %v436, %v440
      %v442 = vshrl.u32 %v336, 16
      %v444 = vrot.slane %v442, 4
      %v445 = vor.u32 %v444, %v440
      %v446 = vrot.slane %v445, 4
      %v448 = vshll.u32 %v337, 16
      %v450 = vrot.slane %v448, 5
      %v451 = vsel %vm379, %v446, %v450
      %v453 = vshrl.u32 %v338, 16
      %v455 = vrot.slane %v453, 4
      %v456 = vshll.u32 %v338, 16
      %v458 = vrot.slane %v456, 5
      %v459 = vor.u32 %v455, %v458
      %v460 = vrot.slane %v459, 4
      %v462 = vshll.u32 %v339, 16
      %v464 = vrot.slane %v462, 5
      %v465 = vsel %vm379, %v460, %v464
      %v466 = vshrl.u32 %v339, 16
      %v468 = vrot.slane %v466, 4
      %v469 = vor.u32 %v468, %v464
      %v470 = vrot.slane %v469, 4
      %v472 = vshll.u32 %v340, 16
      %v474 = vrot.slane %v472, 5
      %v475 = vsel %vm379, %v470, %v474
      %v477 = vshrl.u32 %v341, 16
      %v479 = vrot.slane %v477, 4
      %v480 = vshll.u32 %v341, 16
      %v482 = vrot.slane %v480, 5
      %v483 = vor.u32 %v479, %v482
      %v484 = vrot.slane %v483, 4
      %v486 = vshll.u32 %v342, 16
      %v488 = vrot.slane %v486, 5
      %v489 = vsel %vm379, %v484, %v488
      %v490 = vshrl.u32 %v342, 16
      %v492 = vrot.slane %v490, 4
      %v493 = vor.u32 %v492, %v488
      %v494 = vrot.slane %v493, 4
      %v496 = vshll.u32 %v343, 16
      %v498 = vrot.slane %v496, 5
      %v499 = vsel %vm379, %v494, %v498
      %v501 = vshrl.u32 %v344, 16
      %v503 = vrot.slane %v501, 4
      %v504 = vshll.u32 %v344, 16
      %v506 = vrot.slane %v504, 5
      %v507 = vor.u32 %v503, %v506
      %v508 = vrot.slane %v507, 4
      %v510 = vshll.u32 %v345, 16
      %v512 = vrot.slane %v510, 5
      %v513 = vsel %vm379, %v508, %v512
      %v514 = vshrl.u32 %v345, 16
      %v516 = vrot.slane %v514, 4
      %v517 = vor.u32 %v516, %v512
      %v518 = vrot.slane %v517, 4
      %v520 = vshll.u32 %v346, 16
      %v522 = vrot.slane %v520, 5
      %v523 = vsel %vm379, %v518, %v522
      %v525 = vshrl.u32 %v347, 16
      %v527 = vrot.slane %v525, 4
      %v528 = vshll.u32 %v347, 16
      %v530 = vrot.slane %v528, 5
      %v531 = vor.u32 %v527, %v530
      %v532 = vrot.slane %v531, 4
      %v534 = vshll.u32 %v348, 16
      %v536 = vrot.slane %v534, 5
      %v537 = vsel %vm379, %v532, %v536
      %v538 = vshrl.u32 %v348, 16
      %v540 = vrot.slane %v538, 4
      %v541 = vor.u32 %v540, %v536
      %v542 = vrot.slane %v541, 4
      %v544 = vshll.u32 %v349, 16
      %v546 = vrot.slane %v544, 5
      %v547 = vsel %vm379, %v542, %v546
      %v549 = vshrl.u32 %v350, 16
      %v551 = vrot.slane %v549, 4
      %v552 = vshll.u32 %v350, 16
      %v554 = vrot.slane %v552, 5
      %v555 = vor.u32 %v551, %v554
      %v556 = vrot.slane %v555, 4
      %v558 = vshll.u32 %v351, 16
      %v560 = vrot.slane %v558, 5
      %v561 = vsel %vm379, %v556, %v560
      %v562 = vshrl.u32 %v351, 16
      %v564 = vrot.slane %v562, 4
      %v565 = vor.u32 %v564, %v560
      %v566 = vrot.slane %v565, 4
      %v568 = vshll.u32 %v352, 16
      %v570 = vrot.slane %v568, 5
      %v571 = vsel %vm379, %v566, %v570
      %v573 = vshrl.u32 %v353, 16
      %v575 = vrot.slane %v573, 4
      %v576 = vshll.u32 %v353, 16
      %v578 = vrot.slane %v576, 5
      %v579 = vor.u32 %v575, %v578
      %v580 = vrot.slane %v579, 4
      %v582 = vshll.u32 %v354, 16
      %v584 = vrot.slane %v582, 5
      %v585 = vsel %vm379, %v580, %v584
      %v586 = vshrl.u32 %v354, 16
      %v588 = vrot.slane %v586, 4
      %v589 = vor.u32 %v588, %v584
      %v590 = vrot.slane %v589, 4
      %v592 = vshll.u32 %v355, 16
      %v594 = vrot.slane %v592, 5
      %v595 = vsel %vm379, %v590, %v594
      %v597 = vshrl.u32 %v356, 16
      %v599 = vrot.slane %v597, 4
      %v600 = vshll.u32 %v356, 16
      %v602 = vrot.slane %v600, 5
      %v603 = vor.u32 %v599, %v602
      %v604 = vrot.slane %v603, 4
      %v606 = vshll.u32 %v357, 16
      %v608 = vrot.slane %v606, 5
      %v609 = vsel %vm379, %v604, %v608
      %v610 = vshrl.u32 %v357, 16
      %v612 = vrot.slane %v610, 4
      %v613 = vor.u32 %v612, %v608
      %v614 = vrot.slane %v613, 4
      %v616 = vshll.u32 %v358, 16
      %v618 = vrot.slane %v616, 5
      %v619 = vsel %vm379, %v614, %v618
      %v621 = vshrl.u32 %v359, 16
      %v623 = vrot.slane %v621, 4
      %v624 = vshll.u32 %v359, 16
      %v626 = vrot.slane %v624, 5
      %v627 = vor.u32 %v623, %v626
      %v628 = vrot.slane %v627, 4
      %v630 = vshll.u32 %v360, 16
      %v632 = vrot.slane %v630, 5
      %v633 = vsel %vm379, %v628, %v632
      %v634 = vshrl.u32 %v360, 16
      %v636 = vrot.slane %v634, 4
      %v637 = vor.u32 %v636, %v632
      %v638 = vrot.slane %v637, 4
      %v640 = vshll.u32 %v361, 16
      %v642 = vrot.slane %v640, 5
      %v643 = vsel %vm379, %v638, %v642
      %v645 = vshrl.u32 %v362, 16
      %v647 = vrot.slane %v645, 4
      %v648 = vshll.u32 %v362, 16
      %v650 = vrot.slane %v648, 5
      %v651 = vor.u32 %v647, %v650
      %v652 = vrot.slane %v651, 4
      %v654 = vshll.u32 %v363, 16
      %v656 = vrot.slane %v654, 5
      %v657 = vsel %vm379, %v652, %v656
      %v658 = vshrl.u32 %v363, 16
      %v660 = vrot.slane %v658, 4
      %v661 = vor.u32 %v660, %v656
      %v662 = vrot.slane %v661, 4
      %v664 = vshll.u32 %v364, 16
      %v666 = vrot.slane %v664, 5
      %v667 = vsel %vm379, %v662, %v666
      %v669 = vshrl.u32 %v365, 16
      %v671 = vrot.slane %v669, 4
      %v672 = vshll.u32 %v365, 16
      %v674 = vrot.slane %v672, 5
      %v675 = vor.u32 %v671, %v674
      %v676 = vrot.slane %v675, 4
      %v678 = vshll.u32 %v366, 16
      %v680 = vrot.slane %v678, 5
      %v681 = vsel %vm379, %v676, %v680
      %v682 = vshrl.u32 %v366, 16
      %v684 = vrot.slane %v682, 4
      %v685 = vor.u32 %v684, %v680
      %v686 = vrot.slane %v685, 4
      %v688 = vshll.u32 %v367, 16
      %v690 = vrot.slane %v688, 5
      %v691 = vsel %vm379, %v686, %v690
      %v693 = vshrl.u32 %v368, 16
      %v695 = vrot.slane %v693, 4
      %v696 = vshll.u32 %v368, 16
      %v698 = vrot.slane %v696, 5
      %v699 = vor.u32 %v695, %v698
      %v700 = vrot.slane %v699, 4
      %v702 = vshll.u32 %v369, 16
      %v704 = vrot.slane %v702, 5
      %v705 = vsel %vm379, %v700, %v704
      %v706 = vshrl.u32 %v369, 16
      %v708 = vrot.slane %v706, 4
      %v709 = vor.u32 %v708, %v704
      %v710 = vrot.slane %v709, 4
      %v712 = vshll.u32 %v370, 16
      %v714 = vrot.slane %v712, 5
      %v715 = vsel %vm379, %v710, %v714
      %v717 = vshrl.u32 %v371, 16
      %v719 = vrot.slane %v717, 4
      %v720 = vshll.u32 %v371, 16
      %v722 = vrot.slane %v720, 5
      %v723 = vor.u32 %v719, %v722
      %v724 = vrot.slane %v723, 4
      %v726 = vshll.u32 %v372, 16
      %v728 = vrot.slane %v726, 5
      %v729 = vsel %vm379, %v724, %v728
      %v730 = vshrl.u32 %v372, 16
      %v732 = vrot.slane %v730, 4
      %v733 = vor.u32 %v732, %v728
      %v734 = vrot.slane %v733, 4
      %v736 = vshll.u32 %v373, 16
      %v738 = vrot.slane %v736, 5
      %v739 = vsel %vm379, %v734, %v738
      %v741 = vshrl.u32 %v374, 16
      %v743 = vrot.slane %v741, 4
      %v744 = vshll.u32 %v374, 16
      %v746 = vrot.slane %v744, 5
      %v747 = vor.u32 %v743, %v746
      %v748 = vrot.slane %v747, 4
      %v750 = vshll.u32 %v375, 16
      %v752 = vrot.slane %v750, 5
      %v753 = vsel %vm379, %v748, %v752
      %v754 = vshrl.u32 %v375, 16
      %v756 = vrot.slane %v754, 4
      %v757 = vor.u32 %v756, %v752
      %v758 = vrot.slane %v757, 4
      %v760 = vshll.u32 %v376, 16
      %v762 = vrot.slane %v760, 5
      %v763 = vsel %vm379, %v758, %v762
      %v764 = vunpack.c.l.b16 %v393
      %v765 = vunpack.c.l.b16 %v403
      %v766 = vunpack.c.l.b16 %v417
      %v767 = vunpack.c.l.b16 %v427
      %v768 = vunpack.c.l.b16 %v441
      %v769 = vunpack.c.l.b16 %v451
      %v770 = vunpack.c.l.b16 %v465
      %v771 = vunpack.c.l.b16 %v475
      %v772 = vunpack.c.l.b16 %v489
      %v773 = vunpack.c.l.b16 %v499
      %v774 = vunpack.c.l.b16 %v513
      %v775 = vunpack.c.l.b16 %v523
      %v776 = vunpack.c.l.b16 %v537
      %v777 = vunpack.c.l.b16 %v547
      %v778 = vunpack.c.l.b16 %v561
      %v779 = vunpack.c.l.b16 %v571
      %v780 = vunpack.c.l.b16 %v585
      %v781 = vunpack.c.l.b16 %v595
      %v782 = vunpack.c.l.b16 %v609
      %v783 = vunpack.c.l.b16 %v619
      %v784 = vunpack.c.l.b16 %v633
      %v785 = vunpack.c.l.b16 %v643
      %v786 = vunpack.c.l.b16 %v657
      %v787 = vunpack.c.l.b16 %v667
      %v788 = vunpack.c.l.b16 %v681
      %v789 = vunpack.c.l.b16 %v691
      %v790 = vunpack.c.l.b16 %v705
      %v791 = vunpack.c.l.b16 %v715
      %v792 = vunpack.c.l.b16 %v729
      %v793 = vunpack.c.l.b16 %v739
      %v794 = vunpack.c.l.b16 %v753
      %v795 = vunpack.c.l.b16 %v763
      %v796 = vpack.c.b16 %v765, %v764
      %v797 = vpack.c.b16 %v767, %v766
      %v798 = vpack.c.b16 %v769, %v768
      %v799 = vpack.c.b16 %v771, %v770
      %v800 = vpack.c.b16 %v773, %v772
      %v801 = vpack.c.b16 %v775, %v774
      %v802 = vpack.c.b16 %v777, %v776
      %v803 = vpack.c.b16 %v779, %v778
      %v804 = vpack.c.b16 %v781, %v780
      %v805 = vpack.c.b16 %v783, %v782
      %v806 = vpack.c.b16 %v785, %v784
      %v807 = vpack.c.b16 %v787, %v786
      %v808 = vpack.c.b16 %v789, %v788
      %v809 = vpack.c.b16 %v791, %v790
      %v810 = vpack.c.b16 %v793, %v792
      %v811 = vpack.c.b16 %v795, %v794
      %812 = vrot.lane.b32.xlu0 %v796, 4
      %v813 = vpop.permute.xlu0 %812
      %814 = vrot.lane.b32.xlu0 %v797, 4
      %v815 = vpop.permute.xlu0 %814
      %816 = vrot.lane.b32.xlu0 %v798, 4
      %v817 = vpop.permute.xlu0 %816
      %818 = vrot.lane.b32.xlu0 %v799, 4
      %v819 = vpop.permute.xlu0 %818
      %820 = vrot.lane.b32.xlu0 %v800, 4
      %v821 = vpop.permute.xlu0 %820
      %822 = vrot.lane.b32.xlu0 %v801, 4
      %v823 = vpop.permute.xlu0 %822
      %824 = vrot.lane.b32.xlu0 %v802, 4
      %v825 = vpop.permute.xlu0 %824
      %826 = vrot.lane.b32.xlu0 %v803, 4
      %v827 = vpop.permute.xlu0 %826
      %828 = vrot.lane.b32.xlu0 %v804, 4
      %v829 = vpop.permute.xlu0 %828
      %830 = vrot.lane.b32.xlu0 %v805, 4
      %v831 = vpop.permute.xlu0 %830
      %832 = vrot.lane.b32.xlu0 %v806, 4
      %v833 = vpop.permute.xlu0 %832
      %834 = vrot.lane.b32.xlu0 %v807, 4
      %v835 = vpop.permute.xlu0 %834
      %836 = vrot.lane.b32.xlu0 %v808, 4
      %v837 = vpop.permute.xlu0 %836
      %838 = vrot.lane.b32.xlu0 %v809, 4
      %v839 = vpop.permute.xlu0 %838
      %840 = vrot.lane.b32.xlu0 %v810, 4
      %v841 = vpop.permute.xlu0 %840
      %842 = vrot.lane.b32.xlu0 %v811, 4
      %v843 = vpop.permute.xlu0 %842
      %vm860 = vcmask 64544
      %861 = vst.msk [vmem:[#allocation2] sm:$0xff] %vm860, %v813
      %862 = vst.msk [vmem:[#allocation2 + $0x8] sm:$0xff] %vm860, %v815
      %863 = vst.msk [vmem:[#allocation2 + $0x10] sm:$0xff] %vm860, %v817
      %864 = vst.msk [vmem:[#allocation2 + $0x18] sm:$0xff] %vm860, %v819
      %865 = vst.msk [vmem:[#allocation2 + $0x20] sm:$0xff] %vm860, %v821
      %866 = vst.msk [vmem:[#allocation2 + $0x28] sm:$0xff] %vm860, %v823
      %867 = vst.msk [vmem:[#allocation2 + $0x30] sm:$0xff] %vm860, %v825
      %868 = vst.msk [vmem:[#allocation2 + $0x38] sm:$0xff] %vm860, %v827
      %869 = vst.msk [vmem:[#allocation2 + $0x40] sm:$0xff] %vm860, %v829
      %870 = vst.msk [vmem:[#allocation2 + $0x48] sm:$0xff] %vm860, %v831
      %871 = vst.msk [vmem:[#allocation2 + $0x50] sm:$0xff] %vm860, %v833
      %872 = vst.msk [vmem:[#allocation2 + $0x58] sm:$0xff] %vm860, %v835
      %873 = vst.msk [vmem:[#allocation2 + $0x60] sm:$0xff] %vm860, %v837
      %874 = vst.msk [vmem:[#allocation2 + $0x68] sm:$0xff] %vm860, %v839
      %875 = vst.msk [vmem:[#allocation2 + $0x70] sm:$0xff] %vm860, %v841
      %876 = vst.msk [vmem:[#allocation2 + $0x78] sm:$0xff] %vm860, %v843
      %v877 = vld [vmem:[%s172] sm:$0xe]
      %v878 = vld [vmem:[%s172 + $0x4] sm:$0xf]
      %v879 = vld [vmem:[%s172 + $0x8] sm:$0x1]
      %v880 = vld [vmem:[%s172 + $0xc] sm:$0xe]
      %v881 = vld [vmem:[%s172 + $0x10] sm:$0xf]
      %v882 = vld [vmem:[%s172 + $0x14] sm:$0x1]
      %v883 = vld [vmem:[%s172 + $0x18] sm:$0xe]
      %v884 = vld [vmem:[%s172 + $0x1c] sm:$0xf]
      %v885 = vld [vmem:[%s172 + $0x20] sm:$0x1]
      %v886 = vld [vmem:[%s172 + $0x24] sm:$0xe]
      %v887 = vld [vmem:[%s172 + $0x28] sm:$0xf]
      %v888 = vld [vmem:[%s172 + $0x2c] sm:$0x1]
      %v889 = vld [vmem:[%s172 + $0x30] sm:$0xe]
      %v890 = vld [vmem:[%s172 + $0x34] sm:$0xf]
      %v891 = vld [vmem:[%s172 + $0x38] sm:$0x1]
      %v892 = vld [vmem:[%s172 + $0x3c] sm:$0xe]
      %v893 = vld [vmem:[%s172 + $0x40] sm:$0xf]
      %v894 = vld [vmem:[%s172 + $0x44] sm:$0x1]
      %v895 = vld [vmem:[%s172 + $0x48] sm:$0xe]
      %v896 = vld [vmem:[%s172 + $0x4c] sm:$0xf]
      %v897 = vld [vmem:[%s172 + $0x50] sm:$0x1]
      %v898 = vld [vmem:[%s172 + $0x54] sm:$0xe]
      %v899 = vld [vmem:[%s172 + $0x58] sm:$0xf]
      %v900 = vld [vmem:[%s172 + $0x5c] sm:$0x1]
      %v901 = vld [vmem:[%s172 + $0x60] sm:$0xe]
      %v902 = vld [vmem:[%s172 + $0x64] sm:$0xf]
      %v903 = vld [vmem:[%s172 + $0x68] sm:$0x1]
      %v904 = vld [vmem:[%s172 + $0x6c] sm:$0xe]
      %v905 = vld [vmem:[%s172 + $0x70] sm:$0xf]
      %v906 = vld [vmem:[%s172 + $0x74] sm:$0x1]
      %v907 = vld [vmem:[%s172 + $0x78] sm:$0xe]
      %v908 = vld [vmem:[%s172 + $0x7c] sm:$0xf]
      %v909 = vld [vmem:[%s172 + $0x80] sm:$0x1]
      %v910 = vld [vmem:[%s172 + $0x84] sm:$0xe]
      %v911 = vld [vmem:[%s172 + $0x88] sm:$0xf]
      %v912 = vld [vmem:[%s172 + $0x8c] sm:$0x1]
      %v913 = vld [vmem:[%s172 + $0x90] sm:$0xe]
      %v914 = vld [vmem:[%s172 + $0x94] sm:$0xf]
      %v915 = vld [vmem:[%s172 + $0x98] sm:$0x1]
      %v916 = vld [vmem:[%s172 + $0x9c] sm:$0xe]
      %v917 = vld [vmem:[%s172 + $0xa0] sm:$0xf]
      %v918 = vld [vmem:[%s172 + $0xa4] sm:$0x1]
      %v919 = vld [vmem:[%s172 + $0xa8] sm:$0xe]
      %v920 = vld [vmem:[%s172 + $0xac] sm:$0xf]
      %v921 = vld [vmem:[%s172 + $0xb0] sm:$0x1]
      %v922 = vld [vmem:[%s172 + $0xb4] sm:$0xe]
      %v923 = vld [vmem:[%s172 + $0xb8] sm:$0xf]
      %v924 = vld [vmem:[%s172 + $0xbc] sm:$0x1]
      %vm973 = vcmask 1042432
      %vm974 = vcmask 1046532
      %vm975 = vmor %vm973, %vm974
      %v976 = vrot.slane %v877, 5
      %v977 = vrot.slane %v976, 4
      %v978 = vrot.slane %v878, 5
      %v979 = vsel %vm975, %v977, %v978
      %v980 = vrot.slane %v978, 4
      %v981 = vrot.slane %v879, 5
      %v982 = vsel %vm975, %v980, %v981
      %v983 = vrot.slane %v880, 5
      %v984 = vrot.slane %v983, 4
      %v985 = vrot.slane %v881, 5
      %v986 = vsel %vm975, %v984, %v985
      %v987 = vrot.slane %v985, 4
      %v988 = vrot.slane %v882, 5
      %v989 = vsel %vm975, %v987, %v988
      %v990 = vrot.slane %v883, 5
      %v991 = vrot.slane %v990, 4
      %v992 = vrot.slane %v884, 5
      %v993 = vsel %vm975, %v991, %v992
      %v994 = vrot.slane %v992, 4
      %v995 = vrot.slane %v885, 5
      %v996 = vsel %vm975, %v994, %v995
      %v997 = vrot.slane %v886, 5
      %v998 = vrot.slane %v997, 4
      %v999 = vrot.slane %v887, 5
      %v1000 = vsel %vm975, %v998, %v999
      %v1001 = vrot.slane %v999, 4
      %v1002 = vrot.slane %v888, 5
      %v1003 = vsel %vm975, %v1001, %v1002
      %v1004 = vrot.slane %v889, 5
      %v1005 = vrot.slane %v1004, 4
      %v1006 = vrot.slane %v890, 5
      %v1007 = vsel %vm975, %v1005, %v1006
      %v1008 = vrot.slane %v1006, 4
      %v1009 = vrot.slane %v891, 5
      %v1010 = vsel %vm975, %v1008, %v1009
      %v1011 = vrot.slane %v892, 5
      %v1012 = vrot.slane %v1011, 4
      %v1013 = vrot.slane %v893, 5
      %v1014 = vsel %vm975, %v1012, %v1013
      %v1015 = vrot.slane %v1013, 4
      %v1016 = vrot.slane %v894, 5
      %v1017 = vsel %vm975, %v1015, %v1016
      %v1018 = vrot.slane %v895, 5
      %v1019 = vrot.slane %v1018, 4
      %v1020 = vrot.slane %v896, 5
      %v1021 = vsel %vm975, %v1019, %v1020
      %v1022 = vrot.slane %v1020, 4
      %v1023 = vrot.slane %v897, 5
      %v1024 = vsel %vm975, %v1022, %v1023
      %v1025 = vrot.slane %v898, 5
      %v1026 = vrot.slane %v1025, 4
      %v1027 = vrot.slane %v899, 5
      %v1028 = vsel %vm975, %v1026, %v1027
      %v1029 = vrot.slane %v1027, 4
      %v1030 = vrot.slane %v900, 5
      %v1031 = vsel %vm975, %v1029, %v1030
      %v1032 = vrot.slane %v901, 5
      %v1033 = vrot.slane %v1032, 4
      %v1034 = vrot.slane %v902, 5
      %v1035 = vsel %vm975, %v1033, %v1034
      %v1036 = vrot.slane %v1034, 4
      %v1037 = vrot.slane %v903, 5
      %v1038 = vsel %vm975, %v1036, %v1037
      %v1039 = vrot.slane %v904, 5
      %v1040 = vrot.slane %v1039, 4
      %v1041 = vrot.slane %v905, 5
      %v1042 = vsel %vm975, %v1040, %v1041
      %v1043 = vrot.slane %v1041, 4
      %v1044 = vrot.slane %v906, 5
      %v1045 = vsel %vm975, %v1043, %v1044
      %v1046 = vrot.slane %v907, 5
      %v1047 = vrot.slane %v1046, 4
      %v1048 = vrot.slane %v908, 5
      %v1049 = vsel %vm975, %v1047, %v1048
      %v1050 = vrot.slane %v1048, 4
      %v1051 = vrot.slane %v909, 5
      %v1052 = vsel %vm975, %v1050, %v1051
      %v1053 = vrot.slane %v910, 5
      %v1054 = vrot.slane %v1053, 4
      %v1055 = vrot.slane %v911, 5
      %v1056 = vsel %vm975, %v1054, %v1055
      %v1057 = vrot.slane %v1055, 4
      %v1058 = vrot.slane %v912, 5
      %v1059 = vsel %vm975, %v1057, %v1058
      %v1060 = vrot.slane %v913, 5
      %v1061 = vrot.slane %v1060, 4
      %v1062 = vrot.slane %v914, 5
      %v1063 = vsel %vm975, %v1061, %v1062
      %v1064 = vrot.slane %v1062, 4
      %v1065 = vrot.slane %v915, 5
      %v1066 = vsel %vm975, %v1064, %v1065
      %v1067 = vrot.slane %v916, 5
      %v1068 = vrot.slane %v1067, 4
      %v1069 = vrot.slane %v917, 5
      %v1070 = vsel %vm975, %v1068, %v1069
      %v1071 = vrot.slane %v1069, 4
      %v1072 = vrot.slane %v918, 5
      %v1073 = vsel %vm975, %v1071, %v1072
      %v1074 = vrot.slane %v919, 5
      %v1075 = vrot.slane %v1074, 4
      %v1076 = vrot.slane %v920, 5
      %v1077 = vsel %vm975, %v1075, %v1076
      %v1078 = vrot.slane %v1076, 4
      %v1079 = vrot.slane %v921, 5
      %v1080 = vsel %vm975, %v1078, %v1079
      %v1081 = vrot.slane %v922, 5
      %v1082 = vrot.slane %v1081, 4
      %v1083 = vrot.slane %v923, 5
      %v1084 = vsel %vm975, %v1082, %v1083
      %v1085 = vrot.slane %v1083, 4
      %v1086 = vrot.slane %v924, 5
      %v1087 = vsel %vm975, %v1085, %v1086
      %v1088 = vunpack.c.l.b16 %v979
      %v1089 = vunpack.c.l.b16 %v982
      %v1090 = vunpack.c.l.b16 %v986
      %v1091 = vunpack.c.l.b16 %v989
      %v1092 = vunpack.c.l.b16 %v993
      %v1093 = vunpack.c.l.b16 %v996
      %v1094 = vunpack.c.l.b16 %v1000
      %v1095 = vunpack.c.l.b16 %v1003
      %v1096 = vunpack.c.l.b16 %v1007
      %v1097 = vunpack.c.l.b16 %v1010
      %v1098 = vunpack.c.l.b16 %v1014
      %v1099 = vunpack.c.l.b16 %v1017
      %v1100 = vunpack.c.l.b16 %v1021
      %v1101 = vunpack.c.l.b16 %v1024
      %v1102 = vunpack.c.l.b16 %v1028
      %v1103 = vunpack.c.l.b16 %v1031
      %v1104 = vunpack.c.l.b16 %v1035
      %v1105 = vunpack.c.l.b16 %v1038
      %v1106 = vunpack.c.l.b16 %v1042
      %v1107 = vunpack.c.l.b16 %v1045
      %v1108 = vunpack.c.l.b16 %v1049
      %v1109 = vunpack.c.l.b16 %v1052
      %v1110 = vunpack.c.l.b16 %v1056
      %v1111 = vunpack.c.l.b16 %v1059
      %v1112 = vunpack.c.l.b16 %v1063
      %v1113 = vunpack.c.l.b16 %v1066
      %v1114 = vunpack.c.l.b16 %v1070
      %v1115 = vunpack.c.l.b16 %v1073
      %v1116 = vunpack.c.l.b16 %v1077
      %v1117 = vunpack.c.l.b16 %v1080
      %v1118 = vunpack.c.l.b16 %v1084
      %v1119 = vunpack.c.l.b16 %v1087
      %v1120 = vpack.c.b16 %v1089, %v1088
      %v1121 = vpack.c.b16 %v1091, %v1090
      %v1122 = vpack.c.b16 %v1093, %v1092
      %v1123 = vpack.c.b16 %v1095, %v1094
      %v1124 = vpack.c.b16 %v1097, %v1096
      %v1125 = vpack.c.b16 %v1099, %v1098
      %v1126 = vpack.c.b16 %v1101, %v1100
      %v1127 = vpack.c.b16 %v1103, %v1102
      %v1128 = vpack.c.b16 %v1105, %v1104
      %v1129 = vpack.c.b16 %v1107, %v1106
      %v1130 = vpack.c.b16 %v1109, %v1108
      %v1131 = vpack.c.b16 %v1111, %v1110
      %v1132 = vpack.c.b16 %v1113, %v1112
      %v1133 = vpack.c.b16 %v1115, %v1114
      %v1134 = vpack.c.b16 %v1117, %v1116
      %v1135 = vpack.c.b16 %v1119, %v1118
      %1136 = vrot.lane.b32.xlu0 %v1120, 8
      %v1137 = vpop.permute.xlu0 %1136
      %1138 = vrot.lane.b32.xlu0 %v1121, 8
      %v1139 = vpop.permute.xlu0 %1138
      %1140 = vrot.lane.b32.xlu0 %v1122, 8
      %v1141 = vpop.permute.xlu0 %1140
      %1142 = vrot.lane.b32.xlu0 %v1123, 8
      %v1143 = vpop.permute.xlu0 %1142
      %1144 = vrot.lane.b32.xlu0 %v1124, 8
      %v1145 = vpop.permute.xlu0 %1144
      %1146 = vrot.lane.b32.xlu0 %v1125, 8
      %v1147 = vpop.permute.xlu0 %1146
      %1148 = vrot.lane.b32.xlu0 %v1126, 8
      %v1149 = vpop.permute.xlu0 %1148
      %1150 = vrot.lane.b32.xlu0 %v1127, 8
      %v1151 = vpop.permute.xlu0 %1150
      %1152 = vrot.lane.b32.xlu0 %v1128, 8
      %v1153 = vpop.permute.xlu0 %1152
      %1154 = vrot.lane.b32.xlu0 %v1129, 8
      %v1155 = vpop.permute.xlu0 %1154
      %1156 = vrot.lane.b32.xlu0 %v1130, 8
      %v1157 = vpop.permute.xlu0 %1156
      %1158 = vrot.lane.b32.xlu0 %v1131, 8
      %v1159 = vpop.permute.xlu0 %1158
      %1160 = vrot.lane.b32.xlu0 %v1132, 8
      %v1161 = vpop.permute.xlu0 %1160
      %1162 = vrot.lane.b32.xlu0 %v1133, 8
      %v1163 = vpop.permute.xlu0 %1162
      %1164 = vrot.lane.b32.xlu0 %v1134, 8
      %v1165 = vpop.permute.xlu0 %1164
      %1166 = vrot.lane.b32.xlu0 %v1135, 8
      %v1167 = vpop.permute.xlu0 %1166
      %vm1184 = vcmask 97344
      %1185 = vst.msk [vmem:[#allocation2] sm:$0xff] %vm1184, %v1137
      %1186 = vst.msk [vmem:[#allocation2 + $0x8] sm:$0xff] %vm1184, %v1139
      %1187 = vst.msk [vmem:[#allocation2 + $0x10] sm:$0xff] %vm1184, %v1141
      %1188 = vst.msk [vmem:[#allocation2 + $0x18] sm:$0xff] %vm1184, %v1143
      %1189 = vst.msk [vmem:[#allocation2 + $0x20] sm:$0xff] %vm1184, %v1145
      %1190 = vst.msk [vmem:[#allocation2 + $0x28] sm:$0xff] %vm1184, %v1147
      %1191 = vst.msk [vmem:[#allocation2 + $0x30] sm:$0xff] %vm1184, %v1149
      %1192 = vst.msk [vmem:[#allocation2 + $0x38] sm:$0xff] %vm1184, %v1151
      %1193 = vst.msk [vmem:[#allocation2 + $0x40] sm:$0xff] %vm1184, %v1153
      %1194 = vst.msk [vmem:[#allocation2 + $0x48] sm:$0xff] %vm1184, %v1155
      %1195 = vst.msk [vmem:[#allocation2 + $0x50] sm:$0xff] %vm1184, %v1157
      %1196 = vst.msk [vmem:[#allocation2 + $0x58] sm:$0xff] %vm1184, %v1159
      %1197 = vst.msk [vmem:[#allocation2 + $0x60] sm:$0xff] %vm1184, %v1161
      %1198 = vst.msk [vmem:[#allocation2 + $0x68] sm:$0xff] %vm1184, %v1163
      %1199 = vst.msk [vmem:[#allocation2 + $0x70] sm:$0xff] %vm1184, %v1165
      %1200 = vst.msk [vmem:[#allocation2 + $0x78] sm:$0xff] %vm1184, %v1167
      %s1201 = scalar_lea.vmem %s172, 12
      %v1202 = vld [vmem:[%s1201] sm:$0xf]
      %v1203 = vld [vmem:[%s1201 + $0x4] sm:$0xf]
      %v1204 = vld [vmem:[%s1201 + $0xc] sm:$0xf]
      %v1205 = vld [vmem:[%s1201 + $0x10] sm:$0xf]
      %v1206 = vld [vmem:[%s1201 + $0x18] sm:$0xf]
      %v1207 = vld [vmem:[%s1201 + $0x1c] sm:$0xf]
      %v1208 = vld [vmem:[%s1201 + $0x24] sm:$0xf]
      %v1209 = vld [vmem:[%s1201 + $0x28] sm:$0xf]
      %v1210 = vld [vmem:[%s1201 + $0x30] sm:$0xf]
      %v1211 = vld [vmem:[%s1201 + $0x34] sm:$0xf]
      %v1212 = vld [vmem:[%s1201 + $0x3c] sm:$0xf]
      %v1213 = vld [vmem:[%s1201 + $0x40] sm:$0xf]
      %v1214 = vld [vmem:[%s1201 + $0x48] sm:$0xf]
      %v1215 = vld [vmem:[%s1201 + $0x4c] sm:$0xf]
      %v1216 = vld [vmem:[%s1201 + $0x54] sm:$0xf]
      %v1217 = vld [vmem:[%s1201 + $0x58] sm:$0xf]
      %v1218 = vld [vmem:[%s1201 + $0x60] sm:$0xf]
      %v1219 = vld [vmem:[%s1201 + $0x64] sm:$0xf]
      %v1220 = vld [vmem:[%s1201 + $0x6c] sm:$0xf]
      %v1221 = vld [vmem:[%s1201 + $0x70] sm:$0xf]
      %v1222 = vld [vmem:[%s1201 + $0x78] sm:$0xf]
      %v1223 = vld [vmem:[%s1201 + $0x7c] sm:$0xf]
      %v1224 = vld [vmem:[%s1201 + $0x84] sm:$0xf]
      %v1225 = vld [vmem:[%s1201 + $0x88] sm:$0xf]
      %v1226 = vld [vmem:[%s1201 + $0x90] sm:$0xf]
      %v1227 = vld [vmem:[%s1201 + $0x94] sm:$0xf]
      %v1228 = vld [vmem:[%s1201 + $0x9c] sm:$0xf]
      %v1229 = vld [vmem:[%s1201 + $0xa0] sm:$0xf]
      %v1230 = vld [vmem:[%s1201 + $0xa8] sm:$0xf]
      %v1231 = vld [vmem:[%s1201 + $0xac] sm:$0xf]
      %v1232 = vld [vmem:[%s1201 + $0xb4] sm:$0xf]
      %v1233 = vld [vmem:[%s1201 + $0xb8] sm:$0xf]
      %v1266 = vunpack.c.l.b16 %v1202
      %v1267 = vunpack.c.l.b16 %v1203
      %v1268 = vunpack.c.l.b16 %v1204
      %v1269 = vunpack.c.l.b16 %v1205
      %v1270 = vunpack.c.l.b16 %v1206
      %v1271 = vunpack.c.l.b16 %v1207
      %v1272 = vunpack.c.l.b16 %v1208
      %v1273 = vunpack.c.l.b16 %v1209
      %v1274 = vunpack.c.l.b16 %v1210
      %v1275 = vunpack.c.l.b16 %v1211
      %v1276 = vunpack.c.l.b16 %v1212
      %v1277 = vunpack.c.l.b16 %v1213
      %v1278 = vunpack.c.l.b16 %v1214
      %v1279 = vunpack.c.l.b16 %v1215
      %v1280 = vunpack.c.l.b16 %v1216
      %v1281 = vunpack.c.l.b16 %v1217
      %v1282 = vunpack.c.l.b16 %v1218
      %v1283 = vunpack.c.l.b16 %v1219
      %v1284 = vunpack.c.l.b16 %v1220
      %v1285 = vunpack.c.l.b16 %v1221
      %v1286 = vunpack.c.l.b16 %v1222
      %v1287 = vunpack.c.l.b16 %v1223
      %v1288 = vunpack.c.l.b16 %v1224
      %v1289 = vunpack.c.l.b16 %v1225
      %v1290 = vunpack.c.l.b16 %v1226
      %v1291 = vunpack.c.l.b16 %v1227
      %v1292 = vunpack.c.l.b16 %v1228
      %v1293 = vunpack.c.l.b16 %v1229
      %v1294 = vunpack.c.l.b16 %v1230
      %v1295 = vunpack.c.l.b16 %v1231
      %v1296 = vunpack.c.l.b16 %v1232
      %v1297 = vunpack.c.l.b16 %v1233
      %v1298 = vpack.c.b16 %v1267, %v1266
      %v1299 = vpack.c.b16 %v1269, %v1268
      %v1300 = vpack.c.b16 %v1271, %v1270
      %v1301 = vpack.c.b16 %v1273, %v1272
      %v1302 = vpack.c.b16 %v1275, %v1274
      %v1303 = vpack.c.b16 %v1277, %v1276
      %v1304 = vpack.c.b16 %v1279, %v1278
      %v1305 = vpack.c.b16 %v1281, %v1280
      %v1306 = vpack.c.b16 %v1283, %v1282
      %v1307 = vpack.c.b16 %v1285, %v1284
      %v1308 = vpack.c.b16 %v1287, %v1286
      %v1309 = vpack.c.b16 %v1289, %v1288
      %v1310 = vpack.c.b16 %v1291, %v1290
      %v1311 = vpack.c.b16 %v1293, %v1292
      %v1312 = vpack.c.b16 %v1295, %v1294
      %v1313 = vpack.c.b16 %v1297, %v1296
      %1314 = vrot.lane.b32.xlu0 %v1298, 12
      %v1315 = vpop.permute.xlu0 %1314
      %1316 = vrot.lane.b32.xlu0 %v1299, 12
      %v1317 = vpop.permute.xlu0 %1316
      %1318 = vrot.lane.b32.xlu0 %v1300, 12
      %v1319 = vpop.permute.xlu0 %1318
      %1320 = vrot.lane.b32.xlu0 %v1301, 12
      %v1321 = vpop.permute.xlu0 %1320
      %1322 = vrot.lane.b32.xlu0 %v1302, 12
      %v1323 = vpop.permute.xlu0 %1322
      %1324 = vrot.lane.b32.xlu0 %v1303, 12
      %v1325 = vpop.permute.xlu0 %1324
      %1326 = vrot.lane.b32.xlu0 %v1304, 12
      %v1327 = vpop.permute.xlu0 %1326
      %1328 = vrot.lane.b32.xlu0 %v1305, 12
      %v1329 = vpop.permute.xlu0 %1328
      %1330 = vrot.lane.b32.xlu0 %v1306, 12
      %v1331 = vpop.permute.xlu0 %1330
      %1332 = vrot.lane.b32.xlu0 %v1307, 12
      %v1333 = vpop.permute.xlu0 %1332
      %1334 = vrot.lane.b32.xlu0 %v1308, 12
      %v1335 = vpop.permute.xlu0 %1334
      %1336 = vrot.lane.b32.xlu0 %v1309, 12
      %v1337 = vpop.permute.xlu0 %1336
      %1338 = vrot.lane.b32.xlu0 %v1310, 12
      %v1339 = vpop.permute.xlu0 %1338
      %1340 = vrot.lane.b32.xlu0 %v1311, 12
      %v1341 = vpop.permute.xlu0 %1340
      %1342 = vrot.lane.b32.xlu0 %v1312, 12
      %v1343 = vpop.permute.xlu0 %1342
      %1344 = vrot.lane.b32.xlu0 %v1313, 12
      %v1345 = vpop.permute.xlu0 %1344
      %vm1362 = vcmask 130144
      %1363 = vst.msk [vmem:[#allocation2] sm:$0xff] %vm1362, %v1315
      %1364 = vst.msk [vmem:[#allocation2 + $0x8] sm:$0xff] %vm1362, %v1317
      %1365 = vst.msk [vmem:[#allocation2 + $0x10] sm:$0xff] %vm1362, %v1319
      %1366 = vst.msk [vmem:[#allocation2 + $0x18] sm:$0xff] %vm1362, %v1321
      %1367 = vst.msk [vmem:[#allocation2 + $0x20] sm:$0xff] %vm1362, %v1323
      %1368 = vst.msk [vmem:[#allocation2 + $0x28] sm:$0xff] %vm1362, %v1325
      %1369 = vst.msk [vmem:[#allocation2 + $0x30] sm:$0xff] %vm1362, %v1327
      %1370 = vst.msk [vmem:[#allocation2 + $0x38] sm:$0xff] %vm1362, %v1329
      %1371 = vst.msk [vmem:[#allocation2 + $0x40] sm:$0xff] %vm1362, %v1331
      %1372 = vst.msk [vmem:[#allocation2 + $0x48] sm:$0xff] %vm1362, %v1333
      %1373 = vst.msk [vmem:[#allocation2 + $0x50] sm:$0xff] %vm1362, %v1335
      %1374 = vst.msk [vmem:[#allocation2 + $0x58] sm:$0xff] %vm1362, %v1337
      %1375 = vst.msk [vmem:[#allocation2 + $0x60] sm:$0xff] %vm1362, %v1339
      %1376 = vst.msk [vmem:[#allocation2 + $0x68] sm:$0xff] %vm1362, %v1341
      %1377 = vst.msk [vmem:[#allocation2 + $0x70] sm:$0xff] %vm1362, %v1343
      %1378 = vst.msk [vmem:[#allocation2 + $0x78] sm:$0xff] %vm1362, %v1345
      %v1379 = vld [vmem:[%s1201] sm:$0xf]
      %v1380 = vld [vmem:[%s1201 + $0x4] sm:$0xf]
      %v1381 = vld [vmem:[%s1201 + $0x8] sm:$0x1]
      %v1382 = vld [vmem:[%s1201 + $0xc] sm:$0xf]
      %v1383 = vld [vmem:[%s1201 + $0x10] sm:$0xf]
      %v1384 = vld [vmem:[%s1201 + $0x14] sm:$0x1]
      %v1385 = vld [vmem:[%s1201 + $0x18] sm:$0xf]
      %v1386 = vld [vmem:[%s1201 + $0x1c] sm:$0xf]
      %v1387 = vld [vmem:[%s1201 + $0x20] sm:$0x1]
      %v1388 = vld [vmem:[%s1201 + $0x24] sm:$0xf]
      %v1389 = vld [vmem:[%s1201 + $0x28] sm:$0xf]
      %v1390 = vld [vmem:[%s1201 + $0x2c] sm:$0x1]
      %v1391 = vld [vmem:[%s1201 + $0x30] sm:$0xf]
      %v1392 = vld [vmem:[%s1201 + $0x34] sm:$0xf]
      %v1393 = vld [vmem:[%s1201 + $0x38] sm:$0x1]
      %v1394 = vld [vmem:[%s1201 + $0x3c] sm:$0xf]
      %v1395 = vld [vmem:[%s1201 + $0x40] sm:$0xf]
      %v1396 = vld [vmem:[%s1201 + $0x44] sm:$0x1]
      %v1397 = vld [vmem:[%s1201 + $0x48] sm:$0xf]
      %v1398 = vld [vmem:[%s1201 + $0x4c] sm:$0xf]
      %v1399 = vld [vmem:[%s1201 + $0x50] sm:$0x1]
      %v1400 = vld [vmem:[%s1201 + $0x54] sm:$0xf]
      %v1401 = vld [vmem:[%s1201 + $0x58] sm:$0xf]
      %v1402 = vld [vmem:[%s1201 + $0x5c] sm:$0x1]
      %v1403 = vld [vmem:[%s1201 + $0x60] sm:$0xf]
      %v1404 = vld [vmem:[%s1201 + $0x64] sm:$0xf]
      %v1405 = vld [vmem:[%s1201 + $0x68] sm:$0x1]
      %v1406 = vld [vmem:[%s1201 + $0x6c] sm:$0xf]
      %v1407 = vld [vmem:[%s1201 + $0x70] sm:$0xf]
      %v1408 = vld [vmem:[%s1201 + $0x74] sm:$0x1]
      %v1409 = vld [vmem:[%s1201 + $0x78] sm:$0xf]
      %v1410 = vld [vmem:[%s1201 + $0x7c] sm:$0xf]
      %v1411 = vld [vmem:[%s1201 + $0x80] sm:$0x1]
      %v1412 = vld [vmem:[%s1201 + $0x84] sm:$0xf]
      %v1413 = vld [vmem:[%s1201 + $0x88] sm:$0xf]
      %v1414 = vld [vmem:[%s1201 + $0x8c] sm:$0x1]
      %v1415 = vld [vmem:[%s1201 + $0x90] sm:$0xf]
      %v1416 = vld [vmem:[%s1201 + $0x94] sm:$0xf]
      %v1417 = vld [vmem:[%s1201 + $0x98] sm:$0x1]
      %v1418 = vld [vmem:[%s1201 + $0x9c] sm:$0xf]
      %v1419 = vld [vmem:[%s1201 + $0xa0] sm:$0xf]
      %v1420 = vld [vmem:[%s1201 + $0xa4] sm:$0x1]
      %v1421 = vld [vmem:[%s1201 + $0xa8] sm:$0xf]
      %v1422 = vld [vmem:[%s1201 + $0xac] sm:$0xf]
      %v1423 = vld [vmem:[%s1201 + $0xb0] sm:$0x1]
      %v1424 = vld [vmem:[%s1201 + $0xb4] sm:$0xf]
      %v1425 = vld [vmem:[%s1201 + $0xb8] sm:$0xf]
      %v1426 = vld [vmem:[%s1201 + $0xbc] sm:$0x1]
      %v1428 = vshrl.u32 %v1379, 16
      %v1430 = vrot.slane %v1428, 4
      %v1431 = vshll.u32 %v1379, 16
      %v1433 = vrot.slane %v1431, 5
      %v1434 = vor.u32 %v1430, %v1433
      %v1435 = vrot.slane %v1434, 4
      %v1437 = vshll.u32 %v1380, 16
      %v1439 = vrot.slane %v1437, 5
      %v1440 = vsel %vm379, %v1435, %v1439
      %v1441 = vshrl.u32 %v1380, 16
      %v1443 = vrot.slane %v1441, 4
      %v1444 = vor.u32 %v1443, %v1439
      %v1445 = vrot.slane %v1444, 4
      %v1447 = vshll.u32 %v1381, 16
      %v1449 = vrot.slane %v1447, 5
      %v1450 = vsel %vm379, %v1445, %v1449
      %v1452 = vshrl.u32 %v1382, 16
      %v1454 = vrot.slane %v1452, 4
      %v1455 = vshll.u32 %v1382, 16
      %v1457 = vrot.slane %v1455, 5
      %v1458 = vor.u32 %v1454, %v1457
      %v1459 = vrot.slane %v1458, 4
      %v1461 = vshll.u32 %v1383, 16
      %v1463 = vrot.slane %v1461, 5
      %v1464 = vsel %vm379, %v1459, %v1463
      %v1465 = vshrl.u32 %v1383, 16
      %v1467 = vrot.slane %v1465, 4
      %v1468 = vor.u32 %v1467, %v1463
      %v1469 = vrot.slane %v1468, 4
      %v1471 = vshll.u32 %v1384, 16
      %v1473 = vrot.slane %v1471, 5
      %v1474 = vsel %vm379, %v1469, %v1473
      %v1476 = vshrl.u32 %v1385, 16
      %v1478 = vrot.slane %v1476, 4
      %v1479 = vshll.u32 %v1385, 16
      %v1481 = vrot.slane %v1479, 5
      %v1482 = vor.u32 %v1478, %v1481
      %v1483 = vrot.slane %v1482, 4
      %v1485 = vshll.u32 %v1386, 16
      %v1487 = vrot.slane %v1485, 5
      %v1488 = vsel %vm379, %v1483, %v1487
      %v1489 = vshrl.u32 %v1386, 16
      %v1491 = vrot.slane %v1489, 4
      %v1492 = vor.u32 %v1491, %v1487
      %v1493 = vrot.slane %v1492, 4
      %v1495 = vshll.u32 %v1387, 16
      %v1497 = vrot.slane %v1495, 5
      %v1498 = vsel %vm379, %v1493, %v1497
      %v1500 = vshrl.u32 %v1388, 16
      %v1502 = vrot.slane %v1500, 4
      %v1503 = vshll.u32 %v1388, 16
      %v1505 = vrot.slane %v1503, 5
      %v1506 = vor.u32 %v1502, %v1505
      %v1507 = vrot.slane %v1506, 4
      %v1509 = vshll.u32 %v1389, 16
      %v1511 = vrot.slane %v1509, 5
      %v1512 = vsel %vm379, %v1507, %v1511
      %v1513 = vshrl.u32 %v1389, 16
      %v1515 = vrot.slane %v1513, 4
      %v1516 = vor.u32 %v1515, %v1511
      %v1517 = vrot.slane %v1516, 4
      %v1519 = vshll.u32 %v1390, 16
      %v1521 = vrot.slane %v1519, 5
      %v1522 = vsel %vm379, %v1517, %v1521
      %v1524 = vshrl.u32 %v1391, 16
      %v1526 = vrot.slane %v1524, 4
      %v1527 = vshll.u32 %v1391, 16
      %v1529 = vrot.slane %v1527, 5
      %v1530 = vor.u32 %v1526, %v1529
      %v1531 = vrot.slane %v1530, 4
      %v1533 = vshll.u32 %v1392, 16
      %v1535 = vrot.slane %v1533, 5
      %v1536 = vsel %vm379, %v1531, %v1535
      %v1537 = vshrl.u32 %v1392, 16
      %v1539 = vrot.slane %v1537, 4
      %v1540 = vor.u32 %v1539, %v1535
      %v1541 = vrot.slane %v1540, 4
      %v1543 = vshll.u32 %v1393, 16
      %v1545 = vrot.slane %v1543, 5
      %v1546 = vsel %vm379, %v1541, %v1545
      %v1548 = vshrl.u32 %v1394, 16
      %v1550 = vrot.slane %v1548, 4
      %v1551 = vshll.u32 %v1394, 16
      %v1553 = vrot.slane %v1551, 5
      %v1554 = vor.u32 %v1550, %v1553
      %v1555 = vrot.slane %v1554, 4
      %v1557 = vshll.u32 %v1395, 16
      %v1559 = vrot.slane %v1557, 5
      %v1560 = vsel %vm379, %v1555, %v1559
      %v1561 = vshrl.u32 %v1395, 16
      %v1563 = vrot.slane %v1561, 4
      %v1564 = vor.u32 %v1563, %v1559
      %v1565 = vrot.slane %v1564, 4
      %v1567 = vshll.u32 %v1396, 16
      %v1569 = vrot.slane %v1567, 5
      %v1570 = vsel %vm379, %v1565, %v1569
      %v1572 = vshrl.u32 %v1397, 16
      %v1574 = vrot.slane %v1572, 4
      %v1575 = vshll.u32 %v1397, 16
      %v1577 = vrot.slane %v1575, 5
      %v1578 = vor.u32 %v1574, %v1577
      %v1579 = vrot.slane %v1578, 4
      %v1581 = vshll.u32 %v1398, 16
      %v1583 = vrot.slane %v1581, 5
      %v1584 = vsel %vm379, %v1579, %v1583
      %v1585 = vshrl.u32 %v1398, 16
      %v1587 = vrot.slane %v1585, 4
      %v1588 = vor.u32 %v1587, %v1583
      %v1589 = vrot.slane %v1588, 4
      %v1591 = vshll.u32 %v1399, 16
      %v1593 = vrot.slane %v1591, 5
      %v1594 = vsel %vm379, %v1589, %v1593
      %v1596 = vshrl.u32 %v1400, 16
      %v1598 = vrot.slane %v1596, 4
      %v1599 = vshll.u32 %v1400, 16
      %v1601 = vrot.slane %v1599, 5
      %v1602 = vor.u32 %v1598, %v1601
      %v1603 = vrot.slane %v1602, 4
      %v1605 = vshll.u32 %v1401, 16
      %v1607 = vrot.slane %v1605, 5
      %v1608 = vsel %vm379, %v1603, %v1607
      %v1609 = vshrl.u32 %v1401, 16
      %v1611 = vrot.slane %v1609, 4
      %v1612 = vor.u32 %v1611, %v1607
      %v1613 = vrot.slane %v1612, 4
      %v1615 = vshll.u32 %v1402, 16
      %v1617 = vrot.slane %v1615, 5
      %v1618 = vsel %vm379, %v1613, %v1617
      %v1620 = vshrl.u32 %v1403, 16
      %v1622 = vrot.slane %v1620, 4
      %v1623 = vshll.u32 %v1403, 16
      %v1625 = vrot.slane %v1623, 5
      %v1626 = vor.u32 %v1622, %v1625
      %v1627 = vrot.slane %v1626, 4
      %v1629 = vshll.u32 %v1404, 16
      %v1631 = vrot.slane %v1629, 5
      %v1632 = vsel %vm379, %v1627, %v1631
      %v1633 = vshrl.u32 %v1404, 16
      %v1635 = vrot.slane %v1633, 4
      %v1636 = vor.u32 %v1635, %v1631
      %v1637 = vrot.slane %v1636, 4
      %v1639 = vshll.u32 %v1405, 16
      %v1641 = vrot.slane %v1639, 5
      %v1642 = vsel %vm379, %v1637, %v1641
      %v1644 = vshrl.u32 %v1406, 16
      %v1646 = vrot.slane %v1644, 4
      %v1647 = vshll.u32 %v1406, 16
      %v1649 = vrot.slane %v1647, 5
      %v1650 = vor.u32 %v1646, %v1649
      %v1651 = vrot.slane %v1650, 4
      %v1653 = vshll.u32 %v1407, 16
      %v1655 = vrot.slane %v1653, 5
      %v1656 = vsel %vm379, %v1651, %v1655
      %v1657 = vshrl.u32 %v1407, 16
      %v1659 = vrot.slane %v1657, 4
      %v1660 = vor.u32 %v1659, %v1655
      %v1661 = vrot.slane %v1660, 4
      %v1663 = vshll.u32 %v1408, 16
      %v1665 = vrot.slane %v1663, 5
      %v1666 = vsel %vm379, %v1661, %v1665
      %v1668 = vshrl.u32 %v1409, 16
      %v1670 = vrot.slane %v1668, 4
      %v1671 = vshll.u32 %v1409, 16
      %v1673 = vrot.slane %v1671, 5
      %v1674 = vor.u32 %v1670, %v1673
      %v1675 = vrot.slane %v1674, 4
      %v1677 = vshll.u32 %v1410, 16
      %v1679 = vrot.slane %v1677, 5
      %v1680 = vsel %vm379, %v1675, %v1679
      %v1681 = vshrl.u32 %v1410, 16
      %v1683 = vrot.slane %v1681, 4
      %v1684 = vor.u32 %v1683, %v1679
      %v1685 = vrot.slane %v1684, 4
      %v1687 = vshll.u32 %v1411, 16
      %v1689 = vrot.slane %v1687, 5
      %v1690 = vsel %vm379, %v1685, %v1689
      %v1692 = vshrl.u32 %v1412, 16
      %v1694 = vrot.slane %v1692, 4
      %v1695 = vshll.u32 %v1412, 16
      %v1697 = vrot.slane %v1695, 5
      %v1698 = vor.u32 %v1694, %v1697
      %v1699 = vrot.slane %v1698, 4
      %v1701 = vshll.u32 %v1413, 16
      %v1703 = vrot.slane %v1701, 5
      %v1704 = vsel %vm379, %v1699, %v1703
      %v1705 = vshrl.u32 %v1413, 16
      %v1707 = vrot.slane %v1705, 4
      %v1708 = vor.u32 %v1707, %v1703
      %v1709 = vrot.slane %v1708, 4
      %v1711 = vshll.u32 %v1414, 16
      %v1713 = vrot.slane %v1711, 5
      %v1714 = vsel %vm379, %v1709, %v1713
      %v1716 = vshrl.u32 %v1415, 16
      %v1718 = vrot.slane %v1716, 4
      %v1719 = vshll.u32 %v1415, 16
      %v1721 = vrot.slane %v1719, 5
      %v1722 = vor.u32 %v1718, %v1721
      %v1723 = vrot.slane %v1722, 4
      %v1725 = vshll.u32 %v1416, 16
      %v1727 = vrot.slane %v1725, 5
      %v1728 = vsel %vm379, %v1723, %v1727
      %v1729 = vshrl.u32 %v1416, 16
      %v1731 = vrot.slane %v1729, 4
      %v1732 = vor.u32 %v1731, %v1727
      %v1733 = vrot.slane %v1732, 4
      %v1735 = vshll.u32 %v1417, 16
      %v1737 = vrot.slane %v1735, 5
      %v1738 = vsel %vm379, %v1733, %v1737
      %v1740 = vshrl.u32 %v1418, 16
      %v1742 = vrot.slane %v1740, 4
      %v1743 = vshll.u32 %v1418, 16
      %v1745 = vrot.slane %v1743, 5
      %v1746 = vor.u32 %v1742, %v1745
      %v1747 = vrot.slane %v1746, 4
      %v1749 = vshll.u32 %v1419, 16
      %v1751 = vrot.slane %v1749, 5
      %v1752 = vsel %vm379, %v1747, %v1751
      %v1753 = vshrl.u32 %v1419, 16
      %v1755 = vrot.slane %v1753, 4
      %v1756 = vor.u32 %v1755, %v1751
      %v1757 = vrot.slane %v1756, 4
      %v1759 = vshll.u32 %v1420, 16
      %v1761 = vrot.slane %v1759, 5
      %v1762 = vsel %vm379, %v1757, %v1761
      %v1764 = vshrl.u32 %v1421, 16
      %v1766 = vrot.slane %v1764, 4
      %v1767 = vshll.u32 %v1421, 16
      %v1769 = vrot.slane %v1767, 5
      %v1770 = vor.u32 %v1766, %v1769
      %v1771 = vrot.slane %v1770, 4
      %v1773 = vshll.u32 %v1422, 16
      %v1775 = vrot.slane %v1773, 5
      %v1776 = vsel %vm379, %v1771, %v1775
      %v1777 = vshrl.u32 %v1422, 16
      %v1779 = vrot.slane %v1777, 4
      %v1780 = vor.u32 %v1779, %v1775
      %v1781 = vrot.slane %v1780, 4
      %v1783 = vshll.u32 %v1423, 16
      %v1785 = vrot.slane %v1783, 5
      %v1786 = vsel %vm379, %v1781, %v1785
      %v1788 = vshrl.u32 %v1424, 16
      %v1790 = vrot.slane %v1788, 4
      %v1791 = vshll.u32 %v1424, 16
      %v1793 = vrot.slane %v1791, 5
      %v1794 = vor.u32 %v1790, %v1793
      %v1795 = vrot.slane %v1794, 4
      %v1797 = vshll.u32 %v1425, 16
      %v1799 = vrot.slane %v1797, 5
      %v1800 = vsel %vm379, %v1795, %v1799
      %v1801 = vshrl.u32 %v1425, 16
      %v1803 = vrot.slane %v1801, 4
      %v1804 = vor.u32 %v1803, %v1799
      %v1805 = vrot.slane %v1804, 4
      %v1807 = vshll.u32 %v1426, 16
      %v1809 = vrot.slane %v1807, 5
      %v1810 = vsel %vm379, %v1805, %v1809
      %v1811 = vunpack.c.l.b16 %v1440
      %v1812 = vunpack.c.l.b16 %v1450
      %v1813 = vunpack.c.l.b16 %v1464
      %v1814 = vunpack.c.l.b16 %v1474
      %v1815 = vunpack.c.l.b16 %v1488
      %v1816 = vunpack.c.l.b16 %v1498
      %v1817 = vunpack.c.l.b16 %v1512
      %v1818 = vunpack.c.l.b16 %v1522
      %v1819 = vunpack.c.l.b16 %v1536
      %v1820 = vunpack.c.l.b16 %v1546
      %v1821 = vunpack.c.l.b16 %v1560
      %v1822 = vunpack.c.l.b16 %v1570
      %v1823 = vunpack.c.l.b16 %v1584
      %v1824 = vunpack.c.l.b16 %v1594
      %v1825 = vunpack.c.l.b16 %v1608
      %v1826 = vunpack.c.l.b16 %v1618
      %v1827 = vunpack.c.l.b16 %v1632
      %v1828 = vunpack.c.l.b16 %v1642
      %v1829 = vunpack.c.l.b16 %v1656
      %v1830 = vunpack.c.l.b16 %v1666
      %v1831 = vunpack.c.l.b16 %v1680
      %v1832 = vunpack.c.l.b16 %v1690
      %v1833 = vunpack.c.l.b16 %v1704
      %v1834 = vunpack.c.l.b16 %v1714
      %v1835 = vunpack.c.l.b16 %v1728
      %v1836 = vunpack.c.l.b16 %v1738
      %v1837 = vunpack.c.l.b16 %v1752
      %v1838 = vunpack.c.l.b16 %v1762
      %v1839 = vunpack.c.l.b16 %v1776
      %v1840 = vunpack.c.l.b16 %v1786
      %v1841 = vunpack.c.l.b16 %v1800
      %v1842 = vunpack.c.l.b16 %v1810
      %v1843 = vpack.c.b16 %v1812, %v1811
      %v1844 = vpack.c.b16 %v1814, %v1813
      %v1845 = vpack.c.b16 %v1816, %v1815
      %v1846 = vpack.c.b16 %v1818, %v1817
      %v1847 = vpack.c.b16 %v1820, %v1819
      %v1848 = vpack.c.b16 %v1822, %v1821
      %v1849 = vpack.c.b16 %v1824, %v1823
      %v1850 = vpack.c.b16 %v1826, %v1825
      %v1851 = vpack.c.b16 %v1828, %v1827
      %v1852 = vpack.c.b16 %v1830, %v1829
      %v1853 = vpack.c.b16 %v1832, %v1831
      %v1854 = vpack.c.b16 %v1834, %v1833
      %v1855 = vpack.c.b16 %v1836, %v1835
      %v1856 = vpack.c.b16 %v1838, %v1837
      %v1857 = vpack.c.b16 %v1840, %v1839
      %v1858 = vpack.c.b16 %v1842, %v1841
      %1859 = vrot.lane.b32.xlu0 %v1843, 16
      %v1860 = vpop.permute.xlu0 %1859
      %1861 = vrot.lane.b32.xlu0 %v1844, 16
      %v1862 = vpop.permute.xlu0 %1861
      %1863 = vrot.lane.b32.xlu0 %v1845, 16
      %v1864 = vpop.permute.xlu0 %1863
      %1865 = vrot.lane.b32.xlu0 %v1846, 16
      %v1866 = vpop.permute.xlu0 %1865
      %1867 = vrot.lane.b32.xlu0 %v1847, 16
      %v1868 = vpop.permute.xlu0 %1867
      %1869 = vrot.lane.b32.xlu0 %v1848, 16
      %v1870 = vpop.permute.xlu0 %1869
      %1871 = vrot.lane.b32.xlu0 %v1849, 16
      %v1872 = vpop.permute.xlu0 %1871
      %1873 = vrot.lane.b32.xlu0 %v1850, 16
      %v1874 = vpop.permute.xlu0 %1873
      %1875 = vrot.lane.b32.xlu0 %v1851, 16
      %v1876 = vpop.permute.xlu0 %1875
      %1877 = vrot.lane.b32.xlu0 %v1852, 16
      %v1878 = vpop.permute.xlu0 %1877
      %1879 = vrot.lane.b32.xlu0 %v1853, 16
      %v1880 = vpop.permute.xlu0 %1879
      %1881 = vrot.lane.b32.xlu0 %v1854, 16
      %v1882 = vpop.permute.xlu0 %1881
      %1883 = vrot.lane.b32.xlu0 %v1855, 16
      %v1884 = vpop.permute.xlu0 %1883
      %1885 = vrot.lane.b32.xlu0 %v1856, 16
      %v1886 = vpop.permute.xlu0 %1885
      %1887 = vrot.lane.b32.xlu0 %v1857, 16
      %v1888 = vpop.permute.xlu0 %1887
      %1889 = vrot.lane.b32.xlu0 %v1858, 16
      %v1890 = vpop.permute.xlu0 %1889
      %vm1907 = vcmask 162944
      %1908 = vst.msk [vmem:[#allocation2] sm:$0xff] %vm1907, %v1860
      %1909 = vst.msk [vmem:[#allocation2 + $0x8] sm:$0xff] %vm1907, %v1862
      %1910 = vst.msk [vmem:[#allocation2 + $0x10] sm:$0xff] %vm1907, %v1864
      %1911 = vst.msk [vmem:[#allocation2 + $0x18] sm:$0xff] %vm1907, %v1866
      %1912 = vst.msk [vmem:[#allocation2 + $0x20] sm:$0xff] %vm1907, %v1868
      %1913 = vst.msk [vmem:[#allocation2 + $0x28] sm:$0xff] %vm1907, %v1870
      %1914 = vst.msk [vmem:[#allocation2 + $0x30] sm:$0xff] %vm1907, %v1872
      %1915 = vst.msk [vmem:[#allocation2 + $0x38] sm:$0xff] %vm1907, %v1874
      %1916 = vst.msk [vmem:[#allocation2 + $0x40] sm:$0xff] %vm1907, %v1876
      %1917 = vst.msk [vmem:[#allocation2 + $0x48] sm:$0xff] %vm1907, %v1878
      %1918 = vst.msk [vmem:[#allocation2 + $0x50] sm:$0xff] %vm1907, %v1880
      %1919 = vst.msk [vmem:[#allocation2 + $0x58] sm:$0xff] %vm1907, %v1882
      %1920 = vst.msk [vmem:[#allocation2 + $0x60] sm:$0xff] %vm1907, %v1884
      %1921 = vst.msk [vmem:[#allocation2 + $0x68] sm:$0xff] %vm1907, %v1886
      %1922 = vst.msk [vmem:[#allocation2 + $0x70] sm:$0xff] %vm1907, %v1888
      %1923 = vst.msk [vmem:[#allocation2 + $0x78] sm:$0xff] %vm1907, %v1890
      %v1924 = vld [vmem:[%s1201] sm:$0xe]
      %v1925 = vld [vmem:[%s1201 + $0x4] sm:$0xf]
      %v1926 = vld [vmem:[%s1201 + $0x8] sm:$0x1]
      %v1927 = vld [vmem:[%s1201 + $0xc] sm:$0xe]
      %v1928 = vld [vmem:[%s1201 + $0x10] sm:$0xf]
      %v1929 = vld [vmem:[%s1201 + $0x14] sm:$0x1]
      %v1930 = vld [vmem:[%s1201 + $0x18] sm:$0xe]
      %v1931 = vld [vmem:[%s1201 + $0x1c] sm:$0xf]
      %v1932 = vld [vmem:[%s1201 + $0x20] sm:$0x1]
      %v1933 = vld [vmem:[%s1201 + $0x24] sm:$0xe]
      %v1934 = vld [vmem:[%s1201 + $0x28] sm:$0xf]
      %v1935 = vld [vmem:[%s1201 + $0x2c] sm:$0x1]
      %v1936 = vld [vmem:[%s1201 + $0x30] sm:$0xe]
      %v1937 = vld [vmem:[%s1201 + $0x34] sm:$0xf]
      %v1938 = vld [vmem:[%s1201 + $0x38] sm:$0x1]
      %v1939 = vld [vmem:[%s1201 + $0x3c] sm:$0xe]
      %v1940 = vld [vmem:[%s1201 + $0x40] sm:$0xf]
      %v1941 = vld [vmem:[%s1201 + $0x44] sm:$0x1]
      %v1942 = vld [vmem:[%s1201 + $0x48] sm:$0xe]
      %v1943 = vld [vmem:[%s1201 + $0x4c] sm:$0xf]
      %v1944 = vld [vmem:[%s1201 + $0x50] sm:$0x1]
      %v1945 = vld [vmem:[%s1201 + $0x54] sm:$0xe]
      %v1946 = vld [vmem:[%s1201 + $0x58] sm:$0xf]
      %v1947 = vld [vmem:[%s1201 + $0x5c] sm:$0x1]
      %v1948 = vld [vmem:[%s1201 + $0x60] sm:$0xe]
      %v1949 = vld [vmem:[%s1201 + $0x64] sm:$0xf]
      %v1950 = vld [vmem:[%s1201 + $0x68] sm:$0x1]
      %v1951 = vld [vmem:[%s1201 + $0x6c] sm:$0xe]
      %v1952 = vld [vmem:[%s1201 + $0x70] sm:$0xf]
      %v1953 = vld [vmem:[%s1201 + $0x74] sm:$0x1]
      %v1954 = vld [vmem:[%s1201 + $0x78] sm:$0xe]
      %v1955 = vld [vmem:[%s1201 + $0x7c] sm:$0xf]
      %v1956 = vld [vmem:[%s1201 + $0x80] sm:$0x1]
      %v1957 = vld [vmem:[%s1201 + $0x84] sm:$0xe]
      %v1958 = vld [vmem:[%s1201 + $0x88] sm:$0xf]
      %v1959 = vld [vmem:[%s1201 + $0x8c] sm:$0x1]
      %v1960 = vld [vmem:[%s1201 + $0x90] sm:$0xe]
      %v1961 = vld [vmem:[%s1201 + $0x94] sm:$0xf]
      %v1962 = vld [vmem:[%s1201 + $0x98] sm:$0x1]
      %v1963 = vld [vmem:[%s1201 + $0x9c] sm:$0xe]
      %v1964 = vld [vmem:[%s1201 + $0xa0] sm:$0xf]
      %v1965 = vld [vmem:[%s1201 + $0xa4] sm:$0x1]
      %v1966 = vld [vmem:[%s1201 + $0xa8] sm:$0xe]
      %v1967 = vld [vmem:[%s1201 + $0xac] sm:$0xf]
      %v1968 = vld [vmem:[%s1201 + $0xb0] sm:$0x1]
      %v1969 = vld [vmem:[%s1201 + $0xb4] sm:$0xe]
      %v1970 = vld [vmem:[%s1201 + $0xb8] sm:$0xf]
      %v1971 = vld [vmem:[%s1201 + $0xbc] sm:$0x1]
      %v2020 = vrot.slane %v1924, 5
      %v2021 = vrot.slane %v2020, 4
      %v2022 = vrot.slane %v1925, 5
      %v2023 = vsel %vm975, %v2021, %v2022
      %v2024 = vrot.slane %v2022, 4
      %v2025 = vrot.slane %v1926, 5
      %v2026 = vsel %vm975, %v2024, %v2025
      %v2027 = vrot.slane %v1927, 5
      %v2028 = vrot.slane %v2027, 4
      %v2029 = vrot.slane %v1928, 5
      %v2030 = vsel %vm975, %v2028, %v2029
      %v2031 = vrot.slane %v2029, 4
      %v2032 = vrot.slane %v1929, 5
      %v2033 = vsel %vm975, %v2031, %v2032
      %v2034 = vrot.slane %v1930, 5
      %v2035 = vrot.slane %v2034, 4
      %v2036 = vrot.slane %v1931, 5
      %v2037 = vsel %vm975, %v2035, %v2036
      %v2038 = vrot.slane %v2036, 4
      %v2039 = vrot.slane %v1932, 5
      %v2040 = vsel %vm975, %v2038, %v2039
      %v2041 = vrot.slane %v1933, 5
      %v2042 = vrot.slane %v2041, 4
      %v2043 = vrot.slane %v1934, 5
      %v2044 = vsel %vm975, %v2042, %v2043
      %v2045 = vrot.slane %v2043, 4
      %v2046 = vrot.slane %v1935, 5
      %v2047 = vsel %vm975, %v2045, %v2046
      %v2048 = vrot.slane %v1936, 5
      %v2049 = vrot.slane %v2048, 4
      %v2050 = vrot.slane %v1937, 5
      %v2051 = vsel %vm975, %v2049, %v2050
      %v2052 = vrot.slane %v2050, 4
      %v2053 = vrot.slane %v1938, 5
      %v2054 = vsel %vm975, %v2052, %v2053
      %v2055 = vrot.slane %v1939, 5
      %v2056 = vrot.slane %v2055, 4
      %v2057 = vrot.slane %v1940, 5
      %v2058 = vsel %vm975, %v2056, %v2057
      %v2059 = vrot.slane %v2057, 4
      %v2060 = vrot.slane %v1941, 5
      %v2061 = vsel %vm975, %v2059, %v2060
      %v2062 = vrot.slane %v1942, 5
      %v2063 = vrot.slane %v2062, 4
      %v2064 = vrot.slane %v1943, 5
      %v2065 = vsel %vm975, %v2063, %v2064
      %v2066 = vrot.slane %v2064, 4
      %v2067 = vrot.slane %v1944, 5
      %v2068 = vsel %vm975, %v2066, %v2067
      %v2069 = vrot.slane %v1945, 5
      %v2070 = vrot.slane %v2069, 4
      %v2071 = vrot.slane %v1946, 5
      %v2072 = vsel %vm975, %v2070, %v2071
      %v2073 = vrot.slane %v2071, 4
      %v2074 = vrot.slane %v1947, 5
      %v2075 = vsel %vm975, %v2073, %v2074
      %v2076 = vrot.slane %v1948, 5
      %v2077 = vrot.slane %v2076, 4
      %v2078 = vrot.slane %v1949, 5
      %v2079 = vsel %vm975, %v2077, %v2078
      %v2080 = vrot.slane %v2078, 4
      %v2081 = vrot.slane %v1950, 5
      %v2082 = vsel %vm975, %v2080, %v2081
      %v2083 = vrot.slane %v1951, 5
      %v2084 = vrot.slane %v2083, 4
      %v2085 = vrot.slane %v1952, 5
      %v2086 = vsel %vm975, %v2084, %v2085
      %v2087 = vrot.slane %v2085, 4
      %v2088 = vrot.slane %v1953, 5
      %v2089 = vsel %vm975, %v2087, %v2088
      %v2090 = vrot.slane %v1954, 5
      %v2091 = vrot.slane %v2090, 4
      %v2092 = vrot.slane %v1955, 5
      %v2093 = vsel %vm975, %v2091, %v2092
      %v2094 = vrot.slane %v2092, 4
      %v2095 = vrot.slane %v1956, 5
      %v2096 = vsel %vm975, %v2094, %v2095
      %v2097 = vrot.slane %v1957, 5
      %v2098 = vrot.slane %v2097, 4
      %v2099 = vrot.slane %v1958, 5
      %v2100 = vsel %vm975, %v2098, %v2099
      %v2101 = vrot.slane %v2099, 4
      %v2102 = vrot.slane %v1959, 5
      %v2103 = vsel %vm975, %v2101, %v2102
      %v2104 = vrot.slane %v1960, 5
      %v2105 = vrot.slane %v2104, 4
      %v2106 = vrot.slane %v1961, 5
      %v2107 = vsel %vm975, %v2105, %v2106
      %v2108 = vrot.slane %v2106, 4
      %v2109 = vrot.slane %v1962, 5
      %v2110 = vsel %vm975, %v2108, %v2109
      %v2111 = vrot.slane %v1963, 5
      %v2112 = vrot.slane %v2111, 4
      %v2113 = vrot.slane %v1964, 5
      %v2114 = vsel %vm975, %v2112, %v2113
      %v2115 = vrot.slane %v2113, 4
      %v2116 = vrot.slane %v1965, 5
      %v2117 = vsel %vm975, %v2115, %v2116
      %v2118 = vrot.slane %v1966, 5
      %v2119 = vrot.slane %v2118, 4
      %v2120 = vrot.slane %v1967, 5
      %v2121 = vsel %vm975, %v2119, %v2120
      %v2122 = vrot.slane %v2120, 4
      %v2123 = vrot.slane %v1968, 5
      %v2124 = vsel %vm975, %v2122, %v2123
      %v2125 = vrot.slane %v1969, 5
      %v2126 = vrot.slane %v2125, 4
      %v2127 = vrot.slane %v1970, 5
      %v2128 = vsel %vm975, %v2126, %v2127
      %v2129 = vrot.slane %v2127, 4
      %v2130 = vrot.slane %v1971, 5
      %v2131 = vsel %vm975, %v2129, %v2130
      %v2132 = vunpack.c.l.b16 %v2023
      %v2133 = vunpack.c.l.b16 %v2026
      %v2134 = vunpack.c.l.b16 %v2030
      %v2135 = vunpack.c.l.b16 %v2033
      %v2136 = vunpack.c.l.b16 %v2037
      %v2137 = vunpack.c.l.b16 %v2040
      %v2138 = vunpack.c.l.b16 %v2044
      %v2139 = vunpack.c.l.b16 %v2047
      %v2140 = vunpack.c.l.b16 %v2051
      %v2141 = vunpack.c.l.b16 %v2054
      %v2142 = vunpack.c.l.b16 %v2058
      %v2143 = vunpack.c.l.b16 %v2061
      %v2144 = vunpack.c.l.b16 %v2065
      %v2145 = vunpack.c.l.b16 %v2068
      %v2146 = vunpack.c.l.b16 %v2072
      %v2147 = vunpack.c.l.b16 %v2075
      %v2148 = vunpack.c.l.b16 %v2079
      %v2149 = vunpack.c.l.b16 %v2082
      %v2150 = vunpack.c.l.b16 %v2086
      %v2151 = vunpack.c.l.b16 %v2089
      %v2152 = vunpack.c.l.b16 %v2093
      %v2153 = vunpack.c.l.b16 %v2096
      %v2154 = vunpack.c.l.b16 %v2100
      %v2155 = vunpack.c.l.b16 %v2103
      %v2156 = vunpack.c.l.b16 %v2107
      %v2157 = vunpack.c.l.b16 %v2110
      %v2158 = vunpack.c.l.b16 %v2114
      %v2159 = vunpack.c.l.b16 %v2117
      %v2160 = vunpack.c.l.b16 %v2121
      %v2161 = vunpack.c.l.b16 %v2124
      %v2162 = vunpack.c.l.b16 %v2128
      %v2163 = vunpack.c.l.b16 %v2131
      %v2164 = vpack.c.b16 %v2133, %v2132
      %v2165 = vpack.c.b16 %v2135, %v2134
      %v2166 = vpack.c.b16 %v2137, %v2136
      %v2167 = vpack.c.b16 %v2139, %v2138
      %v2168 = vpack.c.b16 %v2141, %v2140
      %v2169 = vpack.c.b16 %v2143, %v2142
      %v2170 = vpack.c.b16 %v2145, %v2144
      %v2171 = vpack.c.b16 %v2147, %v2146
      %v2172 = vpack.c.b16 %v2149, %v2148
      %v2173 = vpack.c.b16 %v2151, %v2150
      %v2174 = vpack.c.b16 %v2153, %v2152
      %v2175 = vpack.c.b16 %v2155, %v2154
      %v2176 = vpack.c.b16 %v2157, %v2156
      %v2177 = vpack.c.b16 %v2159, %v2158
      %v2178 = vpack.c.b16 %v2161, %v2160
      %v2179 = vpack.c.b16 %v2163, %v2162
      %2180 = vrot.lane.b32.xlu0 %v2164, 20
      %v2181 = vpop.permute.xlu0 %2180
      %2182 = vrot.lane.b32.xlu0 %v2165, 20
      %v2183 = vpop.permute.xlu0 %2182
      %2184 = vrot.lane.b32.xlu0 %v2166, 20
      %v2185 = vpop.permute.xlu0 %2184
      %2186 = vrot.lane.b32.xlu0 %v2167, 20
      %v2187 = vpop.permute.xlu0 %2186
      %2188 = vrot.lane.b32.xlu0 %v2168, 20
      %v2189 = vpop.permute.xlu0 %2188
      %2190 = vrot.lane.b32.xlu0 %v2169, 20
      %v2191 = vpop.permute.xlu0 %2190
      %2192 = vrot.lane.b32.xlu0 %v2170, 20
      %v2193 = vpop.permute.xlu0 %2192
      %2194 = vrot.lane.b32.xlu0 %v2171, 20
      %v2195 = vpop.permute.xlu0 %2194
      %2196 = vrot.lane.b32.xlu0 %v2172, 20
      %v2197 = vpop.permute.xlu0 %2196
      %2198 = vrot.lane.b32.xlu0 %v2173, 20
      %v2199 = vpop.permute.xlu0 %2198
      %2200 = vrot.lane.b32.xlu0 %v2174, 20
      %v2201 = vpop.permute.xlu0 %2200
      %2202 = vrot.lane.b32.xlu0 %v2175, 20
      %v2203 = vpop.permute.xlu0 %2202
      %2204 = vrot.lane.b32.xlu0 %v2176, 20
      %v2205 = vpop.permute.xlu0 %2204
      %2206 = vrot.lane.b32.xlu0 %v2177, 20
      %v2207 = vpop.permute.xlu0 %2206
      %2208 = vrot.lane.b32.xlu0 %v2178, 20
      %v2209 = vpop.permute.xlu0 %2208
      %2210 = vrot.lane.b32.xlu0 %v2179, 20
      %v2211 = vpop.permute.xlu0 %2210
      %vm2228 = vcmask 195744
      %2229 = vst.msk [vmem:[#allocation2] sm:$0xff] %vm2228, %v2181
      %2230 = vst.msk [vmem:[#allocation2 + $0x8] sm:$0xff] %vm2228, %v2183
      %2231 = vst.msk [vmem:[#allocation2 + $0x10] sm:$0xff] %vm2228, %v2185
      %2232 = vst.msk [vmem:[#allocation2 + $0x18] sm:$0xff] %vm2228, %v2187
      %2233 = vst.msk [vmem:[#allocation2 + $0x20] sm:$0xff] %vm2228, %v2189
      %2234 = vst.msk [vmem:[#allocation2 + $0x28] sm:$0xff] %vm2228, %v2191
      %2235 = vst.msk [vmem:[#allocation2 + $0x30] sm:$0xff] %vm2228, %v2193
      %2236 = vst.msk [vmem:[#allocation2 + $0x38] sm:$0xff] %vm2228, %v2195
      %2237 = vst.msk [vmem:[#allocation2 + $0x40] sm:$0xff] %vm2228, %v2197
      %2238 = vst.msk [vmem:[#allocation2 + $0x48] sm:$0xff] %vm2228, %v2199
      %2239 = vst.msk [vmem:[#allocation2 + $0x50] sm:$0xff] %vm2228, %v2201
      %2240 = vst.msk [vmem:[#allocation2 + $0x58] sm:$0xff] %vm2228, %v2203
      %2241 = vst.msk [vmem:[#allocation2 + $0x60] sm:$0xff] %vm2228, %v2205
      %2242 = vst.msk [vmem:[#allocation2 + $0x68] sm:$0xff] %vm2228, %v2207
      %2243 = vst.msk [vmem:[#allocation2 + $0x70] sm:$0xff] %vm2228, %v2209
      %2244 = vst.msk [vmem:[#allocation2 + $0x78] sm:$0xff] %vm2228, %v2211
      %s2245 = scalar_lea.vmem %s172, 24
      %v2246 = vld [vmem:[%s2245] sm:$0xf]
      %v2247 = vld [vmem:[%s2245 + $0x4] sm:$0xf]
      %v2248 = vld [vmem:[%s2245 + $0xc] sm:$0xf]
      %v2249 = vld [vmem:[%s2245 + $0x10] sm:$0xf]
      %v2250 = vld [vmem:[%s2245 + $0x18] sm:$0xf]
      %v2251 = vld [vmem:[%s2245 + $0x1c] sm:$0xf]
      %v2252 = vld [vmem:[%s2245 + $0x24] sm:$0xf]
      %v2253 = vld [vmem:[%s2245 + $0x28] sm:$0xf]
      %v2254 = vld [vmem:[%s2245 + $0x30] sm:$0xf]
      %v2255 = vld [vmem:[%s2245 + $0x34] sm:$0xf]
      %v2256 = vld [vmem:[%s2245 + $0x3c] sm:$0xf]
      %v2257 = vld [vmem:[%s2245 + $0x40] sm:$0xf]
      %v2258 = vld [vmem:[%s2245 + $0x48] sm:$0xf]
      %v2259 = vld [vmem:[%s2245 + $0x4c] sm:$0xf]
      %v2260 = vld [vmem:[%s2245 + $0x54] sm:$0xf]
      %v2261 = vld [vmem:[%s2245 + $0x58] sm:$0xf]
      %v2262 = vld [vmem:[%s2245 + $0x60] sm:$0xf]
      %v2263 = vld [vmem:[%s2245 + $0x64] sm:$0xf]
      %v2264 = vld [vmem:[%s2245 + $0x6c] sm:$0xf]
      %v2265 = vld [vmem:[%s2245 + $0x70] sm:$0xf]
      %v2266 = vld [vmem:[%s2245 + $0x78] sm:$0xf]
      %v2267 = vld [vmem:[%s2245 + $0x7c] sm:$0xf]
      %v2268 = vld [vmem:[%s2245 + $0x84] sm:$0xf]
      %v2269 = vld [vmem:[%s2245 + $0x88] sm:$0xf]
      %v2270 = vld [vmem:[%s2245 + $0x90] sm:$0xf]
      %v2271 = vld [vmem:[%s2245 + $0x94] sm:$0xf]
      %v2272 = vld [vmem:[%s2245 + $0x9c] sm:$0xf]
      %v2273 = vld [vmem:[%s2245 + $0xa0] sm:$0xf]
      %v2274 = vld [vmem:[%s2245 + $0xa8] sm:$0xf]
      %v2275 = vld [vmem:[%s2245 + $0xac] sm:$0xf]
      %v2276 = vld [vmem:[%s2245 + $0xb4] sm:$0xf]
      %v2277 = vld [vmem:[%s2245 + $0xb8] sm:$0xf]
      %v2310 = vunpack.c.l.b16 %v2246
      %v2311 = vunpack.c.l.b16 %v2247
      %v2312 = vunpack.c.l.b16 %v2248
      %v2313 = vunpack.c.l.b16 %v2249
      %v2314 = vunpack.c.l.b16 %v2250
      %v2315 = vunpack.c.l.b16 %v2251
      %v2316 = vunpack.c.l.b16 %v2252
      %v2317 = vunpack.c.l.b16 %v2253
      %v2318 = vunpack.c.l.b16 %v2254
      %v2319 = vunpack.c.l.b16 %v2255
      %v2320 = vunpack.c.l.b16 %v2256
      %v2321 = vunpack.c.l.b16 %v2257
      %v2322 = vunpack.c.l.b16 %v2258
      %v2323 = vunpack.c.l.b16 %v2259
      %v2324 = vunpack.c.l.b16 %v2260
      %v2325 = vunpack.c.l.b16 %v2261
      %v2326 = vunpack.c.l.b16 %v2262
      %v2327 = vunpack.c.l.b16 %v2263
      %v2328 = vunpack.c.l.b16 %v2264
      %v2329 = vunpack.c.l.b16 %v2265
      %v2330 = vunpack.c.l.b16 %v2266
      %v2331 = vunpack.c.l.b16 %v2267
      %v2332 = vunpack.c.l.b16 %v2268
      %v2333 = vunpack.c.l.b16 %v2269
      %v2334 = vunpack.c.l.b16 %v2270
      %v2335 = vunpack.c.l.b16 %v2271
      %v2336 = vunpack.c.l.b16 %v2272
      %v2337 = vunpack.c.l.b16 %v2273
      %v2338 = vunpack.c.l.b16 %v2274
      %v2339 = vunpack.c.l.b16 %v2275
      %v2340 = vunpack.c.l.b16 %v2276
      %v2341 = vunpack.c.l.b16 %v2277
      %v2342 = vpack.c.b16 %v2311, %v2310
      %v2343 = vpack.c.b16 %v2313, %v2312
      %v2344 = vpack.c.b16 %v2315, %v2314
      %v2345 = vpack.c.b16 %v2317, %v2316
      %v2346 = vpack.c.b16 %v2319, %v2318
      %v2347 = vpack.c.b16 %v2321, %v2320
      %v2348 = vpack.c.b16 %v2323, %v2322
      %v2349 = vpack.c.b16 %v2325, %v2324
      %v2350 = vpack.c.b16 %v2327, %v2326
      %v2351 = vpack.c.b16 %v2329, %v2328
      %v2352 = vpack.c.b16 %v2331, %v2330
      %v2353 = vpack.c.b16 %v2333, %v2332
      %v2354 = vpack.c.b16 %v2335, %v2334
      %v2355 = vpack.c.b16 %v2337, %v2336
      %v2356 = vpack.c.b16 %v2339, %v2338
      %v2357 = vpack.c.b16 %v2341, %v2340
      %2358 = vrot.lane.b32.xlu0 %v2342, 24
      %v2359 = vpop.permute.xlu0 %2358
      %2360 = vrot.lane.b32.xlu0 %v2343, 24
      %v2361 = vpop.permute.xlu0 %2360
      %2362 = vrot.lane.b32.xlu0 %v2344, 24
      %v2363 = vpop.permute.xlu0 %2362
      %2364 = vrot.lane.b32.xlu0 %v2345, 24
      %v2365 = vpop.permute.xlu0 %2364
      %2366 = vrot.lane.b32.xlu0 %v2346, 24
      %v2367 = vpop.permute.xlu0 %2366
      %2368 = vrot.lane.b32.xlu0 %v2347, 24
      %v2369 = vpop.permute.xlu0 %2368
      %2370 = vrot.lane.b32.xlu0 %v2348, 24
      %v2371 = vpop.permute.xlu0 %2370
      %2372 = vrot.lane.b32.xlu0 %v2349, 24
      %v2373 = vpop.permute.xlu0 %2372
      %2374 = vrot.lane.b32.xlu0 %v2350, 24
      %v2375 = vpop.permute.xlu0 %2374
      %2376 = vrot.lane.b32.xlu0 %v2351, 24
      %v2377 = vpop.permute.xlu0 %2376
      %2378 = vrot.lane.b32.xlu0 %v2352, 24
      %v2379 = vpop.permute.xlu0 %2378
      %2380 = vrot.lane.b32.xlu0 %v2353, 24
      %v2381 = vpop.permute.xlu0 %2380
      %2382 = vrot.lane.b32.xlu0 %v2354, 24
      %v2383 = vpop.permute.xlu0 %2382
      %2384 = vrot.lane.b32.xlu0 %v2355, 24
      %v2385 = vpop.permute.xlu0 %2384
      %2386 = vrot.lane.b32.xlu0 %v2356, 24
      %v2387 = vpop.permute.xlu0 %2386
      %2388 = vrot.lane.b32.xlu0 %v2357, 24
      %v2389 = vpop.permute.xlu0 %2388
      %vm2406 = vcmask 228544
      %2407 = vst.msk [vmem:[#allocation2] sm:$0xff] %vm2406, %v2359
      %2408 = vst.msk [vmem:[#allocation2 + $0x8] sm:$0xff] %vm2406, %v2361
      %2409 = vst.msk [vmem:[#allocation2 + $0x10] sm:$0xff] %vm2406, %v2363
      %2410 = vst.msk [vmem:[#allocation2 + $0x18] sm:$0xff] %vm2406, %v2365
      %2411 = vst.msk [vmem:[#allocation2 + $0x20] sm:$0xff] %vm2406, %v2367
      %2412 = vst.msk [vmem:[#allocation2 + $0x28] sm:$0xff] %vm2406, %v2369
      %2413 = vst.msk [vmem:[#allocation2 + $0x30] sm:$0xff] %vm2406, %v2371
      %2414 = vst.msk [vmem:[#allocation2 + $0x38] sm:$0xff] %vm2406, %v2373
      %2415 = vst.msk [vmem:[#allocation2 + $0x40] sm:$0xff] %vm2406, %v2375
      %2416 = vst.msk [vmem:[#allocation2 + $0x48] sm:$0xff] %vm2406, %v2377
      %2417 = vst.msk [vmem:[#allocation2 + $0x50] sm:$0xff] %vm2406, %v2379
      %2418 = vst.msk [vmem:[#allocation2 + $0x58] sm:$0xff] %vm2406, %v2381
      %2419 = vst.msk [vmem:[#allocation2 + $0x60] sm:$0xff] %vm2406, %v2383
      %2420 = vst.msk [vmem:[#allocation2 + $0x68] sm:$0xff] %vm2406, %v2385
      %2421 = vst.msk [vmem:[#allocation2 + $0x70] sm:$0xff] %vm2406, %v2387
      %2422 = vst.msk [vmem:[#allocation2 + $0x78] sm:$0xff] %vm2406, %v2389
      %v2423 = vld [vmem:[%s2245] sm:$0xf]
      %v2424 = vld [vmem:[%s2245 + $0x4] sm:$0xf]
      %v2425 = vld [vmem:[%s2245 + $0x8] sm:$0x1]
      %v2426 = vld [vmem:[%s2245 + $0xc] sm:$0xf]
      %v2427 = vld [vmem:[%s2245 + $0x10] sm:$0xf]
      %v2428 = vld [vmem:[%s2245 + $0x14] sm:$0x1]
      %v2429 = vld [vmem:[%s2245 + $0x18] sm:$0xf]
      %v2430 = vld [vmem:[%s2245 + $0x1c] sm:$0xf]
      %v2431 = vld [vmem:[%s2245 + $0x20] sm:$0x1]
      %v2432 = vld [vmem:[%s2245 + $0x24] sm:$0xf]
      %v2433 = vld [vmem:[%s2245 + $0x28] sm:$0xf]
      %v2434 = vld [vmem:[%s2245 + $0x2c] sm:$0x1]
      %v2435 = vld [vmem:[%s2245 + $0x30] sm:$0xf]
      %v2436 = vld [vmem:[%s2245 + $0x34] sm:$0xf]
      %v2437 = vld [vmem:[%s2245 + $0x38] sm:$0x1]
      %v2438 = vld [vmem:[%s2245 + $0x3c] sm:$0xf]
      %v2439 = vld [vmem:[%s2245 + $0x40] sm:$0xf]
      %v2440 = vld [vmem:[%s2245 + $0x44] sm:$0x1]
      %v2441 = vld [vmem:[%s2245 + $0x48] sm:$0xf]
      %v2442 = vld [vmem:[%s2245 + $0x4c] sm:$0xf]
      %v2443 = vld [vmem:[%s2245 + $0x50] sm:$0x1]
      %v2444 = vld [vmem:[%s2245 + $0x54] sm:$0xf]
      %v2445 = vld [vmem:[%s2245 + $0x58] sm:$0xf]
      %v2446 = vld [vmem:[%s2245 + $0x5c] sm:$0x1]
      %v2447 = vld [vmem:[%s2245 + $0x60] sm:$0xf]
      %v2448 = vld [vmem:[%s2245 + $0x64] sm:$0xf]
      %v2449 = vld [vmem:[%s2245 + $0x68] sm:$0x1]
      %v2450 = vld [vmem:[%s2245 + $0x6c] sm:$0xf]
      %v2451 = vld [vmem:[%s2245 + $0x70] sm:$0xf]
      %v2452 = vld [vmem:[%s2245 + $0x74] sm:$0x1]
      %v2453 = vld [vmem:[%s2245 + $0x78] sm:$0xf]
      %v2454 = vld [vmem:[%s2245 + $0x7c] sm:$0xf]
      %v2455 = vld [vmem:[%s2245 + $0x80] sm:$0x1]
      %v2456 = vld [vmem:[%s2245 + $0x84] sm:$0xf]
      %v2457 = vld [vmem:[%s2245 + $0x88] sm:$0xf]
      %v2458 = vld [vmem:[%s2245 + $0x8c] sm:$0x1]
      %v2459 = vld [vmem:[%s2245 + $0x90] sm:$0xf]
      %v2460 = vld [vmem:[%s2245 + $0x94] sm:$0xf]
      %v2461 = vld [vmem:[%s2245 + $0x98] sm:$0x1]
      %v2462 = vld [vmem:[%s2245 + $0x9c] sm:$0xf]
      %v2463 = vld [vmem:[%s2245 + $0xa0] sm:$0xf]
      %v2464 = vld [vmem:[%s2245 + $0xa4] sm:$0x1]
      %v2465 = vld [vmem:[%s2245 + $0xa8] sm:$0xf]
      %v2466 = vld [vmem:[%s2245 + $0xac] sm:$0xf]
      %v2467 = vld [vmem:[%s2245 + $0xb0] sm:$0x1]
      %v2468 = vld [vmem:[%s2245 + $0xb4] sm:$0xf]
      %v2469 = vld [vmem:[%s2245 + $0xb8] sm:$0xf]
      %v2470 = vld [vmem:[%s2245 + $0xbc] sm:$0x1]
      %v2472 = vshrl.u32 %v2423, 16
      %v2474 = vrot.slane %v2472, 4
      %v2475 = vshll.u32 %v2423, 16
      %v2477 = vrot.slane %v2475, 5
      %v2478 = vor.u32 %v2474, %v2477
      %v2479 = vrot.slane %v2478, 4
      %v2481 = vshll.u32 %v2424, 16
      %v2483 = vrot.slane %v2481, 5
      %v2484 = vsel %vm379, %v2479, %v2483
      %v2485 = vshrl.u32 %v2424, 16
      %v2487 = vrot.slane %v2485, 4
      %v2488 = vor.u32 %v2487, %v2483
      %v2489 = vrot.slane %v2488, 4
      %v2491 = vshll.u32 %v2425, 16
      %v2493 = vrot.slane %v2491, 5
      %v2494 = vsel %vm379, %v2489, %v2493
      %v2496 = vshrl.u32 %v2426, 16
      %v2498 = vrot.slane %v2496, 4
      %v2499 = vshll.u32 %v2426, 16
      %v2501 = vrot.slane %v2499, 5
      %v2502 = vor.u32 %v2498, %v2501
      %v2503 = vrot.slane %v2502, 4
      %v2505 = vshll.u32 %v2427, 16
      %v2507 = vrot.slane %v2505, 5
      %v2508 = vsel %vm379, %v2503, %v2507
      %v2509 = vshrl.u32 %v2427, 16
      %v2511 = vrot.slane %v2509, 4
      %v2512 = vor.u32 %v2511, %v2507
      %v2513 = vrot.slane %v2512, 4
      %v2515 = vshll.u32 %v2428, 16
      %v2517 = vrot.slane %v2515, 5
      %v2518 = vsel %vm379, %v2513, %v2517
      %v2520 = vshrl.u32 %v2429, 16
      %v2522 = vrot.slane %v2520, 4
      %v2523 = vshll.u32 %v2429, 16
      %v2525 = vrot.slane %v2523, 5
      %v2526 = vor.u32 %v2522, %v2525
      %v2527 = vrot.slane %v2526, 4
      %v2529 = vshll.u32 %v2430, 16
      %v2531 = vrot.slane %v2529, 5
      %v2532 = vsel %vm379, %v2527, %v2531
      %v2533 = vshrl.u32 %v2430, 16
      %v2535 = vrot.slane %v2533, 4
      %v2536 = vor.u32 %v2535, %v2531
      %v2537 = vrot.slane %v2536, 4
      %v2539 = vshll.u32 %v2431, 16
      %v2541 = vrot.slane %v2539, 5
      %v2542 = vsel %vm379, %v2537, %v2541
      %v2544 = vshrl.u32 %v2432, 16
      %v2546 = vrot.slane %v2544, 4
      %v2547 = vshll.u32 %v2432, 16
      %v2549 = vrot.slane %v2547, 5
      %v2550 = vor.u32 %v2546, %v2549
      %v2551 = vrot.slane %v2550, 4
      %v2553 = vshll.u32 %v2433, 16
      %v2555 = vrot.slane %v2553, 5
      %v2556 = vsel %vm379, %v2551, %v2555
      %v2557 = vshrl.u32 %v2433, 16
      %v2559 = vrot.slane %v2557, 4
      %v2560 = vor.u32 %v2559, %v2555
      %v2561 = vrot.slane %v2560, 4
      %v2563 = vshll.u32 %v2434, 16
      %v2565 = vrot.slane %v2563, 5
      %v2566 = vsel %vm379, %v2561, %v2565
      %v2568 = vshrl.u32 %v2435, 16
      %v2570 = vrot.slane %v2568, 4
      %v2571 = vshll.u32 %v2435, 16
      %v2573 = vrot.slane %v2571, 5
      %v2574 = vor.u32 %v2570, %v2573
      %v2575 = vrot.slane %v2574, 4
      %v2577 = vshll.u32 %v2436, 16
      %v2579 = vrot.slane %v2577, 5
      %v2580 = vsel %vm379, %v2575, %v2579
      %v2581 = vshrl.u32 %v2436, 16
      %v2583 = vrot.slane %v2581, 4
      %v2584 = vor.u32 %v2583, %v2579
      %v2585 = vrot.slane %v2584, 4
      %v2587 = vshll.u32 %v2437, 16
      %v2589 = vrot.slane %v2587, 5
      %v2590 = vsel %vm379, %v2585, %v2589
      %v2592 = vshrl.u32 %v2438, 16
      %v2594 = vrot.slane %v2592, 4
      %v2595 = vshll.u32 %v2438, 16
      %v2597 = vrot.slane %v2595, 5
      %v2598 = vor.u32 %v2594, %v2597
      %v2599 = vrot.slane %v2598, 4
      %v2601 = vshll.u32 %v2439, 16
      %v2603 = vrot.slane %v2601, 5
      %v2604 = vsel %vm379, %v2599, %v2603
      %v2605 = vshrl.u32 %v2439, 16
      %v2607 = vrot.slane %v2605, 4
      %v2608 = vor.u32 %v2607, %v2603
      %v2609 = vrot.slane %v2608, 4
      %v2611 = vshll.u32 %v2440, 16
      %v2613 = vrot.slane %v2611, 5
      %v2614 = vsel %vm379, %v2609, %v2613
      %v2616 = vshrl.u32 %v2441, 16
      %v2618 = vrot.slane %v2616, 4
      %v2619 = vshll.u32 %v2441, 16
      %v2621 = vrot.slane %v2619, 5
      %v2622 = vor.u32 %v2618, %v2621
      %v2623 = vrot.slane %v2622, 4
      %v2625 = vshll.u32 %v2442, 16
      %v2627 = vrot.slane %v2625, 5
      %v2628 = vsel %vm379, %v2623, %v2627
      %v2629 = vshrl.u32 %v2442, 16
      %v2631 = vrot.slane %v2629, 4
      %v2632 = vor.u32 %v2631, %v2627
      %v2633 = vrot.slane %v2632, 4
      %v2635 = vshll.u32 %v2443, 16
      %v2637 = vrot.slane %v2635, 5
      %v2638 = vsel %vm379, %v2633, %v2637
      %v2640 = vshrl.u32 %v2444, 16
      %v2642 = vrot.slane %v2640, 4
      %v2643 = vshll.u32 %v2444, 16
      %v2645 = vrot.slane %v2643, 5
      %v2646 = vor.u32 %v2642, %v2645
      %v2647 = vrot.slane %v2646, 4
      %v2649 = vshll.u32 %v2445, 16
      %v2651 = vrot.slane %v2649, 5
      %v2652 = vsel %vm379, %v2647, %v2651
      %v2653 = vshrl.u32 %v2445, 16
      %v2655 = vrot.slane %v2653, 4
      %v2656 = vor.u32 %v2655, %v2651
      %v2657 = vrot.slane %v2656, 4
      %v2659 = vshll.u32 %v2446, 16
      %v2661 = vrot.slane %v2659, 5
      %v2662 = vsel %vm379, %v2657, %v2661
      %v2664 = vshrl.u32 %v2447, 16
      %v2666 = vrot.slane %v2664, 4
      %v2667 = vshll.u32 %v2447, 16
      %v2669 = vrot.slane %v2667, 5
      %v2670 = vor.u32 %v2666, %v2669
      %v2671 = vrot.slane %v2670, 4
      %v2673 = vshll.u32 %v2448, 16
      %v2675 = vrot.slane %v2673, 5
      %v2676 = vsel %vm379, %v2671, %v2675
      %v2677 = vshrl.u32 %v2448, 16
      %v2679 = vrot.slane %v2677, 4
      %v2680 = vor.u32 %v2679, %v2675
      %v2681 = vrot.slane %v2680, 4
      %v2683 = vshll.u32 %v2449, 16
      %v2685 = vrot.slane %v2683, 5
      %v2686 = vsel %vm379, %v2681, %v2685
      %v2688 = vshrl.u32 %v2450, 16
      %v2690 = vrot.slane %v2688, 4
      %v2691 = vshll.u32 %v2450, 16
      %v2693 = vrot.slane %v2691, 5
      %v2694 = vor.u32 %v2690, %v2693
      %v2695 = vrot.slane %v2694, 4
      %v2697 = vshll.u32 %v2451, 16
      %v2699 = vrot.slane %v2697, 5
      %v2700 = vsel %vm379, %v2695, %v2699
      %v2701 = vshrl.u32 %v2451, 16
      %v2703 = vrot.slane %v2701, 4
      %v2704 = vor.u32 %v2703, %v2699
      %v2705 = vrot.slane %v2704, 4
      %v2707 = vshll.u32 %v2452, 16
      %v2709 = vrot.slane %v2707, 5
      %v2710 = vsel %vm379, %v2705, %v2709
      %v2712 = vshrl.u32 %v2453, 16
      %v2714 = vrot.slane %v2712, 4
      %v2715 = vshll.u32 %v2453, 16
      %v2717 = vrot.slane %v2715, 5
      %v2718 = vor.u32 %v2714, %v2717
      %v2719 = vrot.slane %v2718, 4
      %v2721 = vshll.u32 %v2454, 16
      %v2723 = vrot.slane %v2721, 5
      %v2724 = vsel %vm379, %v2719, %v2723
      %v2725 = vshrl.u32 %v2454, 16
      %v2727 = vrot.slane %v2725, 4
      %v2728 = vor.u32 %v2727, %v2723
      %v2729 = vrot.slane %v2728, 4
      %v2731 = vshll.u32 %v2455, 16
      %v2733 = vrot.slane %v2731, 5
      %v2734 = vsel %vm379, %v2729, %v2733
      %v2736 = vshrl.u32 %v2456, 16
      %v2738 = vrot.slane %v2736, 4
      %v2739 = vshll.u32 %v2456, 16
      %v2741 = vrot.slane %v2739, 5
      %v2742 = vor.u32 %v2738, %v2741
      %v2743 = vrot.slane %v2742, 4
      %v2745 = vshll.u32 %v2457, 16
      %v2747 = vrot.slane %v2745, 5
      %v2748 = vsel %vm379, %v2743, %v2747
      %v2749 = vshrl.u32 %v2457, 16
      %v2751 = vrot.slane %v2749, 4
      %v2752 = vor.u32 %v2751, %v2747
      %v2753 = vrot.slane %v2752, 4
      %v2755 = vshll.u32 %v2458, 16
      %v2757 = vrot.slane %v2755, 5
      %v2758 = vsel %vm379, %v2753, %v2757
      %v2760 = vshrl.u32 %v2459, 16
      %v2762 = vrot.slane %v2760, 4
      %v2763 = vshll.u32 %v2459, 16
      %v2765 = vrot.slane %v2763, 5
      %v2766 = vor.u32 %v2762, %v2765
      %v2767 = vrot.slane %v2766, 4
      %v2769 = vshll.u32 %v2460, 16
      %v2771 = vrot.slane %v2769, 5
      %v2772 = vsel %vm379, %v2767, %v2771
      %v2773 = vshrl.u32 %v2460, 16
      %v2775 = vrot.slane %v2773, 4
      %v2776 = vor.u32 %v2775, %v2771
      %v2777 = vrot.slane %v2776, 4
      %v2779 = vshll.u32 %v2461, 16
      %v2781 = vrot.slane %v2779, 5
      %v2782 = vsel %vm379, %v2777, %v2781
      %v2784 = vshrl.u32 %v2462, 16
      %v2786 = vrot.slane %v2784, 4
      %v2787 = vshll.u32 %v2462, 16
      %v2789 = vrot.slane %v2787, 5
      %v2790 = vor.u32 %v2786, %v2789
      %v2791 = vrot.slane %v2790, 4
      %v2793 = vshll.u32 %v2463, 16
      %v2795 = vrot.slane %v2793, 5
      %v2796 = vsel %vm379, %v2791, %v2795
      %v2797 = vshrl.u32 %v2463, 16
      %v2799 = vrot.slane %v2797, 4
      %v2800 = vor.u32 %v2799, %v2795
      %v2801 = vrot.slane %v2800, 4
      %v2803 = vshll.u32 %v2464, 16
      %v2805 = vrot.slane %v2803, 5
      %v2806 = vsel %vm379, %v2801, %v2805
      %v2808 = vshrl.u32 %v2465, 16
      %v2810 = vrot.slane %v2808, 4
      %v2811 = vshll.u32 %v2465, 16
      %v2813 = vrot.slane %v2811, 5
      %v2814 = vor.u32 %v2810, %v2813
      %v2815 = vrot.slane %v2814, 4
      %v2817 = vshll.u32 %v2466, 16
      %v2819 = vrot.slane %v2817, 5
      %v2820 = vsel %vm379, %v2815, %v2819
      %v2821 = vshrl.u32 %v2466, 16
      %v2823 = vrot.slane %v2821, 4
      %v2824 = vor.u32 %v2823, %v2819
      %v2825 = vrot.slane %v2824, 4
      %v2827 = vshll.u32 %v2467, 16
      %v2829 = vrot.slane %v2827, 5
      %v2830 = vsel %vm379, %v2825, %v2829
      %v2832 = vshrl.u32 %v2468, 16
      %v2834 = vrot.slane %v2832, 4
      %v2835 = vshll.u32 %v2468, 16
      %v2837 = vrot.slane %v2835, 5
      %v2838 = vor.u32 %v2834, %v2837
      %v2839 = vrot.slane %v2838, 4
      %v2841 = vshll.u32 %v2469, 16
      %v2843 = vrot.slane %v2841, 5
      %v2844 = vsel %vm379, %v2839, %v2843
      %v2845 = vshrl.u32 %v2469, 16
      %v2847 = vrot.slane %v2845, 4
      %v2848 = vor.u32 %v2847, %v2843
      %v2849 = vrot.slane %v2848, 4
      %v2851 = vshll.u32 %v2470, 16
      %v2853 = vrot.slane %v2851, 5
      %v2854 = vsel %vm379, %v2849, %v2853
      %v2855 = vunpack.c.l.b16 %v2484
      %v2856 = vunpack.c.l.b16 %v2494
      %v2857 = vunpack.c.l.b16 %v2508
      %v2858 = vunpack.c.l.b16 %v2518
      %v2859 = vunpack.c.l.b16 %v2532
      %v2860 = vunpack.c.l.b16 %v2542
      %v2861 = vunpack.c.l.b16 %v2556
      %v2862 = vunpack.c.l.b16 %v2566
      %v2863 = vunpack.c.l.b16 %v2580
      %v2864 = vunpack.c.l.b16 %v2590
      %v2865 = vunpack.c.l.b16 %v2604
      %v2866 = vunpack.c.l.b16 %v2614
      %v2867 = vunpack.c.l.b16 %v2628
      %v2868 = vunpack.c.l.b16 %v2638
      %v2869 = vunpack.c.l.b16 %v2652
      %v2870 = vunpack.c.l.b16 %v2662
      %v2871 = vunpack.c.l.b16 %v2676
      %v2872 = vunpack.c.l.b16 %v2686
      %v2873 = vunpack.c.l.b16 %v2700
      %v2874 = vunpack.c.l.b16 %v2710
      %v2875 = vunpack.c.l.b16 %v2724
      %v2876 = vunpack.c.l.b16 %v2734
      %v2877 = vunpack.c.l.b16 %v2748
      %v2878 = vunpack.c.l.b16 %v2758
      %v2879 = vunpack.c.l.b16 %v2772
      %v2880 = vunpack.c.l.b16 %v2782
      %v2881 = vunpack.c.l.b16 %v2796
      %v2882 = vunpack.c.l.b16 %v2806
      %v2883 = vunpack.c.l.b16 %v2820
      %v2884 = vunpack.c.l.b16 %v2830
      %v2885 = vunpack.c.l.b16 %v2844
      %v2886 = vunpack.c.l.b16 %v2854
      %v2887 = vpack.c.b16 %v2856, %v2855
      %v2888 = vpack.c.b16 %v2858, %v2857
      %v2889 = vpack.c.b16 %v2860, %v2859
      %v2890 = vpack.c.b16 %v2862, %v2861
      %v2891 = vpack.c.b16 %v2864, %v2863
      %v2892 = vpack.c.b16 %v2866, %v2865
      %v2893 = vpack.c.b16 %v2868, %v2867
      %v2894 = vpack.c.b16 %v2870, %v2869
      %v2895 = vpack.c.b16 %v2872, %v2871
      %v2896 = vpack.c.b16 %v2874, %v2873
      %v2897 = vpack.c.b16 %v2876, %v2875
      %v2898 = vpack.c.b16 %v2878, %v2877
      %v2899 = vpack.c.b16 %v2880, %v2879
      %v2900 = vpack.c.b16 %v2882, %v2881
      %v2901 = vpack.c.b16 %v2884, %v2883
      %v2902 = vpack.c.b16 %v2886, %v2885
      %2903 = vrot.lane.b32.xlu0 %v2887, 28
      %v2904 = vpop.permute.xlu0 %2903
      %2905 = vrot.lane.b32.xlu0 %v2888, 28
      %v2906 = vpop.permute.xlu0 %2905
      %2907 = vrot.lane.b32.xlu0 %v2889, 28
      %v2908 = vpop.permute.xlu0 %2907
      %2909 = vrot.lane.b32.xlu0 %v2890, 28
      %v2910 = vpop.permute.xlu0 %2909
      %2911 = vrot.lane.b32.xlu0 %v2891, 28
      %v2912 = vpop.permute.xlu0 %2911
      %2913 = vrot.lane.b32.xlu0 %v2892, 28
      %v2914 = vpop.permute.xlu0 %2913
      %2915 = vrot.lane.b32.xlu0 %v2893, 28
      %v2916 = vpop.permute.xlu0 %2915
      %2917 = vrot.lane.b32.xlu0 %v2894, 28
      %v2918 = vpop.permute.xlu0 %2917
      %2919 = vrot.lane.b32.xlu0 %v2895, 28
      %v2920 = vpop.permute.xlu0 %2919
      %2921 = vrot.lane.b32.xlu0 %v2896, 28
      %v2922 = vpop.permute.xlu0 %2921
      %2923 = vrot.lane.b32.xlu0 %v2897, 28
      %v2924 = vpop.permute.xlu0 %2923
      %2925 = vrot.lane.b32.xlu0 %v2898, 28
      %v2926 = vpop.permute.xlu0 %2925
      %2927 = vrot.lane.b32.xlu0 %v2899, 28
      %v2928 = vpop.permute.xlu0 %2927
      %2929 = vrot.lane.b32.xlu0 %v2900, 28
      %v2930 = vpop.permute.xlu0 %2929
      %2931 = vrot.lane.b32.xlu0 %v2901, 28
      %v2932 = vpop.permute.xlu0 %2931
      %2933 = vrot.lane.b32.xlu0 %v2902, 28
      %v2934 = vpop.permute.xlu0 %2933
      %vm2951 = vcmask 261344
      %2952 = vst.msk [vmem:[#allocation2] sm:$0xff] %vm2951, %v2904
      %2953 = vst.msk [vmem:[#allocation2 + $0x8] sm:$0xff] %vm2951, %v2906
      %2954 = vst.msk [vmem:[#allocation2 + $0x10] sm:$0xff] %vm2951, %v2908
      %2955 = vst.msk [vmem:[#allocation2 + $0x18] sm:$0xff] %vm2951, %v2910
      %2956 = vst.msk [vmem:[#allocation2 + $0x20] sm:$0xff] %vm2951, %v2912
      %2957 = vst.msk [vmem:[#allocation2 + $0x28] sm:$0xff] %vm2951, %v2914
      %2958 = vst.msk [vmem:[#allocation2 + $0x30] sm:$0xff] %vm2951, %v2916
      %2959 = vst.msk [vmem:[#allocation2 + $0x38] sm:$0xff] %vm2951, %v2918
      %2960 = vst.msk [vmem:[#allocation2 + $0x40] sm:$0xff] %vm2951, %v2920
      %2961 = vst.msk [vmem:[#allocation2 + $0x48] sm:$0xff] %vm2951, %v2922
      %2962 = vst.msk [vmem:[#allocation2 + $0x50] sm:$0xff] %vm2951, %v2924
      %2963 = vst.msk [vmem:[#allocation2 + $0x58] sm:$0xff] %vm2951, %v2926
      %2964 = vst.msk [vmem:[#allocation2 + $0x60] sm:$0xff] %vm2951, %v2928
      %2965 = vst.msk [vmem:[#allocation2 + $0x68] sm:$0xff] %vm2951, %v2930
      %2966 = vst.msk [vmem:[#allocation2 + $0x70] sm:$0xff] %vm2951, %v2932
      %2967 = vst.msk [vmem:[#allocation2 + $0x78] sm:$0xff] %vm2951, %v2934
      %v2968 = vld [vmem:[%s2245] sm:$0xe]
      %v2969 = vld [vmem:[%s2245 + $0x4] sm:$0xf]
      %v2970 = vld [vmem:[%s2245 + $0x8] sm:$0x1]
      %v2971 = vld [vmem:[%s2245 + $0xc] sm:$0xe]
      %v2972 = vld [vmem:[%s2245 + $0x10] sm:$0xf]
      %v2973 = vld [vmem:[%s2245 + $0x14] sm:$0x1]
      %v2974 = vld [vmem:[%s2245 + $0x18] sm:$0xe]
      %v2975 = vld [vmem:[%s2245 + $0x1c] sm:$0xf]
      %v2976 = vld [vmem:[%s2245 + $0x20] sm:$0x1]
      %v2977 = vld [vmem:[%s2245 + $0x24] sm:$0xe]
      %v2978 = vld [vmem:[%s2245 + $0x28] sm:$0xf]
      %v2979 = vld [vmem:[%s2245 + $0x2c] sm:$0x1]
      %v2980 = vld [vmem:[%s2245 + $0x30] sm:$0xe]
      %v2981 = vld [vmem:[%s2245 + $0x34] sm:$0xf]
      %v2982 = vld [vmem:[%s2245 + $0x38] sm:$0x1]
      %v2983 = vld [vmem:[%s2245 + $0x3c] sm:$0xe]
      %v2984 = vld [vmem:[%s2245 + $0x40] sm:$0xf]
      %v2985 = vld [vmem:[%s2245 + $0x44] sm:$0x1]
      %v2986 = vld [vmem:[%s2245 + $0x48] sm:$0xe]
      %v2987 = vld [vmem:[%s2245 + $0x4c] sm:$0xf]
      %v2988 = vld [vmem:[%s2245 + $0x50] sm:$0x1]
      %v2989 = vld [vmem:[%s2245 + $0x54] sm:$0xe]
      %v2990 = vld [vmem:[%s2245 + $0x58] sm:$0xf]
      %v2991 = vld [vmem:[%s2245 + $0x5c] sm:$0x1]
      %v2992 = vld [vmem:[%s2245 + $0x60] sm:$0xe]
      %v2993 = vld [vmem:[%s2245 + $0x64] sm:$0xf]
      %v2994 = vld [vmem:[%s2245 + $0x68] sm:$0x1]
      %v2995 = vld [vmem:[%s2245 + $0x6c] sm:$0xe]
      %v2996 = vld [vmem:[%s2245 + $0x70] sm:$0xf]
      %v2997 = vld [vmem:[%s2245 + $0x74] sm:$0x1]
      %v2998 = vld [vmem:[%s2245 + $0x78] sm:$0xe]
      %v2999 = vld [vmem:[%s2245 + $0x7c] sm:$0xf]
      %v3000 = vld [vmem:[%s2245 + $0x80] sm:$0x1]
      %v3001 = vld [vmem:[%s2245 + $0x84] sm:$0xe]
      %v3002 = vld [vmem:[%s2245 + $0x88] sm:$0xf]
      %v3003 = vld [vmem:[%s2245 + $0x8c] sm:$0x1]
      %v3004 = vld [vmem:[%s2245 + $0x90] sm:$0xe]
      %v3005 = vld [vmem:[%s2245 + $0x94] sm:$0xf]
      %v3006 = vld [vmem:[%s2245 + $0x98] sm:$0x1]
      %v3007 = vld [vmem:[%s2245 + $0x9c] sm:$0xe]
      %v3008 = vld [vmem:[%s2245 + $0xa0] sm:$0xf]
      %v3009 = vld [vmem:[%s2245 + $0xa4] sm:$0x1]
      %v3010 = vld [vmem:[%s2245 + $0xa8] sm:$0xe]
      %v3011 = vld [vmem:[%s2245 + $0xac] sm:$0xf]
      %v3012 = vld [vmem:[%s2245 + $0xb0] sm:$0x1]
      %v3013 = vld [vmem:[%s2245 + $0xb4] sm:$0xe]
      %v3014 = vld [vmem:[%s2245 + $0xb8] sm:$0xf]
      %v3015 = vld [vmem:[%s2245 + $0xbc] sm:$0x1]
      %v3064 = vrot.slane %v2968, 5
      %v3065 = vrot.slane %v3064, 4
      %v3066 = vrot.slane %v2969, 5
      %v3067 = vsel %vm975, %v3065, %v3066
      %v3068 = vrot.slane %v3066, 4
      %v3069 = vrot.slane %v2970, 5
      %v3070 = vsel %vm975, %v3068, %v3069
      %v3071 = vrot.slane %v2971, 5
      %v3072 = vrot.slane %v3071, 4
      %v3073 = vrot.slane %v2972, 5
      %v3074 = vsel %vm975, %v3072, %v3073
      %v3075 = vrot.slane %v3073, 4
      %v3076 = vrot.slane %v2973, 5
      %v3077 = vsel %vm975, %v3075, %v3076
      %v3078 = vrot.slane %v2974, 5
      %v3079 = vrot.slane %v3078, 4
      %v3080 = vrot.slane %v2975, 5
      %v3081 = vsel %vm975, %v3079, %v3080
      %v3082 = vrot.slane %v3080, 4
      %v3083 = vrot.slane %v2976, 5
      %v3084 = vsel %vm975, %v3082, %v3083
      %v3085 = vrot.slane %v2977, 5
      %v3086 = vrot.slane %v3085, 4
      %v3087 = vrot.slane %v2978, 5
      %v3088 = vsel %vm975, %v3086, %v3087
      %v3089 = vrot.slane %v3087, 4
      %v3090 = vrot.slane %v2979, 5
      %v3091 = vsel %vm975, %v3089, %v3090
      %v3092 = vrot.slane %v2980, 5
      %v3093 = vrot.slane %v3092, 4
      %v3094 = vrot.slane %v2981, 5
      %v3095 = vsel %vm975, %v3093, %v3094
      %v3096 = vrot.slane %v3094, 4
      %v3097 = vrot.slane %v2982, 5
      %v3098 = vsel %vm975, %v3096, %v3097
      %v3099 = vrot.slane %v2983, 5
      %v3100 = vrot.slane %v3099, 4
      %v3101 = vrot.slane %v2984, 5
      %v3102 = vsel %vm975, %v3100, %v3101
      %v3103 = vrot.slane %v3101, 4
      %v3104 = vrot.slane %v2985, 5
      %v3105 = vsel %vm975, %v3103, %v3104
      %v3106 = vrot.slane %v2986, 5
      %v3107 = vrot.slane %v3106, 4
      %v3108 = vrot.slane %v2987, 5
      %v3109 = vsel %vm975, %v3107, %v3108
      %v3110 = vrot.slane %v3108, 4
      %v3111 = vrot.slane %v2988, 5
      %v3112 = vsel %vm975, %v3110, %v3111
      %v3113 = vrot.slane %v2989, 5
      %v3114 = vrot.slane %v3113, 4
      %v3115 = vrot.slane %v2990, 5
      %v3116 = vsel %vm975, %v3114, %v3115
      %v3117 = vrot.slane %v3115, 4
      %v3118 = vrot.slane %v2991, 5
      %v3119 = vsel %vm975, %v3117, %v3118
      %v3120 = vrot.slane %v2992, 5
      %v3121 = vrot.slane %v3120, 4
      %v3122 = vrot.slane %v2993, 5
      %v3123 = vsel %vm975, %v3121, %v3122
      %v3124 = vrot.slane %v3122, 4
      %v3125 = vrot.slane %v2994, 5
      %v3126 = vsel %vm975, %v3124, %v3125
      %v3127 = vrot.slane %v2995, 5
      %v3128 = vrot.slane %v3127, 4
      %v3129 = vrot.slane %v2996, 5
      %v3130 = vsel %vm975, %v3128, %v3129
      %v3131 = vrot.slane %v3129, 4
      %v3132 = vrot.slane %v2997, 5
      %v3133 = vsel %vm975, %v3131, %v3132
      %v3134 = vrot.slane %v2998, 5
      %v3135 = vrot.slane %v3134, 4
      %v3136 = vrot.slane %v2999, 5
      %v3137 = vsel %vm975, %v3135, %v3136
      %v3138 = vrot.slane %v3136, 4
      %v3139 = vrot.slane %v3000, 5
      %v3140 = vsel %vm975, %v3138, %v3139
      %v3141 = vrot.slane %v3001, 5
      %v3142 = vrot.slane %v3141, 4
      %v3143 = vrot.slane %v3002, 5
      %v3144 = vsel %vm975, %v3142, %v3143
      %v3145 = vrot.slane %v3143, 4
      %v3146 = vrot.slane %v3003, 5
      %v3147 = vsel %vm975, %v3145, %v3146
      %v3148 = vrot.slane %v3004, 5
      %v3149 = vrot.slane %v3148, 4
      %v3150 = vrot.slane %v3005, 5
      %v3151 = vsel %vm975, %v3149, %v3150
      %v3152 = vrot.slane %v3150, 4
      %v3153 = vrot.slane %v3006, 5
      %v3154 = vsel %vm975, %v3152, %v3153
      %v3155 = vrot.slane %v3007, 5
      %v3156 = vrot.slane %v3155, 4
      %v3157 = vrot.slane %v3008, 5
      %v3158 = vsel %vm975, %v3156, %v3157
      %v3159 = vrot.slane %v3157, 4
      %v3160 = vrot.slane %v3009, 5
      %v3161 = vsel %vm975, %v3159, %v3160
      %v3162 = vrot.slane %v3010, 5
      %v3163 = vrot.slane %v3162, 4
      %v3164 = vrot.slane %v3011, 5
      %v3165 = vsel %vm975, %v3163, %v3164
      %v3166 = vrot.slane %v3164, 4
      %v3167 = vrot.slane %v3012, 5
      %v3168 = vsel %vm975, %v3166, %v3167
      %v3169 = vrot.slane %v3013, 5
      %v3170 = vrot.slane %v3169, 4
      %v3171 = vrot.slane %v3014, 5
      %v3172 = vsel %vm975, %v3170, %v3171
      %v3173 = vrot.slane %v3171, 4
      %v3174 = vrot.slane %v3015, 5
      %v3175 = vsel %vm975, %v3173, %v3174
      %v3176 = vunpack.c.l.b16 %v3067
      %v3177 = vunpack.c.l.b16 %v3070
      %v3178 = vunpack.c.l.b16 %v3074
      %v3179 = vunpack.c.l.b16 %v3077
      %v3180 = vunpack.c.l.b16 %v3081
      %v3181 = vunpack.c.l.b16 %v3084
      %v3182 = vunpack.c.l.b16 %v3088
      %v3183 = vunpack.c.l.b16 %v3091
      %v3184 = vunpack.c.l.b16 %v3095
      %v3185 = vunpack.c.l.b16 %v3098
      %v3186 = vunpack.c.l.b16 %v3102
      %v3187 = vunpack.c.l.b16 %v3105
      %v3188 = vunpack.c.l.b16 %v3109
      %v3189 = vunpack.c.l.b16 %v3112
      %v3190 = vunpack.c.l.b16 %v3116
      %v3191 = vunpack.c.l.b16 %v3119
      %v3192 = vunpack.c.l.b16 %v3123
      %v3193 = vunpack.c.l.b16 %v3126
      %v3194 = vunpack.c.l.b16 %v3130
      %v3195 = vunpack.c.l.b16 %v3133
      %v3196 = vunpack.c.l.b16 %v3137
      %v3197 = vunpack.c.l.b16 %v3140
      %v3198 = vunpack.c.l.b16 %v3144
      %v3199 = vunpack.c.l.b16 %v3147
      %v3200 = vunpack.c.l.b16 %v3151
      %v3201 = vunpack.c.l.b16 %v3154
      %v3202 = vunpack.c.l.b16 %v3158
      %v3203 = vunpack.c.l.b16 %v3161
      %v3204 = vunpack.c.l.b16 %v3165
      %v3205 = vunpack.c.l.b16 %v3168
      %v3206 = vunpack.c.l.b16 %v3172
      %v3207 = vunpack.c.l.b16 %v3175
      %v3208 = vpack.c.b16 %v3177, %v3176
      %v3209 = vpack.c.b16 %v3179, %v3178
      %v3210 = vpack.c.b16 %v3181, %v3180
      %v3211 = vpack.c.b16 %v3183, %v3182
      %v3212 = vpack.c.b16 %v3185, %v3184
      %v3213 = vpack.c.b16 %v3187, %v3186
      %v3214 = vpack.c.b16 %v3189, %v3188
      %v3215 = vpack.c.b16 %v3191, %v3190
      %v3216 = vpack.c.b16 %v3193, %v3192
      %v3217 = vpack.c.b16 %v3195, %v3194
      %v3218 = vpack.c.b16 %v3197, %v3196
      %v3219 = vpack.c.b16 %v3199, %v3198
      %v3220 = vpack.c.b16 %v3201, %v3200
      %v3221 = vpack.c.b16 %v3203, %v3202
      %v3222 = vpack.c.b16 %v3205, %v3204
      %v3223 = vpack.c.b16 %v3207, %v3206
      %3224 = vrot.lane.b32.xlu0 %v3208, 32
      %v3225 = vpop.permute.xlu0 %3224
      %3226 = vrot.lane.b32.xlu0 %v3209, 32
      %v3227 = vpop.permute.xlu0 %3226
      %3228 = vrot.lane.b32.xlu0 %v3210, 32
      %v3229 = vpop.permute.xlu0 %3228
      %3230 = vrot.lane.b32.xlu0 %v3211, 32
      %v3231 = vpop.permute.xlu0 %3230
      %3232 = vrot.lane.b32.xlu0 %v3212, 32
      %v3233 = vpop.permute.xlu0 %3232
      %3234 = vrot.lane.b32.xlu0 %v3213, 32
      %v3235 = vpop.permute.xlu0 %3234
      %3236 = vrot.lane.b32.xlu0 %v3214, 32
      %v3237 = vpop.permute.xlu0 %3236
      %3238 = vrot.lane.b32.xlu0 %v3215, 32
      %v3239 = vpop.permute.xlu0 %3238
      %3240 = vrot.lane.b32.xlu0 %v3216, 32
      %v3241 = vpop.permute.xlu0 %3240
      %3242 = vrot.lane.b32.xlu0 %v3217, 32
      %v3243 = vpop.permute.xlu0 %3242
      %3244 = vrot.lane.b32.xlu0 %v3218, 32
      %v3245 = vpop.permute.xlu0 %3244
      %3246 = vrot.lane.b32.xlu0 %v3219, 32
      %v3247 = vpop.permute.xlu0 %3246
      %3248 = vrot.lane.b32.xlu0 %v3220, 32
      %v3249 = vpop.permute.xlu0 %3248
      %3250 = vrot.lane.b32.xlu0 %v3221, 32
      %v3251 = vpop.permute.xlu0 %3250
      %3252 = vrot.lane.b32.xlu0 %v3222, 32
      %v3253 = vpop.permute.xlu0 %3252
      %3254 = vrot.lane.b32.xlu0 %v3223, 32
      %v3255 = vpop.permute.xlu0 %3254
      %vm3272 = vcmask 294144
      %3273 = vst.msk [vmem:[#allocation2] sm:$0xff] %vm3272, %v3225
      %3274 = vst.msk [vmem:[#allocation2 + $0x8] sm:$0xff] %vm3272, %v3227
      %3275 = vst.msk [vmem:[#allocation2 + $0x10] sm:$0xff] %vm3272, %v3229
      %3276 = vst.msk [vmem:[#allocation2 + $0x18] sm:$0xff] %vm3272, %v3231
      %3277 = vst.msk [vmem:[#allocation2 + $0x20] sm:$0xff] %vm3272, %v3233
      %3278 = vst.msk [vmem:[#allocation2 + $0x28] sm:$0xff] %vm3272, %v3235
      %3279 = vst.msk [vmem:[#allocation2 + $0x30] sm:$0xff] %vm3272, %v3237
      %3280 = vst.msk [vmem:[#allocation2 + $0x38] sm:$0xff] %vm3272, %v3239
      %3281 = vst.msk [vmem:[#allocation2 + $0x40] sm:$0xff] %vm3272, %v3241
      %3282 = vst.msk [vmem:[#allocation2 + $0x48] sm:$0xff] %vm3272, %v3243
      %3283 = vst.msk [vmem:[#allocation2 + $0x50] sm:$0xff] %vm3272, %v3245
      %3284 = vst.msk [vmem:[#allocation2 + $0x58] sm:$0xff] %vm3272, %v3247
      %3285 = vst.msk [vmem:[#allocation2 + $0x60] sm:$0xff] %vm3272, %v3249
      %3286 = vst.msk [vmem:[#allocation2 + $0x68] sm:$0xff] %vm3272, %v3251
      %3287 = vst.msk [vmem:[#allocation2 + $0x70] sm:$0xff] %vm3272, %v3253
      %3288 = vst.msk [vmem:[#allocation2 + $0x78] sm:$0xff] %vm3272, %v3255
      %v3289 = vld [vmem:[#allocation2] sm:$0xff]
      %v3290 = vld [vmem:[#allocation2 + $0x8] sm:$0xff]
      %v3291 = vld [vmem:[#allocation2 + $0x10] sm:$0xff]
      %v3292 = vld [vmem:[#allocation2 + $0x18] sm:$0xff]
      %v3293 = vld [vmem:[#allocation2 + $0x20] sm:$0xff]
      %v3294 = vld [vmem:[#allocation2 + $0x28] sm:$0xff]
      %v3295 = vld [vmem:[#allocation2 + $0x30] sm:$0xff]
      %v3296 = vld [vmem:[#allocation2 + $0x38] sm:$0xff]
      %v3297 = vld [vmem:[#allocation2 + $0x40] sm:$0xff]
      %v3298 = vld [vmem:[#allocation2 + $0x48] sm:$0xff]
      %v3299 = vld [vmem:[#allocation2 + $0x50] sm:$0xff]
      %v3300 = vld [vmem:[#allocation2 + $0x58] sm:$0xff]
      %v3301 = vld [vmem:[#allocation2 + $0x60] sm:$0xff]
      %v3302 = vld [vmem:[#allocation2 + $0x68] sm:$0xff]
      %v3303 = vld [vmem:[#allocation2 + $0x70] sm:$0xff]
      %v3304 = vld [vmem:[#allocation2 + $0x78] sm:$0xff]
      %v3305 = vld [vmem:[%s1] sm:$0xf]
      %v3306 = vld [vmem:[%s1 + $0x4] sm:$0xf]
      %v3307 = vld [vmem:[%s1 + $0x8] sm:$0xf]
      %v3308 = vld [vmem:[%s1 + $0xc] sm:$0xf]
      %v3309 = vld [vmem:[%s1 + $0x10] sm:$0x3]
      %v3315 = vunpack.c.l.b16 %v3305
      %v3316 = vunpack.c.l.b16 %v3306
      %v3317 = vunpack.c.l.b16 %v3307
      %v3318 = vunpack.c.l.b16 %v3308
      %v3319 = vunpack.c.l.b16 %v3309
      %v3320 = vpack.c.b16 %v3316, %v3315
      %v3321 = vpack.c.b16 %v3318, %v3317
      %v3322 = vpack.c.b16 %v3319, %v3319
      %vm3325 = vcmask 293888
      %v3327 = vsel %vm3325, %v3289, 0
      %v3330 = vsel %vm3325, %v3290, 0
      %v3333 = vsel %vm3325, %v3291, 0
      %v3336 = vsel %vm3325, %v3292, 0
      %v3339 = vsel %vm3325, %v3293, 0
      %v3342 = vsel %vm3325, %v3294, 0
      %v3345 = vsel %vm3325, %v3295, 0
      %v3348 = vsel %vm3325, %v3296, 0
      %v3351 = vsel %vm3325, %v3297, 0
      %v3354 = vsel %vm3325, %v3298, 0
      %v3357 = vsel %vm3325, %v3299, 0
      %v3360 = vsel %vm3325, %v3300, 0
      %v3363 = vsel %vm3325, %v3301, 0
      %v3366 = vsel %vm3325, %v3302, 0
      %v3369 = vsel %vm3325, %v3303, 0
      %v3372 = vsel %vm3325, %v3304, 0
      %vm3374 = vcmask 1041408
      %v3376 = vsel %vm3374, %v3322, 0
      %3378 = vmatprep.subr.bf16.mxu0 0
      %3379 = vmatpush1.bf16.msra.mxu0 %v3320
      %3380 = vmatprep.subr.bf16.mxu0 0
      %3381 = vmatpush1.bf16.msra.mxu0 %v3321
      %3382 = vmatprep.subr.bf16.mxu0 0
      %3383 = vmatpush1.bf16.msra.mxu0 %v3376
      %3384 = vmatprep.subr.bf16.mxu0 0
      %3385 = vmatpush1.bf16.msra.mxu0 0
      %3386 = vmatprep.subr.bf16.mxu0 0
      %3387 = vmatpush1.bf16.msra.mxu0 0
      %3388 = vmatprep.subr.bf16.mxu0 0
      %3389 = vmatpush1.bf16.msra.mxu0 0
      %3390 = vmatprep.subr.bf16.mxu0 0
      %3391 = vmatpush1.bf16.msra.mxu0 0
      %3392 = vmatprep.subr.bf16.mxu0 0
      %3393 = vmatpush1.bf16.msra.mxu0 0
      %3394 = vmatprep.subr.bf16.mxu0 0
      %3395 = vmatpush1.bf16.msra.mxu0 0
      %3396 = vmatprep.subr.bf16.mxu0 0
      %3397 = vmatpush1.bf16.msra.mxu0 0
      %3398 = vmatprep.subr.bf16.mxu0 0
      %3399 = vmatpush1.bf16.msra.mxu0 0
      %3400 = vmatprep.subr.bf16.mxu0 0
      %3401 = vmatpush1.bf16.msra.mxu0 0
      %3402 = vmatprep.subr.bf16.mxu0 0
      %3403 = vmatpush1.bf16.msra.mxu0 0
      %3404 = vmatprep.subr.bf16.mxu0 0
      %3405 = vmatpush1.bf16.msra.mxu0 0
      %3406 = vmatprep.subr.bf16.mxu0 0
      %3407 = vmatpush1.bf16.msra.mxu0 0
      %3408 = vmatprep.subr.bf16.mxu0 0
      %3409 = vmatpush1.bf16.msra.mxu0 0
      %3410 = vmatprep.mubr.bf16.mxu0 0
      %3411 = vmatmul.mubr.bf16.gmra.mrb[0].mxu0 %v3327
      %v3412 = vpop.f32.mrb[0].mxu0
      %v3413 = vadd.f32 0.0, %v3412
      %v3414 = vpop.f32.mrb[0].mxu0
      %v3415 = vpop.f32.mrb[0].mxu0
      %v3416 = vadd.f32 0.0, %v3415
      %v3417 = vpop.f32.mrb[0].mxu0
      %3418 = vmatprep.mubr.bf16.mxu0 0
      %3419 = vmatmul.mubr.bf16.gmra.mrb[0].mxu0 %v3330
      %v3420 = vpop.f32.mrb[0].mxu0
      %v3421 = vadd.f32 0.0, %v3420
      %v3422 = vpop.f32.mrb[0].mxu0
      %v3423 = vpop.f32.mrb[0].mxu0
      %v3424 = vadd.f32 0.0, %v3423
      %v3425 = vpop.f32.mrb[0].mxu0
      %3426 = vmatprep.mubr.bf16.mxu0 0
      %3427 = vmatmul.mubr.bf16.gmra.mrb[0].mxu0 %v3333
      %v3428 = vpop.f32.mrb[0].mxu0
      %v3429 = vadd.f32 0.0, %v3428
      %v3430 = vpop.f32.mrb[0].mxu0
      %v3431 = vpop.f32.mrb[0].mxu0
      %v3432 = vadd.f32 0.0, %v3431
      %v3433 = vpop.f32.mrb[0].mxu0
      %3434 = vmatprep.mubr.bf16.mxu0 0
      %3435 = vmatmul.mubr.bf16.gmra.mrb[0].mxu0 %v3336
      %v3436 = vpop.f32.mrb[0].mxu0
      %v3437 = vadd.f32 0.0, %v3436
      %v3438 = vpop.f32.mrb[0].mxu0
      %v3439 = vpop.f32.mrb[0].mxu0
      %v3440 = vadd.f32 0.0, %v3439
      %v3441 = vpop.f32.mrb[0].mxu0
      %3442 = vmatprep.mubr.bf16.mxu0 0
      %3443 = vmatmul.mubr.bf16.gmra.mrb[0].mxu0 %v3339
      %v3444 = vpop.f32.mrb[0].mxu0
      %v3445 = vadd.f32 0.0, %v3444
      %v3446 = vpop.f32.mrb[0].mxu0
      %v3447 = vpop.f32.mrb[0].mxu0
      %v3448 = vadd.f32 0.0, %v3447
      %v3449 = vpop.f32.mrb[0].mxu0
      %3450 = vmatprep.mubr.bf16.mxu0 0
      %3451 = vmatmul.mubr.bf16.gmra.mrb[0].mxu0 %v3342
      %v3452 = vpop.f32.mrb[0].mxu0
      %v3453 = vadd.f32 0.0, %v3452
      %v3454 = vpop.f32.mrb[0].mxu0
      %v3455 = vpop.f32.mrb[0].mxu0
      %v3456 = vadd.f32 0.0, %v3455
      %v3457 = vpop.f32.mrb[0].mxu0
      %3458 = vmatprep.mubr.bf16.mxu0 0
      %3459 = vmatmul.mubr.bf16.gmra.mrb[0].mxu0 %v3345
      %v3460 = vpop.f32.mrb[0].mxu0
      %v3461 = vadd.f32 0.0, %v3460
      %v3462 = vpop.f32.mrb[0].mxu0
      %v3463 = vpop.f32.mrb[0].mxu0
      %v3464 = vadd.f32 0.0, %v3463
      %v3465 = vpop.f32.mrb[0].mxu0
      %3466 = vmatprep.mubr.bf16.mxu0 0
      %3467 = vmatmul.mubr.bf16.gmra.mrb[0].mxu0 %v3348
      %v3468 = vpop.f32.mrb[0].mxu0
      %v3469 = vadd.f32 0.0, %v3468
      %v3470 = vpop.f32.mrb[0].mxu0
      %v3471 = vpop.f32.mrb[0].mxu0
      %v3472 = vadd.f32 0.0, %v3471
      %v3473 = vpop.f32.mrb[0].mxu0
      %3474 = vmatprep.mubr.bf16.mxu0 0
      %3475 = vmatmul.mubr.bf16.gmra.mrb[0].mxu0 %v3351
      %v3476 = vpop.f32.mrb[0].mxu0
      %v3477 = vadd.f32 0.0, %v3476
      %v3478 = vpop.f32.mrb[0].mxu0
      %v3479 = vpop.f32.mrb[0].mxu0
      %v3480 = vadd.f32 0.0, %v3479
      %v3481 = vpop.f32.mrb[0].mxu0
      %3482 = vmatprep.mubr.bf16.mxu0 0
      %3483 = vmatmul.mubr.bf16.gmra.mrb[0].mxu0 %v3354
      %v3484 = vpop.f32.mrb[0].mxu0
      %v3485 = vadd.f32 0.0, %v3484
      %v3486 = vpop.f32.mrb[0].mxu0
      %v3487 = vpop.f32.mrb[0].mxu0
      %v3488 = vadd.f32 0.0, %v3487
      %v3489 = vpop.f32.mrb[0].mxu0
      %3490 = vmatprep.mubr.bf16.mxu0 0
      %3491 = vmatmul.mubr.bf16.gmra.mrb[0].mxu0 %v3357
      %v3492 = vpop.f32.mrb[0].mxu0
      %v3493 = vadd.f32 0.0, %v3492
      %v3494 = vpop.f32.mrb[0].mxu0
      %v3495 = vpop.f32.mrb[0].mxu0
      %v3496 = vadd.f32 0.0, %v3495
      %v3497 = vpop.f32.mrb[0].mxu0
      %3498 = vmatprep.mubr.bf16.mxu0 0
      %3499 = vmatmul.mubr.bf16.gmra.mrb[0].mxu0 %v3360
      %v3500 = vpop.f32.mrb[0].mxu0
      %v3501 = vadd.f32 0.0, %v3500
      %v3502 = vpop.f32.mrb[0].mxu0
      %v3503 = vpop.f32.mrb[0].mxu0
      %v3504 = vadd.f32 0.0, %v3503
      %v3505 = vpop.f32.mrb[0].mxu0
      %3506 = vmatprep.mubr.bf16.mxu0 0
      %3507 = vmatmul.mubr.bf16.gmra.mrb[0].mxu0 %v3363
      %v3508 = vpop.f32.mrb[0].mxu0
      %v3509 = vadd.f32 0.0, %v3508
      %v3510 = vpop.f32.mrb[0].mxu0
      %v3511 = vpop.f32.mrb[0].mxu0
      %v3512 = vadd.f32 0.0, %v3511
      %v3513 = vpop.f32.mrb[0].mxu0
      %3514 = vmatprep.mubr.bf16.mxu0 0
      %3515 = vmatmul.mubr.bf16.gmra.mrb[0].mxu0 %v3366
      %v3516 = vpop.f32.mrb[0].mxu0
      %v3517 = vadd.f32 0.0, %v3516
      %v3518 = vpop.f32.mrb[0].mxu0
      %v3519 = vpop.f32.mrb[0].mxu0
      %v3520 = vadd.f32 0.0, %v3519
      %v3521 = vpop.f32.mrb[0].mxu0
      %3522 = vmatprep.mubr.bf16.mxu0 0
      %3523 = vmatmul.mubr.bf16.gmra.mrb[0].mxu0 %v3369
      %v3524 = vpop.f32.mrb[0].mxu0
      %v3525 = vadd.f32 0.0, %v3524
      %v3526 = vpop.f32.mrb[0].mxu0
      %v3527 = vpop.f32.mrb[0].mxu0
      %v3528 = vadd.f32 0.0, %v3527
      %v3529 = vpop.f32.mrb[0].mxu0
      %3530 = vmatprep.mubr.bf16.mxu0 0
      %3531 = vmatmul.mubr.bf16.gmra.mrb[0].mxu0 %v3372
      %v3532 = vpop.f32.mrb[0].mxu0
      %v3533 = vadd.f32 0.0, %v3532
      %v3534 = vpop.f32.mrb[0].mxu0
      %v3535 = vpop.f32.mrb[0].mxu0
      %v3536 = vadd.f32 0.0, %v3535
      %v3537 = vpop.f32.mrb[0].mxu0
      %3538 = vdwg.mxu0
      %v3555 = vrot.slane %v3421, 7
      %vm3556 = vcmask 1041409
      %v3557 = vsel %vm3556, %v3555, %v3413
      %v3558 = vrot.slane %v3429, 6
      %vm3559 = vcmask 1042434
      %v3560 = vsel %vm3559, %v3558, %v3557
      %v3561 = vrot.slane %v3437, 5
      %vm3562 = vcmask 1043459
      %v3563 = vsel %vm3562, %v3561, %v3560
      %v3564 = vrot.slane %v3445, 4
      %vm3565 = vcmask 1044484
      %v3566 = vsel %vm3565, %v3564, %v3563
      %v3567 = vrot.slane %v3453, 3
      %vm3568 = vcmask 1045509
      %v3569 = vsel %vm3568, %v3567, %v3566
      %v3570 = vrot.slane %v3461, 2
      %vm3571 = vcmask 1046534
      %v3572 = vsel %vm3571, %v3570, %v3569
      %v3573 = vrot.slane %v3469, 1
      %vm3574 = vcmask 1047559
      %v3575 = vsel %vm3574, %v3573, %v3572
      %v3576 = vrot.slane %v3485, 7
      %v3577 = vsel %vm3556, %v3576, %v3477
      %v3578 = vrot.slane %v3493, 6
      %v3579 = vsel %vm3559, %v3578, %v3577
      %v3580 = vrot.slane %v3501, 5
      %v3581 = vsel %vm3562, %v3580, %v3579
      %v3582 = vrot.slane %v3509, 4
      %v3583 = vsel %vm3565, %v3582, %v3581
      %v3584 = vrot.slane %v3517, 3
      %v3585 = vsel %vm3568, %v3584, %v3583
      %v3586 = vrot.slane %v3525, 2
      %v3587 = vsel %vm3571, %v3586, %v3585
      %v3588 = vrot.slane %v3533, 1
      %v3589 = vsel %vm3574, %v3588, %v3587
      %vm3592 = vcmask 64512
      %3593 = vst.msk [vmem:[%s177] sm:$0xff] %vm3592, %v3575
      %3594 = vst.msk [vmem:[%s177 + $0x8] sm:$0xff] %vm3592, %v3589
      %v3595 = vsel %vm3559, %v3555, %v3413
      %v3596 = vsel %vm3562, %v3558, %v3595
      %v3597 = vsel %vm3565, %v3561, %v3596
      %v3598 = vsel %vm3568, %v3564, %v3597
      %v3599 = vsel %vm3571, %v3567, %v3598
      %v3600 = vsel %vm3574, %v3570, %v3599
      %v3601 = vsel %vm3556, %v3477, %v3573
      %v3602 = vsel %vm3559, %v3576, %v3601
      %v3603 = vsel %vm3562, %v3578, %v3602
      %v3604 = vsel %vm3565, %v3580, %v3603
      %v3605 = vsel %vm3568, %v3582, %v3604
      %v3606 = vsel %vm3571, %v3584, %v3605
      %v3607 = vsel %vm3574, %v3586, %v3606
      %3608 = vrot.lane.b32.xlu0 %v3600, 8
      %v3609 = vpop.permute.xlu0 %3608
      %3610 = vrot.lane.b32.xlu0 %v3607, 8
      %v3611 = vpop.permute.xlu0 %3610
      %3612 = vrot.lane.b32.xlu0 %v3588, 8
      %v3613 = vpop.permute.xlu0 %3612
      %vm3617 = vcmask 130113
      %3618 = vst.msk [vmem:[%s177 - $0x1] sm:$0xfe] %vm3617, %v3609
      %vm3619 = vcmask 130112
      %3620 = vst.msk [vmem:[%s177 + $0x7] sm:$0xff] %vm3619, %v3611
      %vm3621 = vcmask 122944
      %3622 = vst.msk [vmem:[%s177 + $0xf] sm:$0x1] %vm3621, %v3613
      %v3623 = vsel %vm3562, %v3555, %v3413
      %v3624 = vsel %vm3565, %v3558, %v3623
      %v3625 = vsel %vm3568, %v3561, %v3624
      %v3626 = vsel %vm3571, %v3564, %v3625
      %v3627 = vsel %vm3574, %v3567, %v3626
      %v3628 = vsel %vm3556, %v3573, %v3570
      %v3629 = vsel %vm3559, %v3477, %v3628
      %v3630 = vsel %vm3562, %v3576, %v3629
      %v3631 = vsel %vm3565, %v3578, %v3630
      %v3632 = vsel %vm3568, %v3580, %v3631
      %v3633 = vsel %vm3571, %v3582, %v3632
      %v3634 = vsel %vm3574, %v3584, %v3633
      %v3635 = vsel %vm3556, %v3588, %v3586
      %3636 = vrot.lane.b32.xlu0 %v3627, 16
      %v3637 = vpop.permute.xlu0 %3636
      %3638 = vrot.lane.b32.xlu0 %v3634, 16
      %v3639 = vpop.permute.xlu0 %3638
      %3640 = vrot.lane.b32.xlu0 %v3635, 16
      %v3641 = vpop.permute.xlu0 %3640
      %vm3645 = vcmask 195714
      %3646 = vst.msk [vmem:[%s177 - $0x2] sm:$0xfc] %vm3645, %v3637
      %vm3647 = vcmask 195712
      %3648 = vst.msk [vmem:[%s177 + $0x6] sm:$0xff] %vm3647, %v3639
      %vm3649 = vcmask 189568
      %3650 = vst.msk [vmem:[%s177 + $0xe] sm:$0x3] %vm3649, %v3641
      %v3651 = vsel %vm3565, %v3555, %v3413
      %v3652 = vsel %vm3568, %v3558, %v3651
      %v3653 = vsel %vm3571, %v3561, %v3652
      %v3654 = vsel %vm3574, %v3564, %v3653
      %v3655 = vsel %vm3556, %v3570, %v3567
      %v3656 = vsel %vm3559, %v3573, %v3655
      %v3657 = vsel %vm3562, %v3477, %v3656
      %v3658 = vsel %vm3565, %v3576, %v3657
      %v3659 = vsel %vm3568, %v3578, %v3658
      %v3660 = vsel %vm3571, %v3580, %v3659
      %v3661 = vsel %vm3574, %v3582, %v3660
      %v3662 = vsel %vm3556, %v3586, %v3584
      %v3663 = vsel %vm3559, %v3588, %v3662
      %3664 = vrot.lane.b32.xlu0 %v3654, 24
      %v3665 = vpop.permute.xlu0 %3664
      %3666 = vrot.lane.b32.xlu0 %v3661, 24
      %v3667 = vpop.permute.xlu0 %3666
      %3668 = vrot.lane.b32.xlu0 %v3663, 24
      %v3669 = vpop.permute.xlu0 %3668
      %vm3673 = vcmask 261315
      %3674 = vst.msk [vmem:[%s177 - $0x3] sm:$0xf8] %vm3673, %v3665
      %vm3675 = vcmask 261312
      %3676 = vst.msk [vmem:[%s177 + $0x5] sm:$0xff] %vm3675, %v3667
      %vm3677 = vcmask 256192
      %3678 = vst.msk [vmem:[%s177 + $0xd] sm:$0x7] %vm3677, %v3669
      %v3679 = vsel %vm3568, %v3555, %v3413
      %v3680 = vsel %vm3571, %v3558, %v3679
      %v3681 = vsel %vm3574, %v3561, %v3680
      %v3682 = vsel %vm3556, %v3567, %v3564
      %v3683 = vsel %vm3559, %v3570, %v3682
      %v3684 = vsel %vm3562, %v3573, %v3683
      %v3685 = vsel %vm3565, %v3477, %v3684
      %v3686 = vsel %vm3568, %v3576, %v3685
      %v3687 = vsel %vm3571, %v3578, %v3686
      %v3688 = vsel %vm3574, %v3580, %v3687
      %v3689 = vsel %vm3556, %v3584, %v3582
      %v3690 = vsel %vm3559, %v3586, %v3689
      %v3691 = vsel %vm3562, %v3588, %v3690
      %3692 = vrot.lane.b32.xlu0 %v3681, 32
      %v3693 = vpop.permute.xlu0 %3692
      %3694 = vrot.lane.b32.xlu0 %v3688, 32
      %v3695 = vpop.permute.xlu0 %3694
      %3696 = vrot.lane.b32.xlu0 %v3691, 32
      %v3697 = vpop.permute.xlu0 %3696
      %vm3701 = vcmask 326916
      %3702 = vst.msk [vmem:[%s177 - $0x4] sm:$0xf0] %vm3701, %v3693
      %vm3703 = vcmask 326912
      %3704 = vst.msk [vmem:[%s177 + $0x4] sm:$0xff] %vm3703, %v3695
      %vm3705 = vcmask 322816
      %3706 = vst.msk [vmem:[%s177 + $0xc] sm:$0xf] %vm3705, %v3697
      %v3707 = vsel %vm3571, %v3555, %v3413
      %v3708 = vsel %vm3574, %v3558, %v3707
      %v3709 = vsel %vm3556, %v3564, %v3561
      %v3710 = vsel %vm3559, %v3567, %v3709
      %v3711 = vsel %vm3562, %v3570, %v3710
      %v3712 = vsel %vm3565, %v3573, %v3711
      %v3713 = vsel %vm3568, %v3477, %v3712
      %v3714 = vsel %vm3571, %v3576, %v3713
      %v3715 = vsel %vm3574, %v3578, %v3714
      %v3716 = vsel %vm3556, %v3582, %v3580
      %v3717 = vsel %vm3559, %v3584, %v3716
      %v3718 = vsel %vm3562, %v3586, %v3717
      %v3719 = vsel %vm3565, %v3588, %v3718
      %3720 = vrot.lane.b32.xlu0 %v3708, 40
      %v3721 = vpop.permute.xlu0 %3720
      %3722 = vrot.lane.b32.xlu0 %v3715, 40
      %v3723 = vpop.permute.xlu0 %3722
      %3724 = vrot.lane.b32.xlu0 %v3719, 40
      %v3725 = vpop.permute.xlu0 %3724
      %vm3729 = vcmask 392517
      %3730 = vst.msk [vmem:[%s177 - $0x5] sm:$0xe0] %vm3729, %v3721
      %vm3731 = vcmask 392512
      %3732 = vst.msk [vmem:[%s177 + $0x3] sm:$0xff] %vm3731, %v3723
      %vm3733 = vcmask 389440
      %3734 = vst.msk [vmem:[%s177 + $0xb] sm:$0x1f] %vm3733, %v3725
      %v3735 = vsel %vm3574, %v3555, %v3413
      %v3736 = vsel %vm3556, %v3561, %v3558
      %v3737 = vsel %vm3559, %v3564, %v3736
      %v3738 = vsel %vm3562, %v3567, %v3737
      %v3739 = vsel %vm3565, %v3570, %v3738
      %v3740 = vsel %vm3568, %v3573, %v3739
      %v3741 = vsel %vm3571, %v3477, %v3740
      %v3742 = vsel %vm3574, %v3576, %v3741
      %v3743 = vsel %vm3556, %v3580, %v3578
      %v3744 = vsel %vm3559, %v3582, %v3743
      %v3745 = vsel %vm3562, %v3584, %v3744
      %v3746 = vsel %vm3565, %v3586, %v3745
      %v3747 = vsel %vm3568, %v3588, %v3746
      %3748 = vrot.lane.b32.xlu0 %v3735, 48
      %v3749 = vpop.permute.xlu0 %3748
      %3750 = vrot.lane.b32.xlu0 %v3742, 48
      %v3751 = vpop.permute.xlu0 %3750
      %3752 = vrot.lane.b32.xlu0 %v3747, 48
      %v3753 = vpop.permute.xlu0 %3752
      %vm3757 = vcmask 458118
      %3758 = vst.msk [vmem:[%s177 - $0x6] sm:$0xc0] %vm3757, %v3749
      %vm3759 = vcmask 458112
      %3760 = vst.msk [vmem:[%s177 + $0x2] sm:$0xff] %vm3759, %v3751
      %vm3761 = vcmask 456064
      %3762 = vst.msk [vmem:[%s177 + $0xa] sm:$0x3f] %vm3761, %v3753
      %v3763 = vsel %vm3556, %v3558, %v3555
      %v3764 = vsel %vm3559, %v3561, %v3763
      %v3765 = vsel %vm3562, %v3564, %v3764
      %v3766 = vsel %vm3565, %v3567, %v3765
      %v3767 = vsel %vm3568, %v3570, %v3766
      %v3768 = vsel %vm3571, %v3573, %v3767
      %v3769 = vsel %vm3574, %v3477, %v3768
      %v3770 = vsel %vm3556, %v3578, %v3576
      %v3771 = vsel %vm3559, %v3580, %v3770
      %v3772 = vsel %vm3562, %v3582, %v3771
      %v3773 = vsel %vm3565, %v3584, %v3772
      %v3774 = vsel %vm3568, %v3586, %v3773
      %v3775 = vsel %vm3571, %v3588, %v3774
      %3776 = vrot.lane.b32.xlu0 %v3413, 56
      %v3777 = vpop.permute.xlu0 %3776
      %3778 = vrot.lane.b32.xlu0 %v3769, 56
      %v3779 = vpop.permute.xlu0 %3778
      %3780 = vrot.lane.b32.xlu0 %v3775, 56
      %v3781 = vpop.permute.xlu0 %3780
      %vm3785 = vcmask 523719
      %3786 = vst.msk [vmem:[%s177 - $0x7] sm:$0x80] %vm3785, %v3777
      %vm3787 = vcmask 523712
      %3788 = vst.msk [vmem:[%s177 + $0x1] sm:$0xff] %vm3787, %v3779
      %vm3789 = vcmask 522688
      %3790 = vst.msk [vmem:[%s177 + $0x9] sm:$0x7f] %vm3789, %v3781
      %v3807 = vrot.slane %v3424, 7
      %v3808 = vsel %vm3556, %v3807, %v3416
      %v3809 = vrot.slane %v3432, 6
      %v3810 = vsel %vm3559, %v3809, %v3808
      %v3811 = vrot.slane %v3440, 5
      %v3812 = vsel %vm3562, %v3811, %v3810
      %v3813 = vrot.slane %v3448, 4
      %v3814 = vsel %vm3565, %v3813, %v3812
      %v3815 = vrot.slane %v3456, 3
      %v3816 = vsel %vm3568, %v3815, %v3814
      %v3817 = vrot.slane %v3464, 2
      %v3818 = vsel %vm3571, %v3817, %v3816
      %v3819 = vrot.slane %v3472, 1
      %v3820 = vsel %vm3574, %v3819, %v3818
      %v3821 = vrot.slane %v3488, 7
      %v3822 = vsel %vm3556, %v3821, %v3480
      %v3823 = vrot.slane %v3496, 6
      %v3824 = vsel %vm3559, %v3823, %v3822
      %v3825 = vrot.slane %v3504, 5
      %v3826 = vsel %vm3562, %v3825, %v3824
      %v3827 = vrot.slane %v3512, 4
      %v3828 = vsel %vm3565, %v3827, %v3826
      %v3829 = vrot.slane %v3520, 3
      %v3830 = vsel %vm3568, %v3829, %v3828
      %v3831 = vrot.slane %v3528, 2
      %v3832 = vsel %vm3571, %v3831, %v3830
      %v3833 = vrot.slane %v3536, 1
      %v3834 = vsel %vm3574, %v3833, %v3832
      %3835 = vrot.lane.b32.xlu0 %v3820, 64
      %v3836 = vpop.permute.xlu0 %3835
      %3837 = vrot.lane.b32.xlu0 %v3834, 64
      %v3838 = vpop.permute.xlu0 %3837
      %vm3841 = vcmask 589312
      %3842 = vst.msk [vmem:[%s177] sm:$0xff] %vm3841, %v3836
      %3843 = vst.msk [vmem:[%s177 + $0x8] sm:$0xff] %vm3841, %v3838
      %v3844 = vsel %vm3559, %v3807, %v3416
      %v3845 = vsel %vm3562, %v3809, %v3844
      %v3846 = vsel %vm3565, %v3811, %v3845
      %v3847 = vsel %vm3568, %v3813, %v3846
      %v3848 = vsel %vm3571, %v3815, %v3847
      %v3849 = vsel %vm3574, %v3817, %v3848
      %v3850 = vsel %vm3556, %v3480, %v3819
      %v3851 = vsel %vm3559, %v3821, %v3850
      %v3852 = vsel %vm3562, %v3823, %v3851
      %v3853 = vsel %vm3565, %v3825, %v3852
      %v3854 = vsel %vm3568, %v3827, %v3853
      %v3855 = vsel %vm3571, %v3829, %v3854
      %v3856 = vsel %vm3574, %v3831, %v3855
      %3857 = vrot.lane.b32.xlu0 %v3849, 72
      %v3858 = vpop.permute.xlu0 %3857
      %3859 = vrot.lane.b32.xlu0 %v3856, 72
      %v3860 = vpop.permute.xlu0 %3859
      %3861 = vrot.lane.b32.xlu0 %v3833, 72
      %v3862 = vpop.permute.xlu0 %3861
      %vm3866 = vcmask 654913
      %3867 = vst.msk [vmem:[%s177 - $0x1] sm:$0xfe] %vm3866, %v3858
      %vm3868 = vcmask 654912
      %3869 = vst.msk [vmem:[%s177 + $0x7] sm:$0xff] %vm3868, %v3860
      %vm3870 = vcmask 647744
      %3871 = vst.msk [vmem:[%s177 + $0xf] sm:$0x1] %vm3870, %v3862
      %v3872 = vsel %vm3562, %v3807, %v3416
      %v3873 = vsel %vm3565, %v3809, %v3872
      %v3874 = vsel %vm3568, %v3811, %v3873
      %v3875 = vsel %vm3571, %v3813, %v3874
      %v3876 = vsel %vm3574, %v3815, %v3875
      %v3877 = vsel %vm3556, %v3819, %v3817
      %v3878 = vsel %vm3559, %v3480, %v3877
      %v3879 = vsel %vm3562, %v3821, %v3878
      %v3880 = vsel %vm3565, %v3823, %v3879
      %v3881 = vsel %vm3568, %v3825, %v3880
      %v3882 = vsel %vm3571, %v3827, %v3881
      %v3883 = vsel %vm3574, %v3829, %v3882
      %v3884 = vsel %vm3556, %v3833, %v3831
      %3885 = vrot.lane.b32.xlu0 %v3876, 80
      %v3886 = vpop.permute.xlu0 %3885
      %3887 = vrot.lane.b32.xlu0 %v3883, 80
      %v3888 = vpop.permute.xlu0 %3887
      %3889 = vrot.lane.b32.xlu0 %v3884, 80
      %v3890 = vpop.permute.xlu0 %3889
      %vm3894 = vcmask 720514
      %3895 = vst.msk [vmem:[%s177 - $0x2] sm:$0xfc] %vm3894, %v3886
      %vm3896 = vcmask 720512
      %3897 = vst.msk [vmem:[%s177 + $0x6] sm:$0xff] %vm3896, %v3888
      %vm3898 = vcmask 714368
      %3899 = vst.msk [vmem:[%s177 + $0xe] sm:$0x3] %vm3898, %v3890
      %v3900 = vsel %vm3565, %v3807, %v3416
      %v3901 = vsel %vm3568, %v3809, %v3900
      %v3902 = vsel %vm3571, %v3811, %v3901
      %v3903 = vsel %vm3574, %v3813, %v3902
      %v3904 = vsel %vm3556, %v3817, %v3815
      %v3905 = vsel %vm3559, %v3819, %v3904
      %v3906 = vsel %vm3562, %v3480, %v3905
      %v3907 = vsel %vm3565, %v3821, %v3906
      %v3908 = vsel %vm3568, %v3823, %v3907
      %v3909 = vsel %vm3571, %v3825, %v3908
      %v3910 = vsel %vm3574, %v3827, %v3909
      %v3911 = vsel %vm3556, %v3831, %v3829
      %v3912 = vsel %vm3559, %v3833, %v3911
      %3913 = vrot.lane.b32.xlu0 %v3903, 88
      %v3914 = vpop.permute.xlu0 %3913
      %3915 = vrot.lane.b32.xlu0 %v3910, 88
      %v3916 = vpop.permute.xlu0 %3915
      %3917 = vrot.lane.b32.xlu0 %v3912, 88
      %v3918 = vpop.permute.xlu0 %3917
      %vm3922 = vcmask 786115
      %3923 = vst.msk [vmem:[%s177 - $0x3] sm:$0xf8] %vm3922, %v3914
      %vm3924 = vcmask 786112
      %3925 = vst.msk [vmem:[%s177 + $0x5] sm:$0xff] %vm3924, %v3916
      %vm3926 = vcmask 780992
      %3927 = vst.msk [vmem:[%s177 + $0xd] sm:$0x7] %vm3926, %v3918
      %v3928 = vsel %vm3568, %v3807, %v3416
      %v3929 = vsel %vm3571, %v3809, %v3928
      %v3930 = vsel %vm3574, %v3811, %v3929
      %v3931 = vsel %vm3556, %v3815, %v3813
      %v3932 = vsel %vm3559, %v3817, %v3931
      %v3933 = vsel %vm3562, %v3819, %v3932
      %v3934 = vsel %vm3565, %v3480, %v3933
      %v3935 = vsel %vm3568, %v3821, %v3934
      %v3936 = vsel %vm3571, %v3823, %v3935
      %v3937 = vsel %vm3574, %v3825, %v3936
      %v3938 = vsel %vm3556, %v3829, %v3827
      %v3939 = vsel %vm3559, %v3831, %v3938
      %v3940 = vsel %vm3562, %v3833, %v3939
      %3941 = vrot.lane.b32.xlu0 %v3930, 96
      %v3942 = vpop.permute.xlu0 %3941
      %3943 = vrot.lane.b32.xlu0 %v3937, 96
      %v3944 = vpop.permute.xlu0 %3943
      %3945 = vrot.lane.b32.xlu0 %v3940, 96
      %v3946 = vpop.permute.xlu0 %3945
      %vm3950 = vcmask 851716
      %3951 = vst.msk [vmem:[%s177 - $0x4] sm:$0xf0] %vm3950, %v3942
      %vm3952 = vcmask 851712
      %3953 = vst.msk [vmem:[%s177 + $0x4] sm:$0xff] %vm3952, %v3944
      %vm3954 = vcmask 847616
      %3955 = vst.msk [vmem:[%s177 + $0xc] sm:$0xf] %vm3954, %v3946
      %v3956 = vsel %vm3571, %v3807, %v3416
      %v3957 = vsel %vm3574, %v3809, %v3956
      %v3958 = vsel %vm3556, %v3813, %v3811
      %v3959 = vsel %vm3559, %v3815, %v3958
      %v3960 = vsel %vm3562, %v3817, %v3959
      %v3961 = vsel %vm3565, %v3819, %v3960
      %v3962 = vsel %vm3568, %v3480, %v3961
      %v3963 = vsel %vm3571, %v3821, %v3962
      %v3964 = vsel %vm3574, %v3823, %v3963
      %v3965 = vsel %vm3556, %v3827, %v3825
      %v3966 = vsel %vm3559, %v3829, %v3965
      %v3967 = vsel %vm3562, %v3831, %v3966
      %v3968 = vsel %vm3565, %v3833, %v3967
      %3969 = vrot.lane.b32.xlu0 %v3957, 104
      %v3970 = vpop.permute.xlu0 %3969
      %3971 = vrot.lane.b32.xlu0 %v3964, 104
      %v3972 = vpop.permute.xlu0 %3971
      %3973 = vrot.lane.b32.xlu0 %v3968, 104
      %v3974 = vpop.permute.xlu0 %3973
      %vm3978 = vcmask 917317
      %3979 = vst.msk [vmem:[%s177 - $0x5] sm:$0xe0] %vm3978, %v3970
      %vm3980 = vcmask 917312
      %3981 = vst.msk [vmem:[%s177 + $0x3] sm:$0xff] %vm3980, %v3972
      %vm3982 = vcmask 914240
      %3983 = vst.msk [vmem:[%s177 + $0xb] sm:$0x1f] %vm3982, %v3974
      %v3984 = vsel %vm3574, %v3807, %v3416
      %v3985 = vsel %vm3556, %v3811, %v3809
      %v3986 = vsel %vm3559, %v3813, %v3985
      %v3987 = vsel %vm3562, %v3815, %v3986
      %v3988 = vsel %vm3565, %v3817, %v3987
      %v3989 = vsel %vm3568, %v3819, %v3988
      %v3990 = vsel %vm3571, %v3480, %v3989
      %v3991 = vsel %vm3574, %v3821, %v3990
      %v3992 = vsel %vm3556, %v3825, %v3823
      %v3993 = vsel %vm3559, %v3827, %v3992
      %v3994 = vsel %vm3562, %v3829, %v3993
      %v3995 = vsel %vm3565, %v3831, %v3994
      %v3996 = vsel %vm3568, %v3833, %v3995
      %3997 = vrot.lane.b32.xlu0 %v3984, 112
      %v3998 = vpop.permute.xlu0 %3997
      %3999 = vrot.lane.b32.xlu0 %v3991, 112
      %v4000 = vpop.permute.xlu0 %3999
      %4001 = vrot.lane.b32.xlu0 %v3996, 112
      %v4002 = vpop.permute.xlu0 %4001
      %vm4006 = vcmask 982918
      %4007 = vst.msk [vmem:[%s177 - $0x6] sm:$0xc0] %vm4006, %v3998
      %vm4008 = vcmask 982912
      %4009 = vst.msk [vmem:[%s177 + $0x2] sm:$0xff] %vm4008, %v4000
      %vm4010 = vcmask 980864
      %4011 = vst.msk [vmem:[%s177 + $0xa] sm:$0x3f] %vm4010, %v4002
      %v4012 = vsel %vm3556, %v3809, %v3807
      %v4013 = vsel %vm3559, %v3811, %v4012
      %v4014 = vsel %vm3562, %v3813, %v4013
      %v4015 = vsel %vm3565, %v3815, %v4014
      %v4016 = vsel %vm3568, %v3817, %v4015
      %v4017 = vsel %vm3571, %v3819, %v4016
      %v4018 = vsel %vm3574, %v3480, %v4017
      %v4019 = vsel %vm3556, %v3823, %v3821
      %v4020 = vsel %vm3559, %v3825, %v4019
      %v4021 = vsel %vm3562, %v3827, %v4020
      %v4022 = vsel %vm3565, %v3829, %v4021
      %v4023 = vsel %vm3568, %v3831, %v4022
      %v4024 = vsel %vm3571, %v3833, %v4023
      %4025 = vrot.lane.b32.xlu0 %v3416, 120
      %v4026 = vpop.permute.xlu0 %4025
      %4027 = vrot.lane.b32.xlu0 %v4018, 120
      %v4028 = vpop.permute.xlu0 %4027
      %4029 = vrot.lane.b32.xlu0 %v4024, 120
      %v4030 = vpop.permute.xlu0 %4029
      %vm4034 = vcmask 1048519
      %4035 = vst.msk [vmem:[%s177 - $0x7] sm:$0x80] %vm4034, %v4026
      %vm4036 = vcmask 1048512
      %4037 = vst.msk [vmem:[%s177 + $0x1] sm:$0xff] %vm4036, %v4028
      %vm4038 = vcmask 1047488
      %4039 = vst.msk [vmem:[%s177 + $0x9] sm:$0x7f] %vm4038, %v4030
      %v4040 = vsel %vm3592, %v3413, 0.0
      %v4041 = vsel %vm3592, %v3416, 0.0
      %v4042 = vadd.f32 %v4040, %v4041
      %v4043 = vsel %vm3592, %v3421, 0.0
      %v4044 = vadd.f32 %v4042, %v4043
      %v4045 = vsel %vm3592, %v3424, 0.0
      %v4046 = vadd.f32 %v4044, %v4045
      %v4047 = vsel %vm3592, %v3429, 0.0
      %v4048 = vadd.f32 %v4046, %v4047
      %v4049 = vsel %vm3592, %v3432, 0.0
      %v4050 = vadd.f32 %v4048, %v4049
      %v4051 = vsel %vm3592, %v3437, 0.0
      %v4052 = vadd.f32 %v4050, %v4051
      %v4053 = vsel %vm3592, %v3440, 0.0
      %v4054 = vadd.f32 %v4052, %v4053
      %v4055 = vsel %vm3592, %v3445, 0.0
      %v4056 = vadd.f32 %v4054, %v4055
      %v4057 = vsel %vm3592, %v3448, 0.0
      %v4058 = vadd.f32 %v4056, %v4057
      %v4059 = vsel %vm3592, %v3453, 0.0
      %v4060 = vadd.f32 %v4058, %v4059
      %v4061 = vsel %vm3592, %v3456, 0.0
      %v4062 = vadd.f32 %v4060, %v4061
      %v4063 = vsel %vm3592, %v3461, 0.0
      %v4064 = vadd.f32 %v4062, %v4063
      %v4065 = vsel %vm3592, %v3464, 0.0
      %v4066 = vadd.f32 %v4064, %v4065
      %v4067 = vsel %vm3592, %v3469, 0.0
      %v4068 = vadd.f32 %v4066, %v4067
      %v4069 = vsel %vm3592, %v3472, 0.0
      %v4070 = vadd.f32 %v4068, %v4069
      %v4071 = vsel %vm3592, %v3477, 0.0
      %v4072 = vadd.f32 %v4070, %v4071
      %v4073 = vsel %vm3592, %v3480, 0.0
      %v4074 = vadd.f32 %v4072, %v4073
      %v4075 = vsel %vm3592, %v3485, 0.0
      %v4076 = vadd.f32 %v4074, %v4075
      %v4077 = vsel %vm3592, %v3488, 0.0
      %v4078 = vadd.f32 %v4076, %v4077
      %v4079 = vsel %vm3592, %v3493, 0.0
      %v4080 = vadd.f32 %v4078, %v4079
      %v4081 = vsel %vm3592, %v3496, 0.0
      %v4082 = vadd.f32 %v4080, %v4081
      %v4083 = vsel %vm3592, %v3501, 0.0
      %v4084 = vadd.f32 %v4082, %v4083
      %v4085 = vsel %vm3592, %v3504, 0.0
      %v4086 = vadd.f32 %v4084, %v4085
      %v4087 = vsel %vm3592, %v3509, 0.0
      %v4088 = vadd.f32 %v4086, %v4087
      %v4089 = vsel %vm3592, %v3512, 0.0
      %v4090 = vadd.f32 %v4088, %v4089
      %v4091 = vsel %vm3592, %v3517, 0.0
      %v4092 = vadd.f32 %v4090, %v4091
      %v4093 = vsel %vm3592, %v3520, 0.0
      %v4094 = vadd.f32 %v4092, %v4093
      %v4095 = vsel %vm3592, %v3525, 0.0
      %v4096 = vadd.f32 %v4094, %v4095
      %v4097 = vsel %vm3592, %v3528, 0.0
      %v4098 = vadd.f32 %v4096, %v4097
      %v4099 = vsel %vm3592, %v3533, 0.0
      %v4100 = vadd.f32 %v4098, %v4099
      %v4101 = vsel %vm3592, %v3536, 0.0
      %v4102 = vadd.f32 %v4100, %v4101
      %v4103 = vrot.slane %v4102, 4
      %v4104 = vadd.f32 %v4102, %v4103
      %v4105 = vrot.slane %v4104, 2
      %v4106 = vadd.f32 %v4104, %v4105
      %v4107 = vrot.slane %v4106, 1
      %v4108 = vadd.f32 %v4106, %v4107
      %v4109 = vmul.f32 %v3413, %v3413
      %v4110 = vmul.f32 %v3416, %v3416
      %v4111 = vmul.f32 %v3421, %v3421
      %v4112 = vmul.f32 %v3424, %v3424
      %v4113 = vmul.f32 %v3429, %v3429
      %v4114 = vmul.f32 %v3432, %v3432
      %v4115 = vmul.f32 %v3437, %v3437
      %v4116 = vmul.f32 %v3440, %v3440
      %v4117 = vmul.f32 %v3445, %v3445
      %v4118 = vmul.f32 %v3448, %v3448
      %v4119 = vmul.f32 %v3453, %v3453
      %v4120 = vmul.f32 %v3456, %v3456
      %v4121 = vmul.f32 %v3461, %v3461
      %v4122 = vmul.f32 %v3464, %v3464
      %v4123 = vmul.f32 %v3469, %v3469
      %v4124 = vmul.f32 %v3472, %v3472
      %v4125 = vmul.f32 %v3477, %v3477
      %v4126 = vmul.f32 %v3480, %v3480
      %v4127 = vmul.f32 %v3485, %v3485
      %v4128 = vmul.f32 %v3488, %v3488
      %v4129 = vmul.f32 %v3493, %v3493
      %v4130 = vmul.f32 %v3496, %v3496
      %v4131 = vmul.f32 %v3501, %v3501
      %v4132 = vmul.f32 %v3504, %v3504
      %v4133 = vmul.f32 %v3509, %v3509
      %v4134 = vmul.f32 %v3512, %v3512
      %v4135 = vmul.f32 %v3517, %v3517
      %v4136 = vmul.f32 %v3520, %v3520
      %v4137 = vmul.f32 %v3525, %v3525
      %v4138 = vmul.f32 %v3528, %v3528
      %v4139 = vmul.f32 %v3533, %v3533
      %v4140 = vmul.f32 %v3536, %v3536
      %v4141 = vsel %vm3592, %v4109, 0.0
      %v4142 = vsel %vm3592, %v4110, 0.0
      %v4143 = vadd.f32 %v4141, %v4142
      %v4144 = vsel %vm3592, %v4111, 0.0
      %v4145 = vadd.f32 %v4143, %v4144
      %v4146 = vsel %vm3592, %v4112, 0.0
      %v4147 = vadd.f32 %v4145, %v4146
      %v4148 = vsel %vm3592, %v4113, 0.0
      %v4149 = vadd.f32 %v4147, %v4148
      %v4150 = vsel %vm3592, %v4114, 0.0
      %v4151 = vadd.f32 %v4149, %v4150
      %v4152 = vsel %vm3592, %v4115, 0.0
      %v4153 = vadd.f32 %v4151, %v4152
      %v4154 = vsel %vm3592, %v4116, 0.0
      %v4155 = vadd.f32 %v4153, %v4154
      %v4156 = vsel %vm3592, %v4117, 0.0
      %v4157 = vadd.f32 %v4155, %v4156
      %v4158 = vsel %vm3592, %v4118, 0.0
      %v4159 = vadd.f32 %v4157, %v4158
      %v4160 = vsel %vm3592, %v4119, 0.0
      %v4161 = vadd.f32 %v4159, %v4160
      %v4162 = vsel %vm3592, %v4120, 0.0
      %v4163 = vadd.f32 %v4161, %v4162
      %v4164 = vsel %vm3592, %v4121, 0.0
      %v4165 = vadd.f32 %v4163, %v4164
      %v4166 = vsel %vm3592, %v4122, 0.0
      %v4167 = vadd.f32 %v4165, %v4166
      %v4168 = vsel %vm3592, %v4123, 0.0
      %v4169 = vadd.f32 %v4167, %v4168
      %v4170 = vsel %vm3592, %v4124, 0.0
      %v4171 = vadd.f32 %v4169, %v4170
      %v4172 = vsel %vm3592, %v4125, 0.0
      %v4173 = vadd.f32 %v4171, %v4172
      %v4174 = vsel %vm3592, %v4126, 0.0
      %v4175 = vadd.f32 %v4173, %v4174
      %v4176 = vsel %vm3592, %v4127, 0.0
      %v4177 = vadd.f32 %v4175, %v4176
      %v4178 = vsel %vm3592, %v4128, 0.0
      %v4179 = vadd.f32 %v4177, %v4178
      %v4180 = vsel %vm3592, %v4129, 0.0
      %v4181 = vadd.f32 %v4179, %v4180
      %v4182 = vsel %vm3592, %v4130, 0.0
      %v4183 = vadd.f32 %v4181, %v4182
      %v4184 = vsel %vm3592, %v4131, 0.0
      %v4185 = vadd.f32 %v4183, %v4184
      %v4186 = vsel %vm3592, %v4132, 0.0
      %v4187 = vadd.f32 %v4185, %v4186
      %v4188 = vsel %vm3592, %v4133, 0.0
      %v4189 = vadd.f32 %v4187, %v4188
      %v4190 = vsel %vm3592, %v4134, 0.0
      %v4191 = vadd.f32 %v4189, %v4190
      %v4192 = vsel %vm3592, %v4135, 0.0
      %v4193 = vadd.f32 %v4191, %v4192
      %v4194 = vsel %vm3592, %v4136, 0.0
      %v4195 = vadd.f32 %v4193, %v4194
      %v4196 = vsel %vm3592, %v4137, 0.0
      %v4197 = vadd.f32 %v4195, %v4196
      %v4198 = vsel %vm3592, %v4138, 0.0
      %v4199 = vadd.f32 %v4197, %v4198
      %v4200 = vsel %vm3592, %v4139, 0.0
      %v4201 = vadd.f32 %v4199, %v4200
      %v4202 = vsel %vm3592, %v4140, 0.0
      %v4203 = vadd.f32 %v4201, %v4202
      %v4204 = vrot.slane %v4203, 4
      %v4205 = vadd.f32 %v4203, %v4204
      %v4206 = vrot.slane %v4205, 2
      %v4207 = vadd.f32 %v4205, %v4206
      %v4208 = vrot.slane %v4207, 1
      %v4209 = vadd.f32 %v4207, %v4208
      %vm4210 = vcmask 1040384
      %v4211 = vsel %vm4210, %v4108, %v4209
      %vm4212 = vcmask 58368
      %4213 = vst.msk [vmem:[%s182] sm:$0x3] %vm4212, %v4211
      %s4214 = smul.u32 2, %s15
      %p4215 = scmp.lt.s32.totalorder %s4214, 3
      %s4216 = scalar_select %p4215, %s4214, 3
      %s4217 = smul.addr %s4216, 8
      %s4218 = scalar_lea.vmem %s2, %s4217
      %p4219 = scmp.lt.s32.totalorder %s15, 1
      %s4220 = scalar_select %p4219, %s15, 1
      %s4221 = smul.addr %s4220, 2
      %s4222 = scalar_lea.vmem %s3, %s4221
      // Predicated region
      $region29: #{conv_block_forward.3} parent=27 // pred_check
        %p4223 = pneg %p80
      $region30: #{conv_block_forward.3} parent=27 // pred_check_branch
        %4225 = sbr.rel (%p4223) target = $region32
      $region31: #{conv_block_forward.3} parent=27 // pred_region
        %s4226 = smul.u32 2, %s15
      $region32: #{conv_block_forward.3} parent=27 // pred_fallthru
        _
      // Predicated region
      $region33: #{conv_block_forward.3} parent=27 // pred_check
        %p4227 = pneg %p106
      $region34: #{conv_block_forward.3} parent=27 // pred_check_branch
        %4229 = sbr.rel (%p4227) target = $region36
      $region35: #{conv_block_forward.3} parent=27 // pred_region
        _
      $region36: #{conv_block_forward.3} parent=27 // pred_fallthru
        _
    $region28: #{conv_block_forward.3} parent=5 // pred_fallthru
      _
    %p4230 = scmp.le.s32.totalorder 2, %s10
    // Predicated region
    $region37: #{conv_block_forward.3} parent=5 // pred_check
      %p4231 = pneg %p4230
    $region38: #{conv_block_forward.3} parent=5 // pred_check_branch
      %4233 = sbr.rel (%p4231) target = $region40
    $region39: #{conv_block_forward.3} parent=5 // pred_region
      %s4234 = ssub.s32 %s10, 2
      // Predicated region
      $region41: #{conv_block_forward.3} parent=39 // pred_check
        %p4235 = pneg %p86
      $region42: #{conv_block_forward.3} parent=39 // pred_check_branch
        %4237 = sbr.rel (%p4235) target = $region44
      $region43: #{conv_block_forward.3} parent=39 // pred_region
        %s4238 = smul.u32 2, %s16
        %p4239 = scmp.lt.s32.totalorder %s4238, 3
        %s4240 = scalar_select %p4239, %s4238, 3
        %s4241 = smul.addr %s4240, 8
        %s4242 = scalar_lea.vmem %s2, %s4241
      $region44: #{conv_block_forward.3} parent=39 // pred_fallthru
        _
      // Predicated region
      $region45: #{conv_block_forward.3} parent=39 // pred_check
        %p4243 = pneg %p112
      $region46: #{conv_block_forward.3} parent=39 // pred_check_branch
        %4245 = sbr.rel (%p4243) target = $region48
      $region47: #{conv_block_forward.3} parent=39 // pred_region
        %p4246 = scmp.lt.s32.totalorder %s16, 1
        %s4247 = scalar_select %p4246, %s16, 1
        %s4248 = smul.addr %s4247, 2
        %s4249 = scalar_lea.vmem %s3, %s4248
      $region48: #{conv_block_forward.3} parent=39 // pred_fallthru
        _
    $region40: #{conv_block_forward.3} parent=5 // pred_fallthru
      _
  $region6: #{conv_block_forward.3} parent=0 // loop_footer
    %s14 = sadd.s32 1, %s10
  $region7: #{conv_block_forward.3} parent=0 // loop_footer_branch
    %9 = sbr.rel target = $region3
  $region8: #{conv_block_forward.3} parent=0 // loop_exit
    _

// kernel: conv_block_forward.4
$region0: #{conv_block_forward.4}
  #allocation0 [shape = 'u32[]', space=smem, size = 0x4, offset = 0x4, fixed_abs, tag = 'smem constant byte address 0x4 - core index']
  #allocation1 [shape = 'u32[144,128]{1,0:T(1,128)}', space=vmem, size = 0x12000, scoped, tag = 'internal scratch']
  #allocation2 [shape = 'bf16[18,18,8]{2,1,0:T(8,128)(2,1)}', space=vmem, size = 0x1b000, scoped, tag = 'scratch operand']
  #allocation3 [shape = 'bf16[256,72]{1,0:T(16,128)(2,1)}', space=vmem, size = 0x10000, scoped, tag = 'scratch operand']
  %s0 = inlined_call_operand.vmem [shape: f32[32,128], index: 0, kind: input, shape index: {}]
  %s1 = inlined_call_operand.vmem [shape: f32[1,128], index: 1, kind: input, shape index: {}]
  %s2 = inlined_call_operand.vmem [shape: f32[1,128], index: 2, kind: input, shape index: {}]
  %s3 = inlined_call_operand.vmem [shape: bf16[72,8], index: 3, kind: input, shape index: {}]
  %s4 = inlined_call_operand.vmem [shape: f32[32,128], index: 4, kind: output, shape index: {0}]
  %s5 = inlined_call_operand.vmem [shape: f32[2,2,8], index: 5, kind: output, shape index: {1}]
  %6 = xla_tuple %s4, %s5
  %s7 = sld [smem:[#allocation0]]
  $region57: #{conv_block_forward.4} parent=0
    _
  %s9 = ssub.s32 1, %s7
  %s10 = scalar_select 0, %s9, %s7
  loop: start=0, step=1, limit=4
  $region2: #{conv_block_forward.4} parent=0 // loop_pre_header
    _
  $region3: #{conv_block_forward.4} parent=0 // loop_header
    %s12 = sphi 0, %s16
    %p13 = scmp.ge.s32.totalorder %s12, 4
    %s22 = sphi 0, %s24
    %s25 = sphi 0, %s22
    %s26 = sphi 0, %s25
    %s42 = sphi 0, %s26
    %s46 = sphi 0, %s46
    %s48 = sphi 0, %s46
    %s49 = sphi 0, %s48
    %s63 = sphi 0, %s49
    %s67 = sphi 0, %s67
    %s69 = sphi 0, %s67
    %s70 = sphi 0, %s69
    %s84 = sphi 0, %s70
    %s88 = sphi 0, %s88
    %s90 = sphi 0, %s88
    %s91 = sphi 0, %s90
    %s105 = sphi 0, %s91
    %s111 = sphi 0, %s113
    %s114 = sphi 0, %s111
    %s115 = sphi 0, %s114
    %s131 = sphi 0, %s115
    %s137 = sphi 0, %s139
    %s140 = sphi 0, %s137
    %s141 = sphi 0, %s140
    %s157 = sphi 0, %s141
  $region4: #{conv_block_forward.4} parent=0 // loop_header_branch
    %15 = sbr.rel (%p13) target = $region8
  $region5: #{conv_block_forward.4} parent=0 // loop_body
    %s17 = ssub.s32 %s12, 1
    %s18 = ssub.s32 %s12, 2
    %s19 = sadd.s32 %s12, 1
    %s20 = ssub.s32 %s12, %s19
    %p21 = scmp.eq.s32.totalorder %s20, 0
    %s23 = sadd.s32 %s22, 1
    %s24 = scalar_select %p21, %s22, %s23
    %p27 = pneg %p21
    %p28 = scmp.eq.s32.totalorder %s12, 1
    %p29 = por %p27, %p28
    %p30 = scmp.ne.s32.totalorder %s22, %s25
    %p31 = scmp.eq.s32.totalorder %s12, 0
    %p32 = por %p30, %p31
    %p33 = scmp.ne.s32.totalorder %s22, %s25
    %p34 = scmp.eq.s32.totalorder %s17, 1
    %p35 = por %p33, %p34
    %p36 = scmp.ne.s32.totalorder %s25, %s26
    %p37 = scmp.eq.s32.totalorder %s17, 0
    %p38 = por %p36, %p37
    %p39 = scmp.ne.s32.totalorder %s25, %s26
    %p40 = scmp.eq.s32.totalorder %s18, 1
    %p41 = por %p39, %p40
    %p43 = scmp.ne.s32.totalorder %s26, %s42
    %p44 = scmp.eq.s32.totalorder %s18, 0
    %p45 = por %p43, %p44
    %s47 = sadd.s32 %s46, 1
    %p50 = scmp.eq.s32.totalorder %s12, 1
    %p51 = scmp.ne.s32.totalorder %s46, %s48
    %p52 = scmp.eq.s32.totalorder %s12, 0
    %p53 = por %p51, %p52
    %p54 = scmp.ne.s32.totalorder %s46, %s48
    %p55 = scmp.eq.s32.totalorder %s17, 1
    %p56 = por %p54, %p55
    %p57 = scmp.ne.s32.totalorder %s48, %s49
    %p58 = scmp.eq.s32.totalorder %s17, 0
    %p59 = por %p57, %p58
    %p60 = scmp.ne.s32.totalorder %s48, %s49
    %p61 = scmp.eq.s32.totalorder %s18, 1
    %p62 = por %p60, %p61
    %p64 = scmp.ne.s32.totalorder %s49, %s63
    %p65 = scmp.eq.s32.totalorder %s18, 0
    %p66 = por %p64, %p65
    %s68 = sadd.s32 %s67, 1
    %p71 = scmp.eq.s32.totalorder %s12, 1
    %p72 = scmp.ne.s32.totalorder %s67, %s69
    %p73 = scmp.eq.s32.totalorder %s12, 0
    %p74 = por %p72, %p73
    %p75 = scmp.ne.s32.totalorder %s67, %s69
    %p76 = scmp.eq.s32.totalorder %s17, 1
    %p77 = por %p75, %p76
    %p78 = scmp.ne.s32.totalorder %s69, %s70
    %p79 = scmp.eq.s32.totalorder %s17, 0
    %p80 = por %p78, %p79
    %p81 = scmp.ne.s32.totalorder %s69, %s70
    %p82 = scmp.eq.s32.totalorder %s18, 1
    %p83 = por %p81, %p82
    %p85 = scmp.ne.s32.totalorder %s70, %s84
    %p86 = scmp.eq.s32.totalorder %s18, 0
    %p87 = por %p85, %p86
    %s89 = sadd.s32 %s88, 1
    %p92 = scmp.eq.s32.totalorder %s12, 1
    %p93 = scmp.ne.s32.totalorder %s88, %s90
    %p94 = scmp.eq.s32.totalorder %s12, 0
    %p95 = por %p93, %p94
    %p96 = scmp.ne.s32.totalorder %s88, %s90
    %p97 = scmp.eq.s32.totalorder %s17, 1
    %p98 = por %p96, %p97
    %p99 = scmp.ne.s32.totalorder %s90, %s91
    %p100 = scmp.eq.s32.totalorder %s17, 0
    %p101 = por %p99, %p100
    %p102 = scmp.ne.s32.totalorder %s90, %s91
    %p103 = scmp.eq.s32.totalorder %s18, 1
    %p104 = por %p102, %p103
    %p106 = scmp.ne.s32.totalorder %s91, %s105
    %p107 = scmp.eq.s32.totalorder %s18, 0
    %p108 = por %p106, %p107
    %s109 = ssub.s32 %s12, %s19
    %p110 = scmp.eq.s32.totalorder %s109, 0
    %s112 = sadd.s32 %s111, 1
    %s113 = scalar_select %p110, %s111, %s112
    %p116 = pneg %p110
    %p117 = scmp.eq.s32.totalorder %s12, 1
    %p118 = por %p116, %p117
    %p119 = scmp.ne.s32.totalorder %s111, %s114
    %p120 = scmp.eq.s32.totalorder %s12, 0
    %p121 = por %p119, %p120
    %p122 = scmp.ne.s32.totalorder %s111, %s114
    %p123 = scmp.eq.s32.totalorder %s17, 1
    %p124 = por %p122, %p123
    %p125 = scmp.ne.s32.totalorder %s114, %s115
    %p126 = scmp.eq.s32.totalorder %s17, 0
    %p127 = por %p125, %p126
    %p128 = scmp.ne.s32.totalorder %s114, %s115
    %p129 = scmp.eq.s32.totalorder %s18, 1
    %p130 = por %p128, %p129
    %p132 = scmp.ne.s32.totalorder %s115, %s131
    %p133 = scmp.eq.s32.totalorder %s18, 0
    %p134 = por %p132, %p133
    %s135 = ssub.s32 %s12, %s19
    %p136 = scmp.eq.s32.totalorder %s135, 0
    %s138 = sadd.s32 %s137, 1
    %s139 = scalar_select %p136, %s137, %s138
    %p142 = pneg %p136
    %p143 = scmp.eq.s32.totalorder %s12, 1
    %p144 = por %p142, %p143
    %p145 = scmp.ne.s32.totalorder %s137, %s140
    %p146 = scmp.eq.s32.totalorder %s12, 0
    %p147 = por %p145, %p146
    %p148 = scmp.ne.s32.totalorder %s137, %s140
    %p149 = scmp.eq.s32.totalorder %s17, 1
    %p150 = por %p148, %p149
    %p151 = scmp.ne.s32.totalorder %s140, %s141
    %p152 = scmp.eq.s32.totalorder %s17, 0
    %p153 = por %p151, %p152
    %p154 = scmp.ne.s32.totalorder %s140, %s141
    %p155 = scmp.eq.s32.totalorder %s18, 1
    %p156 = por %p154, %p155
    %p158 = scmp.ne.s32.totalorder %s141, %s157
    %p159 = scmp.eq.s32.totalorder %s18, 0
    %p160 = por %p158, %p159
    %p161 = scmp.le.s32.totalorder 1, %s12
    %p162 = scmp.lt.s32.totalorder %s12, 3
    %p163 = pnand %p161, %p162
    %p164 = pneg %p163
    // Predicated region
    $region9: #{conv_block_forward.4} parent=5 // pred_check
      _
    $region10: #{conv_block_forward.4} parent=5 // pred_check_branch
      %166 = sbr.rel (%p163) target = $region12
    $region11: #{conv_block_forward.4} parent=5 // pred_region
      %s167 = ssub.s32 %s12, 1
      // Predicated region
      $region13: #{conv_block_forward.4} parent=11 // pred_check
        %p168 = pneg %p59
      $region14: #{conv_block_forward.4} parent=11 // pred_check_branch
        %170 = sbr.rel (%p168) target = $region16
      $region15: #{conv_block_forward.4} parent=11 // pred_region
        _
      $region16: #{conv_block_forward.4} parent=11 // pred_fallthru
        _
      // Predicated region
      $region17: #{conv_block_forward.4} parent=11 // pred_check
        %p171 = pneg %p80
      $region18: #{conv_block_forward.4} parent=11 // pred_check_branch
        %173 = sbr.rel (%p171) target = $region20
      $region19: #{conv_block_forward.4} parent=11 // pred_region
        _
      $region20: #{conv_block_forward.4} parent=11 // pred_fallthru
        _
      // Predicated region
      $region21: #{conv_block_forward.4} parent=11 // pred_check
        %p174 = pneg %p101
      $region22: #{conv_block_forward.4} parent=11 // pred_check_branch
        %176 = sbr.rel (%p174) target = $region24
      $region23: #{conv_block_forward.4} parent=11 // pred_region
        _
      $region24: #{conv_block_forward.4} parent=11 // pred_fallthru
        _
    $region12: #{conv_block_forward.4} parent=5 // pred_fallthru
      _
    %p177 = scmp.lt.s32.totalorder %s12, 2
    // Predicated region
    $region25: #{conv_block_forward.4} parent=5 // pred_check
      %p178 = pneg %p177
    $region26: #{conv_block_forward.4} parent=5 // pred_check_branch
      %180 = sbr.rel (%p178) target = $region28
    $region27: #{conv_block_forward.4} parent=5 // pred_region
      // Predicated region
      $region29: #{conv_block_forward.4} parent=27 // pred_check
        %p181 = pneg %p32
      $region30: #{conv_block_forward.4} parent=27 // pred_check_branch
        %183 = sbr.rel (%p181) target = $region32
      $region31: #{conv_block_forward.4} parent=27 // pred_region
        %s184 = smul.u32 2, %s12
        %p185 = scmp.lt.s32.totalorder %s184, 3
        %s186 = scalar_select %p185, %s184, 3
        %s187 = smul.addr %s186, 8
        %s188 = scalar_lea.vmem %s0, %s187
        %s189 = smul.u32 2, %s12
      $region32: #{conv_block_forward.4} parent=27 // pred_fallthru
        _
    $region28: #{conv_block_forward.4} parent=5 // pred_fallthru
      _
    %p190 = scmp.le.s32.totalorder 1, %s12
    %p191 = scmp.lt.s32.totalorder %s12, 3
    %p192 = pnand %p190, %p191
    %p193 = pneg %p192
    // Predicated region
    $region33: #{conv_block_forward.4} parent=5 // pred_check
      _
    $region34: #{conv_block_forward.4} parent=5 // pred_check_branch
      %195 = sbr.rel (%p192) target = $region36
    $region35: #{conv_block_forward.4} parent=5 // pred_region
      %s196 = ssub.s32 %s12, 1
      %s197 = smul.u32 2, %s17
      %p198 = scmp.lt.s32.totalorder %s197, 3
      %s199 = scalar_select %p198, %s197, 3
      %s200 = smul.addr %s199, 8
      %s201 = scalar_lea.vmem %s0, %s200
      %p202 = pneg %p38
      %p203 = pneg %p35
      %p204 = pneg %p59
      %p205 = pneg %p56
      %p206 = pneg %p80
      %p207 = pneg %p77
      %p208 = pneg %p101
      %p209 = pneg %p98
      %p210 = pneg %p127
      %p211 = pneg %p124
      %s212 = smul.u32 2, %s17
      %p213 = scmp.lt.s32.totalorder %s212, 3
      %s214 = scalar_select %p213, %s212, 3
      %s215 = smul.addr %s214, 8
      %s216 = scalar_lea.vmem %s4, %s215
      %p217 = pneg %p153
      %p218 = pneg %p150
      %p219 = scmp.lt.s32.totalorder %s17, 1
      %s220 = scalar_select %p219, %s17, 1
      %s221 = smul.addr %s220, 2
      %s222 = scalar_lea.vmem %s5, %s221
      %s223 = smul.u32 2, %s17
      %p224 = scmp.lt.s32.totalorder %s223, 3
      %s225 = scalar_select %p224, %s223, 3
      %s226 = smul.addr %s225, 8
      %s227 = scalar_lea.vmem %s0, %s226
      %s228 = smul.u32 2, %s17
      %s229 = smul.u32 2, %s17
      %p230 = scmp.lt.s32.totalorder %s229, 3
      %s231 = scalar_select %p230, %s229, 3
      %s232 = smul.addr %s231, 8
      %s233 = scalar_lea.vmem %s4, %s232
      %s234 = smul.u32 2, %s17
      %p235 = scmp.lt.s32.totalorder %s17, 1
      %s236 = scalar_select %p235, %s17, 1
      %s237 = smul.addr %s236, 2
      %s238 = scalar_lea.vmem %s5, %s237
      %v240 = vld [vmem:[%s227] sm:$0xff]
      %v241 = vld [vmem:[%s227 + $0x8] sm:$0xff]
      %v242 = vld [vmem:[%s1] sm:$0x1]
      %v244 = vlaneseq
      %v245 = vshrl.u32 %v244, 7
      %v246 = vsub.s32 0, %v245
      %v247 = vrot.slane %v242, %v246
      %v249 = vmul.f32 %v240, %v247
      %v250 = vmul.f32 %v241, %v247
      %v251 = vld [vmem:[%s2] sm:$0x1]
      %v253 = vlaneseq
      %v254 = vshrl.u32 %v253, 7
      %v255 = vsub.s32 0, %v254
      %v256 = vrot.slane %v251, %v255
      %v258 = vadd.f32 %v249, %v256
      %v259 = vadd.f32 %v250, %v256
      %v260 = vmax.f32 %v258, 0.0
      %v261 = vmax.f32 %v259, 0.0
      %vm262 = vcmask 60416
      %263 = vst.msk [vmem:[#allocation2] sm:$0xf] %vm262, 0
      %264 = vst.msk [vmem:[#allocation2 + $0x4] sm:$0xf] %vm262, 0
      %vm265 = vcmask 57344
      %266 = vst.msk [vmem:[#allocation2 + $0x8] sm:$0x1] %vm265, 0
      %s267 = scalar_lea.vmem [#allocation2], 204
      %268 = vst.msk [vmem:[%s267] sm:$0xf] %vm262, 0
      %269 = vst.msk [vmem:[%s267 + $0x4] sm:$0xf] %vm262, 0
      %270 = vst.msk [vmem:[%s267 + $0x8] sm:$0x1] %vm265, 0
      %vm271 = vcmask 57344
      %vm272 = vsmask.f32 256
      %vm273 = vmand %vm271, %vm272
      %v274 = vld [vmem:[#allocation2] sm:$0x1]
      %v275 = vsel %vm273, 0, %v274
      %276 = vst [vmem:[#allocation2] sm:$0x1] %v275
      %v277 = vld [vmem:[#allocation2 + $0xc] sm:$0x1]
      %v278 = vsel %vm273, 0, %v277
      %279 = vst [vmem:[#allocation2 + $0xc] sm:$0x1] %v278
      %v280 = vld [vmem:[#allocation2 + $0x18] sm:$0x1]
      %v281 = vsel %vm273, 0, %v280
      %282 = vst [vmem:[#allocation2 + $0x18] sm:$0x1] %v281
      %v283 = vld [vmem:[#allocation2 + $0x24] sm:$0x1]
      %v284 = vsel %vm273, 0, %v283
      %285 = vst [vmem:[#allocation2 + $0x24] sm:$0x1] %v284
      %v286 = vld [vmem:[#allocation2 + $0x30] sm:$0x1]
      %v287 = vsel %vm273, 0, %v286
      %288 = vst [vmem:[#allocation2 + $0x30] sm:$0x1] %v287
      %v289 = vld [vmem:[#allocation2 + $0x3c] sm:$0x1]
      %v290 = vsel %vm273, 0, %v289
      %291 = vst [vmem:[#allocation2 + $0x3c] sm:$0x1] %v290
      %v292 = vld [vmem:[#allocation2 + $0x48] sm:$0x1]
      %v293 = vsel %vm273, 0, %v292
      %294 = vst [vmem:[#allocation2 + $0x48] sm:$0x1] %v293
      %v295 = vld [vmem:[#allocation2 + $0x54] sm:$0x1]
      %v296 = vsel %vm273, 0, %v295
      %297 = vst [vmem:[#allocation2 + $0x54] sm:$0x1] %v296
      %v298 = vld [vmem:[#allocation2 + $0x60] sm:$0x1]
      %v299 = vsel %vm273, 0, %v298
      %300 = vst [vmem:[#allocation2 + $0x60] sm:$0x1] %v299
      %v301 = vld [vmem:[#allocation2 + $0x6c] sm:$0x1]
      %v302 = vsel %vm273, 0, %v301
      %303 = vst [vmem:[#allocation2 + $0x6c] sm:$0x1] %v302
      %v304 = vld [vmem:[#allocation2 + $0x78] sm:$0x1]
      %v305 = vsel %vm273, 0, %v304
      %306 = vst [vmem:[#allocation2 + $0x78] sm:$0x1] %v305
      %v307 = vld [vmem:[#allocation2 + $0x84] sm:$0x1]
      %v308 = vsel %vm273, 0, %v307
      %309 = vst [vmem:[#allocation2 + $0x84] sm:$0x1] %v308
      %v310 = vld [vmem:[#allocation2 + $0x90] sm:$0x1]
      %v311 = vsel %vm273, 0, %v310
      %312 = vst [vmem:[#allocation2 + $0x90] sm:$0x1] %v311
      %v313 = vld [vmem:[#allocation2 + $0x9c] sm:$0x1]
      %v314 = vsel %vm273, 0, %v313
      %315 = vst [vmem:[#allocation2 + $0x9c] sm:$0x1] %v314
      %v316 = vld [vmem:[#allocation2 + $0xa8] sm:$0x1]
      %v317 = vsel %vm273, 0, %v316
      %318 = vst [vmem:[#allocation2 + $0xa8] sm:$0x1] %v317
      %v319 = vld [vmem:[#allocation2 + $0xb4] sm:$0x1]
      %v320 = vsel %vm273, 0, %v319
      %321 = vst [vmem:[#allocation2 + $0xb4] sm:$0x1] %v320
      %v322 = vld [vmem:[#allocation2 + $0xc0] sm:$0x1]
      %v323 = vsel %vm273, 0, %v322
      %324 = vst [vmem:[#allocation2 + $0xc0] sm:$0x1] %v323
      %v325 = vld [vmem:[#allocation2 + $0xcc] sm:$0x1]
      %v326 = vsel %vm273, 0, %v325
      %327 = vst [vmem:[#allocation2 + $0xcc] sm:$0x1] %v326
      %vm328 = vsmask.f32 7938
      %vm329 = vmand %vm271, %vm328
      %v330 = vld [vmem:[#allocation2 + $0x8] sm:$0x1]
      %v331 = vsel %vm329, 0, %v330
      %332 = vst [vmem:[#allocation2 + $0x8] sm:$0x1] %v331
      %v333 = vld [vmem:[#allocation2 + $0x14] sm:$0x1]
      %v334 = vsel %vm329, 0, %v333
      %335 = vst [vmem:[#allocation2 + $0x14] sm:$0x1] %v334
      %v336 = vld [vmem:[#allocation2 + $0x20] sm:$0x1]
      %v337 = vsel %vm329, 0, %v336
      %338 = vst [vmem:[#allocation2 + $0x20] sm:$0x1] %v337
      %v339 = vld [vmem:[#allocation2 + $0x2c] sm:$0x1]
      %v340 = vsel %vm329, 0, %v339
      %341 = vst [vmem:[#allocation2 + $0x2c] sm:$0x1] %v340
      %v342 = vld [vmem:[#allocation2 + $0x38] sm:$0x1]
      %v343 = vsel %vm329, 0, %v342
      %344 = vst [vmem:[#allocation2 + $0x38] sm:$0x1] %v343
      %v345 = vld [vmem:[#allocation2 + $0x44] sm:$0x1]
      %v346 = vsel %vm329, 0, %v345
      %347 = vst [vmem:[#allocation2 + $0x44] sm:$0x1] %v346
      %v348 = vld [vmem:[#allocation2 + $0x50] sm:$0x1]
      %v349 = vsel %vm329, 0, %v348
      %350 = vst [vmem:[#allocation2 + $0x50] sm:$0x1] %v349
      %v351 = vld [vmem:[#allocation2 + $0x5c] sm:$0x1]
      %v352 = vsel %vm329, 0, %v351
      %353 = vst [vmem:[#allocation2 + $0x5c] sm:$0x1] %v352
      %v354 = vld [vmem:[#allocation2 + $0x68] sm:$0x1]
      %v355 = vsel %vm329, 0, %v354
      %356 = vst [vmem:[#allocation2 + $0x68] sm:$0x1] %v355
      %v357 = vld [vmem:[#allocation2 + $0x74] sm:$0x1]
      %v358 = vsel %vm329, 0, %v357
      %359 = vst [vmem:[#allocation2 + $0x74] sm:$0x1] %v358
      %v360 = vld [vmem:[#allocation2 + $0x80] sm:$0x1]
      %v361 = vsel %vm329, 0, %v360
      %362 = vst [vmem:[#allocation2 + $0x80] sm:$0x1] %v361
      %v363 = vld [vmem:[#allocation2 + $0x8c] sm:$0x1]
      %v364 = vsel %vm329, 0, %v363
      %365 = vst [vmem:[#allocation2 + $0x8c] sm:$0x1] %v364
      %v366 = vld [vmem:[#allocation2 + $0x98] sm:$0x1]
      %v367 = vsel %vm329, 0, %v366
      %368 = vst [vmem:[#allocation2 + $0x98] sm:$0x1] %v367
      %v369 = vld [vmem:[#allocation2 + $0xa4] sm:$0x1]
      %v370 = vsel %vm329, 0, %v369
      %371 = vst [vmem:[#allocation2 + $0xa4] sm:$0x1] %v370
      %v372 = vld [vmem:[#allocation2 + $0xb0] sm:$0x1]
      %v373 = vsel %vm329, 0, %v372
      %374 = vst [vmem:[#allocation2 + $0xb0] sm:$0x1] %v373
      %v375 = vld [vmem:[#allocation2 + $0xbc] sm:$0x1]
      %v376 = vsel %vm329, 0, %v375
      %377 = vst [vmem:[#allocation2 + $0xbc] sm:$0x1] %v376
      %v378 = vld [vmem:[#allocation2 + $0xc8] sm:$0x1]
      %v379 = vsel %vm329, 0, %v378
      %380 = vst [vmem:[#allocation2 + $0xc8] sm:$0x1] %v379
      %v381 = vld [vmem:[#allocation2 + $0xd4] sm:$0x1]
      %v382 = vsel %vm329, 0, %v381
      %383 = vst [vmem:[#allocation2 + $0xd4] sm:$0x1] %v382
      %v384 = vpack.c.bf16 %v261, %v260
      %v386 = vcombine.high %v384, %v384
      %v388 = vunpack.c.l.s4 1966171168
      %v389 = vunpack.c.0.s8 %v388
      %v390 = vlaneseq
      %v391 = vshrl.u32 %v390, 7
      %v392 = vsub.s32 %v389, %v391
      %v393 = vrot.slane %v384, %v392
      %v395 = vunpack.c.l.s4 1966171168
      %v396 = vunpack.c.0.s8 %v395
      %v397 = vlaneseq
      %v398 = vshrl.u32 %v397, 7
      %v399 = vsub.s32 %v396, %v398
      %v400 = vrot.slane %v386, %v399
      %v401 = vcombine.high %v393, %v393
      %v402 = vcombine.high %v400, %v400
      %v404 = vunpack.c.l.s4 1966171168
      %v405 = vunpack.c.0.s8 %v404
      %v406 = vlaneseq
      %v407 = vshrl.u32 %v406, 7
      %v408 = vsub.s32 %v405, %v407
      %v409 = vrot.slane %v393, %v408
      %v411 = vunpack.c.l.s4 1966171168
      %v412 = vunpack.c.0.s8 %v411
      %v413 = vlaneseq
      %v414 = vshrl.u32 %v413, 7
      %v415 = vsub.s32 %v412, %v414
      %v416 = vrot.slane %v400, %v415
      %v418 = vunpack.c.l.s4 1966171168
      %v419 = vunpack.c.0.s8 %v418
      %v420 = vlaneseq
      %v421 = vshrl.u32 %v420, 7
      %v422 = vsub.s32 %v419, %v421
      %v423 = vrot.slane %v401, %v422
      %v425 = vunpack.c.l.s4 1966171168
      %v426 = vunpack.c.0.s8 %v425
      %v427 = vlaneseq
      %v428 = vshrl.u32 %v427, 7
      %v429 = vsub.s32 %v426, %v428
      %v430 = vrot.slane %v402, %v429
      %v431 = vcombine.high %v409, %v409
      %v432 = vcombine.high %v416, %v416
      %v433 = vcombine.high %v423, %v423
      %v434 = vcombine.high %v430, %v430
      %v435 = vunpack.i.l.s16 %v409
      %v436 = vunpack.i.h.s16 %v409
      %v437 = vunpack.i.l.s16 %v423
      %v438 = vunpack.i.h.s16 %v423
      %v439 = vunpack.i.l.s16 %v431
      %v440 = vunpack.i.h.s16 %v431
      %v441 = vunpack.i.l.s16 %v433
      %v442 = vunpack.i.h.s16 %v433
      %v443 = vunpack.i.l.s16 %v416
      %v444 = vunpack.i.h.s16 %v416
      %v445 = vunpack.i.l.s16 %v430
      %v446 = vunpack.i.h.s16 %v430
      %v447 = vunpack.i.l.s16 %v432
      %v448 = vunpack.i.h.s16 %v432
      %v449 = vunpack.i.l.s16 %v434
      %v450 = vunpack.i.h.s16 %v434
      %v451 = vpack.i.b16 %v435, %v435
      %v452 = vpack.i.b16 %v436, %v436
      %v453 = vpack.i.b16 %v437, %v437
      %v454 = vpack.i.b16 %v438, %v438
      %v455 = vpack.i.b16 %v439, %v439
      %v456 = vpack.i.b16 %v440, %v440
      %v457 = vpack.i.b16 %v441, %v441
      %v458 = vpack.i.b16 %v442, %v442
      %v459 = vpack.i.b16 %v443, %v443
      %v460 = vpack.i.b16 %v444, %v444
      %v461 = vpack.i.b16 %v445, %v445
      %v462 = vpack.i.b16 %v446, %v446
      %v463 = vpack.i.b16 %v447, %v447
      %v464 = vpack.i.b16 %v448, %v448
      %v465 = vpack.i.b16 %v449, %v449
      %v466 = vpack.i.b16 %v450, %v450
      %v468 = vunpack.c.l.s4 286326784
      %v469 = vunpack.c.0.s8 %v468
      %v470 = vlaneseq
      %v471 = vshrl.u32 %v470, 7
      %v472 = vsub.s32 %v469, %v471
      %v473 = vrot.slane %v451, %v472
      %v475 = vunpack.c.l.s4 286326784
      %v476 = vunpack.c.0.s8 %v475
      %v477 = vlaneseq
      %v478 = vshrl.u32 %v477, 7
      %v479 = vsub.s32 %v476, %v478
      %v480 = vrot.slane %v452, %v479
      %v482 = vunpack.c.l.s4 286326784
      %v483 = vunpack.c.0.s8 %v482
      %v484 = vlaneseq
      %v485 = vshrl.u32 %v484, 7
      %v486 = vsub.s32 %v483, %v485
      %v487 = vrot.slane %v453, %v486
      %v489 = vunpack.c.l.s4 286326784
      %v490 = vunpack.c.0.s8 %v489
      %v491 = vlaneseq
      %v492 = vshrl.u32 %v491, 7
      %v493 = vsub.s32 %v490, %v492
      %v494 = vrot.slane %v454, %v493
      %v496 = vunpack.c.l.s4 286326784
      %v497 = vunpack.c.0.s8 %v496
      %v498 = vlaneseq
      %v499 = vshrl.u32 %v498, 7
      %v500 = vsub.s32 %v497, %v499
      %v501 = vrot.slane %v455, %v500
      %v503 = vunpack.c.l.s4 286326784
      %v504 = vunpack.c.0.s8 %v503
      %v505 = vlaneseq
      %v506 = vshrl.u32 %v505, 7
      %v507 = vsub.s32 %v504, %v506
      %v508 = vrot.slane %v456, %v507
      %v510 = vunpack.c.l.s4 286326784
      %v511 = vunpack.c.0.s8 %v510
      %v512 = vlaneseq
      %v513 = vshrl.u32 %v512, 7
      %v514 = vsub.s32 %v511, %v513
      %v515 = vrot.slane %v457, %v514
      %v517 = vunpack.c.l.s4 286326784
      %v518 = vunpack.c.0.s8 %v517
      %v519 = vlaneseq
      %v520 = vshrl.u32 %v519, 7
      %v521 = vsub.s32 %v518, %v520
      %v522 = vrot.slane %v458, %v521
      %v524 = vunpack.c.l.s4 286326784
      %v525 = vunpack.c.0.s8 %v524
      %v526 = vlaneseq
      %v527 = vshrl.u32 %v526, 7
      %v528 = vsub.s32 %v525, %v527
      %v529 = vrot.slane %v459, %v528
      %v531 = vunpack.c.l.s4 286326784
      %v532 = vunpack.c.0.s8 %v531
      %v533 = vlaneseq
      %v534 = vshrl.u32 %v533, 7
      %v535 = vsub.s32 %v532, %v534
      %v536 = vrot.slane %v460, %v535
      %v538 = vunpack.c.l.s4 286326784
      %v539 = vunpack.c.0.s8 %v538
      %v540 = vlaneseq
      %v541 = vshrl.u32 %v540, 7
      %v542 = vsub.s32 %v539, %v541
      %v543 = vrot.slane %v461, %v542
      %v545 = vunpack.c.l.s4 286326784
      %v546 = vunpack.c.0.s8 %v545
      %v547 = vlaneseq
      %v548 = vshrl.u32 %v547, 7
      %v549 = vsub.s32 %v546, %v548
      %v550 = vrot.slane %v462, %v549
      %v552 = vunpack.c.l.s4 286326784
      %v553 = vunpack.c.0.s8 %v552
      %v554 = vlaneseq
      %v555 = vshrl.u32 %v554, 7
      %v556 = vsub.s32 %v553, %v555
      %v557 = vrot.slane %v463, %v556
      %v559 = vunpack.c.l.s4 286326784
      %v560 = vunpack.c.0.s8 %v559
      %v561 = vlaneseq
      %v562 = vshrl.u32 %v561, 7
      %v563 = vsub.s32 %v560, %v562
      %v564 = vrot.slane %v464, %v563
      %v566 = vunpack.c.l.s4 286326784
      %v567 = vunpack.c.0.s8 %v566
      %v568 = vlaneseq
      %v569 = vshrl.u32 %v568, 7
      %v570 = vsub.s32 %v567, %v569
      %v571 = vrot.slane %v465, %v570
      %v573 = vunpack.c.l.s4 286326784
      %v574 = vunpack.c.0.s8 %v573
      %v575 = vlaneseq
      %v576 = vshrl.u32 %v575, 7
      %v577 = vsub.s32 %v574, %v576
      %v578 = vrot.slane %v466, %v577
      %s595 = scalar_lea.vmem [#allocation2], 12
      %v596 = vld [vmem:[%s595] sm:$0x1]
      %v597 = vsel %vm329, %v473, %v596
      %598 = vst [vmem:[%s595] sm:$0x1] %v597
      %v599 = vld [vmem:[%s595 + $0xc] sm:$0x1]
      %v600 = vsel %vm329, %v480, %v599
      %601 = vst [vmem:[%s595 + $0xc] sm:$0x1] %v600
      %v602 = vld [vmem:[%s595 + $0x18] sm:$0x1]
      %v603 = vsel %vm329, %v487, %v602
      %604 = vst [vmem:[%s595 + $0x18] sm:$0x1] %v603
      %v605 = vld [vmem:[%s595 + $0x24] sm:$0x1]
      %v606 = vsel %vm329, %v494, %v605
      %607 = vst [vmem:[%s595 + $0x24] sm:$0x1] %v606
      %v608 = vld [vmem:[%s595 + $0x30] sm:$0x1]
      %v609 = vsel %vm329, %v501, %v608
      %610 = vst [vmem:[%s595 + $0x30] sm:$0x1] %v609
      %v611 = vld [vmem:[%s595 + $0x3c] sm:$0x1]
      %v612 = vsel %vm329, %v508, %v611
      %613 = vst [vmem:[%s595 + $0x3c] sm:$0x1] %v612
      %v614 = vld [vmem:[%s595 + $0x48] sm:$0x1]
      %v615 = vsel %vm329, %v515, %v614
      %616 = vst [vmem:[%s595 + $0x48] sm:$0x1] %v615
      %v617 = vld [vmem:[%s595 + $0x54] sm:$0x1]
      %v618 = vsel %vm329, %v522, %v617
      %619 = vst [vmem:[%s595 + $0x54] sm:$0x1] %v618
      %v620 = vld [vmem:[%s595 + $0x60] sm:$0x1]
      %v621 = vsel %vm329, %v529, %v620
      %622 = vst [vmem:[%s595 + $0x60] sm:$0x1] %v621
      %v623 = vld [vmem:[%s595 + $0x6c] sm:$0x1]
      %v624 = vsel %vm329, %v536, %v623
      %625 = vst [vmem:[%s595 + $0x6c] sm:$0x1] %v624
      %v626 = vld [vmem:[%s595 + $0x78] sm:$0x1]
      %v627 = vsel %vm329, %v543, %v626
      %628 = vst [vmem:[%s595 + $0x78] sm:$0x1] %v627
      %v629 = vld [vmem:[%s595 + $0x84] sm:$0x1]
      %v630 = vsel %vm329, %v550, %v629
      %631 = vst [vmem:[%s595 + $0x84] sm:$0x1] %v630
      %v632 = vld [vmem:[%s595 + $0x90] sm:$0x1]
      %v633 = vsel %vm329, %v557, %v632
      %634 = vst [vmem:[%s595 + $0x90] sm:$0x1] %v633
      %v635 = vld [vmem:[%s595 + $0x9c] sm:$0x1]
      %v636 = vsel %vm329, %v564, %v635
      %637 = vst [vmem:[%s595 + $0x9c] sm:$0x1] %v636
      %v638 = vld [vmem:[%s595 + $0xa8] sm:$0x1]
      %v639 = vsel %vm329, %v571, %v638
      %640 = vst [vmem:[%s595 + $0xa8] sm:$0x1] %v639
      %v641 = vld [vmem:[%s595 + $0xb4] sm:$0x1]
      %v642 = vsel %vm329, %v578, %v641
      %643 = vst [vmem:[%s595 + $0xb4] sm:$0x1] %v642
      %644 = vrot.lane.b32.xlu0 %v473, 120
      %v645 = vpop.permute.xlu0 %644
      %646 = vrot.lane.b32.xlu0 %v480, 120
      %v647 = vpop.permute.xlu0 %646
      %648 = vrot.lane.b32.xlu0 %v487, 120
      %v649 = vpop.permute.xlu0 %648
      %650 = vrot.lane.b32.xlu0 %v494, 120
      %v651 = vpop.permute.xlu0 %650
      %652 = vrot.lane.b32.xlu0 %v501, 120
      %v653 = vpop.permute.xlu0 %652
      %654 = vrot.lane.b32.xlu0 %v508, 120
      %v655 = vpop.permute.xlu0 %654
      %656 = vrot.lane.b32.xlu0 %v515, 120
      %v657 = vpop.permute.xlu0 %656
      %658 = vrot.lane.b32.xlu0 %v522, 120
      %v659 = vpop.permute.xlu0 %658
      %660 = vrot.lane.b32.xlu0 %v529, 120
      %v661 = vpop.permute.xlu0 %660
      %662 = vrot.lane.b32.xlu0 %v536, 120
      %v663 = vpop.permute.xlu0 %662
      %664 = vrot.lane.b32.xlu0 %v543, 120
      %v665 = vpop.permute.xlu0 %664
      %666 = vrot.lane.b32.xlu0 %v550, 120
      %v667 = vpop.permute.xlu0 %666
      %668 = vrot.lane.b32.xlu0 %v557, 120
      %v669 = vpop.permute.xlu0 %668
      %670 = vrot.lane.b32.xlu0 %v564, 120
      %v671 = vpop.permute.xlu0 %670
      %672 = vrot.lane.b32.xlu0 %v571, 120
      %v673 = vpop.permute.xlu0 %672
      %674 = vrot.lane.b32.xlu0 %v578, 120
      %v675 = vpop.permute.xlu0 %674
      %vm692 = vcmask 58369
      %vm693 = vsmask.f32 1280
      %vm694 = vmand %vm692, %vm693
      %v695 = vld [vmem:[%s595] sm:$0x2]
      %v696 = vsel %vm694, %v645, %v695
      %697 = vst [vmem:[%s595] sm:$0x2] %v696
      %v698 = vld [vmem:[%s595 + $0xc] sm:$0x2]
      %v699 = vsel %vm694, %v647, %v698
      %700 = vst [vmem:[%s595 + $0xc] sm:$0x2] %v699
      %v701 = vld [vmem:[%s595 + $0x18] sm:$0x2]
      %v702 = vsel %vm694, %v649, %v701
      %703 = vst [vmem:[%s595 + $0x18] sm:$0x2] %v702
      %v704 = vld [vmem:[%s595 + $0x24] sm:$0x2]
      %v705 = vsel %vm694, %v651, %v704
      %706 = vst [vmem:[%s595 + $0x24] sm:$0x2] %v705
      %v707 = vld [vmem:[%s595 + $0x30] sm:$0x2]
      %v708 = vsel %vm694, %v653, %v707
      %709 = vst [vmem:[%s595 + $0x30] sm:$0x2] %v708
      %v710 = vld [vmem:[%s595 + $0x3c] sm:$0x2]
      %v711 = vsel %vm694, %v655, %v710
      %712 = vst [vmem:[%s595 + $0x3c] sm:$0x2] %v711
      %v713 = vld [vmem:[%s595 + $0x48] sm:$0x2]
      %v714 = vsel %vm694, %v657, %v713
      %715 = vst [vmem:[%s595 + $0x48] sm:$0x2] %v714
      %v716 = vld [vmem:[%s595 + $0x54] sm:$0x2]
      %v717 = vsel %vm694, %v659, %v716
      %718 = vst [vmem:[%s595 + $0x54] sm:$0x2] %v717
      %v719 = vld [vmem:[%s595 + $0x60] sm:$0x2]
      %v720 = vsel %vm694, %v661, %v719
      %721 = vst [vmem:[%s595 + $0x60] sm:$0x2] %v720
      %v722 = vld [vmem:[%s595 + $0x6c] sm:$0x2]
      %v723 = vsel %vm694, %v663, %v722
      %724 = vst [vmem:[%s595 + $0x6c] sm:$0x2] %v723
      %v725 = vld [vmem:[%s595 + $0x78] sm:$0x2]
      %v726 = vsel %vm694, %v665, %v725
      %727 = vst [vmem:[%s595 + $0x78] sm:$0x2] %v726
      %v728 = vld [vmem:[%s595 + $0x84] sm:$0x2]
      %v729 = vsel %vm694, %v667, %v728
      %730 = vst [vmem:[%s595 + $0x84] sm:$0x2] %v729
      %v731 = vld [vmem:[%s595 + $0x90] sm:$0x2]
      %v732 = vsel %vm694, %v669, %v731
      %733 = vst [vmem:[%s595 + $0x90] sm:$0x2] %v732
      %v734 = vld [vmem:[%s595 + $0x9c] sm:$0x2]
      %v735 = vsel %vm694, %v671, %v734
      %736 = vst [vmem:[%s595 + $0x9c] sm:$0x2] %v735
      %v737 = vld [vmem:[%s595 + $0xa8] sm:$0x2]
      %v738 = vsel %vm694, %v673, %v737
      %739 = vst [vmem:[%s595 + $0xa8] sm:$0x2] %v738
      %v740 = vld [vmem:[%s595 + $0xb4] sm:$0x2]
      %v741 = vsel %vm694, %v675, %v740
      %742 = vst [vmem:[%s595 + $0xb4] sm:$0x2] %v741
      %743 = vrot.lane.b32.xlu0 %v473, 112
      %v744 = vpop.permute.xlu0 %743
      %745 = vrot.lane.b32.xlu0 %v480, 112
      %v746 = vpop.permute.xlu0 %745
      %747 = vrot.lane.b32.xlu0 %v487, 112
      %v748 = vpop.permute.xlu0 %747
      %749 = vrot.lane.b32.xlu0 %v494, 112
      %v750 = vpop.permute.xlu0 %749
      %751 = vrot.lane.b32.xlu0 %v501, 112
      %v752 = vpop.permute.xlu0 %751
      %753 = vrot.lane.b32.xlu0 %v508, 112
      %v754 = vpop.permute.xlu0 %753
      %755 = vrot.lane.b32.xlu0 %v515, 112
      %v756 = vpop.permute.xlu0 %755
      %757 = vrot.lane.b32.xlu0 %v522, 112
      %v758 = vpop.permute.xlu0 %757
      %759 = vrot.lane.b32.xlu0 %v529, 112
      %v760 = vpop.permute.xlu0 %759
      %761 = vrot.lane.b32.xlu0 %v536, 112
      %v762 = vpop.permute.xlu0 %761
      %763 = vrot.lane.b32.xlu0 %v543, 112
      %v764 = vpop.permute.xlu0 %763
      %765 = vrot.lane.b32.xlu0 %v550, 112
      %v766 = vpop.permute.xlu0 %765
      %767 = vrot.lane.b32.xlu0 %v557, 112
      %v768 = vpop.permute.xlu0 %767
      %769 = vrot.lane.b32.xlu0 %v564, 112
      %v770 = vpop.permute.xlu0 %769
      %771 = vrot.lane.b32.xlu0 %v571, 112
      %v772 = vpop.permute.xlu0 %771
      %773 = vrot.lane.b32.xlu0 %v578, 112
      %v774 = vpop.permute.xlu0 %773
      %vm791 = vsmask.f32 7942
      %vm792 = vmand %vm692, %vm791
      %v793 = vld [vmem:[%s595] sm:$0x2]
      %v794 = vsel %vm792, %v744, %v793
      %795 = vst [vmem:[%s595] sm:$0x2] %v794
      %v796 = vld [vmem:[%s595 + $0xc] sm:$0x2]
      %v797 = vsel %vm792, %v746, %v796
      %798 = vst [vmem:[%s595 + $0xc] sm:$0x2] %v797
      %v799 = vld [vmem:[%s595 + $0x18] sm:$0x2]
      %v800 = vsel %vm792, %v748, %v799
      %801 = vst [vmem:[%s595 + $0x18] sm:$0x2] %v800
      %v802 = vld [vmem:[%s595 + $0x24] sm:$0x2]
      %v803 = vsel %vm792, %v750, %v802
      %804 = vst [vmem:[%s595 + $0x24] sm:$0x2] %v803
      %v805 = vld [vmem:[%s595 + $0x30] sm:$0x2]
      %v806 = vsel %vm792, %v752, %v805
      %807 = vst [vmem:[%s595 + $0x30] sm:$0x2] %v806
      %v808 = vld [vmem:[%s595 + $0x3c] sm:$0x2]
      %v809 = vsel %vm792, %v754, %v808
      %810 = vst [vmem:[%s595 + $0x3c] sm:$0x2] %v809
      %v811 = vld [vmem:[%s595 + $0x48] sm:$0x2]
      %v812 = vsel %vm792, %v756, %v811
      %813 = vst [vmem:[%s595 + $0x48] sm:$0x2] %v812
      %v814 = vld [vmem:[%s595 + $0x54] sm:$0x2]
      %v815 = vsel %vm792, %v758, %v814
      %816 = vst [vmem:[%s595 + $0x54] sm:$0x2] %v815
      %v817 = vld [vmem:[%s595 + $0x60] sm:$0x2]
      %v818 = vsel %vm792, %v760, %v817
      %819 = vst [vmem:[%s595 + $0x60] sm:$0x2] %v818
      %v820 = vld [vmem:[%s595 + $0x6c] sm:$0x2]
      %v821 = vsel %vm792, %v762, %v820
      %822 = vst [vmem:[%s595 + $0x6c] sm:$0x2] %v821
      %v823 = vld [vmem:[%s595 + $0x78] sm:$0x2]
      %v824 = vsel %vm792, %v764, %v823
      %825 = vst [vmem:[%s595 + $0x78] sm:$0x2] %v824
      %v826 = vld [vmem:[%s595 + $0x84] sm:$0x2]
      %v827 = vsel %vm792, %v766, %v826
      %828 = vst [vmem:[%s595 + $0x84] sm:$0x2] %v827
      %v829 = vld [vmem:[%s595 + $0x90] sm:$0x2]
      %v830 = vsel %vm792, %v768, %v829
      %831 = vst [vmem:[%s595 + $0x90] sm:$0x2] %v830
      %v832 = vld [vmem:[%s595 + $0x9c] sm:$0x2]
      %v833 = vsel %vm792, %v770, %v832
      %834 = vst [vmem:[%s595 + $0x9c] sm:$0x2] %v833
      %v835 = vld [vmem:[%s595 + $0xa8] sm:$0x2]
      %v836 = vsel %vm792, %v772, %v835
      %837 = vst [vmem:[%s595 + $0xa8] sm:$0x2] %v836
      %v838 = vld [vmem:[%s595 + $0xb4] sm:$0x2]
      %v839 = vsel %vm792, %v774, %v838
      %840 = vst [vmem:[%s595 + $0xb4] sm:$0x2] %v839
      %841 = vrot.lane.b32.xlu0 %v473, 104
      %v842 = vpop.permute.xlu0 %841
      %843 = vrot.lane.b32.xlu0 %v480, 104
      %v844 = vpop.permute.xlu0 %843
      %845 = vrot.lane.b32.xlu0 %v487, 104
      %v846 = vpop.permute.xlu0 %845
      %847 = vrot.lane.b32.xlu0 %v494, 104
      %v848 = vpop.permute.xlu0 %847
      %849 = vrot.lane.b32.xlu0 %v501, 104
      %v850 = vpop.permute.xlu0 %849
      %851 = vrot.lane.b32.xlu0 %v508, 104
      %v852 = vpop.permute.xlu0 %851
      %853 = vrot.lane.b32.xlu0 %v515, 104
      %v854 = vpop.permute.xlu0 %853
      %855 = vrot.lane.b32.xlu0 %v522, 104
      %v856 = vpop.permute.xlu0 %855
      %857 = vrot.lane.b32.xlu0 %v529, 104
      %v858 = vpop.permute.xlu0 %857
      %859 = vrot.lane.b32.xlu0 %v536, 104
      %v860 = vpop.permute.xlu0 %859
      %861 = vrot.lane.b32.xlu0 %v543, 104
      %v862 = vpop.permute.xlu0 %861
      %863 = vrot.lane.b32.xlu0 %v550, 104
      %v864 = vpop.permute.xlu0 %863
      %865 = vrot.lane.b32.xlu0 %v557, 104
      %v866 = vpop.permute.xlu0 %865
      %867 = vrot.lane.b32.xlu0 %v564, 104
      %v868 = vpop.permute.xlu0 %867
      %869 = vrot.lane.b32.xlu0 %v571, 104
      %v870 = vpop.permute.xlu0 %869
      %871 = vrot.lane.b32.xlu0 %v578, 104
      %v872 = vpop.permute.xlu0 %871
      %vm889 = vcmask 59394
      %vm890 = vsmask.f32 2304
      %vm891 = vmand %vm889, %vm890
      %v892 = vld [vmem:[%s595] sm:$0x4]
      %v893 = vsel %vm891, %v842, %v892
      %894 = vst [vmem:[%s595] sm:$0x4] %v893
      %v895 = vld [vmem:[%s595 + $0xc] sm:$0x4]
      %v896 = vsel %vm891, %v844, %v895
      %897 = vst [vmem:[%s595 + $0xc] sm:$0x4] %v896
      %v898 = vld [vmem:[%s595 + $0x18] sm:$0x4]
      %v899 = vsel %vm891, %v846, %v898
      %900 = vst [vmem:[%s595 + $0x18] sm:$0x4] %v899
      %v901 = vld [vmem:[%s595 + $0x24] sm:$0x4]
      %v902 = vsel %vm891, %v848, %v901
      %903 = vst [vmem:[%s595 + $0x24] sm:$0x4] %v902
      %v904 = vld [vmem:[%s595 + $0x30] sm:$0x4]
      %v905 = vsel %vm891, %v850, %v904
      %906 = vst [vmem:[%s595 + $0x30] sm:$0x4] %v905
      %v907 = vld [vmem:[%s595 + $0x3c] sm:$0x4]
      %v908 = vsel %vm891, %v852, %v907
      %909 = vst [vmem:[%s595 + $0x3c] sm:$0x4] %v908
      %v910 = vld [vmem:[%s595 + $0x48] sm:$0x4]
      %v911 = vsel %vm891, %v854, %v910
      %912 = vst [vmem:[%s595 + $0x48] sm:$0x4] %v911
      %v913 = vld [vmem:[%s595 + $0x54] sm:$0x4]
      %v914 = vsel %vm891, %v856, %v913
      %915 = vst [vmem:[%s595 + $0x54] sm:$0x4] %v914
      %v916 = vld [vmem:[%s595 + $0x60] sm:$0x4]
      %v917 = vsel %vm891, %v858, %v916
      %918 = vst [vmem:[%s595 + $0x60] sm:$0x4] %v917
      %v919 = vld [vmem:[%s595 + $0x6c] sm:$0x4]
      %v920 = vsel %vm891, %v860, %v919
      %921 = vst [vmem:[%s595 + $0x6c] sm:$0x4] %v920
      %v922 = vld [vmem:[%s595 + $0x78] sm:$0x4]
      %v923 = vsel %vm891, %v862, %v922
      %924 = vst [vmem:[%s595 + $0x78] sm:$0x4] %v923
      %v925 = vld [vmem:[%s595 + $0x84] sm:$0x4]
      %v926 = vsel %vm891, %v864, %v925
      %927 = vst [vmem:[%s595 + $0x84] sm:$0x4] %v926
      %v928 = vld [vmem:[%s595 + $0x90] sm:$0x4]
      %v929 = vsel %vm891, %v866, %v928
      %930 = vst [vmem:[%s595 + $0x90] sm:$0x4] %v929
      %v931 = vld [vmem:[%s595 + $0x9c] sm:$0x4]
      %v932 = vsel %vm891, %v868, %v931
      %933 = vst [vmem:[%s595 + $0x9c] sm:$0x4] %v932
      %v934 = vld [vmem:[%s595 + $0xa8] sm:$0x4]
      %v935 = vsel %vm891, %v870, %v934
      %936 = vst [vmem:[%s595 + $0xa8] sm:$0x4] %v935
      %v937 = vld [vmem:[%s595 + $0xb4] sm:$0x4]
      %v938 = vsel %vm891, %v872, %v937
      %939 = vst [vmem:[%s595 + $0xb4] sm:$0x4] %v938
      %940 = vrot.lane.b32.xlu0 %v473, 96
      %v941 = vpop.permute.xlu0 %940
      %942 = vrot.lane.b32.xlu0 %v480, 96
      %v943 = vpop.permute.xlu0 %942
      %944 = vrot.lane.b32.xlu0 %v487, 96
      %v945 = vpop.permute.xlu0 %944
      %946 = vrot.lane.b32.xlu0 %v494, 96
      %v947 = vpop.permute.xlu0 %946
      %948 = vrot.lane.b32.xlu0 %v501, 96
      %v949 = vpop.permute.xlu0 %948
      %950 = vrot.lane.b32.xlu0 %v508, 96
      %v951 = vpop.permute.xlu0 %950
      %952 = vrot.lane.b32.xlu0 %v515, 96
      %v953 = vpop.permute.xlu0 %952
      %954 = vrot.lane.b32.xlu0 %v522, 96
      %v955 = vpop.permute.xlu0 %954
      %956 = vrot.lane.b32.xlu0 %v529, 96
      %v957 = vpop.permute.xlu0 %956
      %958 = vrot.lane.b32.xlu0 %v536, 96
      %v959 = vpop.permute.xlu0 %958
      %960 = vrot.lane.b32.xlu0 %v543, 96
      %v961 = vpop.permute.xlu0 %960
      %962 = vrot.lane.b32.xlu0 %v550, 96
      %v963 = vpop.permute.xlu0 %962
      %964 = vrot.lane.b32.xlu0 %v557, 96
      %v965 = vpop.permute.xlu0 %964
      %966 = vrot.lane.b32.xlu0 %v564, 96
      %v967 = vpop.permute.xlu0 %966
      %968 = vrot.lane.b32.xlu0 %v571, 96
      %v969 = vpop.permute.xlu0 %968
      %970 = vrot.lane.b32.xlu0 %v578, 96
      %v971 = vpop.permute.xlu0 %970
      %vm988 = vsmask.f32 7946
      %vm989 = vmand %vm889, %vm988
      %v990 = vld [vmem:[%s595] sm:$0x4]
      %v991 = vsel %vm989, %v941, %v990
      %992 = vst [vmem:[%s595] sm:$0x4] %v991
      %v993 = vld [vmem:[%s595 + $0xc] sm:$0x4]
      %v994 = vsel %vm989, %v943, %v993
      %995 = vst [vmem:[%s595 + $0xc] sm:$0x4] %v994
      %v996 = vld [vmem:[%s595 + $0x18] sm:$0x4]
      %v997 = vsel %vm989, %v945, %v996
      %998 = vst [vmem:[%s595 + $0x18] sm:$0x4] %v997
      %v999 = vld [vmem:[%s595 + $0x24] sm:$0x4]
      %v1000 = vsel %vm989, %v947, %v999
      %1001 = vst [vmem:[%s595 + $0x24] sm:$0x4] %v1000
      %v1002 = vld [vmem:[%s595 + $0x30] sm:$0x4]
      %v1003 = vsel %vm989, %v949, %v1002
      %1004 = vst [vmem:[%s595 + $0x30] sm:$0x4] %v1003
      %v1005 = vld [vmem:[%s595 + $0x3c] sm:$0x4]
      %v1006 = vsel %vm989, %v951, %v1005
      %1007 = vst [vmem:[%s595 + $0x3c] sm:$0x4] %v1006
      %v1008 = vld [vmem:[%s595 + $0x48] sm:$0x4]
      %v1009 = vsel %vm989, %v953, %v1008
      %1010 = vst [vmem:[%s595 + $0x48] sm:$0x4] %v1009
      %v1011 = vld [vmem:[%s595 + $0x54] sm:$0x4]
      %v1012 = vsel %vm989, %v955, %v1011
      %1013 = vst [vmem:[%s595 + $0x54] sm:$0x4] %v1012
      %v1014 = vld [vmem:[%s595 + $0x60] sm:$0x4]
      %v1015 = vsel %vm989, %v957, %v1014
      %1016 = vst [vmem:[%s595 + $0x60] sm:$0x4] %v1015
      %v1017 = vld [vmem:[%s595 + $0x6c] sm:$0x4]
      %v1018 = vsel %vm989, %v959, %v1017
      %1019 = vst [vmem:[%s595 + $0x6c] sm:$0x4] %v1018
      %v1020 = vld [vmem:[%s595 + $0x78] sm:$0x4]
      %v1021 = vsel %vm989, %v961, %v1020
      %1022 = vst [vmem:[%s595 + $0x78] sm:$0x4] %v1021
      %v1023 = vld [vmem:[%s595 + $0x84] sm:$0x4]
      %v1024 = vsel %vm989, %v963, %v1023
      %1025 = vst [vmem:[%s595 + $0x84] sm:$0x4] %v1024
      %v1026 = vld [vmem:[%s595 + $0x90] sm:$0x4]
      %v1027 = vsel %vm989, %v965, %v1026
      %1028 = vst [vmem:[%s595 + $0x90] sm:$0x4] %v1027
      %v1029 = vld [vmem:[%s595 + $0x9c] sm:$0x4]
      %v1030 = vsel %vm989, %v967, %v1029
      %1031 = vst [vmem:[%s595 + $0x9c] sm:$0x4] %v1030
      %v1032 = vld [vmem:[%s595 + $0xa8] sm:$0x4]
      %v1033 = vsel %vm989, %v969, %v1032
      %1034 = vst [vmem:[%s595 + $0xa8] sm:$0x4] %v1033
      %v1035 = vld [vmem:[%s595 + $0xb4] sm:$0x4]
      %v1036 = vsel %vm989, %v971, %v1035
      %1037 = vst [vmem:[%s595 + $0xb4] sm:$0x4] %v1036
      %1038 = vrot.lane.b32.xlu0 %v473, 88
      %v1039 = vpop.permute.xlu0 %1038
      %1040 = vrot.lane.b32.xlu0 %v480, 88
      %v1041 = vpop.permute.xlu0 %1040
      %1042 = vrot.lane.b32.xlu0 %v487, 88
      %v1043 = vpop.permute.xlu0 %1042
      %1044 = vrot.lane.b32.xlu0 %v494, 88
      %v1045 = vpop.permute.xlu0 %1044
      %1046 = vrot.lane.b32.xlu0 %v501, 88
      %v1047 = vpop.permute.xlu0 %1046
      %1048 = vrot.lane.b32.xlu0 %v508, 88
      %v1049 = vpop.permute.xlu0 %1048
      %1050 = vrot.lane.b32.xlu0 %v515, 88
      %v1051 = vpop.permute.xlu0 %1050
      %1052 = vrot.lane.b32.xlu0 %v522, 88
      %v1053 = vpop.permute.xlu0 %1052
      %1054 = vrot.lane.b32.xlu0 %v529, 88
      %v1055 = vpop.permute.xlu0 %1054
      %1056 = vrot.lane.b32.xlu0 %v536, 88
      %v1057 = vpop.permute.xlu0 %1056
      %1058 = vrot.lane.b32.xlu0 %v543, 88
      %v1059 = vpop.permute.xlu0 %1058
      %1060 = vrot.lane.b32.xlu0 %v550, 88
      %v1061 = vpop.permute.xlu0 %1060
      %1062 = vrot.lane.b32.xlu0 %v557, 88
      %v1063 = vpop.permute.xlu0 %1062
      %1064 = vrot.lane.b32.xlu0 %v564, 88
      %v1065 = vpop.permute.xlu0 %1064
      %1066 = vrot.lane.b32.xlu0 %v571, 88
      %v1067 = vpop.permute.xlu0 %1066
      %1068 = vrot.lane.b32.xlu0 %v578, 88
      %v1069 = vpop.permute.xlu0 %1068
      %vm1086 = vcmask 60419
      %vm1087 = vsmask.f32 3328
      %vm1088 = vmand %vm1086, %vm1087
      %v1089 = vld [vmem:[%s595] sm:$0x8]
      %v1090 = vsel %vm1088, %v1039, %v1089
      %1091 = vst [vmem:[%s595] sm:$0x8] %v1090
      %v1092 = vld [vmem:[%s595 + $0xc] sm:$0x8]
      %v1093 = vsel %vm1088, %v1041, %v1092
      %1094 = vst [vmem:[%s595 + $0xc] sm:$0x8] %v1093
      %v1095 = vld [vmem:[%s595 + $0x18] sm:$0x8]
      %v1096 = vsel %vm1088, %v1043, %v1095
      %1097 = vst [vmem:[%s595 + $0x18] sm:$0x8] %v1096
      %v1098 = vld [vmem:[%s595 + $0x24] sm:$0x8]
      %v1099 = vsel %vm1088, %v1045, %v1098
      %1100 = vst [vmem:[%s595 + $0x24] sm:$0x8] %v1099
      %v1101 = vld [vmem:[%s595 + $0x30] sm:$0x8]
      %v1102 = vsel %vm1088, %v1047, %v1101
      %1103 = vst [vmem:[%s595 + $0x30] sm:$0x8] %v1102
      %v1104 = vld [vmem:[%s595 + $0x3c] sm:$0x8]
      %v1105 = vsel %vm1088, %v1049, %v1104
      %1106 = vst [vmem:[%s595 + $0x3c] sm:$0x8] %v1105
      %v1107 = vld [vmem:[%s595 + $0x48] sm:$0x8]
      %v1108 = vsel %vm1088, %v1051, %v1107
      %1109 = vst [vmem:[%s595 + $0x48] sm:$0x8] %v1108
      %v1110 = vld [vmem:[%s595 + $0x54] sm:$0x8]
      %v1111 = vsel %vm1088, %v1053, %v1110
      %1112 = vst [vmem:[%s595 + $0x54] sm:$0x8] %v1111
      %v1113 = vld [vmem:[%s595 + $0x60] sm:$0x8]
      %v1114 = vsel %vm1088, %v1055, %v1113
      %1115 = vst [vmem:[%s595 + $0x60] sm:$0x8] %v1114
      %v1116 = vld [vmem:[%s595 + $0x6c] sm:$0x8]
      %v1117 = vsel %vm1088, %v1057, %v1116
      %1118 = vst [vmem:[%s595 + $0x6c] sm:$0x8] %v1117
      %v1119 = vld [vmem:[%s595 + $0x78] sm:$0x8]
      %v1120 = vsel %vm1088, %v1059, %v1119
      %1121 = vst [vmem:[%s595 + $0x78] sm:$0x8] %v1120
      %v1122 = vld [vmem:[%s595 + $0x84] sm:$0x8]
      %v1123 = vsel %vm1088, %v1061, %v1122
      %1124 = vst [vmem:[%s595 + $0x84] sm:$0x8] %v1123
      %v1125 = vld [vmem:[%s595 + $0x90] sm:$0x8]
      %v1126 = vsel %vm1088, %v1063, %v1125
      %1127 = vst [vmem:[%s595 + $0x90] sm:$0x8] %v1126
      %v1128 = vld [vmem:[%s595 + $0x9c] sm:$0x8]
      %v1129 = vsel %vm1088, %v1065, %v1128
      %1130 = vst [vmem:[%s595 + $0x9c] sm:$0x8] %v1129
      %v1131 = vld [vmem:[%s595 + $0xa8] sm:$0x8]
      %v1132 = vsel %vm1088, %v1067, %v1131
      %1133 = vst [vmem:[%s595 + $0xa8] sm:$0x8] %v1132
      %v1134 = vld [vmem:[%s595 + $0xb4] sm:$0x8]
      %v1135 = vsel %vm1088, %v1069, %v1134
      %1136 = vst [vmem:[%s595 + $0xb4] sm:$0x8] %v1135
      %1137 = vrot.lane.b32.xlu0 %v473, 80
      %v1138 = vpop.permute.xlu0 %1137
      %1139 = vrot.lane.b32.xlu0 %v480, 80
      %v1140 = vpop.permute.xlu0 %1139
      %1141 = vrot.lane.b32.xlu0 %v487, 80
      %v1142 = vpop.permute.xlu0 %1141
      %1143 = vrot.lane.b32.xlu0 %v494, 80
      %v1144 = vpop.permute.xlu0 %1143
      %1145 = vrot.lane.b32.xlu0 %v501, 80
      %v1146 = vpop.permute.xlu0 %1145
      %1147 = vrot.lane.b32.xlu0 %v508, 80
      %v1148 = vpop.permute.xlu0 %1147
      %1149 = vrot.lane.b32.xlu0 %v515, 80
      %v1150 = vpop.permute.xlu0 %1149
      %1151 = vrot.lane.b32.xlu0 %v522, 80
      %v1152 = vpop.permute.xlu0 %1151
      %1153 = vrot.lane.b32.xlu0 %v529, 80
      %v1154 = vpop.permute.xlu0 %1153
      %1155 = vrot.lane.b32.xlu0 %v536, 80
      %v1156 = vpop.permute.xlu0 %1155
      %1157 = vrot.lane.b32.xlu0 %v543, 80
      %v1158 = vpop.permute.xlu0 %1157
      %1159 = vrot.lane.b32.xlu0 %v550, 80
      %v1160 = vpop.permute.xlu0 %1159
      %1161 = vrot.lane.b32.xlu0 %v557, 80
      %v1162 = vpop.permute.xlu0 %1161
      %1163 = vrot.lane.b32.xlu0 %v564, 80
      %v1164 = vpop.permute.xlu0 %1163
      %1165 = vrot.lane.b32.xlu0 %v571, 80
      %v1166 = vpop.permute.xlu0 %1165
      %1167 = vrot.lane.b32.xlu0 %v578, 80
      %v1168 = vpop.permute.xlu0 %1167
      %vm1185 = vsmask.f32 7950
      %vm1186 = vmand %vm1086, %vm1185
      %v1187 = vld [vmem:[%s595] sm:$0x8]
      %v1188 = vsel %vm1186, %v1138, %v1187
      %1189 = vst [vmem:[%s595] sm:$0x8] %v1188
      %v1190 = vld [vmem:[%s595 + $0xc] sm:$0x8]
      %v1191 = vsel %vm1186, %v1140, %v1190
      %1192 = vst [vmem:[%s595 + $0xc] sm:$0x8] %v1191
      %v1193 = vld [vmem:[%s595 + $0x18] sm:$0x8]
      %v1194 = vsel %vm1186, %v1142, %v1193
      %1195 = vst [vmem:[%s595 + $0x18] sm:$0x8] %v1194
      %v1196 = vld [vmem:[%s595 + $0x24] sm:$0x8]
      %v1197 = vsel %vm1186, %v1144, %v1196
      %1198 = vst [vmem:[%s595 + $0x24] sm:$0x8] %v1197
      %v1199 = vld [vmem:[%s595 + $0x30] sm:$0x8]
      %v1200 = vsel %vm1186, %v1146, %v1199
      %1201 = vst [vmem:[%s595 + $0x30] sm:$0x8] %v1200
      %v1202 = vld [vmem:[%s595 + $0x3c] sm:$0x8]
      %v1203 = vsel %vm1186, %v1148, %v1202
      %1204 = vst [vmem:[%s595 + $0x3c] sm:$0x8] %v1203
      %v1205 = vld [vmem:[%s595 + $0x48] sm:$0x8]
      %v1206 = vsel %vm1186, %v1150, %v1205
      %1207 = vst [vmem:[%s595 + $0x48] sm:$0x8] %v1206
      %v1208 = vld [vmem:[%s595 + $0x54] sm:$0x8]
      %v1209 = vsel %vm1186, %v1152, %v1208
      %1210 = vst [vmem:[%s595 + $0x54] sm:$0x8] %v1209
      %v1211 = vld [vmem:[%s595 + $0x60] sm:$0x8]
      %v1212 = vsel %vm1186, %v1154, %v1211
      %1213 = vst [vmem:[%s595 + $0x60] sm:$0x8] %v1212
      %v1214 = vld [vmem:[%s595 + $0x6c] sm:$0x8]
      %v1215 = vsel %vm1186, %v1156, %v1214
      %1216 = vst [vmem:[%s595 + $0x6c] sm:$0x8] %v1215
      %v1217 = vld [vmem:[%s595 + $0x78] sm:$0x8]
      %v1218 = vsel %vm1186, %v1158, %v1217
      %1219 = vst [vmem:[%s595 + $0x78] sm:$0x8] %v1218
      %v1220 = vld [vmem:[%s595 + $0x84] sm:$0x8]
      %v1221 = vsel %vm1186, %v1160, %v1220
      %1222 = vst [vmem:[%s595 + $0x84] sm:$0x8] %v1221
      %v1223 = vld [vmem:[%s595 + $0x90] sm:$0x8]
      %v1224 = vsel %vm1186, %v1162, %v1223
      %1225 = vst [vmem:[%s595 + $0x90] sm:$0x8] %v1224
      %v1226 = vld [vmem:[%s595 + $0x9c] sm:$0x8]
      %v1227 = vsel %vm1186, %v1164, %v1226
      %1228 = vst [vmem:[%s595 + $0x9c] sm:$0x8] %v1227
      %v1229 = vld [vmem:[%s595 + $0xa8] sm:$0x8]
      %v1230 = vsel %vm1186, %v1166, %v1229
      %1231 = vst [vmem:[%s595 + $0xa8] sm:$0x8] %v1230
      %v1232 = vld [vmem:[%s595 + $0xb4] sm:$0x8]
      %v1233 = vsel %vm1186, %v1168, %v1232
      %1234 = vst [vmem:[%s595 + $0xb4] sm:$0x8] %v1233
      %1235 = vrot.lane.b32.xlu0 %v473, 72
      %v1236 = vpop.permute.xlu0 %1235
      %1237 = vrot.lane.b32.xlu0 %v480, 72
      %v1238 = vpop.permute.xlu0 %1237
      %1239 = vrot.lane.b32.xlu0 %v487, 72
      %v1240 = vpop.permute.xlu0 %1239
      %1241 = vrot.lane.b32.xlu0 %v494, 72
      %v1242 = vpop.permute.xlu0 %1241
      %1243 = vrot.lane.b32.xlu0 %v501, 72
      %v1244 = vpop.permute.xlu0 %1243
      %1245 = vrot.lane.b32.xlu0 %v508, 72
      %v1246 = vpop.permute.xlu0 %1245
      %1247 = vrot.lane.b32.xlu0 %v515, 72
      %v1248 = vpop.permute.xlu0 %1247
      %1249 = vrot.lane.b32.xlu0 %v522, 72
      %v1250 = vpop.permute.xlu0 %1249
      %1251 = vrot.lane.b32.xlu0 %v529, 72
      %v1252 = vpop.permute.xlu0 %1251
      %1253 = vrot.lane.b32.xlu0 %v536, 72
      %v1254 = vpop.permute.xlu0 %1253
      %1255 = vrot.lane.b32.xlu0 %v543, 72
      %v1256 = vpop.permute.xlu0 %1255
      %1257 = vrot.lane.b32.xlu0 %v550, 72
      %v1258 = vpop.permute.xlu0 %1257
      %1259 = vrot.lane.b32.xlu0 %v557, 72
      %v1260 = vpop.permute.xlu0 %1259
      %1261 = vrot.lane.b32.xlu0 %v564, 72
      %v1262 = vpop.permute.xlu0 %1261
      %1263 = vrot.lane.b32.xlu0 %v571, 72
      %v1264 = vpop.permute.xlu0 %1263
      %1265 = vrot.lane.b32.xlu0 %v578, 72
      %v1266 = vpop.permute.xlu0 %1265
      %v1283 = vld [vmem:[%s595 + $0x4] sm:$0x1]
      %v1284 = vsel %vm273, %v1236, %v1283
      %1285 = vst [vmem:[%s595 + $0x4] sm:$0x1] %v1284
      %v1286 = vld [vmem:[%s595 + $0x10] sm:$0x1]
      %v1287 = vsel %vm273, %v1238, %v1286
      %1288 = vst [vmem:[%s595 + $0x10] sm:$0x1] %v1287
      %v1289 = vld [vmem:[%s595 + $0x1c] sm:$0x1]
      %v1290 = vsel %vm273, %v1240, %v1289
      %1291 = vst [vmem:[%s595 + $0x1c] sm:$0x1] %v1290
      %v1292 = vld [vmem:[%s595 + $0x28] sm:$0x1]
      %v1293 = vsel %vm273, %v1242, %v1292
      %1294 = vst [vmem:[%s595 + $0x28] sm:$0x1] %v1293
      %v1295 = vld [vmem:[%s595 + $0x34] sm:$0x1]
      %v1296 = vsel %vm273, %v1244, %v1295
      %1297 = vst [vmem:[%s595 + $0x34] sm:$0x1] %v1296
      %v1298 = vld [vmem:[%s595 + $0x40] sm:$0x1]
      %v1299 = vsel %vm273, %v1246, %v1298
      %1300 = vst [vmem:[%s595 + $0x40] sm:$0x1] %v1299
      %v1301 = vld [vmem:[%s595 + $0x4c] sm:$0x1]
      %v1302 = vsel %vm273, %v1248, %v1301
      %1303 = vst [vmem:[%s595 + $0x4c] sm:$0x1] %v1302
      %v1304 = vld [vmem:[%s595 + $0x58] sm:$0x1]
      %v1305 = vsel %vm273, %v1250, %v1304
      %1306 = vst [vmem:[%s595 + $0x58] sm:$0x1] %v1305
      %v1307 = vld [vmem:[%s595 + $0x64] sm:$0x1]
      %v1308 = vsel %vm273, %v1252, %v1307
      %1309 = vst [vmem:[%s595 + $0x64] sm:$0x1] %v1308
      %v1310 = vld [vmem:[%s595 + $0x70] sm:$0x1]
      %v1311 = vsel %vm273, %v1254, %v1310
      %1312 = vst [vmem:[%s595 + $0x70] sm:$0x1] %v1311
      %v1313 = vld [vmem:[%s595 + $0x7c] sm:$0x1]
      %v1314 = vsel %vm273, %v1256, %v1313
      %1315 = vst [vmem:[%s595 + $0x7c] sm:$0x1] %v1314
      %v1316 = vld [vmem:[%s595 + $0x88] sm:$0x1]
      %v1317 = vsel %vm273, %v1258, %v1316
      %1318 = vst [vmem:[%s595 + $0x88] sm:$0x1] %v1317
      %v1319 = vld [vmem:[%s595 + $0x94] sm:$0x1]
      %v1320 = vsel %vm273, %v1260, %v1319
      %1321 = vst [vmem:[%s595 + $0x94] sm:$0x1] %v1320
      %v1322 = vld [vmem:[%s595 + $0xa0] sm:$0x1]
      %v1323 = vsel %vm273, %v1262, %v1322
      %1324 = vst [vmem:[%s595 + $0xa0] sm:$0x1] %v1323
      %v1325 = vld [vmem:[%s595 + $0xac] sm:$0x1]
      %v1326 = vsel %vm273, %v1264, %v1325
      %1327 = vst [vmem:[%s595 + $0xac] sm:$0x1] %v1326
      %v1328 = vld [vmem:[%s595 + $0xb8] sm:$0x1]
      %v1329 = vsel %vm273, %v1266, %v1328
      %1330 = vst [vmem:[%s595 + $0xb8] sm:$0x1] %v1329
      %1331 = vrot.lane.b32.xlu0 %v473, 64
      %v1332 = vpop.permute.xlu0 %1331
      %1333 = vrot.lane.b32.xlu0 %v480, 64
      %v1334 = vpop.permute.xlu0 %1333
      %1335 = vrot.lane.b32.xlu0 %v487, 64
      %v1336 = vpop.permute.xlu0 %1335
      %1337 = vrot.lane.b32.xlu0 %v494, 64
      %v1338 = vpop.permute.xlu0 %1337
      %1339 = vrot.lane.b32.xlu0 %v501, 64
      %v1340 = vpop.permute.xlu0 %1339
      %1341 = vrot.lane.b32.xlu0 %v508, 64
      %v1342 = vpop.permute.xlu0 %1341
      %1343 = vrot.lane.b32.xlu0 %v515, 64
      %v1344 = vpop.permute.xlu0 %1343
      %1345 = vrot.lane.b32.xlu0 %v522, 64
      %v1346 = vpop.permute.xlu0 %1345
      %1347 = vrot.lane.b32.xlu0 %v529, 64
      %v1348 = vpop.permute.xlu0 %1347
      %1349 = vrot.lane.b32.xlu0 %v536, 64
      %v1350 = vpop.permute.xlu0 %1349
      %1351 = vrot.lane.b32.xlu0 %v543, 64
      %v1352 = vpop.permute.xlu0 %1351
      %1353 = vrot.lane.b32.xlu0 %v550, 64
      %v1354 = vpop.permute.xlu0 %1353
      %1355 = vrot.lane.b32.xlu0 %v557, 64
      %v1356 = vpop.permute.xlu0 %1355
      %1357 = vrot.lane.b32.xlu0 %v564, 64
      %v1358 = vpop.permute.xlu0 %1357
      %1359 = vrot.lane.b32.xlu0 %v571, 64
      %v1360 = vpop.permute.xlu0 %1359
      %1361 = vrot.lane.b32.xlu0 %v578, 64
      %v1362 = vpop.permute.xlu0 %1361
      %v1379 = vld [vmem:[%s595 + $0x4] sm:$0x1]
      %v1380 = vsel %vm329, %v1332, %v1379
      %1381 = vst [vmem:[%s595 + $0x4] sm:$0x1] %v1380
      %v1382 = vld [vmem:[%s595 + $0x10] sm:$0x1]
      %v1383 = vsel %vm329, %v1334, %v1382
      %1384 = vst [vmem:[%s595 + $0x10] sm:$0x1] %v1383
      %v1385 = vld [vmem:[%s595 + $0x1c] sm:$0x1]
      %v1386 = vsel %vm329, %v1336, %v1385
      %1387 = vst [vmem:[%s595 + $0x1c] sm:$0x1] %v1386
      %v1388 = vld [vmem:[%s595 + $0x28] sm:$0x1]
      %v1389 = vsel %vm329, %v1338, %v1388
      %1390 = vst [vmem:[%s595 + $0x28] sm:$0x1] %v1389
      %v1391 = vld [vmem:[%s595 + $0x34] sm:$0x1]
      %v1392 = vsel %vm329, %v1340, %v1391
      %1393 = vst [vmem:[%s595 + $0x34] sm:$0x1] %v1392
      %v1394 = vld [vmem:[%s595 + $0x40] sm:$0x1]
      %v1395 = vsel %vm329, %v1342, %v1394
      %1396 = vst [vmem:[%s595 + $0x40] sm:$0x1] %v1395
      %v1397 = vld [vmem:[%s595 + $0x4c] sm:$0x1]
      %v1398 = vsel %vm329, %v1344, %v1397
      %1399 = vst [vmem:[%s595 + $0x4c] sm:$0x1] %v1398
      %v1400 = vld [vmem:[%s595 + $0x58] sm:$0x1]
      %v1401 = vsel %vm329, %v1346, %v1400
      %1402 = vst [vmem:[%s595 + $0x58] sm:$0x1] %v1401
      %v1403 = vld [vmem:[%s595 + $0x64] sm:$0x1]
      %v1404 = vsel %vm329, %v1348, %v1403
      %1405 = vst [vmem:[%s595 + $0x64] sm:$0x1] %v1404
      %v1406 = vld [vmem:[%s595 + $0x70] sm:$0x1]
      %v1407 = vsel %vm329, %v1350, %v1406
      %1408 = vst [vmem:[%s595 + $0x70] sm:$0x1] %v1407
      %v1409 = vld [vmem:[%s595 + $0x7c] sm:$0x1]
      %v1410 = vsel %vm329, %v1352, %v1409
      %1411 = vst [vmem:[%s595 + $0x7c] sm:$0x1] %v1410
      %v1412 = vld [vmem:[%s595 + $0x88] sm:$0x1]
      %v1413 = vsel %vm329, %v1354, %v1412
      %1414 = vst [vmem:[%s595 + $0x88] sm:$0x1] %v1413
      %v1415 = vld [vmem:[%s595 + $0x94] sm:$0x1]
      %v1416 = vsel %vm329, %v1356, %v1415
      %1417 = vst [vmem:[%s595 + $0x94] sm:$0x1] %v1416
      %v1418 = vld [vmem:[%s595 + $0xa0] sm:$0x1]
      %v1419 = vsel %vm329, %v1358, %v1418
      %1420 = vst [vmem:[%s595 + $0xa0] sm:$0x1] %v1419
      %v1421 = vld [vmem:[%s595 + $0xac] sm:$0x1]
      %v1422 = vsel %vm329, %v1360, %v1421
      %1423 = vst [vmem:[%s595 + $0xac] sm:$0x1] %v1422
      %v1424 = vld [vmem:[%s595 + $0xb8] sm:$0x1]
      %v1425 = vsel %vm329, %v1362, %v1424
      %1426 = vst [vmem:[%s595 + $0xb8] sm:$0x1] %v1425
      %1427 = vrot.lane.b32.xlu0 %v473, 56
      %v1428 = vpop.permute.xlu0 %1427
      %1429 = vrot.lane.b32.xlu0 %v480, 56
      %v1430 = vpop.permute.xlu0 %1429
      %1431 = vrot.lane.b32.xlu0 %v487, 56
      %v1432 = vpop.permute.xlu0 %1431
      %1433 = vrot.lane.b32.xlu0 %v494, 56
      %v1434 = vpop.permute.xlu0 %1433
      %1435 = vrot.lane.b32.xlu0 %v501, 56
      %v1436 = vpop.permute.xlu0 %1435
      %1437 = vrot.lane.b32.xlu0 %v508, 56
      %v1438 = vpop.permute.xlu0 %1437
      %1439 = vrot.lane.b32.xlu0 %v515, 56
      %v1440 = vpop.permute.xlu0 %1439
      %1441 = vrot.lane.b32.xlu0 %v522, 56
      %v1442 = vpop.permute.xlu0 %1441
      %1443 = vrot.lane.b32.xlu0 %v529, 56
      %v1444 = vpop.permute.xlu0 %1443
      %1445 = vrot.lane.b32.xlu0 %v536, 56
      %v1446 = vpop.permute.xlu0 %1445
      %1447 = vrot.lane.b32.xlu0 %v543, 56
      %v1448 = vpop.permute.xlu0 %1447
      %1449 = vrot.lane.b32.xlu0 %v550, 56
      %v1450 = vpop.permute.xlu0 %1449
      %1451 = vrot.lane.b32.xlu0 %v557, 56
      %v1452 = vpop.permute.xlu0 %1451
      %1453 = vrot.lane.b32.xlu0 %v564, 56
      %v1454 = vpop.permute.xlu0 %1453
      %1455 = vrot.lane.b32.xlu0 %v571, 56
      %v1456 = vpop.permute.xlu0 %1455
      %1457 = vrot.lane.b32.xlu0 %v578, 56
      %v1458 = vpop.permute.xlu0 %1457
      %v1475 = vld [vmem:[%s595 + $0x4] sm:$0x2]
      %v1476 = vsel %vm694, %v1428, %v1475
      %1477 = vst [vmem:[%s595 + $0x4] sm:$0x2] %v1476
      %v1478 = vld [vmem:[%s595 + $0x10] sm:$0x2]
      %v1479 = vsel %vm694, %v1430, %v1478
      %1480 = vst [vmem:[%s595 + $0x10] sm:$0x2] %v1479
      %v1481 = vld [vmem:[%s595 + $0x1c] sm:$0x2]
      %v1482 = vsel %vm694, %v1432, %v1481
      %1483 = vst [vmem:[%s595 + $0x1c] sm:$0x2] %v1482
      %v1484 = vld [vmem:[%s595 + $0x28] sm:$0x2]
      %v1485 = vsel %vm694, %v1434, %v1484
      %1486 = vst [vmem:[%s595 + $0x28] sm:$0x2] %v1485
      %v1487 = vld [vmem:[%s595 + $0x34] sm:$0x2]
      %v1488 = vsel %vm694, %v1436, %v1487
      %1489 = vst [vmem:[%s595 + $0x34] sm:$0x2] %v1488
      %v1490 = vld [vmem:[%s595 + $0x40] sm:$0x2]
      %v1491 = vsel %vm694, %v1438, %v1490
      %1492 = vst [vmem:[%s595 + $0x40] sm:$0x2] %v1491
      %v1493 = vld [vmem:[%s595 + $0x4c] sm:$0x2]
      %v1494 = vsel %vm694, %v1440, %v1493
      %1495 = vst [vmem:[%s595 + $0x4c] sm:$0x2] %v1494
      %v1496 = vld [vmem:[%s595 + $0x58] sm:$0x2]
      %v1497 = vsel %vm694, %v1442, %v1496
      %1498 = vst [vmem:[%s595 + $0x58] sm:$0x2] %v1497
      %v1499 = vld [vmem:[%s595 + $0x64] sm:$0x2]
      %v1500 = vsel %vm694, %v1444, %v1499
      %1501 = vst [vmem:[%s595 + $0x64] sm:$0x2] %v1500
      %v1502 = vld [vmem:[%s595 + $0x70] sm:$0x2]
      %v1503 = vsel %vm694, %v1446, %v1502
      %1504 = vst [vmem:[%s595 + $0x70] sm:$0x2] %v1503
      %v1505 = vld [vmem:[%s595 + $0x7c] sm:$0x2]
      %v1506 = vsel %vm694, %v1448, %v1505
      %1507 = vst [vmem:[%s595 + $0x7c] sm:$0x2] %v1506
      %v1508 = vld [vmem:[%s595 + $0x88] sm:$0x2]
      %v1509 = vsel %vm694, %v1450, %v1508
      %1510 = vst [vmem:[%s595 + $0x88] sm:$0x2] %v1509
      %v1511 = vld [vmem:[%s595 + $0x94] sm:$0x2]
      %v1512 = vsel %vm694, %v1452, %v1511
      %1513 = vst [vmem:[%s595 + $0x94] sm:$0x2] %v1512
      %v1514 = vld [vmem:[%s595 + $0xa0] sm:$0x2]
      %v1515 = vsel %vm694, %v1454, %v1514
      %1516 = vst [vmem:[%s595 + $0xa0] sm:$0x2] %v1515
      %v1517 = vld [vmem:[%s595 + $0xac] sm:$0x2]
      %v1518 = vsel %vm694, %v1456, %v1517
      %1519 = vst [vmem:[%s595 + $0xac] sm:$0x2] %v1518
      %v1520 = vld [vmem:[%s595 + $0xb8] sm:$0x2]
      %v1521 = vsel %vm694, %v1458, %v1520
      %1522 = vst [vmem:[%s595 + $0xb8] sm:$0x2] %v1521
      %1523 = vrot.lane.b32.xlu0 %v473, 48
      %v1524 = vpop.permute.xlu0 %1523
      %1525 = vrot.lane.b32.xlu0 %v480, 48
      %v1526 = vpop.permute.xlu0 %1525
      %1527 = vrot.lane.b32.xlu0 %v487, 48
      %v1528 = vpop.permute.xlu0 %1527
      %1529 = vrot.lane.b32.xlu0 %v494, 48
      %v1530 = vpop.permute.xlu0 %1529
      %1531 = vrot.lane.b32.xlu0 %v501, 48
      %v1532 = vpop.permute.xlu0 %1531
      %1533 = vrot.lane.b32.xlu0 %v508, 48
      %v1534 = vpop.permute.xlu0 %1533
      %1535 = vrot.lane.b32.xlu0 %v515, 48
      %v1536 = vpop.permute.xlu0 %1535
      %1537 = vrot.lane.b32.xlu0 %v522, 48
      %v1538 = vpop.permute.xlu0 %1537
      %1539 = vrot.lane.b32.xlu0 %v529, 48
      %v1540 = vpop.permute.xlu0 %1539
      %1541 = vrot.lane.b32.xlu0 %v536, 48
      %v1542 = vpop.permute.xlu0 %1541
      %1543 = vrot.lane.b32.xlu0 %v543, 48
      %v1544 = vpop.permute.xlu0 %1543
      %1545 = vrot.lane.b32.xlu0 %v550, 48
      %v1546 = vpop.permute.xlu0 %1545
      %1547 = vrot.lane.b32.xlu0 %v557, 48
      %v1548 = vpop.permute.xlu0 %1547
      %1549 = vrot.lane.b32.xlu0 %v564, 48
      %v1550 = vpop.permute.xlu0 %1549
      %1551 = vrot.lane.b32.xlu0 %v571, 48
      %v1552 = vpop.permute.xlu0 %1551
      %1553 = vrot.lane.b32.xlu0 %v578, 48
      %v1554 = vpop.permute.xlu0 %1553
      %v1571 = vld [vmem:[%s595 + $0x4] sm:$0x2]
      %v1572 = vsel %vm792, %v1524, %v1571
      %1573 = vst [vmem:[%s595 + $0x4] sm:$0x2] %v1572
      %v1574 = vld [vmem:[%s595 + $0x10] sm:$0x2]
      %v1575 = vsel %vm792, %v1526, %v1574
      %1576 = vst [vmem:[%s595 + $0x10] sm:$0x2] %v1575
      %v1577 = vld [vmem:[%s595 + $0x1c] sm:$0x2]
      %v1578 = vsel %vm792, %v1528, %v1577
      %1579 = vst [vmem:[%s595 + $0x1c] sm:$0x2] %v1578
      %v1580 = vld [vmem:[%s595 + $0x28] sm:$0x2]
      %v1581 = vsel %vm792, %v1530, %v1580
      %1582 = vst [vmem:[%s595 + $0x28] sm:$0x2] %v1581
      %v1583 = vld [vmem:[%s595 + $0x34] sm:$0x2]
      %v1584 = vsel %vm792, %v1532, %v1583
      %1585 = vst [vmem:[%s595 + $0x34] sm:$0x2] %v1584
      %v1586 = vld [vmem:[%s595 + $0x40] sm:$0x2]
      %v1587 = vsel %vm792, %v1534, %v1586
      %1588 = vst [vmem:[%s595 + $0x40] sm:$0x2] %v1587
      %v1589 = vld [vmem:[%s595 + $0x4c] sm:$0x2]
      %v1590 = vsel %vm792, %v1536, %v1589
      %1591 = vst [vmem:[%s595 + $0x4c] sm:$0x2] %v1590
      %v1592 = vld [vmem:[%s595 + $0x58] sm:$0x2]
      %v1593 = vsel %vm792, %v1538, %v1592
      %1594 = vst [vmem:[%s595 + $0x58] sm:$0x2] %v1593
      %v1595 = vld [vmem:[%s595 + $0x64] sm:$0x2]
      %v1596 = vsel %vm792, %v1540, %v1595
      %1597 = vst [vmem:[%s595 + $0x64] sm:$0x2] %v1596
      %v1598 = vld [vmem:[%s595 + $0x70] sm:$0x2]
      %v1599 = vsel %vm792, %v1542, %v1598
      %1600 = vst [vmem:[%s595 + $0x70] sm:$0x2] %v1599
      %v1601 = vld [vmem:[%s595 + $0x7c] sm:$0x2]
      %v1602 = vsel %vm792, %v1544, %v1601
      %1603 = vst [vmem:[%s595 + $0x7c] sm:$0x2] %v1602
      %v1604 = vld [vmem:[%s595 + $0x88] sm:$0x2]
      %v1605 = vsel %vm792, %v1546, %v1604
      %1606 = vst [vmem:[%s595 + $0x88] sm:$0x2] %v1605
      %v1607 = vld [vmem:[%s595 + $0x94] sm:$0x2]
      %v1608 = vsel %vm792, %v1548, %v1607
      %1609 = vst [vmem:[%s595 + $0x94] sm:$0x2] %v1608
      %v1610 = vld [vmem:[%s595 + $0xa0] sm:$0x2]
      %v1611 = vsel %vm792, %v1550, %v1610
      %1612 = vst [vmem:[%s595 + $0xa0] sm:$0x2] %v1611
      %v1613 = vld [vmem:[%s595 + $0xac] sm:$0x2]
      %v1614 = vsel %vm792, %v1552, %v1613
      %1615 = vst [vmem:[%s595 + $0xac] sm:$0x2] %v1614
      %v1616 = vld [vmem:[%s595 + $0xb8] sm:$0x2]
      %v1617 = vsel %vm792, %v1554, %v1616
      %1618 = vst [vmem:[%s595 + $0xb8] sm:$0x2] %v1617
      %1619 = vrot.lane.b32.xlu0 %v473, 40
      %v1620 = vpop.permute.xlu0 %1619
      %1621 = vrot.lane.b32.xlu0 %v480, 40
      %v1622 = vpop.permute.xlu0 %1621
      %1623 = vrot.lane.b32.xlu0 %v487, 40
      %v1624 = vpop.permute.xlu0 %1623
      %1625 = vrot.lane.b32.xlu0 %v494, 40
      %v1626 = vpop.permute.xlu0 %1625
      %1627 = vrot.lane.b32.xlu0 %v501, 40
      %v1628 = vpop.permute.xlu0 %1627
      %1629 = vrot.lane.b32.xlu0 %v508, 40
      %v1630 = vpop.permute.xlu0 %1629
      %1631 = vrot.lane.b32.xlu0 %v515, 40
      %v1632 = vpop.permute.xlu0 %1631
      %1633 = vrot.lane.b32.xlu0 %v522, 40
      %v1634 = vpop.permute.xlu0 %1633
      %1635 = vrot.lane.b32.xlu0 %v529, 40
      %v1636 = vpop.permute.xlu0 %1635
      %1637 = vrot.lane.b32.xlu0 %v536, 40
      %v1638 = vpop.permute.xlu0 %1637
      %1639 = vrot.lane.b32.xlu0 %v543, 40
      %v1640 = vpop.permute.xlu0 %1639
      %1641 = vrot.lane.b32.xlu0 %v550, 40
      %v1642 = vpop.permute.xlu0 %1641
      %1643 = vrot.lane.b32.xlu0 %v557, 40
      %v1644 = vpop.permute.xlu0 %1643
      %1645 = vrot.lane.b32.xlu0 %v564, 40
      %v1646 = vpop.permute.xlu0 %1645
      %1647 = vrot.lane.b32.xlu0 %v571, 40
      %v1648 = vpop.permute.xlu0 %1647
      %1649 = vrot.lane.b32.xlu0 %v578, 40
      %v1650 = vpop.permute.xlu0 %1649
      %v1667 = vld [vmem:[%s595 + $0x4] sm:$0x4]
      %v1668 = vsel %vm891, %v1620, %v1667
      %1669 = vst [vmem:[%s595 + $0x4] sm:$0x4] %v1668
      %v1670 = vld [vmem:[%s595 + $0x10] sm:$0x4]
      %v1671 = vsel %vm891, %v1622, %v1670
      %1672 = vst [vmem:[%s595 + $0x10] sm:$0x4] %v1671
      %v1673 = vld [vmem:[%s595 + $0x1c] sm:$0x4]
      %v1674 = vsel %vm891, %v1624, %v1673
      %1675 = vst [vmem:[%s595 + $0x1c] sm:$0x4] %v1674
      %v1676 = vld [vmem:[%s595 + $0x28] sm:$0x4]
      %v1677 = vsel %vm891, %v1626, %v1676
      %1678 = vst [vmem:[%s595 + $0x28] sm:$0x4] %v1677
      %v1679 = vld [vmem:[%s595 + $0x34] sm:$0x4]
      %v1680 = vsel %vm891, %v1628, %v1679
      %1681 = vst [vmem:[%s595 + $0x34] sm:$0x4] %v1680
      %v1682 = vld [vmem:[%s595 + $0x40] sm:$0x4]
      %v1683 = vsel %vm891, %v1630, %v1682
      %1684 = vst [vmem:[%s595 + $0x40] sm:$0x4] %v1683
      %v1685 = vld [vmem:[%s595 + $0x4c] sm:$0x4]
      %v1686 = vsel %vm891, %v1632, %v1685
      %1687 = vst [vmem:[%s595 + $0x4c] sm:$0x4] %v1686
      %v1688 = vld [vmem:[%s595 + $0x58] sm:$0x4]
      %v1689 = vsel %vm891, %v1634, %v1688
      %1690 = vst [vmem:[%s595 + $0x58] sm:$0x4] %v1689
      %v1691 = vld [vmem:[%s595 + $0x64] sm:$0x4]
      %v1692 = vsel %vm891, %v1636, %v1691
      %1693 = vst [vmem:[%s595 + $0x64] sm:$0x4] %v1692
      %v1694 = vld [vmem:[%s595 + $0x70] sm:$0x4]
      %v1695 = vsel %vm891, %v1638, %v1694
      %1696 = vst [vmem:[%s595 + $0x70] sm:$0x4] %v1695
      %v1697 = vld [vmem:[%s595 + $0x7c] sm:$0x4]
      %v1698 = vsel %vm891, %v1640, %v1697
      %1699 = vst [vmem:[%s595 + $0x7c] sm:$0x4] %v1698
      %v1700 = vld [vmem:[%s595 + $0x88] sm:$0x4]
      %v1701 = vsel %vm891, %v1642, %v1700
      %1702 = vst [vmem:[%s595 + $0x88] sm:$0x4] %v1701
      %v1703 = vld [vmem:[%s595 + $0x94] sm:$0x4]
      %v1704 = vsel %vm891, %v1644, %v1703
      %1705 = vst [vmem:[%s595 + $0x94] sm:$0x4] %v1704
      %v1706 = vld [vmem:[%s595 + $0xa0] sm:$0x4]
      %v1707 = vsel %vm891, %v1646, %v1706
      %1708 = vst [vmem:[%s595 + $0xa0] sm:$0x4] %v1707
      %v1709 = vld [vmem:[%s595 + $0xac] sm:$0x4]
      %v1710 = vsel %vm891, %v1648, %v1709
      %1711 = vst [vmem:[%s595 + $0xac] sm:$0x4] %v1710
      %v1712 = vld [vmem:[%s595 + $0xb8] sm:$0x4]
      %v1713 = vsel %vm891, %v1650, %v1712
      %1714 = vst [vmem:[%s595 + $0xb8] sm:$0x4] %v1713
      %1715 = vrot.lane.b32.xlu0 %v473, 32
      %v1716 = vpop.permute.xlu0 %1715
      %1717 = vrot.lane.b32.xlu0 %v480, 32
      %v1718 = vpop.permute.xlu0 %1717
      %1719 = vrot.lane.b32.xlu0 %v487, 32
      %v1720 = vpop.permute.xlu0 %1719
      %1721 = vrot.lane.b32.xlu0 %v494, 32
      %v1722 = vpop.permute.xlu0 %1721
      %1723 = vrot.lane.b32.xlu0 %v501, 32
      %v1724 = vpop.permute.xlu0 %1723
      %1725 = vrot.lane.b32.xlu0 %v508, 32
      %v1726 = vpop.permute.xlu0 %1725
      %1727 = vrot.lane.b32.xlu0 %v515, 32
      %v1728 = vpop.permute.xlu0 %1727
      %1729 = vrot.lane.b32.xlu0 %v522, 32
      %v1730 = vpop.permute.xlu0 %1729
      %1731 = vrot.lane.b32.xlu0 %v529, 32
      %v1732 = vpop.permute.xlu0 %1731
      %1733 = vrot.lane.b32.xlu0 %v536, 32
      %v1734 = vpop.permute.xlu0 %1733
      %1735 = vrot.lane.b32.xlu0 %v543, 32
      %v1736 = vpop.permute.xlu0 %1735
      %1737 = vrot.lane.b32.xlu0 %v550, 32
      %v1738 = vpop.permute.xlu0 %1737
      %1739 = vrot.lane.b32.xlu0 %v557, 32
      %v1740 = vpop.permute.xlu0 %1739
      %1741 = vrot.lane.b32.xlu0 %v564, 32
      %v1742 = vpop.permute.xlu0 %1741
      %1743 = vrot.lane.b32.xlu0 %v571, 32
      %v1744 = vpop.permute.xlu0 %1743
      %1745 = vrot.lane.b32.xlu0 %v578, 32
      %v1746 = vpop.permute.xlu0 %1745
      %v1763 = vld [vmem:[%s595 + $0x4] sm:$0x4]
      %v1764 = vsel %vm989, %v1716, %v1763
      %1765 = vst [vmem:[%s595 + $0x4] sm:$0x4] %v1764
      %v1766 = vld [vmem:[%s595 + $0x10] sm:$0x4]
      %v1767 = vsel %vm989, %v1718, %v1766
      %1768 = vst [vmem:[%s595 + $0x10] sm:$0x4] %v1767
      %v1769 = vld [vmem:[%s595 + $0x1c] sm:$0x4]
      %v1770 = vsel %vm989, %v1720, %v1769
      %1771 = vst [vmem:[%s595 + $0x1c] sm:$0x4] %v1770
      %v1772 = vld [vmem:[%s595 + $0x28] sm:$0x4]
      %v1773 = vsel %vm989, %v1722, %v1772
      %1774 = vst [vmem:[%s595 + $0x28] sm:$0x4] %v1773
      %v1775 = vld [vmem:[%s595 + $0x34] sm:$0x4]
      %v1776 = vsel %vm989, %v1724, %v1775
      %1777 = vst [vmem:[%s595 + $0x34] sm:$0x4] %v1776
      %v1778 = vld [vmem:[%s595 + $0x40] sm:$0x4]
      %v1779 = vsel %vm989, %v1726, %v1778
      %1780 = vst [vmem:[%s595 + $0x40] sm:$0x4] %v1779
      %v1781 = vld [vmem:[%s595 + $0x4c] sm:$0x4]
      %v1782 = vsel %vm989, %v1728, %v1781
      %1783 = vst [vmem:[%s595 + $0x4c] sm:$0x4] %v1782
      %v1784 = vld [vmem:[%s595 + $0x58] sm:$0x4]
      %v1785 = vsel %vm989, %v1730, %v1784
      %1786 = vst [vmem:[%s595 + $0x58] sm:$0x4] %v1785
      %v1787 = vld [vmem:[%s595 + $0x64] sm:$0x4]
      %v1788 = vsel %vm989, %v1732, %v1787
      %1789 = vst [vmem:[%s595 + $0x64] sm:$0x4] %v1788
      %v1790 = vld [vmem:[%s595 + $0x70] sm:$0x4]
      %v1791 = vsel %vm989, %v1734, %v1790
      %1792 = vst [vmem:[%s595 + $0x70] sm:$0x4] %v1791
      %v1793 = vld [vmem:[%s595 + $0x7c] sm:$0x4]
      %v1794 = vsel %vm989, %v1736, %v1793
      %1795 = vst [vmem:[%s595 + $0x7c] sm:$0x4] %v1794
      %v1796 = vld [vmem:[%s595 + $0x88] sm:$0x4]
      %v1797 = vsel %vm989, %v1738, %v1796
      %1798 = vst [vmem:[%s595 + $0x88] sm:$0x4] %v1797
      %v1799 = vld [vmem:[%s595 + $0x94] sm:$0x4]
      %v1800 = vsel %vm989, %v1740, %v1799
      %1801 = vst [vmem:[%s595 + $0x94] sm:$0x4] %v1800
      %v1802 = vld [vmem:[%s595 + $0xa0] sm:$0x4]
      %v1803 = vsel %vm989, %v1742, %v1802
      %1804 = vst [vmem:[%s595 + $0xa0] sm:$0x4] %v1803
      %v1805 = vld [vmem:[%s595 + $0xac] sm:$0x4]
      %v1806 = vsel %vm989, %v1744, %v1805
      %1807 = vst [vmem:[%s595 + $0xac] sm:$0x4] %v1806
      %v1808 = vld [vmem:[%s595 + $0xb8] sm:$0x4]
      %v1809 = vsel %vm989, %v1746, %v1808
      %1810 = vst [vmem:[%s595 + $0xb8] sm:$0x4] %v1809
      %1811 = vrot.lane.b32.xlu0 %v473, 24
      %v1812 = vpop.permute.xlu0 %1811
      %1813 = vrot.lane.b32.xlu0 %v480, 24
      %v1814 = vpop.permute.xlu0 %1813
      %1815 = vrot.lane.b32.xlu0 %v487, 24
      %v1816 = vpop.permute.xlu0 %1815
      %1817 = vrot.lane.b32.xlu0 %v494, 24
      %v1818 = vpop.permute.xlu0 %1817
      %1819 = vrot.lane.b32.xlu0 %v501, 24
      %v1820 = vpop.permute.xlu0 %1819
      %1821 = vrot.lane.b32.xlu0 %v508, 24
      %v1822 = vpop.permute.xlu0 %1821
      %1823 = vrot.lane.b32.xlu0 %v515, 24
      %v1824 = vpop.permute.xlu0 %1823
      %1825 = vrot.lane.b32.xlu0 %v522, 24
      %v1826 = vpop.permute.xlu0 %1825
      %1827 = vrot.lane.b32.xlu0 %v529, 24
      %v1828 = vpop.permute.xlu0 %1827
      %1829 = vrot.lane.b32.xlu0 %v536, 24
      %v1830 = vpop.permute.xlu0 %1829
      %1831 = vrot.lane.b32.xlu0 %v543, 24
      %v1832 = vpop.permute.xlu0 %1831
      %1833 = vrot.lane.b32.xlu0 %v550, 24
      %v1834 = vpop.permute.xlu0 %1833
      %1835 = vrot.lane.b32.xlu0 %v557, 24
      %v1836 = vpop.permute.xlu0 %1835
      %1837 = vrot.lane.b32.xlu0 %v564, 24
      %v1838 = vpop.permute.xlu0 %1837
      %1839 = vrot.lane.b32.xlu0 %v571, 24
      %v1840 = vpop.permute.xlu0 %1839
      %1841 = vrot.lane.b32.xlu0 %v578, 24
      %v1842 = vpop.permute.xlu0 %1841
      %v1859 = vld [vmem:[%s595 + $0x4] sm:$0x8]
      %v1860 = vsel %vm1088, %v1812, %v1859
      %1861 = vst [vmem:[%s595 + $0x4] sm:$0x8] %v1860
      %v1862 = vld [vmem:[%s595 + $0x10] sm:$0x8]
      %v1863 = vsel %vm1088, %v1814, %v1862
      %1864 = vst [vmem:[%s595 + $0x10] sm:$0x8] %v1863
      %v1865 = vld [vmem:[%s595 + $0x1c] sm:$0x8]
      %v1866 = vsel %vm1088, %v1816, %v1865
      %1867 = vst [vmem:[%s595 + $0x1c] sm:$0x8] %v1866
      %v1868 = vld [vmem:[%s595 + $0x28] sm:$0x8]
      %v1869 = vsel %vm1088, %v1818, %v1868
      %1870 = vst [vmem:[%s595 + $0x28] sm:$0x8] %v1869
      %v1871 = vld [vmem:[%s595 + $0x34] sm:$0x8]
      %v1872 = vsel %vm1088, %v1820, %v1871
      %1873 = vst [vmem:[%s595 + $0x34] sm:$0x8] %v1872
      %v1874 = vld [vmem:[%s595 + $0x40] sm:$0x8]
      %v1875 = vsel %vm1088, %v1822, %v1874
      %1876 = vst [vmem:[%s595 + $0x40] sm:$0x8] %v1875
      %v1877 = vld [vmem:[%s595 + $0x4c] sm:$0x8]
      %v1878 = vsel %vm1088, %v1824, %v1877
      %1879 = vst [vmem:[%s595 + $0x4c] sm:$0x8] %v1878
      %v1880 = vld [vmem:[%s595 + $0x58] sm:$0x8]
      %v1881 = vsel %vm1088, %v1826, %v1880
      %1882 = vst [vmem:[%s595 + $0x58] sm:$0x8] %v1881
      %v1883 = vld [vmem:[%s595 + $0x64] sm:$0x8]
      %v1884 = vsel %vm1088, %v1828, %v1883
      %1885 = vst [vmem:[%s595 + $0x64] sm:$0x8] %v1884
      %v1886 = vld [vmem:[%s595 + $0x70] sm:$0x8]
      %v1887 = vsel %vm1088, %v1830, %v1886
      %1888 = vst [vmem:[%s595 + $0x70] sm:$0x8] %v1887
      %v1889 = vld [vmem:[%s595 + $0x7c] sm:$0x8]
      %v1890 = vsel %vm1088, %v1832, %v1889
      %1891 = vst [vmem:[%s595 + $0x7c] sm:$0x8] %v1890
      %v1892 = vld [vmem:[%s595 + $0x88] sm:$0x8]
      %v1893 = vsel %vm1088, %v1834, %v1892
      %1894 = vst [vmem:[%s595 + $0x88] sm:$0x8] %v1893
      %v1895 = vld [vmem:[%s595 + $0x94] sm:$0x8]
      %v1896 = vsel %vm1088, %v1836, %v1895
      %1897 = vst [vmem:[%s595 + $0x94] sm:$0x8] %v1896
      %v1898 = vld [vmem:[%s595 + $0xa0] sm:$0x8]
      %v1899 = vsel %vm1088, %v1838, %v1898
      %1900 = vst [vmem:[%s595 + $0xa0] sm:$0x8] %v1899
      %v1901 = vld [vmem:[%s595 + $0xac] sm:$0x8]
      %v1902 = vsel %vm1088, %v1840, %v1901
      %1903 = vst [vmem:[%s595 + $0xac] sm:$0x8] %v1902
      %v1904 = vld [vmem:[%s595 + $0xb8] sm:$0x8]
      %v1905 = vsel %vm1088, %v1842, %v1904
      %1906 = vst [vmem:[%s595 + $0xb8] sm:$0x8] %v1905
      %1907 = vrot.lane.b32.xlu0 %v473, 16
      %v1908 = vpop.permute.xlu0 %1907
      %1909 = vrot.lane.b32.xlu0 %v480, 16
      %v1910 = vpop.permute.xlu0 %1909
      %1911 = vrot.lane.b32.xlu0 %v487, 16
      %v1912 = vpop.permute.xlu0 %1911
      %1913 = vrot.lane.b32.xlu0 %v494, 16
      %v1914 = vpop.permute.xlu0 %1913
      %1915 = vrot.lane.b32.xlu0 %v501, 16
      %v1916 = vpop.permute.xlu0 %1915
      %1917 = vrot.lane.b32.xlu0 %v508, 16
      %v1918 = vpop.permute.xlu0 %1917
      %1919 = vrot.lane.b32.xlu0 %v515, 16
      %v1920 = vpop.permute.xlu0 %1919
      %1921 = vrot.lane.b32.xlu0 %v522, 16
      %v1922 = vpop.permute.xlu0 %1921
      %1923 = vrot.lane.b32.xlu0 %v529, 16
      %v1924 = vpop.permute.xlu0 %1923
      %1925 = vrot.lane.b32.xlu0 %v536, 16
      %v1926 = vpop.permute.xlu0 %1925
      %1927 = vrot.lane.b32.xlu0 %v543, 16
      %v1928 = vpop.permute.xlu0 %1927
      %1929 = vrot.lane.b32.xlu0 %v550, 16
      %v1930 = vpop.permute.xlu0 %1929
      %1931 = vrot.lane.b32.xlu0 %v557, 16
      %v1932 = vpop.permute.xlu0 %1931
      %1933 = vrot.lane.b32.xlu0 %v564, 16
      %v1934 = vpop.permute.xlu0 %1933
      %1935 = vrot.lane.b32.xlu0 %v571, 16
      %v1936 = vpop.permute.xlu0 %1935
      %1937 = vrot.lane.b32.xlu0 %v578, 16
      %v1938 = vpop.permute.xlu0 %1937
      %v1955 = vld [vmem:[%s595 + $0x4] sm:$0x8]
      %v1956 = vsel %vm1186, %v1908, %v1955
      %1957 = vst [vmem:[%s595 + $0x4] sm:$0x8] %v1956
      %v1958 = vld [vmem:[%s595 + $0x10] sm:$0x8]
      %v1959 = vsel %vm1186, %v1910, %v1958
      %1960 = vst [vmem:[%s595 + $0x10] sm:$0x8] %v1959
      %v1961 = vld [vmem:[%s595 + $0x1c] sm:$0x8]
      %v1962 = vsel %vm1186, %v1912, %v1961
      %1963 = vst [vmem:[%s595 + $0x1c] sm:$0x8] %v1962
      %v1964 = vld [vmem:[%s595 + $0x28] sm:$0x8]
      %v1965 = vsel %vm1186, %v1914, %v1964
      %1966 = vst [vmem:[%s595 + $0x28] sm:$0x8] %v1965
      %v1967 = vld [vmem:[%s595 + $0x34] sm:$0x8]
      %v1968 = vsel %vm1186, %v1916, %v1967
      %1969 = vst [vmem:[%s595 + $0x34] sm:$0x8] %v1968
      %v1970 = vld [vmem:[%s595 + $0x40] sm:$0x8]
      %v1971 = vsel %vm1186, %v1918, %v1970
      %1972 = vst [vmem:[%s595 + $0x40] sm:$0x8] %v1971
      %v1973 = vld [vmem:[%s595 + $0x4c] sm:$0x8]
      %v1974 = vsel %vm1186, %v1920, %v1973
      %1975 = vst [vmem:[%s595 + $0x4c] sm:$0x8] %v1974
      %v1976 = vld [vmem:[%s595 + $0x58] sm:$0x8]
      %v1977 = vsel %vm1186, %v1922, %v1976
      %1978 = vst [vmem:[%s595 + $0x58] sm:$0x8] %v1977
      %v1979 = vld [vmem:[%s595 + $0x64] sm:$0x8]
      %v1980 = vsel %vm1186, %v1924, %v1979
      %1981 = vst [vmem:[%s595 + $0x64] sm:$0x8] %v1980
      %v1982 = vld [vmem:[%s595 + $0x70] sm:$0x8]
      %v1983 = vsel %vm1186, %v1926, %v1982
      %1984 = vst [vmem:[%s595 + $0x70] sm:$0x8] %v1983
      %v1985 = vld [vmem:[%s595 + $0x7c] sm:$0x8]
      %v1986 = vsel %vm1186, %v1928, %v1985
      %1987 = vst [vmem:[%s595 + $0x7c] sm:$0x8] %v1986
      %v1988 = vld [vmem:[%s595 + $0x88] sm:$0x8]
      %v1989 = vsel %vm1186, %v1930, %v1988
      %1990 = vst [vmem:[%s595 + $0x88] sm:$0x8] %v1989
      %v1991 = vld [vmem:[%s595 + $0x94] sm:$0x8]
      %v1992 = vsel %vm1186, %v1932, %v1991
      %1993 = vst [vmem:[%s595 + $0x94] sm:$0x8] %v1992
      %v1994 = vld [vmem:[%s595 + $0xa0] sm:$0x8]
      %v1995 = vsel %vm1186, %v1934, %v1994
      %1996 = vst [vmem:[%s595 + $0xa0] sm:$0x8] %v1995
      %v1997 = vld [vmem:[%s595 + $0xac] sm:$0x8]
      %v1998 = vsel %vm1186, %v1936, %v1997
      %1999 = vst [vmem:[%s595 + $0xac] sm:$0x8] %v1998
      %v2000 = vld [vmem:[%s595 + $0xb8] sm:$0x8]
      %v2001 = vsel %vm1186, %v1938, %v2000
      %2002 = vst [vmem:[%s595 + $0xb8] sm:$0x8] %v2001
      %2003 = vrot.lane.b32.xlu0 %v473, 8
      %v2004 = vpop.permute.xlu0 %2003
      %2005 = vrot.lane.b32.xlu0 %v480, 8
      %v2006 = vpop.permute.xlu0 %2005
      %2007 = vrot.lane.b32.xlu0 %v487, 8
      %v2008 = vpop.permute.xlu0 %2007
      %2009 = vrot.lane.b32.xlu0 %v494, 8
      %v2010 = vpop.permute.xlu0 %2009
      %2011 = vrot.lane.b32.xlu0 %v501, 8
      %v2012 = vpop.permute.xlu0 %2011
      %2013 = vrot.lane.b32.xlu0 %v508, 8
      %v2014 = vpop.permute.xlu0 %2013
      %2015 = vrot.lane.b32.xlu0 %v515, 8
      %v2016 = vpop.permute.xlu0 %2015
      %2017 = vrot.lane.b32.xlu0 %v522, 8
      %v2018 = vpop.permute.xlu0 %2017
      %2019 = vrot.lane.b32.xlu0 %v529, 8
      %v2020 = vpop.permute.xlu0 %2019
      %2021 = vrot.lane.b32.xlu0 %v536, 8
      %v2022 = vpop.permute.xlu0 %2021
      %2023 = vrot.lane.b32.xlu0 %v543, 8
      %v2024 = vpop.permute.xlu0 %2023
      %2025 = vrot.lane.b32.xlu0 %v550, 8
      %v2026 = vpop.permute.xlu0 %2025
      %2027 = vrot.lane.b32.xlu0 %v557, 8
      %v2028 = vpop.permute.xlu0 %2027
      %2029 = vrot.lane.b32.xlu0 %v564, 8
      %v2030 = vpop.permute.xlu0 %2029
      %2031 = vrot.lane.b32.xlu0 %v571, 8
      %v2032 = vpop.permute.xlu0 %2031
      %2033 = vrot.lane.b32.xlu0 %v578, 8
      %v2034 = vpop.permute.xlu0 %2033
      %v2051 = vld [vmem:[%s595 + $0x8] sm:$0x1]
      %v2052 = vsel %vm273, %v2004, %v2051
      %2053 = vst [vmem:[%s595 + $0x8] sm:$0x1] %v2052
      %v2054 = vld [vmem:[%s595 + $0x14] sm:$0x1]
      %v2055 = vsel %vm273, %v2006, %v2054
      %2056 = vst [vmem:[%s595 + $0x14] sm:$0x1] %v2055
      %v2057 = vld [vmem:[%s595 + $0x20] sm:$0x1]
      %v2058 = vsel %vm273, %v2008, %v2057
      %2059 = vst [vmem:[%s595 + $0x20] sm:$0x1] %v2058
      %v2060 = vld [vmem:[%s595 + $0x2c] sm:$0x1]
      %v2061 = vsel %vm273, %v2010, %v2060
      %2062 = vst [vmem:[%s595 + $0x2c] sm:$0x1] %v2061
      %v2063 = vld [vmem:[%s595 + $0x38] sm:$0x1]
      %v2064 = vsel %vm273, %v2012, %v2063
      %2065 = vst [vmem:[%s595 + $0x38] sm:$0x1] %v2064
      %v2066 = vld [vmem:[%s595 + $0x44] sm:$0x1]
      %v2067 = vsel %vm273, %v2014, %v2066
      %2068 = vst [vmem:[%s595 + $0x44] sm:$0x1] %v2067
      %v2069 = vld [vmem:[%s595 + $0x50] sm:$0x1]
      %v2070 = vsel %vm273, %v2016, %v2069
      %2071 = vst [vmem:[%s595 + $0x50] sm:$0x1] %v2070
      %v2072 = vld [vmem:[%s595 + $0x5c] sm:$0x1]
      %v2073 = vsel %vm273, %v2018, %v2072
      %2074 = vst [vmem:[%s595 + $0x5c] sm:$0x1] %v2073
      %v2075 = vld [vmem:[%s595 + $0x68] sm:$0x1]
      %v2076 = vsel %vm273, %v2020, %v2075
      %2077 = vst [vmem:[%s595 + $0x68] sm:$0x1] %v2076
      %v2078 = vld [vmem:[%s595 + $0x74] sm:$0x1]
      %v2079 = vsel %vm273, %v2022, %v2078
      %2080 = vst [vmem:[%s595 + $0x74] sm:$0x1] %v2079
      %v2081 = vld [vmem:[%s595 + $0x80] sm:$0x1]
      %v2082 = vsel %vm273, %v2024, %v2081
      %2083 = vst [vmem:[%s595 + $0x80] sm:$0x1] %v2082
      %v2084 = vld [vmem:[%s595 + $0x8c] sm:$0x1]
      %v2085 = vsel %vm273, %v2026, %v2084
      %2086 = vst [vmem:[%s595 + $0x8c] sm:$0x1] %v2085
      %v2087 = vld [vmem:[%s595 + $0x98] sm:$0x1]
      %v2088 = vsel %vm273, %v2028, %v2087
      %2089 = vst [vmem:[%s595 + $0x98] sm:$0x1] %v2088
      %v2090 = vld [vmem:[%s595 + $0xa4] sm:$0x1]
      %v2091 = vsel %vm273, %v2030, %v2090
      %2092 = vst [vmem:[%s595 + $0xa4] sm:$0x1] %v2091
      %v2093 = vld [vmem:[%s595 + $0xb0] sm:$0x1]
      %v2094 = vsel %vm273, %v2032, %v2093
      %2095 = vst [vmem:[%s595 + $0xb0] sm:$0x1] %v2094
      %v2096 = vld [vmem:[%s595 + $0xbc] sm:$0x1]
      %v2097 = vsel %vm273, %v2034, %v2096
      %2098 = vst [vmem:[%s595 + $0xbc] sm:$0x1] %v2097
      %v2099 = vld [vmem:[#allocation2] sm:$0xf]
      %v2100 = vld [vmem:[#allocation2 + $0x4] sm:$0xf]
      %v2101 = vld [vmem:[#allocation2 + $0xc] sm:$0xf]
      %v2102 = vld [vmem:[#allocation2 + $0x10] sm:$0xf]
      %v2103 = vld [vmem:[#allocation2 + $0x18] sm:$0xf]
      %v2104 = vld [vmem:[#allocation2 + $0x1c] sm:$0xf]
      %v2105 = vld [vmem:[#allocation2 + $0x24] sm:$0xf]
      %v2106 = vld [vmem:[#allocation2 + $0x28] sm:$0xf]
      %v2107 = vld [vmem:[#allocation2 + $0x30] sm:$0xf]
      %v2108 = vld [vmem:[#allocation2 + $0x34] sm:$0xf]
      %v2109 = vld [vmem:[#allocation2 + $0x3c] sm:$0xf]
      %v2110 = vld [vmem:[#allocation2 + $0x40] sm:$0xf]
      %v2111 = vld [vmem:[#allocation2 + $0x48] sm:$0xf]
      %v2112 = vld [vmem:[#allocation2 + $0x4c] sm:$0xf]
      %v2113 = vld [vmem:[#allocation2 + $0x54] sm:$0xf]
      %v2114 = vld [vmem:[#allocation2 + $0x58] sm:$0xf]
      %v2115 = vld [vmem:[#allocation2 + $0x60] sm:$0xf]
      %v2116 = vld [vmem:[#allocation2 + $0x64] sm:$0xf]
      %v2117 = vld [vmem:[#allocation2 + $0x6c] sm:$0xf]
      %v2118 = vld [vmem:[#allocation2 + $0x70] sm:$0xf]
      %v2119 = vld [vmem:[#allocation2 + $0x78] sm:$0xf]
      %v2120 = vld [vmem:[#allocation2 + $0x7c] sm:$0xf]
      %v2121 = vld [vmem:[#allocation2 + $0x84] sm:$0xf]
      %v2122 = vld [vmem:[#allocation2 + $0x88] sm:$0xf]
      %v2123 = vld [vmem:[#allocation2 + $0x90] sm:$0xf]
      %v2124 = vld [vmem:[#allocation2 + $0x94] sm:$0xf]
      %v2125 = vld [vmem:[#allocation2 + $0x9c] sm:$0xf]
      %v2126 = vld [vmem:[#allocation2 + $0xa0] sm:$0xf]
      %v2127 = vld [vmem:[#allocation2 + $0xa8] sm:$0xf]
      %v2128 = vld [vmem:[#allocation2 + $0xac] sm:$0xf]
      %v2129 = vld [vmem:[#allocation2 + $0xb4] sm:$0xf]
      %v2130 = vld [vmem:[#allocation2 + $0xb8] sm:$0xf]
      %v2163 = vunpack.c.l.b16 %v2099
      %v2164 = vunpack.c.l.b16 %v2100
      %v2165 = vunpack.c.l.b16 %v2101
      %v2166 = vunpack.c.l.b16 %v2102
      %v2167 = vunpack.c.l.b16 %v2103
      %v2168 = vunpack.c.l.b16 %v2104
      %v2169 = vunpack.c.l.b16 %v2105
      %v2170 = vunpack.c.l.b16 %v2106
      %v2171 = vunpack.c.l.b16 %v2107
      %v2172 = vunpack.c.l.b16 %v2108
      %v2173 = vunpack.c.l.b16 %v2109
      %v2174 = vunpack.c.l.b16 %v2110
      %v2175 = vunpack.c.l.b16 %v2111
      %v2176 = vunpack.c.l.b16 %v2112
      %v2177 = vunpack.c.l.b16 %v2113
      %v2178 = vunpack.c.l.b16 %v2114
      %v2179 = vunpack.c.l.b16 %v2115
      %v2180 = vunpack.c.l.b16 %v2116
      %v2181 = vunpack.c.l.b16 %v2117
      %v2182 = vunpack.c.l.b16 %v2118
      %v2183 = vunpack.c.l.b16 %v2119
      %v2184 = vunpack.c.l.b16 %v2120
      %v2185 = vunpack.c.l.b16 %v2121
      %v2186 = vunpack.c.l.b16 %v2122
      %v2187 = vunpack.c.l.b16 %v2123
      %v2188 = vunpack.c.l.b16 %v2124
      %v2189 = vunpack.c.l.b16 %v2125
      %v2190 = vunpack.c.l.b16 %v2126
      %v2191 = vunpack.c.l.b16 %v2127
      %v2192 = vunpack.c.l.b16 %v2128
      %v2193 = vunpack.c.l.b16 %v2129
      %v2194 = vunpack.c.l.b16 %v2130
      %v2195 = vpack.c.b16 %v2164, %v2163
      %v2196 = vpack.c.b16 %v2166, %v2165
      %v2197 = vpack.c.b16 %v2168, %v2167
      %v2198 = vpack.c.b16 %v2170, %v2169
      %v2199 = vpack.c.b16 %v2172, %v2171
      %v2200 = vpack.c.b16 %v2174, %v2173
      %v2201 = vpack.c.b16 %v2176, %v2175
      %v2202 = vpack.c.b16 %v2178, %v2177
      %v2203 = vpack.c.b16 %v2180, %v2179
      %v2204 = vpack.c.b16 %v2182, %v2181
      %v2205 = vpack.c.b16 %v2184, %v2183
      %v2206 = vpack.c.b16 %v2186, %v2185
      %v2207 = vpack.c.b16 %v2188, %v2187
      %v2208 = vpack.c.b16 %v2190, %v2189
      %v2209 = vpack.c.b16 %v2192, %v2191
      %v2210 = vpack.c.b16 %v2194, %v2193
      %vm2227 = vcmask 64512
      %2228 = vst.msk [vmem:[#allocation3] sm:$0xff] %vm2227, %v2195
      %2229 = vst.msk [vmem:[#allocation3 + $0x8] sm:$0xff] %vm2227, %v2196
      %2230 = vst.msk [vmem:[#allocation3 + $0x10] sm:$0xff] %vm2227, %v2197
      %2231 = vst.msk [vmem:[#allocation3 + $0x18] sm:$0xff] %vm2227, %v2198
      %2232 = vst.msk [vmem:[#allocation3 + $0x20] sm:$0xff] %vm2227, %v2199
      %2233 = vst.msk [vmem:[#allocation3 + $0x28] sm:$0xff] %vm2227, %v2200
      %2234 = vst.msk [vmem:[#allocation3 + $0x30] sm:$0xff] %vm2227, %v2201
      %2235 = vst.msk [vmem:[#allocation3 + $0x38] sm:$0xff] %vm2227, %v2202
      %2236 = vst.msk [vmem:[#allocation3 + $0x40] sm:$0xff] %vm2227, %v2203
      %2237 = vst.msk [vmem:[#allocation3 + $0x48] sm:$0xff] %vm2227, %v2204
      %2238 = vst.msk [vmem:[#allocation3 + $0x50] sm:$0xff] %vm2227, %v2205
      %2239 = vst.msk [vmem:[#allocation3 + $0x58] sm:$0xff] %vm2227, %v2206
      %2240 = vst.msk [vmem:[#allocation3 + $0x60] sm:$0xff] %vm2227, %v2207
      %2241 = vst.msk [vmem:[#allocation3 + $0x68] sm:$0xff] %vm2227, %v2208
      %2242 = vst.msk [vmem:[#allocation3 + $0x70] sm:$0xff] %vm2227, %v2209
      %2243 = vst.msk [vmem:[#allocation3 + $0x78] sm:$0xff] %vm2227, %v2210
      %v2244 = vld [vmem:[#allocation2] sm:$0xf]
      %v2245 = vld [vmem:[#allocation2 + $0x4] sm:$0xf]
      %v2246 = vld [vmem:[#allocation2 + $0x8] sm:$0x1]
      %v2247 = vld [vmem:[#allocation2 + $0xc] sm:$0xf]
      %v2248 = vld [vmem:[#allocation2 + $0x10] sm:$0xf]
      %v2249 = vld [vmem:[#allocation2 + $0x14] sm:$0x1]
      %v2250 = vld [vmem:[#allocation2 + $0x18] sm:$0xf]
      %v2251 = vld [vmem:[#allocation2 + $0x1c] sm:$0xf]
      %v2252 = vld [vmem:[#allocation2 + $0x20] sm:$0x1]
      %v2253 = vld [vmem:[#allocation2 + $0x24] sm:$0xf]
      %v2254 = vld [vmem:[#allocation2 + $0x28] sm:$0xf]
      %v2255 = vld [vmem:[#allocation2 + $0x2c] sm:$0x1]
      %v2256 = vld [vmem:[#allocation2 + $0x30] sm:$0xf]
      %v2257 = vld [vmem:[#allocation2 + $0x34] sm:$0xf]
      %v2258 = vld [vmem:[#allocation2 + $0x38] sm:$0x1]
      %v2259 = vld [vmem:[#allocation2 + $0x3c] sm:$0xf]
      %v2260 = vld [vmem:[#allocation2 + $0x40] sm:$0xf]
      %v2261 = vld [vmem:[#allocation2 + $0x44] sm:$0x1]
      %v2262 = vld [vmem:[#allocation2 + $0x48] sm:$0xf]
      %v2263 = vld [vmem:[#allocation2 + $0x4c] sm:$0xf]
      %v2264 = vld [vmem:[#allocation2 + $0x50] sm:$0x1]
      %v2265 = vld [vmem:[#allocation2 + $0x54] sm:$0xf]
      %v2266 = vld [vmem:[#allocation2 + $0x58] sm:$0xf]
      %v2267 = vld [vmem:[#allocation2 + $0x5c] sm:$0x1]
      %v2268 = vld [vmem:[#allocation2 + $0x60] sm:$0xf]
      %v2269 = vld [vmem:[#allocation2 + $0x64] sm:$0xf]
      %v2270 = vld [vmem:[#allocation2 + $0x68] sm:$0x1]
      %v2271 = vld [vmem:[#allocation2 + $0x6c] sm:$0xf]
      %v2272 = vld [vmem:[#allocation2 + $0x70] sm:$0xf]
      %v2273 = vld [vmem:[#allocation2 + $0x74] sm:$0x1]
      %v2274 = vld [vmem:[#allocation2 + $0x78] sm:$0xf]
      %v2275 = vld [vmem:[#allocation2 + $0x7c] sm:$0xf]
      %v2276 = vld [vmem:[#allocation2 + $0x80] sm:$0x1]
      %v2277 = vld [vmem:[#allocation2 + $0x84] sm:$0xf]
      %v2278 = vld [vmem:[#allocation2 + $0x88] sm:$0xf]
      %v2279 = vld [vmem:[#allocation2 + $0x8c] sm:$0x1]
      %v2280 = vld [vmem:[#allocation2 + $0x90] sm:$0xf]
      %v2281 = vld [vmem:[#allocation2 + $0x94] sm:$0xf]
      %v2282 = vld [vmem:[#allocation2 + $0x98] sm:$0x1]
      %v2283 = vld [vmem:[#allocation2 + $0x9c] sm:$0xf]
      %v2284 = vld [vmem:[#allocation2 + $0xa0] sm:$0xf]
      %v2285 = vld [vmem:[#allocation2 + $0xa4] sm:$0x1]
      %v2286 = vld [vmem:[#allocation2 + $0xa8] sm:$0xf]
      %v2287 = vld [vmem:[#allocation2 + $0xac] sm:$0xf]
      %v2288 = vld [vmem:[#allocation2 + $0xb0] sm:$0x1]
      %v2289 = vld [vmem:[#allocation2 + $0xb4] sm:$0xf]
      %v2290 = vld [vmem:[#allocation2 + $0xb8] sm:$0xf]
      %v2291 = vld [vmem:[#allocation2 + $0xbc] sm:$0x1]
      %vm2292 = vsmask.f32 7440
      %vm2293 = vmor %vm1087, %vm2292
      %v2295 = vshrl.u32 %v2244, 16
      %v2297 = vrot.slane %v2295, 4
      %v2298 = vshll.u32 %v2244, 16
      %v2300 = vrot.slane %v2298, 5
      %v2301 = vor.u32 %v2297, %v2300
      %v2302 = vrot.slane %v2301, 4
      %v2304 = vshll.u32 %v2245, 16
      %v2306 = vrot.slane %v2304, 5
      %v2307 = vsel %vm2293, %v2302, %v2306
      %v2308 = vshrl.u32 %v2245, 16
      %v2310 = vrot.slane %v2308, 4
      %v2311 = vor.u32 %v2310, %v2306
      %v2312 = vrot.slane %v2311, 4
      %v2314 = vshll.u32 %v2246, 16
      %v2316 = vrot.slane %v2314, 5
      %v2317 = vsel %vm2293, %v2312, %v2316
      %v2319 = vshrl.u32 %v2247, 16
      %v2321 = vrot.slane %v2319, 4
      %v2322 = vshll.u32 %v2247, 16
      %v2324 = vrot.slane %v2322, 5
      %v2325 = vor.u32 %v2321, %v2324
      %v2326 = vrot.slane %v2325, 4
      %v2328 = vshll.u32 %v2248, 16
      %v2330 = vrot.slane %v2328, 5
      %v2331 = vsel %vm2293, %v2326, %v2330
      %v2332 = vshrl.u32 %v2248, 16
      %v2334 = vrot.slane %v2332, 4
      %v2335 = vor.u32 %v2334, %v2330
      %v2336 = vrot.slane %v2335, 4
      %v2338 = vshll.u32 %v2249, 16
      %v2340 = vrot.slane %v2338, 5
      %v2341 = vsel %vm2293, %v2336, %v2340
      %v2343 = vshrl.u32 %v2250, 16
      %v2345 = vrot.slane %v2343, 4
      %v2346 = vshll.u32 %v2250, 16
      %v2348 = vrot.slane %v2346, 5
      %v2349 = vor.u32 %v2345, %v2348
      %v2350 = vrot.slane %v2349, 4
      %v2352 = vshll.u32 %v2251, 16
      %v2354 = vrot.slane %v2352, 5
      %v2355 = vsel %vm2293, %v2350, %v2354
      %v2356 = vshrl.u32 %v2251, 16
      %v2358 = vrot.slane %v2356, 4
      %v2359 = vor.u32 %v2358, %v2354
      %v2360 = vrot.slane %v2359, 4
      %v2362 = vshll.u32 %v2252, 16
      %v2364 = vrot.slane %v2362, 5
      %v2365 = vsel %vm2293, %v2360, %v2364
      %v2367 = vshrl.u32 %v2253, 16
      %v2369 = vrot.slane %v2367, 4
      %v2370 = vshll.u32 %v2253, 16
      %v2372 = vrot.slane %v2370, 5
      %v2373 = vor.u32 %v2369, %v2372
      %v2374 = vrot.slane %v2373, 4
      %v2376 = vshll.u32 %v2254, 16
      %v2378 = vrot.slane %v2376, 5
      %v2379 = vsel %vm2293, %v2374, %v2378
      %v2380 = vshrl.u32 %v2254, 16
      %v2382 = vrot.slane %v2380, 4
      %v2383 = vor.u32 %v2382, %v2378
      %v2384 = vrot.slane %v2383, 4
      %v2386 = vshll.u32 %v2255, 16
      %v2388 = vrot.slane %v2386, 5
      %v2389 = vsel %vm2293, %v2384, %v2388
      %v2391 = vshrl.u32 %v2256, 16
      %v2393 = vrot.slane %v2391, 4
      %v2394 = vshll.u32 %v2256, 16
      %v2396 = vrot.slane %v2394, 5
      %v2397 = vor.u32 %v2393, %v2396
      %v2398 = vrot.slane %v2397, 4
      %v2400 = vshll.u32 %v2257, 16
      %v2402 = vrot.slane %v2400, 5
      %v2403 = vsel %vm2293, %v2398, %v2402
      %v2404 = vshrl.u32 %v2257, 16
      %v2406 = vrot.slane %v2404, 4
      %v2407 = vor.u32 %v2406, %v2402
      %v2408 = vrot.slane %v2407, 4
      %v2410 = vshll.u32 %v2258, 16
      %v2412 = vrot.slane %v2410, 5
      %v2413 = vsel %vm2293, %v2408, %v2412
      %v2415 = vshrl.u32 %v2259, 16
      %v2417 = vrot.slane %v2415, 4
      %v2418 = vshll.u32 %v2259, 16
      %v2420 = vrot.slane %v2418, 5
      %v2421 = vor.u32 %v2417, %v2420
      %v2422 = vrot.slane %v2421, 4
      %v2424 = vshll.u32 %v2260, 16
      %v2426 = vrot.slane %v2424, 5
      %v2427 = vsel %vm2293, %v2422, %v2426
      %v2428 = vshrl.u32 %v2260, 16
      %v2430 = vrot.slane %v2428, 4
      %v2431 = vor.u32 %v2430, %v2426
      %v2432 = vrot.slane %v2431, 4
      %v2434 = vshll.u32 %v2261, 16
      %v2436 = vrot.slane %v2434, 5
      %v2437 = vsel %vm2293, %v2432, %v2436
      %v2439 = vshrl.u32 %v2262, 16
      %v2441 = vrot.slane %v2439, 4
      %v2442 = vshll.u32 %v2262, 16
      %v2444 = vrot.slane %v2442, 5
      %v2445 = vor.u32 %v2441, %v2444
      %v2446 = vrot.slane %v2445, 4
      %v2448 = vshll.u32 %v2263, 16
      %v2450 = vrot.slane %v2448, 5
      %v2451 = vsel %vm2293, %v2446, %v2450
      %v2452 = vshrl.u32 %v2263, 16
      %v2454 = vrot.slane %v2452, 4
      %v2455 = vor.u32 %v2454, %v2450
      %v2456 = vrot.slane %v2455, 4
      %v2458 = vshll.u32 %v2264, 16
      %v2460 = vrot.slane %v2458, 5
      %v2461 = vsel %vm2293, %v2456, %v2460
      %v2463 = vshrl.u32 %v2265, 16
      %v2465 = vrot.slane %v2463, 4
      %v2466 = vshll.u32 %v2265, 16
      %v2468 = vrot.slane %v2466, 5
      %v2469 = vor.u32 %v2465, %v2468
      %v2470 = vrot.slane %v2469, 4
      %v2472 = vshll.u32 %v2266, 16
      %v2474 = vrot.slane %v2472, 5
      %v2475 = vsel %vm2293, %v2470, %v2474
      %v2476 = vshrl.u32 %v2266, 16
      %v2478 = vrot.slane %v2476, 4
      %v2479 = vor.u32 %v2478, %v2474
      %v2480 = vrot.slane %v2479, 4
      %v2482 = vshll.u32 %v2267, 16
      %v2484 = vrot.slane %v2482, 5
      %v2485 = vsel %vm2293, %v2480, %v2484
      %v2487 = vshrl.u32 %v2268, 16
      %v2489 = vrot.slane %v2487, 4
      %v2490 = vshll.u32 %v2268, 16
      %v2492 = vrot.slane %v2490, 5
      %v2493 = vor.u32 %v2489, %v2492
      %v2494 = vrot.slane %v2493, 4
      %v2496 = vshll.u32 %v2269, 16
      %v2498 = vrot.slane %v2496, 5
      %v2499 = vsel %vm2293, %v2494, %v2498
      %v2500 = vshrl.u32 %v2269, 16
      %v2502 = vrot.slane %v2500, 4
      %v2503 = vor.u32 %v2502, %v2498
      %v2504 = vrot.slane %v2503, 4
      %v2506 = vshll.u32 %v2270, 16
      %v2508 = vrot.slane %v2506, 5
      %v2509 = vsel %vm2293, %v2504, %v2508
      %v2511 = vshrl.u32 %v2271, 16
      %v2513 = vrot.slane %v2511, 4
      %v2514 = vshll.u32 %v2271, 16
      %v2516 = vrot.slane %v2514, 5
      %v2517 = vor.u32 %v2513, %v2516
      %v2518 = vrot.slane %v2517, 4
      %v2520 = vshll.u32 %v2272, 16
      %v2522 = vrot.slane %v2520, 5
      %v2523 = vsel %vm2293, %v2518, %v2522
      %v2524 = vshrl.u32 %v2272, 16
      %v2526 = vrot.slane %v2524, 4
      %v2527 = vor.u32 %v2526, %v2522
      %v2528 = vrot.slane %v2527, 4
      %v2530 = vshll.u32 %v2273, 16
      %v2532 = vrot.slane %v2530, 5
      %v2533 = vsel %vm2293, %v2528, %v2532
      %v2535 = vshrl.u32 %v2274, 16
      %v2537 = vrot.slane %v2535, 4
      %v2538 = vshll.u32 %v2274, 16
      %v2540 = vrot.slane %v2538, 5
      %v2541 = vor.u32 %v2537, %v2540
      %v2542 = vrot.slane %v2541, 4
      %v2544 = vshll.u32 %v2275, 16
      %v2546 = vrot.slane %v2544, 5
      %v2547 = vsel %vm2293, %v2542, %v2546
      %v2548 = vshrl.u32 %v2275, 16
      %v2550 = vrot.slane %v2548, 4
      %v2551 = vor.u32 %v2550, %v2546
      %v2552 = vrot.slane %v2551, 4
      %v2554 = vshll.u32 %v2276, 16
      %v2556 = vrot.slane %v2554, 5
      %v2557 = vsel %vm2293, %v2552, %v2556
      %v2559 = vshrl.u32 %v2277, 16
      %v2561 = vrot.slane %v2559, 4
      %v2562 = vshll.u32 %v2277, 16
      %v2564 = vrot.slane %v2562, 5
      %v2565 = vor.u32 %v2561, %v2564
      %v2566 = vrot.slane %v2565, 4
      %v2568 = vshll.u32 %v2278, 16
      %v2570 = vrot.slane %v2568, 5
      %v2571 = vsel %vm2293, %v2566, %v2570
      %v2572 = vshrl.u32 %v2278, 16
      %v2574 = vrot.slane %v2572, 4
      %v2575 = vor.u32 %v2574, %v2570
      %v2576 = vrot.slane %v2575, 4
      %v2578 = vshll.u32 %v2279, 16
      %v2580 = vrot.slane %v2578, 5
      %v2581 = vsel %vm2293, %v2576, %v2580
      %v2583 = vshrl.u32 %v2280, 16
      %v2585 = vrot.slane %v2583, 4
      %v2586 = vshll.u32 %v2280, 16
      %v2588 = vrot.slane %v2586, 5
      %v2589 = vor.u32 %v2585, %v2588
      %v2590 = vrot.slane %v2589, 4
      %v2592 = vshll.u32 %v2281, 16
      %v2594 = vrot.slane %v2592, 5
      %v2595 = vsel %vm2293, %v2590, %v2594
      %v2596 = vshrl.u32 %v2281, 16
      %v2598 = vrot.slane %v2596, 4
      %v2599 = vor.u32 %v2598, %v2594
      %v2600 = vrot.slane %v2599, 4
      %v2602 = vshll.u32 %v2282, 16
      %v2604 = vrot.slane %v2602, 5
      %v2605 = vsel %vm2293, %v2600, %v2604
      %v2607 = vshrl.u32 %v2283, 16
      %v2609 = vrot.slane %v2607, 4
      %v2610 = vshll.u32 %v2283, 16
      %v2612 = vrot.slane %v2610, 5
      %v2613 = vor.u32 %v2609, %v2612
      %v2614 = vrot.slane %v2613, 4
      %v2616 = vshll.u32 %v2284, 16
      %v2618 = vrot.slane %v2616, 5
      %v2619 = vsel %vm2293, %v2614, %v2618
      %v2620 = vshrl.u32 %v2284, 16
      %v2622 = vrot.slane %v2620, 4
      %v2623 = vor.u32 %v2622, %v2618
      %v2624 = vrot.slane %v2623, 4
      %v2626 = vshll.u32 %v2285, 16
      %v2628 = vrot.slane %v2626, 5
      %v2629 = vsel %vm2293, %v2624, %v2628
      %v2631 = vshrl.u32 %v2286, 16
      %v2633 = vrot.slane %v2631, 4
      %v2634 = vshll.u32 %v2286, 16
      %v2636 = vrot.slane %v2634, 5
      %v2637 = vor.u32 %v2633, %v2636
      %v2638 = vrot.slane %v2637, 4
      %v2640 = vshll.u32 %v2287, 16
      %v2642 = vrot.slane %v2640, 5
      %v2643 = vsel %vm2293, %v2638, %v2642
      %v2644 = vshrl.u32 %v2287, 16
      %v2646 = vrot.slane %v2644, 4
      %v2647 = vor.u32 %v2646, %v2642
      %v2648 = vrot.slane %v2647, 4
      %v2650 = vshll.u32 %v2288, 16
      %v2652 = vrot.slane %v2650, 5
      %v2653 = vsel %vm2293, %v2648, %v2652
      %v2655 = vshrl.u32 %v2289, 16
      %v2657 = vrot.slane %v2655, 4
      %v2658 = vshll.u32 %v2289, 16
      %v2660 = vrot.slane %v2658, 5
      %v2661 = vor.u32 %v2657, %v2660
      %v2662 = vrot.slane %v2661, 4
      %v2664 = vshll.u32 %v2290, 16
      %v2666 = vrot.slane %v2664, 5
      %v2667 = vsel %vm2293, %v2662, %v2666
      %v2668 = vshrl.u32 %v2290, 16
      %v2670 = vrot.slane %v2668, 4
      %v2671 = vor.u32 %v2670, %v2666
      %v2672 = vrot.slane %v2671, 4
      %v2674 = vshll.u32 %v2291, 16
      %v2676 = vrot.slane %v2674, 5
      %v2677 = vsel %vm2293, %v2672, %v2676
      %v2678 = vunpack.c.l.b16 %v2307
      %v2679 = vunpack.c.l.b16 %v2317
      %v2680 = vunpack.c.l.b16 %v2331
      %v2681 = vunpack.c.l.b16 %v2341
      %v2682 = vunpack.c.l.b16 %v2355
      %v2683 = vunpack.c.l.b16 %v2365
      %v2684 = vunpack.c.l.b16 %v2379
      %v2685 = vunpack.c.l.b16 %v2389
      %v2686 = vunpack.c.l.b16 %v2403
      %v2687 = vunpack.c.l.b16 %v2413
      %v2688 = vunpack.c.l.b16 %v2427
      %v2689 = vunpack.c.l.b16 %v2437
      %v2690 = vunpack.c.l.b16 %v2451
      %v2691 = vunpack.c.l.b16 %v2461
      %v2692 = vunpack.c.l.b16 %v2475
      %v2693 = vunpack.c.l.b16 %v2485
      %v2694 = vunpack.c.l.b16 %v2499
      %v2695 = vunpack.c.l.b16 %v2509
      %v2696 = vunpack.c.l.b16 %v2523
      %v2697 = vunpack.c.l.b16 %v2533
      %v2698 = vunpack.c.l.b16 %v2547
      %v2699 = vunpack.c.l.b16 %v2557
      %v2700 = vunpack.c.l.b16 %v2571
      %v2701 = vunpack.c.l.b16 %v2581
      %v2702 = vunpack.c.l.b16 %v2595
      %v2703 = vunpack.c.l.b16 %v2605
      %v2704 = vunpack.c.l.b16 %v2619
      %v2705 = vunpack.c.l.b16 %v2629
      %v2706 = vunpack.c.l.b16 %v2643
      %v2707 = vunpack.c.l.b16 %v2653
      %v2708 = vunpack.c.l.b16 %v2667
      %v2709 = vunpack.c.l.b16 %v2677
      %v2710 = vpack.c.b16 %v2679, %v2678
      %v2711 = vpack.c.b16 %v2681, %v2680
      %v2712 = vpack.c.b16 %v2683, %v2682
      %v2713 = vpack.c.b16 %v2685, %v2684
      %v2714 = vpack.c.b16 %v2687, %v2686
      %v2715 = vpack.c.b16 %v2689, %v2688
      %v2716 = vpack.c.b16 %v2691, %v2690
      %v2717 = vpack.c.b16 %v2693, %v2692
      %v2718 = vpack.c.b16 %v2695, %v2694
      %v2719 = vpack.c.b16 %v2697, %v2696
      %v2720 = vpack.c.b16 %v2699, %v2698
      %v2721 = vpack.c.b16 %v2701, %v2700
      %v2722 = vpack.c.b16 %v2703, %v2702
      %v2723 = vpack.c.b16 %v2705, %v2704
      %v2724 = vpack.c.b16 %v2707, %v2706
      %v2725 = vpack.c.b16 %v2709, %v2708
      %2726 = vrot.lane.b32.xlu0 %v2710, 8
      %v2727 = vpop.permute.xlu0 %2726
      %2728 = vrot.lane.b32.xlu0 %v2711, 8
      %v2729 = vpop.permute.xlu0 %2728
      %2730 = vrot.lane.b32.xlu0 %v2712, 8
      %v2731 = vpop.permute.xlu0 %2730
      %2732 = vrot.lane.b32.xlu0 %v2713, 8
      %v2733 = vpop.permute.xlu0 %2732
      %2734 = vrot.lane.b32.xlu0 %v2714, 8
      %v2735 = vpop.permute.xlu0 %2734
      %2736 = vrot.lane.b32.xlu0 %v2715, 8
      %v2737 = vpop.permute.xlu0 %2736
      %2738 = vrot.lane.b32.xlu0 %v2716, 8
      %v2739 = vpop.permute.xlu0 %2738
      %2740 = vrot.lane.b32.xlu0 %v2717, 8
      %v2741 = vpop.permute.xlu0 %2740
      %2742 = vrot.lane.b32.xlu0 %v2718, 8
      %v2743 = vpop.permute.xlu0 %2742
      %2744 = vrot.lane.b32.xlu0 %v2719, 8
      %v2745 = vpop.permute.xlu0 %2744
      %2746 = vrot.lane.b32.xlu0 %v2720, 8
      %v2747 = vpop.permute.xlu0 %2746
      %2748 = vrot.lane.b32.xlu0 %v2721, 8
      %v2749 = vpop.permute.xlu0 %2748
      %2750 = vrot.lane.b32.xlu0 %v2722, 8
      %v2751 = vpop.permute.xlu0 %2750
      %2752 = vrot.lane.b32.xlu0 %v2723, 8
      %v2753 = vpop.permute.xlu0 %2752
      %2754 = vrot.lane.b32.xlu0 %v2724, 8
      %v2755 = vpop.permute.xlu0 %2754
      %2756 = vrot.lane.b32.xlu0 %v2725, 8
      %v2757 = vpop.permute.xlu0 %2756
      %vm2774 = vcmask 130112
      %2775 = vst.msk [vmem:[#allocation3] sm:$0xff] %vm2774, %v2727
      %2776 = vst.msk [vmem:[#allocation3 + $0x8] sm:$0xff] %vm2774, %v2729
      %2777 = vst.msk [vmem:[#allocation3 + $0x10] sm:$0xff] %vm2774, %v2731
      %2778 = vst.msk [vmem:[#allocation3 + $0x18] sm:$0xff] %vm2774, %v2733
      %2779 = vst.msk [vmem:[#allocation3 + $0x20] sm:$0xff] %vm2774, %v2735
      %2780 = vst.msk [vmem:[#allocation3 + $0x28] sm:$0xff] %vm2774, %v2737
      %2781 = vst.msk [vmem:[#allocation3 + $0x30] sm:$0xff] %vm2774, %v2739
      %2782 = vst.msk [vmem:[#allocation3 + $0x38] sm:$0xff] %vm2774, %v2741
      %2783 = vst.msk [vmem:[#allocation3 + $0x40] sm:$0xff] %vm2774, %v2743
      %2784 = vst.msk [vmem:[#allocation3 + $0x48] sm:$0xff] %vm2774, %v2745
      %2785 = vst.msk [vmem:[#allocation3 + $0x50] sm:$0xff] %vm2774, %v2747
      %2786 = vst.msk [vmem:[#allocation3 + $0x58] sm:$0xff] %vm2774, %v2749
      %2787 = vst.msk [vmem:[#allocation3 + $0x60] sm:$0xff] %vm2774, %v2751
      %2788 = vst.msk [vmem:[#allocation3 + $0x68] sm:$0xff] %vm2774, %v2753
      %2789 = vst.msk [vmem:[#allocation3 + $0x70] sm:$0xff] %vm2774, %v2755
      %2790 = vst.msk [vmem:[#allocation3 + $0x78] sm:$0xff] %vm2774, %v2757
      %v2791 = vld [vmem:[#allocation2] sm:$0xe]
      %v2792 = vld [vmem:[#allocation2 + $0x4] sm:$0xf]
      %v2793 = vld [vmem:[#allocation2 + $0x8] sm:$0x1]
      %v2794 = vld [vmem:[#allocation2 + $0xc] sm:$0xe]
      %v2795 = vld [vmem:[#allocation2 + $0x10] sm:$0xf]
      %v2796 = vld [vmem:[#allocation2 + $0x14] sm:$0x1]
      %v2797 = vld [vmem:[#allocation2 + $0x18] sm:$0xe]
      %v2798 = vld [vmem:[#allocation2 + $0x1c] sm:$0xf]
      %v2799 = vld [vmem:[#allocation2 + $0x20] sm:$0x1]
      %v2800 = vld [vmem:[#allocation2 + $0x24] sm:$0xe]
      %v2801 = vld [vmem:[#allocation2 + $0x28] sm:$0xf]
      %v2802 = vld [vmem:[#allocation2 + $0x2c] sm:$0x1]
      %v2803 = vld [vmem:[#allocation2 + $0x30] sm:$0xe]
      %v2804 = vld [vmem:[#allocation2 + $0x34] sm:$0xf]
      %v2805 = vld [vmem:[#allocation2 + $0x38] sm:$0x1]
      %v2806 = vld [vmem:[#allocation2 + $0x3c] sm:$0xe]
      %v2807 = vld [vmem:[#allocation2 + $0x40] sm:$0xf]
      %v2808 = vld [vmem:[#allocation2 + $0x44] sm:$0x1]
      %v2809 = vld [vmem:[#allocation2 + $0x48] sm:$0xe]
      %v2810 = vld [vmem:[#allocation2 + $0x4c] sm:$0xf]
      %v2811 = vld [vmem:[#allocation2 + $0x50] sm:$0x1]
      %v2812 = vld [vmem:[#allocation2 + $0x54] sm:$0xe]
      %v2813 = vld [vmem:[#allocation2 + $0x58] sm:$0xf]
      %v2814 = vld [vmem:[#allocation2 + $0x5c] sm:$0x1]
      %v2815 = vld [vmem:[#allocation2 + $0x60] sm:$0xe]
      %v2816 = vld [vmem:[#allocation2 + $0x64] sm:$0xf]
      %v2817 = vld [vmem:[#allocation2 + $0x68] sm:$0x1]
      %v2818 = vld [vmem:[#allocation2 + $0x6c] sm:$0xe]
      %v2819 = vld [vmem:[#allocation2 + $0x70] sm:$0xf]
      %v2820 = vld [vmem:[#allocation2 + $0x74] sm:$0x1]
      %v2821 = vld [vmem:[#allocation2 + $0x78] sm:$0xe]
      %v2822 = vld [vmem:[#allocation2 + $0x7c] sm:$0xf]
      %v2823 = vld [vmem:[#allocation2 + $0x80] sm:$0x1]
      %v2824 = vld [vmem:[#allocation2 + $0x84] sm:$0xe]
      %v2825 = vld [vmem:[#allocation2 + $0x88] sm:$0xf]
      %v2826 = vld [vmem:[#allocation2 + $0x8c] sm:$0x1]
      %v2827 = vld [vmem:[#allocation2 + $0x90] sm:$0xe]
      %v2828 = vld [vmem:[#allocation2 + $0x94] sm:$0xf]
      %v2829 = vld [vmem:[#allocation2 + $0x98] sm:$0x1]
      %v2830 = vld [vmem:[#allocation2 + $0x9c] sm:$0xe]
      %v2831 = vld [vmem:[#allocation2 + $0xa0] sm:$0xf]
      %v2832 = vld [vmem:[#allocation2 + $0xa4] sm:$0x1]
      %v2833 = vld [vmem:[#allocation2 + $0xa8] sm:$0xe]
      %v2834 = vld [vmem:[#allocation2 + $0xac] sm:$0xf]
      %v2835 = vld [vmem:[#allocation2 + $0xb0] sm:$0x1]
      %v2836 = vld [vmem:[#allocation2 + $0xb4] sm:$0xe]
      %v2837 = vld [vmem:[#allocation2 + $0xb8] sm:$0xf]
      %v2838 = vld [vmem:[#allocation2 + $0xbc] sm:$0x1]
      %vm2887 = vcmask 1042432
      %vm2888 = vcmask 1046532
      %vm2889 = vmor %vm2887, %vm2888
      %v2890 = vrot.slane %v2791, 5
      %v2891 = vrot.slane %v2890, 4
      %v2892 = vrot.slane %v2792, 5
      %v2893 = vsel %vm2889, %v2891, %v2892
      %v2894 = vrot.slane %v2892, 4
      %v2895 = vrot.slane %v2793, 5
      %v2896 = vsel %vm2889, %v2894, %v2895
      %v2897 = vrot.slane %v2794, 5
      %v2898 = vrot.slane %v2897, 4
      %v2899 = vrot.slane %v2795, 5
      %v2900 = vsel %vm2889, %v2898, %v2899
      %v2901 = vrot.slane %v2899, 4
      %v2902 = vrot.slane %v2796, 5
      %v2903 = vsel %vm2889, %v2901, %v2902
      %v2904 = vrot.slane %v2797, 5
      %v2905 = vrot.slane %v2904, 4
      %v2906 = vrot.slane %v2798, 5
      %v2907 = vsel %vm2889, %v2905, %v2906
      %v2908 = vrot.slane %v2906, 4
      %v2909 = vrot.slane %v2799, 5
      %v2910 = vsel %vm2889, %v2908, %v2909
      %v2911 = vrot.slane %v2800, 5
      %v2912 = vrot.slane %v2911, 4
      %v2913 = vrot.slane %v2801, 5
      %v2914 = vsel %vm2889, %v2912, %v2913
      %v2915 = vrot.slane %v2913, 4
      %v2916 = vrot.slane %v2802, 5
      %v2917 = vsel %vm2889, %v2915, %v2916
      %v2918 = vrot.slane %v2803, 5
      %v2919 = vrot.slane %v2918, 4
      %v2920 = vrot.slane %v2804, 5
      %v2921 = vsel %vm2889, %v2919, %v2920
      %v2922 = vrot.slane %v2920, 4
      %v2923 = vrot.slane %v2805, 5
      %v2924 = vsel %vm2889, %v2922, %v2923
      %v2925 = vrot.slane %v2806, 5
      %v2926 = vrot.slane %v2925, 4
      %v2927 = vrot.slane %v2807, 5
      %v2928 = vsel %vm2889, %v2926, %v2927
      %v2929 = vrot.slane %v2927, 4
      %v2930 = vrot.slane %v2808, 5
      %v2931 = vsel %vm2889, %v2929, %v2930
      %v2932 = vrot.slane %v2809, 5
      %v2933 = vrot.slane %v2932, 4
      %v2934 = vrot.slane %v2810, 5
      %v2935 = vsel %vm2889, %v2933, %v2934
      %v2936 = vrot.slane %v2934, 4
      %v2937 = vrot.slane %v2811, 5
      %v2938 = vsel %vm2889, %v2936, %v2937
      %v2939 = vrot.slane %v2812, 5
      %v2940 = vrot.slane %v2939, 4
      %v2941 = vrot.slane %v2813, 5
      %v2942 = vsel %vm2889, %v2940, %v2941
      %v2943 = vrot.slane %v2941, 4
      %v2944 = vrot.slane %v2814, 5
      %v2945 = vsel %vm2889, %v2943, %v2944
      %v2946 = vrot.slane %v2815, 5
      %v2947 = vrot.slane %v2946, 4
      %v2948 = vrot.slane %v2816, 5
      %v2949 = vsel %vm2889, %v2947, %v2948
      %v2950 = vrot.slane %v2948, 4
      %v2951 = vrot.slane %v2817, 5
      %v2952 = vsel %vm2889, %v2950, %v2951
      %v2953 = vrot.slane %v2818, 5
      %v2954 = vrot.slane %v2953, 4
      %v2955 = vrot.slane %v2819, 5
      %v2956 = vsel %vm2889, %v2954, %v2955
      %v2957 = vrot.slane %v2955, 4
      %v2958 = vrot.slane %v2820, 5
      %v2959 = vsel %vm2889, %v2957, %v2958
      %v2960 = vrot.slane %v2821, 5
      %v2961 = vrot.slane %v2960, 4
      %v2962 = vrot.slane %v2822, 5
      %v2963 = vsel %vm2889, %v2961, %v2962
      %v2964 = vrot.slane %v2962, 4
      %v2965 = vrot.slane %v2823, 5
      %v2966 = vsel %vm2889, %v2964, %v2965
      %v2967 = vrot.slane %v2824, 5
      %v2968 = vrot.slane %v2967, 4
      %v2969 = vrot.slane %v2825, 5
      %v2970 = vsel %vm2889, %v2968, %v2969
      %v2971 = vrot.slane %v2969, 4
      %v2972 = vrot.slane %v2826, 5
      %v2973 = vsel %vm2889, %v2971, %v2972
      %v2974 = vrot.slane %v2827, 5
      %v2975 = vrot.slane %v2974, 4
      %v2976 = vrot.slane %v2828, 5
      %v2977 = vsel %vm2889, %v2975, %v2976
      %v2978 = vrot.slane %v2976, 4
      %v2979 = vrot.slane %v2829, 5
      %v2980 = vsel %vm2889, %v2978, %v2979
      %v2981 = vrot.slane %v2830, 5
      %v2982 = vrot.slane %v2981, 4
      %v2983 = vrot.slane %v2831, 5
      %v2984 = vsel %vm2889, %v2982, %v2983
      %v2985 = vrot.slane %v2983, 4
      %v2986 = vrot.slane %v2832, 5
      %v2987 = vsel %vm2889, %v2985, %v2986
      %v2988 = vrot.slane %v2833, 5
      %v2989 = vrot.slane %v2988, 4
      %v2990 = vrot.slane %v2834, 5
      %v2991 = vsel %vm2889, %v2989, %v2990
      %v2992 = vrot.slane %v2990, 4
      %v2993 = vrot.slane %v2835, 5
      %v2994 = vsel %vm2889, %v2992, %v2993
      %v2995 = vrot.slane %v2836, 5
      %v2996 = vrot.slane %v2995, 4
      %v2997 = vrot.slane %v2837, 5
      %v2998 = vsel %vm2889, %v2996, %v2997
      %v2999 = vrot.slane %v2997, 4
      %v3000 = vrot.slane %v2838, 5
      %v3001 = vsel %vm2889, %v2999, %v3000
      %v3002 = vunpack.c.l.b16 %v2893
      %v3003 = vunpack.c.l.b16 %v2896
      %v3004 = vunpack.c.l.b16 %v2900
      %v3005 = vunpack.c.l.b16 %v2903
      %v3006 = vunpack.c.l.b16 %v2907
      %v3007 = vunpack.c.l.b16 %v2910
      %v3008 = vunpack.c.l.b16 %v2914
      %v3009 = vunpack.c.l.b16 %v2917
      %v3010 = vunpack.c.l.b16 %v2921
      %v3011 = vunpack.c.l.b16 %v2924
      %v3012 = vunpack.c.l.b16 %v2928
      %v3013 = vunpack.c.l.b16 %v2931
      %v3014 = vunpack.c.l.b16 %v2935
      %v3015 = vunpack.c.l.b16 %v2938
      %v3016 = vunpack.c.l.b16 %v2942
      %v3017 = vunpack.c.l.b16 %v2945
      %v3018 = vunpack.c.l.b16 %v2949
      %v3019 = vunpack.c.l.b16 %v2952
      %v3020 = vunpack.c.l.b16 %v2956
      %v3021 = vunpack.c.l.b16 %v2959
      %v3022 = vunpack.c.l.b16 %v2963
      %v3023 = vunpack.c.l.b16 %v2966
      %v3024 = vunpack.c.l.b16 %v2970
      %v3025 = vunpack.c.l.b16 %v2973
      %v3026 = vunpack.c.l.b16 %v2977
      %v3027 = vunpack.c.l.b16 %v2980
      %v3028 = vunpack.c.l.b16 %v2984
      %v3029 = vunpack.c.l.b16 %v2987
      %v3030 = vunpack.c.l.b16 %v2991
      %v3031 = vunpack.c.l.b16 %v2994
      %v3032 = vunpack.c.l.b16 %v2998
      %v3033 = vunpack.c.l.b16 %v3001
      %v3034 = vpack.c.b16 %v3003, %v3002
      %v3035 = vpack.c.b16 %v3005, %v3004
      %v3036 = vpack.c.b16 %v3007, %v3006
      %v3037 = vpack.c.b16 %v3009, %v3008
      %v3038 = vpack.c.b16 %v3011, %v3010
      %v3039 = vpack.c.b16 %v3013, %v3012
      %v3040 = vpack.c.b16 %v3015, %v3014
      %v3041 = vpack.c.b16 %v3017, %v3016
      %v3042 = vpack.c.b16 %v3019, %v3018
      %v3043 = vpack.c.b16 %v3021, %v3020
      %v3044 = vpack.c.b16 %v3023, %v3022
      %v3045 = vpack.c.b16 %v3025, %v3024
      %v3046 = vpack.c.b16 %v3027, %v3026
      %v3047 = vpack.c.b16 %v3029, %v3028
      %v3048 = vpack.c.b16 %v3031, %v3030
      %v3049 = vpack.c.b16 %v3033, %v3032
      %3050 = vrot.lane.b32.xlu0 %v3034, 16
      %v3051 = vpop.permute.xlu0 %3050
      %3052 = vrot.lane.b32.xlu0 %v3035, 16
      %v3053 = vpop.permute.xlu0 %3052
      %3054 = vrot.lane.b32.xlu0 %v3036, 16
      %v3055 = vpop.permute.xlu0 %3054
      %3056 = vrot.lane.b32.xlu0 %v3037, 16
      %v3057 = vpop.permute.xlu0 %3056
      %3058 = vrot.lane.b32.xlu0 %v3038, 16
      %v3059 = vpop.permute.xlu0 %3058
      %3060 = vrot.lane.b32.xlu0 %v3039, 16
      %v3061 = vpop.permute.xlu0 %3060
      %3062 = vrot.lane.b32.xlu0 %v3040, 16
      %v3063 = vpop.permute.xlu0 %3062
      %3064 = vrot.lane.b32.xlu0 %v3041, 16
      %v3065 = vpop.permute.xlu0 %3064
      %3066 = vrot.lane.b32.xlu0 %v3042, 16
      %v3067 = vpop.permute.xlu0 %3066
      %3068 = vrot.lane.b32.xlu0 %v3043, 16
      %v3069 = vpop.permute.xlu0 %3068
      %3070 = vrot.lane.b32.xlu0 %v3044, 16
      %v3071 = vpop.permute.xlu0 %3070
      %3072 = vrot.lane.b32.xlu0 %v3045, 16
      %v3073 = vpop.permute.xlu0 %3072
      %3074 = vrot.lane.b32.xlu0 %v3046, 16
      %v3075 = vpop.permute.xlu0 %3074
      %3076 = vrot.lane.b32.xlu0 %v3047, 16
      %v3077 = vpop.permute.xlu0 %3076
      %3078 = vrot.lane.b32.xlu0 %v3048, 16
      %v3079 = vpop.permute.xlu0 %3078
      %3080 = vrot.lane.b32.xlu0 %v3049, 16
      %v3081 = vpop.permute.xlu0 %3080
      %vm3098 = vcmask 195712
      %3099 = vst.msk [vmem:[#allocation3] sm:$0xff] %vm3098, %v3051
      %3100 = vst.msk [vmem:[#allocation3 + $0x8] sm:$0xff] %vm3098, %v3053
      %3101 = vst.msk [vmem:[#allocation3 + $0x10] sm:$0xff] %vm3098, %v3055
      %3102 = vst.msk [vmem:[#allocation3 + $0x18] sm:$0xff] %vm3098, %v3057
      %3103 = vst.msk [vmem:[#allocation3 + $0x20] sm:$0xff] %vm3098, %v3059
      %3104 = vst.msk [vmem:[#allocation3 + $0x28] sm:$0xff] %vm3098, %v3061
      %3105 = vst.msk [vmem:[#allocation3 + $0x30] sm:$0xff] %vm3098, %v3063
      %3106 = vst.msk [vmem:[#allocation3 + $0x38] sm:$0xff] %vm3098, %v3065
      %3107 = vst.msk [vmem:[#allocation3 + $0x40] sm:$0xff] %vm3098, %v3067
      %3108 = vst.msk [vmem:[#allocation3 + $0x48] sm:$0xff] %vm3098, %v3069
      %3109 = vst.msk [vmem:[#allocation3 + $0x50] sm:$0xff] %vm3098, %v3071
      %3110 = vst.msk [vmem:[#allocation3 + $0x58] sm:$0xff] %vm3098, %v3073
      %3111 = vst.msk [vmem:[#allocation3 + $0x60] sm:$0xff] %vm3098, %v3075
      %3112 = vst.msk [vmem:[#allocation3 + $0x68] sm:$0xff] %vm3098, %v3077
      %3113 = vst.msk [vmem:[#allocation3 + $0x70] sm:$0xff] %vm3098, %v3079
      %3114 = vst.msk [vmem:[#allocation3 + $0x78] sm:$0xff] %vm3098, %v3081
      %v3115 = vld [vmem:[%s595] sm:$0xf]
      %v3116 = vld [vmem:[%s595 + $0x4] sm:$0xf]
      %v3117 = vld [vmem:[%s595 + $0xc] sm:$0xf]
      %v3118 = vld [vmem:[%s595 + $0x10] sm:$0xf]
      %v3119 = vld [vmem:[%s595 + $0x18] sm:$0xf]
      %v3120 = vld [vmem:[%s595 + $0x1c] sm:$0xf]
      %v3121 = vld [vmem:[%s595 + $0x24] sm:$0xf]
      %v3122 = vld [vmem:[%s595 + $0x28] sm:$0xf]
      %v3123 = vld [vmem:[%s595 + $0x30] sm:$0xf]
      %v3124 = vld [vmem:[%s595 + $0x34] sm:$0xf]
      %v3125 = vld [vmem:[%s595 + $0x3c] sm:$0xf]
      %v3126 = vld [vmem:[%s595 + $0x40] sm:$0xf]
      %v3127 = vld [vmem:[%s595 + $0x48] sm:$0xf]
      %v3128 = vld [vmem:[%s595 + $0x4c] sm:$0xf]
      %v3129 = vld [vmem:[%s595 + $0x54] sm:$0xf]
      %v3130 = vld [vmem:[%s595 + $0x58] sm:$0xf]
      %v3131 = vld [vmem:[%s595 + $0x60] sm:$0xf]
      %v3132 = vld [vmem:[%s595 + $0x64] sm:$0xf]
      %v3133 = vld [vmem:[%s595 + $0x6c] sm:$0xf]
      %v3134 = vld [vmem:[%s595 + $0x70] sm:$0xf]
      %v3135 = vld [vmem:[%s595 + $0x78] sm:$0xf]
      %v3136 = vld [vmem:[%s595 + $0x7c] sm:$0xf]
      %v3137 = vld [vmem:[%s595 + $0x84] sm:$0xf]
      %v3138 = vld [vmem:[%s595 + $0x88] sm:$0xf]
      %v3139 = vld [vmem:[%s595 + $0x90] sm:$0xf]
      %v3140 = vld [vmem:[%s595 + $0x94] sm:$0xf]
      %v3141 = vld [vmem:[%s595 + $0x9c] sm:$0xf]
      %v3142 = vld [vmem:[%s595 + $0xa0] sm:$0xf]
      %v3143 = vld [vmem:[%s595 + $0xa8] sm:$0xf]
      %v3144 = vld [vmem:[%s595 + $0xac] sm:$0xf]
      %v3145 = vld [vmem:[%s595 + $0xb4] sm:$0xf]
      %v3146 = vld [vmem:[%s595 + $0xb8] sm:$0xf]
      %v3179 = vunpack.c.l.b16 %v3115
      %v3180 = vunpack.c.l.b16 %v3116
      %v3181 = vunpack.c.l.b16 %v3117
      %v3182 = vunpack.c.l.b16 %v3118
      %v3183 = vunpack.c.l.b16 %v3119
      %v3184 = vunpack.c.l.b16 %v3120
      %v3185 = vunpack.c.l.b16 %v3121
      %v3186 = vunpack.c.l.b16 %v3122
      %v3187 = vunpack.c.l.b16 %v3123
      %v3188 = vunpack.c.l.b16 %v3124
      %v3189 = vunpack.c.l.b16 %v3125
      %v3190 = vunpack.c.l.b16 %v3126
      %v3191 = vunpack.c.l.b16 %v3127
      %v3192 = vunpack.c.l.b16 %v3128
      %v3193 = vunpack.c.l.b16 %v3129
      %v3194 = vunpack.c.l.b16 %v3130
      %v3195 = vunpack.c.l.b16 %v3131
      %v3196 = vunpack.c.l.b16 %v3132
      %v3197 = vunpack.c.l.b16 %v3133
      %v3198 = vunpack.c.l.b16 %v3134
      %v3199 = vunpack.c.l.b16 %v3135
      %v3200 = vunpack.c.l.b16 %v3136
      %v3201 = vunpack.c.l.b16 %v3137
      %v3202 = vunpack.c.l.b16 %v3138
      %v3203 = vunpack.c.l.b16 %v3139
      %v3204 = vunpack.c.l.b16 %v3140
      %v3205 = vunpack.c.l.b16 %v3141
      %v3206 = vunpack.c.l.b16 %v3142
      %v3207 = vunpack.c.l.b16 %v3143
      %v3208 = vunpack.c.l.b16 %v3144
      %v3209 = vunpack.c.l.b16 %v3145
      %v3210 = vunpack.c.l.b16 %v3146
      %v3211 = vpack.c.b16 %v3180, %v3179
      %v3212 = vpack.c.b16 %v3182, %v3181
      %v3213 = vpack.c.b16 %v3184, %v3183
      %v3214 = vpack.c.b16 %v3186, %v3185
      %v3215 = vpack.c.b16 %v3188, %v3187
      %v3216 = vpack.c.b16 %v3190, %v3189
      %v3217 = vpack.c.b16 %v3192, %v3191
      %v3218 = vpack.c.b16 %v3194, %v3193
      %v3219 = vpack.c.b16 %v3196, %v3195
      %v3220 = vpack.c.b16 %v3198, %v3197
      %v3221 = vpack.c.b16 %v3200, %v3199
      %v3222 = vpack.c.b16 %v3202, %v3201
      %v3223 = vpack.c.b16 %v3204, %v3203
      %v3224 = vpack.c.b16 %v3206, %v3205
      %v3225 = vpack.c.b16 %v3208, %v3207
      %v3226 = vpack.c.b16 %v3210, %v3209
      %3227 = vrot.lane.b32.xlu0 %v3211, 24
      %v3228 = vpop.permute.xlu0 %3227
      %3229 = vrot.lane.b32.xlu0 %v3212, 24
      %v3230 = vpop.permute.xlu0 %3229
      %3231 = vrot.lane.b32.xlu0 %v3213, 24
      %v3232 = vpop.permute.xlu0 %3231
      %3233 = vrot.lane.b32.xlu0 %v3214, 24
      %v3234 = vpop.permute.xlu0 %3233
      %3235 = vrot.lane.b32.xlu0 %v3215, 24
      %v3236 = vpop.permute.xlu0 %3235
      %3237 = vrot.lane.b32.xlu0 %v3216, 24
      %v3238 = vpop.permute.xlu0 %3237
      %3239 = vrot.lane.b32.xlu0 %v3217, 24
      %v3240 = vpop.permute.xlu0 %3239
      %3241 = vrot.lane.b32.xlu0 %v3218, 24
      %v3242 = vpop.permute.xlu0 %3241
      %3243 = vrot.lane.b32.xlu0 %v3219, 24
      %v3244 = vpop.permute.xlu0 %3243
      %3245 = vrot.lane.b32.xlu0 %v3220, 24
      %v3246 = vpop.permute.xlu0 %3245
      %3247 = vrot.lane.b32.xlu0 %v3221, 24
      %v3248 = vpop.permute.xlu0 %3247
      %3249 = vrot.lane.b32.xlu0 %v3222, 24
      %v3250 = vpop.permute.xlu0 %3249
      %3251 = vrot.lane.b32.xlu0 %v3223, 24
      %v3252 = vpop.permute.xlu0 %3251
      %3253 = vrot.lane.b32.xlu0 %v3224, 24
      %v3254 = vpop.permute.xlu0 %3253
      %3255 = vrot.lane.b32.xlu0 %v3225, 24
      %v3256 = vpop.permute.xlu0 %3255
      %3257 = vrot.lane.b32.xlu0 %v3226, 24
      %v3258 = vpop.permute.xlu0 %3257
      %vm3275 = vcmask 261312
      %3276 = vst.msk [vmem:[#allocation3] sm:$0xff] %vm3275, %v3228
      %3277 = vst.msk [vmem:[#allocation3 + $0x8] sm:$0xff] %vm3275, %v3230
      %3278 = vst.msk [vmem:[#allocation3 + $0x10] sm:$0xff] %vm3275, %v3232
      %3279 = vst.msk [vmem:[#allocation3 + $0x18] sm:$0xff] %vm3275, %v3234
      %3280 = vst.msk [vmem:[#allocation3 + $0x20] sm:$0xff] %vm3275, %v3236
      %3281 = vst.msk [vmem:[#allocation3 + $0x28] sm:$0xff] %vm3275, %v3238
      %3282 = vst.msk [vmem:[#allocation3 + $0x30] sm:$0xff] %vm3275, %v3240
      %3283 = vst.msk [vmem:[#allocation3 + $0x38] sm:$0xff] %vm3275, %v3242
      %3284 = vst.msk [vmem:[#allocation3 + $0x40] sm:$0xff] %vm3275, %v3244
      %3285 = vst.msk [vmem:[#allocation3 + $0x48] sm:$0xff] %vm3275, %v3246
      %3286 = vst.msk [vmem:[#allocation3 + $0x50] sm:$0xff] %vm3275, %v3248
      %3287 = vst.msk [vmem:[#allocation3 + $0x58] sm:$0xff] %vm3275, %v3250
      %3288 = vst.msk [vmem:[#allocation3 + $0x60] sm:$0xff] %vm3275, %v3252
      %3289 = vst.msk [vmem:[#allocation3 + $0x68] sm:$0xff] %vm3275, %v3254
      %3290 = vst.msk [vmem:[#allocation3 + $0x70] sm:$0xff] %vm3275, %v3256
      %3291 = vst.msk [vmem:[#allocation3 + $0x78] sm:$0xff] %vm3275, %v3258
      %v3292 = vld [vmem:[%s595] sm:$0xf]
      %v3293 = vld [vmem:[%s595 + $0x4] sm:$0xf]
      %v3294 = vld [vmem:[%s595 + $0x8] sm:$0x1]
      %v3295 = vld [vmem:[%s595 + $0xc] sm:$0xf]
      %v3296 = vld [vmem:[%s595 + $0x10] sm:$0xf]
      %v3297 = vld [vmem:[%s595 + $0x14] sm:$0x1]
      %v3298 = vld [vmem:[%s595 + $0x18] sm:$0xf]
      %v3299 = vld [vmem:[%s595 + $0x1c] sm:$0xf]
      %v3300 = vld [vmem:[%s595 + $0x20] sm:$0x1]
      %v3301 = vld [vmem:[%s595 + $0x24] sm:$0xf]
      %v3302 = vld [vmem:[%s595 + $0x28] sm:$0xf]
      %v3303 = vld [vmem:[%s595 + $0x2c] sm:$0x1]
      %v3304 = vld [vmem:[%s595 + $0x30] sm:$0xf]
      %v3305 = vld [vmem:[%s595 + $0x34] sm:$0xf]
      %v3306 = vld [vmem:[%s595 + $0x38] sm:$0x1]
      %v3307 = vld [vmem:[%s595 + $0x3c] sm:$0xf]
      %v3308 = vld [vmem:[%s595 + $0x40] sm:$0xf]
      %v3309 = vld [vmem:[%s595 + $0x44] sm:$0x1]
      %v3310 = vld [vmem:[%s595 + $0x48] sm:$0xf]
      %v3311 = vld [vmem:[%s595 + $0x4c] sm:$0xf]
      %v3312 = vld [vmem:[%s595 + $0x50] sm:$0x1]
      %v3313 = vld [vmem:[%s595 + $0x54] sm:$0xf]
      %v3314 = vld [vmem:[%s595 + $0x58] sm:$0xf]
      %v3315 = vld [vmem:[%s595 + $0x5c] sm:$0x1]
      %v3316 = vld [vmem:[%s595 + $0x60] sm:$0xf]
      %v3317 = vld [vmem:[%s595 + $0x64] sm:$0xf]
      %v3318 = vld [vmem:[%s595 + $0x68] sm:$0x1]
      %v3319 = vld [vmem:[%s595 + $0x6c] sm:$0xf]
      %v3320 = vld [vmem:[%s595 + $0x70] sm:$0xf]
      %v3321 = vld [vmem:[%s595 + $0x74] sm:$0x1]
      %v3322 = vld [vmem:[%s595 + $0x78] sm:$0xf]
      %v3323 = vld [vmem:[%s595 + $0x7c] sm:$0xf]
      %v3324 = vld [vmem:[%s595 + $0x80] sm:$0x1]
      %v3325 = vld [vmem:[%s595 + $0x84] sm:$0xf]
      %v3326 = vld [vmem:[%s595 + $0x88] sm:$0xf]
      %v3327 = vld [vmem:[%s595 + $0x8c] sm:$0x1]
      %v3328 = vld [vmem:[%s595 + $0x90] sm:$0xf]
      %v3329 = vld [vmem:[%s595 + $0x94] sm:$0xf]
      %v3330 = vld [vmem:[%s595 + $0x98] sm:$0x1]
      %v3331 = vld [vmem:[%s595 + $0x9c] sm:$0xf]
      %v3332 = vld [vmem:[%s595 + $0xa0] sm:$0xf]
      %v3333 = vld [vmem:[%s595 + $0xa4] sm:$0x1]
      %v3334 = vld [vmem:[%s595 + $0xa8] sm:$0xf]
      %v3335 = vld [vmem:[%s595 + $0xac] sm:$0xf]
      %v3336 = vld [vmem:[%s595 + $0xb0] sm:$0x1]
      %v3337 = vld [vmem:[%s595 + $0xb4] sm:$0xf]
      %v3338 = vld [vmem:[%s595 + $0xb8] sm:$0xf]
      %v3339 = vld [vmem:[%s595 + $0xbc] sm:$0x1]
      %v3341 = vshrl.u32 %v3292, 16
      %v3343 = vrot.slane %v3341, 4
      %v3344 = vshll.u32 %v3292, 16
      %v3346 = vrot.slane %v3344, 5
      %v3347 = vor.u32 %v3343, %v3346
      %v3348 = vrot.slane %v3347, 4
      %v3350 = vshll.u32 %v3293, 16
      %v3352 = vrot.slane %v3350, 5
      %v3353 = vsel %vm2293, %v3348, %v3352
      %v3354 = vshrl.u32 %v3293, 16
      %v3356 = vrot.slane %v3354, 4
      %v3357 = vor.u32 %v3356, %v3352
      %v3358 = vrot.slane %v3357, 4
      %v3360 = vshll.u32 %v3294, 16
      %v3362 = vrot.slane %v3360, 5
      %v3363 = vsel %vm2293, %v3358, %v3362
      %v3365 = vshrl.u32 %v3295, 16
      %v3367 = vrot.slane %v3365, 4
      %v3368 = vshll.u32 %v3295, 16
      %v3370 = vrot.slane %v3368, 5
      %v3371 = vor.u32 %v3367, %v3370
      %v3372 = vrot.slane %v3371, 4
      %v3374 = vshll.u32 %v3296, 16
      %v3376 = vrot.slane %v3374, 5
      %v3377 = vsel %vm2293, %v3372, %v3376
      %v3378 = vshrl.u32 %v3296, 16
      %v3380 = vrot.slane %v3378, 4
      %v3381 = vor.u32 %v3380, %v3376
      %v3382 = vrot.slane %v3381, 4
      %v3384 = vshll.u32 %v3297, 16
      %v3386 = vrot.slane %v3384, 5
      %v3387 = vsel %vm2293, %v3382, %v3386
      %v3389 = vshrl.u32 %v3298, 16
      %v3391 = vrot.slane %v3389, 4
      %v3392 = vshll.u32 %v3298, 16
      %v3394 = vrot.slane %v3392, 5
      %v3395 = vor.u32 %v3391, %v3394
      %v3396 = vrot.slane %v3395, 4
      %v3398 = vshll.u32 %v3299, 16
      %v3400 = vrot.slane %v3398, 5
      %v3401 = vsel %vm2293, %v3396, %v3400
      %v3402 = vshrl.u32 %v3299, 16
      %v3404 = vrot.slane %v3402, 4
      %v3405 = vor.u32 %v3404, %v3400
      %v3406 = vrot.slane %v3405, 4
      %v3408 = vshll.u32 %v3300, 16
      %v3410 = vrot.slane %v3408, 5
      %v3411 = vsel %vm2293, %v3406, %v3410
      %v3413 = vshrl.u32 %v3301, 16
      %v3415 = vrot.slane %v3413, 4
      %v3416 = vshll.u32 %v3301, 16
      %v3418 = vrot.slane %v3416, 5
      %v3419 = vor.u32 %v3415, %v3418
      %v3420 = vrot.slane %v3419, 4
      %v3422 = vshll.u32 %v3302, 16
      %v3424 = vrot.slane %v3422, 5
      %v3425 = vsel %vm2293, %v3420, %v3424
      %v3426 = vshrl.u32 %v3302, 16
      %v3428 = vrot.slane %v3426, 4
      %v3429 = vor.u32 %v3428, %v3424
      %v3430 = vrot.slane %v3429, 4
      %v3432 = vshll.u32 %v3303, 16
      %v3434 = vrot.slane %v3432, 5
      %v3435 = vsel %vm2293, %v3430, %v3434
      %v3437 = vshrl.u32 %v3304, 16
      %v3439 = vrot.slane %v3437, 4
      %v3440 = vshll.u32 %v3304, 16
      %v3442 = vrot.slane %v3440, 5
      %v3443 = vor.u32 %v3439, %v3442
      %v3444 = vrot.slane %v3443, 4
      %v3446 = vshll.u32 %v3305, 16
      %v3448 = vrot.slane %v3446, 5
      %v3449 = vsel %vm2293, %v3444, %v3448
      %v3450 = vshrl.u32 %v3305, 16
      %v3452 = vrot.slane %v3450, 4
      %v3453 = vor.u32 %v3452, %v3448
      %v3454 = vrot.slane %v3453, 4
      %v3456 = vshll.u32 %v3306, 16
      %v3458 = vrot.slane %v3456, 5
      %v3459 = vsel %vm2293, %v3454, %v3458
      %v3461 = vshrl.u32 %v3307, 16
      %v3463 = vrot.slane %v3461, 4
      %v3464 = vshll.u32 %v3307, 16
      %v3466 = vrot.slane %v3464, 5
      %v3467 = vor.u32 %v3463, %v3466
      %v3468 = vrot.slane %v3467, 4
      %v3470 = vshll.u32 %v3308, 16
      %v3472 = vrot.slane %v3470, 5
      %v3473 = vsel %vm2293, %v3468, %v3472
      %v3474 = vshrl.u32 %v3308, 16
      %v3476 = vrot.slane %v3474, 4
      %v3477 = vor.u32 %v3476, %v3472
      %v3478 = vrot.slane %v3477, 4
      %v3480 = vshll.u32 %v3309, 16
      %v3482 = vrot.slane %v3480, 5
      %v3483 = vsel %vm2293, %v3478, %v3482
      %v3485 = vshrl.u32 %v3310, 16
      %v3487 = vrot.slane %v3485, 4
      %v3488 = vshll.u32 %v3310, 16
      %v3490 = vrot.slane %v3488, 5
      %v3491 = vor.u32 %v3487, %v3490
      %v3492 = vrot.slane %v3491, 4
      %v3494 = vshll.u32 %v3311, 16
      %v3496 = vrot.slane %v3494, 5
      %v3497 = vsel %vm2293, %v3492, %v3496
      %v3498 = vshrl.u32 %v3311, 16
      %v3500 = vrot.slane %v3498, 4
      %v3501 = vor.u32 %v3500, %v3496
      %v3502 = vrot.slane %v3501, 4
      %v3504 = vshll.u32 %v3312, 16
      %v3506 = vrot.slane %v3504, 5
      %v3507 = vsel %vm2293, %v3502, %v3506
      %v3509 = vshrl.u32 %v3313, 16
      %v3511 = vrot.slane %v3509, 4
      %v3512 = vshll.u32 %v3313, 16
      %v3514 = vrot.slane %v3512, 5
      %v3515 = vor.u32 %v3511, %v3514
      %v3516 = vrot.slane %v3515, 4
      %v3518 = vshll.u32 %v3314, 16
      %v3520 = vrot.slane %v3518, 5
      %v3521 = vsel %vm2293, %v3516, %v3520
      %v3522 = vshrl.u32 %v3314, 16
      %v3524 = vrot.slane %v3522, 4
      %v3525 = vor.u32 %v3524, %v3520
      %v3526 = vrot.slane %v3525, 4
      %v3528 = vshll.u32 %v3315, 16
      %v3530 = vrot.slane %v3528, 5
      %v3531 = vsel %vm2293, %v3526, %v3530
      %v3533 = vshrl.u32 %v3316, 16
      %v3535 = vrot.slane %v3533, 4
      %v3536 = vshll.u32 %v3316, 16
      %v3538 = vrot.slane %v3536, 5
      %v3539 = vor.u32 %v3535, %v3538
      %v3540 = vrot.slane %v3539, 4
      %v3542 = vshll.u32 %v3317, 16
      %v3544 = vrot.slane %v3542, 5
      %v3545 = vsel %vm2293, %v3540, %v3544
      %v3546 = vshrl.u32 %v3317, 16
      %v3548 = vrot.slane %v3546, 4
      %v3549 = vor.u32 %v3548, %v3544
      %v3550 = vrot.slane %v3549, 4
      %v3552 = vshll.u32 %v3318, 16
      %v3554 = vrot.slane %v3552, 5
      %v3555 = vsel %vm2293, %v3550, %v3554
      %v3557 = vshrl.u32 %v3319, 16
      %v3559 = vrot.slane %v3557, 4
      %v3560 = vshll.u32 %v3319, 16
      %v3562 = vrot.slane %v3560, 5
      %v3563 = vor.u32 %v3559, %v3562
      %v3564 = vrot.slane %v3563, 4
      %v3566 = vshll.u32 %v3320, 16
      %v3568 = vrot.slane %v3566, 5
      %v3569 = vsel %vm2293, %v3564, %v3568
      %v3570 = vshrl.u32 %v3320, 16
      %v3572 = vrot.slane %v3570, 4
      %v3573 = vor.u32 %v3572, %v3568
      %v3574 = vrot.slane %v3573, 4
      %v3576 = vshll.u32 %v3321, 16
      %v3578 = vrot.slane %v3576, 5
      %v3579 = vsel %vm2293, %v3574, %v3578
      %v3581 = vshrl.u32 %v3322, 16
      %v3583 = vrot.slane %v3581, 4
      %v3584 = vshll.u32 %v3322, 16
      %v3586 = vrot.slane %v3584, 5
      %v3587 = vor.u32 %v3583, %v3586
      %v3588 = vrot.slane %v3587, 4
      %v3590 = vshll.u32 %v3323, 16
      %v3592 = vrot.slane %v3590, 5
      %v3593 = vsel %vm2293, %v3588, %v3592
      %v3594 = vshrl.u32 %v3323, 16
      %v3596 = vrot.slane %v3594, 4
      %v3597 = vor.u32 %v3596, %v3592
      %v3598 = vrot.slane %v3597, 4
      %v3600 = vshll.u32 %v3324, 16
      %v3602 = vrot.slane %v3600, 5
      %v3603 = vsel %vm2293, %v3598, %v3602
      %v3605 = vshrl.u32 %v3325, 16
      %v3607 = vrot.slane %v3605, 4
      %v3608 = vshll.u32 %v3325, 16
      %v3610 = vrot.slane %v3608, 5
      %v3611 = vor.u32 %v3607, %v3610
      %v3612 = vrot.slane %v3611, 4
      %v3614 = vshll.u32 %v3326, 16
      %v3616 = vrot.slane %v3614, 5
      %v3617 = vsel %vm2293, %v3612, %v3616
      %v3618 = vshrl.u32 %v3326, 16
      %v3620 = vrot.slane %v3618, 4
      %v3621 = vor.u32 %v3620, %v3616
      %v3622 = vrot.slane %v3621, 4
      %v3624 = vshll.u32 %v3327, 16
      %v3626 = vrot.slane %v3624, 5
      %v3627 = vsel %vm2293, %v3622, %v3626
      %v3629 = vshrl.u32 %v3328, 16
      %v3631 = vrot.slane %v3629, 4
      %v3632 = vshll.u32 %v3328, 16
      %v3634 = vrot.slane %v3632, 5
      %v3635 = vor.u32 %v3631, %v3634
      %v3636 = vrot.slane %v3635, 4
      %v3638 = vshll.u32 %v3329, 16
      %v3640 = vrot.slane %v3638, 5
      %v3641 = vsel %vm2293, %v3636, %v3640
      %v3642 = vshrl.u32 %v3329, 16
      %v3644 = vrot.slane %v3642, 4
      %v3645 = vor.u32 %v3644, %v3640
      %v3646 = vrot.slane %v3645, 4
      %v3648 = vshll.u32 %v3330, 16
      %v3650 = vrot.slane %v3648, 5
      %v3651 = vsel %vm2293, %v3646, %v3650
      %v3653 = vshrl.u32 %v3331, 16
      %v3655 = vrot.slane %v3653, 4
      %v3656 = vshll.u32 %v3331, 16
      %v3658 = vrot.slane %v3656, 5
      %v3659 = vor.u32 %v3655, %v3658
      %v3660 = vrot.slane %v3659, 4
      %v3662 = vshll.u32 %v3332, 16
      %v3664 = vrot.slane %v3662, 5
      %v3665 = vsel %vm2293, %v3660, %v3664
      %v3666 = vshrl.u32 %v3332, 16
      %v3668 = vrot.slane %v3666, 4
      %v3669 = vor.u32 %v3668, %v3664
      %v3670 = vrot.slane %v3669, 4
      %v3672 = vshll.u32 %v3333, 16
      %v3674 = vrot.slane %v3672, 5
      %v3675 = vsel %vm2293, %v3670, %v3674
      %v3677 = vshrl.u32 %v3334, 16
      %v3679 = vrot.slane %v3677, 4
      %v3680 = vshll.u32 %v3334, 16
      %v3682 = vrot.slane %v3680, 5
      %v3683 = vor.u32 %v3679, %v3682
      %v3684 = vrot.slane %v3683, 4
      %v3686 = vshll.u32 %v3335, 16
      %v3688 = vrot.slane %v3686, 5
      %v3689 = vsel %vm2293, %v3684, %v3688
      %v3690 = vshrl.u32 %v3335, 16
      %v3692 = vrot.slane %v3690, 4
      %v3693 = vor.u32 %v3692, %v3688
      %v3694 = vrot.slane %v3693, 4
      %v3696 = vshll.u32 %v3336, 16
      %v3698 = vrot.slane %v3696, 5
      %v3699 = vsel %vm2293, %v3694, %v3698
      %v3701 = vshrl.u32 %v3337, 16
      %v3703 = vrot.slane %v3701, 4
      %v3704 = vshll.u32 %v3337, 16
      %v3706 = vrot.slane %v3704, 5
      %v3707 = vor.u32 %v3703, %v3706
      %v3708 = vrot.slane %v3707, 4
      %v3710 = vshll.u32 %v3338, 16
      %v3712 = vrot.slane %v3710, 5
      %v3713 = vsel %vm2293, %v3708, %v3712
      %v3714 = vshrl.u32 %v3338, 16
      %v3716 = vrot.slane %v3714, 4
      %v3717 = vor.u32 %v3716, %v3712
      %v3718 = vrot.slane %v3717, 4
      %v3720 = vshll.u32 %v3339, 16
      %v3722 = vrot.slane %v3720, 5
      %v3723 = vsel %vm2293, %v3718, %v3722
      %v3724 = vunpack.c.l.b16 %v3353
      %v3725 = vunpack.c.l.b16 %v3363
      %v3726 = vunpack.c.l.b16 %v3377
      %v3727 = vunpack.c.l.b16 %v3387
      %v3728 = vunpack.c.l.b16 %v3401
      %v3729 = vunpack.c.l.b16 %v3411
      %v3730 = vunpack.c.l.b16 %v3425
      %v3731 = vunpack.c.l.b16 %v3435
      %v3732 = vunpack.c.l.b16 %v3449
      %v3733 = vunpack.c.l.b16 %v3459
      %v3734 = vunpack.c.l.b16 %v3473
      %v3735 = vunpack.c.l.b16 %v3483
      %v3736 = vunpack.c.l.b16 %v3497
      %v3737 = vunpack.c.l.b16 %v3507
      %v3738 = vunpack.c.l.b16 %v3521
      %v3739 = vunpack.c.l.b16 %v3531
      %v3740 = vunpack.c.l.b16 %v3545
      %v3741 = vunpack.c.l.b16 %v3555
      %v3742 = vunpack.c.l.b16 %v3569
      %v3743 = vunpack.c.l.b16 %v3579
      %v3744 = vunpack.c.l.b16 %v3593
      %v3745 = vunpack.c.l.b16 %v3603
      %v3746 = vunpack.c.l.b16 %v3617
      %v3747 = vunpack.c.l.b16 %v3627
      %v3748 = vunpack.c.l.b16 %v3641
      %v3749 = vunpack.c.l.b16 %v3651
      %v3750 = vunpack.c.l.b16 %v3665
      %v3751 = vunpack.c.l.b16 %v3675
      %v3752 = vunpack.c.l.b16 %v3689
      %v3753 = vunpack.c.l.b16 %v3699
      %v3754 = vunpack.c.l.b16 %v3713
      %v3755 = vunpack.c.l.b16 %v3723
      %v3756 = vpack.c.b16 %v3725, %v3724
      %v3757 = vpack.c.b16 %v3727, %v3726
      %v3758 = vpack.c.b16 %v3729, %v3728
      %v3759 = vpack.c.b16 %v3731, %v3730
      %v3760 = vpack.c.b16 %v3733, %v3732
      %v3761 = vpack.c.b16 %v3735, %v3734
      %v3762 = vpack.c.b16 %v3737, %v3736
      %v3763 = vpack.c.b16 %v3739, %v3738
      %v3764 = vpack.c.b16 %v3741, %v3740
      %v3765 = vpack.c.b16 %v3743, %v3742
      %v3766 = vpack.c.b16 %v3745, %v3744
      %v3767 = vpack.c.b16 %v3747, %v3746
      %v3768 = vpack.c.b16 %v3749, %v3748
      %v3769 = vpack.c.b16 %v3751, %v3750
      %v3770 = vpack.c.b16 %v3753, %v3752
      %v3771 = vpack.c.b16 %v3755, %v3754
      %3772 = vrot.lane.b32.xlu0 %v3756, 32
      %v3773 = vpop.permute.xlu0 %3772
      %3774 = vrot.lane.b32.xlu0 %v3757, 32
      %v3775 = vpop.permute.xlu0 %3774
      %3776 = vrot.lane.b32.xlu0 %v3758, 32
      %v3777 = vpop.permute.xlu0 %3776
      %3778 = vrot.lane.b32.xlu0 %v3759, 32
      %v3779 = vpop.permute.xlu0 %3778
      %3780 = vrot.lane.b32.xlu0 %v3760, 32
      %v3781 = vpop.permute.xlu0 %3780
      %3782 = vrot.lane.b32.xlu0 %v3761, 32
      %v3783 = vpop.permute.xlu0 %3782
      %3784 = vrot.lane.b32.xlu0 %v3762, 32
      %v3785 = vpop.permute.xlu0 %3784
      %3786 = vrot.lane.b32.xlu0 %v3763, 32
      %v3787 = vpop.permute.xlu0 %3786
      %3788 = vrot.lane.b32.xlu0 %v3764, 32
      %v3789 = vpop.permute.xlu0 %3788
      %3790 = vrot.lane.b32.xlu0 %v3765, 32
      %v3791 = vpop.permute.xlu0 %3790
      %3792 = vrot.lane.b32.xlu0 %v3766, 32
      %v3793 = vpop.permute.xlu0 %3792
      %3794 = vrot.lane.b32.xlu0 %v3767, 32
      %v3795 = vpop.permute.xlu0 %3794
      %3796 = vrot.lane.b32.xlu0 %v3768, 32
      %v3797 = vpop.permute.xlu0 %3796
      %3798 = vrot.lane.b32.xlu0 %v3769, 32
      %v3799 = vpop.permute.xlu0 %3798
      %3800 = vrot.lane.b32.xlu0 %v3770, 32
      %v3801 = vpop.permute.xlu0 %3800
      %3802 = vrot.lane.b32.xlu0 %v3771, 32
      %v3803 = vpop.permute.xlu0 %3802
      %vm3820 = vcmask 326912
      %3821 = vst.msk [vmem:[#allocation3] sm:$0xff] %vm3820, %v3773
      %3822 = vst.msk [vmem:[#allocation3 + $0x8] sm:$0xff] %vm3820, %v3775
      %3823 = vst.msk [vmem:[#allocation3 + $0x10] sm:$0xff] %vm3820, %v3777
      %3824 = vst.msk [vmem:[#allocation3 + $0x18] sm:$0xff] %vm3820, %v3779
      %3825 = vst.msk [vmem:[#allocation3 + $0x20] sm:$0xff] %vm3820, %v3781
      %3826 = vst.msk [vmem:[#allocation3 + $0x28] sm:$0xff] %vm3820, %v3783
      %3827 = vst.msk [vmem:[#allocation3 + $0x30] sm:$0xff] %vm3820, %v3785
      %3828 = vst.msk [vmem:[#allocation3 + $0x38] sm:$0xff] %vm3820, %v3787
      %3829 = vst.msk [vmem:[#allocation3 + $0x40] sm:$0xff] %vm3820, %v3789
      %3830 = vst.msk [vmem:[#allocation3 + $0x48] sm:$0xff] %vm3820, %v3791
      %3831 = vst.msk [vmem:[#allocation3 + $0x50] sm:$0xff] %vm3820, %v3793
      %3832 = vst.msk [vmem:[#allocation3 + $0x58] sm:$0xff] %vm3820, %v3795
      %3833 = vst.msk [vmem:[#allocation3 + $0x60] sm:$0xff] %vm3820, %v3797
      %3834 = vst.msk [vmem:[#allocation3 + $0x68] sm:$0xff] %vm3820, %v3799
      %3835 = vst.msk [vmem:[#allocation3 + $0x70] sm:$0xff] %vm3820, %v3801
      %3836 = vst.msk [vmem:[#allocation3 + $0x78] sm:$0xff] %vm3820, %v3803
      %v3837 = vld [vmem:[%s595] sm:$0xe]
      %v3838 = vld [vmem:[%s595 + $0x4] sm:$0xf]
      %v3839 = vld [vmem:[%s595 + $0x8] sm:$0x1]
      %v3840 = vld [vmem:[%s595 + $0xc] sm:$0xe]
      %v3841 = vld [vmem:[%s595 + $0x10] sm:$0xf]
      %v3842 = vld [vmem:[%s595 + $0x14] sm:$0x1]
      %v3843 = vld [vmem:[%s595 + $0x18] sm:$0xe]
      %v3844 = vld [vmem:[%s595 + $0x1c] sm:$0xf]
      %v3845 = vld [vmem:[%s595 + $0x20] sm:$0x1]
      %v3846 = vld [vmem:[%s595 + $0x24] sm:$0xe]
      %v3847 = vld [vmem:[%s595 + $0x28] sm:$0xf]
      %v3848 = vld [vmem:[%s595 + $0x2c] sm:$0x1]
      %v3849 = vld [vmem:[%s595 + $0x30] sm:$0xe]
      %v3850 = vld [vmem:[%s595 + $0x34] sm:$0xf]
      %v3851 = vld [vmem:[%s595 + $0x38] sm:$0x1]
      %v3852 = vld [vmem:[%s595 + $0x3c] sm:$0xe]
      %v3853 = vld [vmem:[%s595 + $0x40] sm:$0xf]
      %v3854 = vld [vmem:[%s595 + $0x44] sm:$0x1]
      %v3855 = vld [vmem:[%s595 + $0x48] sm:$0xe]
      %v3856 = vld [vmem:[%s595 + $0x4c] sm:$0xf]
      %v3857 = vld [vmem:[%s595 + $0x50] sm:$0x1]
      %v3858 = vld [vmem:[%s595 + $0x54] sm:$0xe]
      %v3859 = vld [vmem:[%s595 + $0x58] sm:$0xf]
      %v3860 = vld [vmem:[%s595 + $0x5c] sm:$0x1]
      %v3861 = vld [vmem:[%s595 + $0x60] sm:$0xe]
      %v3862 = vld [vmem:[%s595 + $0x64] sm:$0xf]
      %v3863 = vld [vmem:[%s595 + $0x68] sm:$0x1]
      %v3864 = vld [vmem:[%s595 + $0x6c] sm:$0xe]
      %v3865 = vld [vmem:[%s595 + $0x70] sm:$0xf]
      %v3866 = vld [vmem:[%s595 + $0x74] sm:$0x1]
      %v3867 = vld [vmem:[%s595 + $0x78] sm:$0xe]
      %v3868 = vld [vmem:[%s595 + $0x7c] sm:$0xf]
      %v3869 = vld [vmem:[%s595 + $0x80] sm:$0x1]
      %v3870 = vld [vmem:[%s595 + $0x84] sm:$0xe]
      %v3871 = vld [vmem:[%s595 + $0x88] sm:$0xf]
      %v3872 = vld [vmem:[%s595 + $0x8c] sm:$0x1]
      %v3873 = vld [vmem:[%s595 + $0x90] sm:$0xe]
      %v3874 = vld [vmem:[%s595 + $0x94] sm:$0xf]
      %v3875 = vld [vmem:[%s595 + $0x98] sm:$0x1]
      %v3876 = vld [vmem:[%s595 + $0x9c] sm:$0xe]
      %v3877 = vld [vmem:[%s595 + $0xa0] sm:$0xf]
      %v3878 = vld [vmem:[%s595 + $0xa4] sm:$0x1]
      %v3879 = vld [vmem:[%s595 + $0xa8] sm:$0xe]
      %v3880 = vld [vmem:[%s595 + $0xac] sm:$0xf]
      %v3881 = vld [vmem:[%s595 + $0xb0] sm:$0x1]
      %v3882 = vld [vmem:[%s595 + $0xb4] sm:$0xe]
      %v3883 = vld [vmem:[%s595 + $0xb8] sm:$0xf]
      %v3884 = vld [vmem:[%s595 + $0xbc] sm:$0x1]
      %v3933 = vrot.slane %v3837, 5
      %v3934 = vrot.slane %v3933, 4
      %v3935 = vrot.slane %v3838, 5
      %v3936 = vsel %vm2889, %v3934, %v3935
      %v3937 = vrot.slane %v3935, 4
      %v3938 = vrot.slane %v3839, 5
      %v3939 = vsel %vm2889, %v3937, %v3938
      %v3940 = vrot.slane %v3840, 5
      %v3941 = vrot.slane %v3940, 4
      %v3942 = vrot.slane %v3841, 5
      %v3943 = vsel %vm2889, %v3941, %v3942
      %v3944 = vrot.slane %v3942, 4
      %v3945 = vrot.slane %v3842, 5
      %v3946 = vsel %vm2889, %v3944, %v3945
      %v3947 = vrot.slane %v3843, 5
      %v3948 = vrot.slane %v3947, 4
      %v3949 = vrot.slane %v3844, 5
      %v3950 = vsel %vm2889, %v3948, %v3949
      %v3951 = vrot.slane %v3949, 4
      %v3952 = vrot.slane %v3845, 5
      %v3953 = vsel %vm2889, %v3951, %v3952
      %v3954 = vrot.slane %v3846, 5
      %v3955 = vrot.slane %v3954, 4
      %v3956 = vrot.slane %v3847, 5
      %v3957 = vsel %vm2889, %v3955, %v3956
      %v3958 = vrot.slane %v3956, 4
      %v3959 = vrot.slane %v3848, 5
      %v3960 = vsel %vm2889, %v3958, %v3959
      %v3961 = vrot.slane %v3849, 5
      %v3962 = vrot.slane %v3961, 4
      %v3963 = vrot.slane %v3850, 5
      %v3964 = vsel %vm2889, %v3962, %v3963
      %v3965 = vrot.slane %v3963, 4
      %v3966 = vrot.slane %v3851, 5
      %v3967 = vsel %vm2889, %v3965, %v3966
      %v3968 = vrot.slane %v3852, 5
      %v3969 = vrot.slane %v3968, 4
      %v3970 = vrot.slane %v3853, 5
      %v3971 = vsel %vm2889, %v3969, %v3970
      %v3972 = vrot.slane %v3970, 4
      %v3973 = vrot.slane %v3854, 5
      %v3974 = vsel %vm2889, %v3972, %v3973
      %v3975 = vrot.slane %v3855, 5
      %v3976 = vrot.slane %v3975, 4
      %v3977 = vrot.slane %v3856, 5
      %v3978 = vsel %vm2889, %v3976, %v3977
      %v3979 = vrot.slane %v3977, 4
      %v3980 = vrot.slane %v3857, 5
      %v3981 = vsel %vm2889, %v3979, %v3980
      %v3982 = vrot.slane %v3858, 5
      %v3983 = vrot.slane %v3982, 4
      %v3984 = vrot.slane %v3859, 5
      %v3985 = vsel %vm2889, %v3983, %v3984
      %v3986 = vrot.slane %v3984, 4
      %v3987 = vrot.slane %v3860, 5
      %v3988 = vsel %vm2889, %v3986, %v3987
      %v3989 = vrot.slane %v3861, 5
      %v3990 = vrot.slane %v3989, 4
      %v3991 = vrot.slane %v3862, 5
      %v3992 = vsel %vm2889, %v3990, %v3991
      %v3993 = vrot.slane %v3991, 4
      %v3994 = vrot.slane %v3863, 5
      %v3995 = vsel %vm2889, %v3993, %v3994
      %v3996 = vrot.slane %v3864, 5
      %v3997 = vrot.slane %v3996, 4
      %v3998 = vrot.slane %v3865, 5
      %v3999 = vsel %vm2889, %v3997, %v3998
      %v4000 = vrot.slane %v3998, 4
      %v4001 = vrot.slane %v3866, 5
      %v4002 = vsel %vm2889, %v4000, %v4001
      %v4003 = vrot.slane %v3867, 5
      %v4004 = vrot.slane %v4003, 4
      %v4005 = vrot.slane %v3868, 5
      %v4006 = vsel %vm2889, %v4004, %v4005
      %v4007 = vrot.slane %v4005, 4
      %v4008 = vrot.slane %v3869, 5
      %v4009 = vsel %vm2889, %v4007, %v4008
      %v4010 = vrot.slane %v3870, 5
      %v4011 = vrot.slane %v4010, 4
      %v4012 = vrot.slane %v3871, 5
      %v4013 = vsel %vm2889, %v4011, %v4012
      %v4014 = vrot.slane %v4012, 4
      %v4015 = vrot.slane %v3872, 5
      %v4016 = vsel %vm2889, %v4014, %v4015
      %v4017 = vrot.slane %v3873, 5
      %v4018 = vrot.slane %v4017, 4
      %v4019 = vrot.slane %v3874, 5
      %v4020 = vsel %vm2889, %v4018, %v4019
      %v4021 = vrot.slane %v4019, 4
      %v4022 = vrot.slane %v3875, 5
      %v4023 = vsel %vm2889, %v4021, %v4022
      %v4024 = vrot.slane %v3876, 5
      %v4025 = vrot.slane %v4024, 4
      %v4026 = vrot.slane %v3877, 5
      %v4027 = vsel %vm2889, %v4025, %v4026
      %v4028 = vrot.slane %v4026, 4
      %v4029 = vrot.slane %v3878, 5
      %v4030 = vsel %vm2889, %v4028, %v4029
      %v4031 = vrot.slane %v3879, 5
      %v4032 = vrot.slane %v4031, 4
      %v4033 = vrot.slane %v3880, 5
      %v4034 = vsel %vm2889, %v4032, %v4033
      %v4035 = vrot.slane %v4033, 4
      %v4036 = vrot.slane %v3881, 5
      %v4037 = vsel %vm2889, %v4035, %v4036
      %v4038 = vrot.slane %v3882, 5
      %v4039 = vrot.slane %v4038, 4
      %v4040 = vrot.slane %v3883, 5
      %v4041 = vsel %vm2889, %v4039, %v4040
      %v4042 = vrot.slane %v4040, 4
      %v4043 = vrot.slane %v3884, 5
      %v4044 = vsel %vm2889, %v4042, %v4043
      %v4045 = vunpack.c.l.b16 %v3936
      %v4046 = vunpack.c.l.b16 %v3939
      %v4047 = vunpack.c.l.b16 %v3943
      %v4048 = vunpack.c.l.b16 %v3946
      %v4049 = vunpack.c.l.b16 %v3950
      %v4050 = vunpack.c.l.b16 %v3953
      %v4051 = vunpack.c.l.b16 %v3957
      %v4052 = vunpack.c.l.b16 %v3960
      %v4053 = vunpack.c.l.b16 %v3964
      %v4054 = vunpack.c.l.b16 %v3967
      %v4055 = vunpack.c.l.b16 %v3971
      %v4056 = vunpack.c.l.b16 %v3974
      %v4057 = vunpack.c.l.b16 %v3978
      %v4058 = vunpack.c.l.b16 %v3981
      %v4059 = vunpack.c.l.b16 %v3985
      %v4060 = vunpack.c.l.b16 %v3988
      %v4061 = vunpack.c.l.b16 %v3992
      %v4062 = vunpack.c.l.b16 %v3995
      %v4063 = vunpack.c.l.b16 %v3999
      %v4064 = vunpack.c.l.b16 %v4002
      %v4065 = vunpack.c.l.b16 %v4006
      %v4066 = vunpack.c.l.b16 %v4009
      %v4067 = vunpack.c.l.b16 %v4013
      %v4068 = vunpack.c.l.b16 %v4016
      %v4069 = vunpack.c.l.b16 %v4020
      %v4070 = vunpack.c.l.b16 %v4023
      %v4071 = vunpack.c.l.b16 %v4027
      %v4072 = vunpack.c.l.b16 %v4030
      %v4073 = vunpack.c.l.b16 %v4034
      %v4074 = vunpack.c.l.b16 %v4037
      %v4075 = vunpack.c.l.b16 %v4041
      %v4076 = vunpack.c.l.b16 %v4044
      %v4077 = vpack.c.b16 %v4046, %v4045
      %v4078 = vpack.c.b16 %v4048, %v4047
      %v4079 = vpack.c.b16 %v4050, %v4049
      %v4080 = vpack.c.b16 %v4052, %v4051
      %v4081 = vpack.c.b16 %v4054, %v4053
      %v4082 = vpack.c.b16 %v4056, %v4055
      %v4083 = vpack.c.b16 %v4058, %v4057
      %v4084 = vpack.c.b16 %v4060, %v4059
      %v4085 = vpack.c.b16 %v4062, %v4061
      %v4086 = vpack.c.b16 %v4064, %v4063
      %v4087 = vpack.c.b16 %v4066, %v4065
      %v4088 = vpack.c.b16 %v4068, %v4067
      %v4089 = vpack.c.b16 %v4070, %v4069
      %v4090 = vpack.c.b16 %v4072, %v4071
      %v4091 = vpack.c.b16 %v4074, %v4073
      %v4092 = vpack.c.b16 %v4076, %v4075
      %4093 = vrot.lane.b32.xlu0 %v4077, 40
      %v4094 = vpop.permute.xlu0 %4093
      %4095 = vrot.lane.b32.xlu0 %v4078, 40
      %v4096 = vpop.permute.xlu0 %4095
      %4097 = vrot.lane.b32.xlu0 %v4079, 40
      %v4098 = vpop.permute.xlu0 %4097
      %4099 = vrot.lane.b32.xlu0 %v4080, 40
      %v4100 = vpop.permute.xlu0 %4099
      %4101 = vrot.lane.b32.xlu0 %v4081, 40
      %v4102 = vpop.permute.xlu0 %4101
      %4103 = vrot.lane.b32.xlu0 %v4082, 40
      %v4104 = vpop.permute.xlu0 %4103
      %4105 = vrot.lane.b32.xlu0 %v4083, 40
      %v4106 = vpop.permute.xlu0 %4105
      %4107 = vrot.lane.b32.xlu0 %v4084, 40
      %v4108 = vpop.permute.xlu0 %4107
      %4109 = vrot.lane.b32.xlu0 %v4085, 40
      %v4110 = vpop.permute.xlu0 %4109
      %4111 = vrot.lane.b32.xlu0 %v4086, 40
      %v4112 = vpop.permute.xlu0 %4111
      %4113 = vrot.lane.b32.xlu0 %v4087, 40
      %v4114 = vpop.permute.xlu0 %4113
      %4115 = vrot.lane.b32.xlu0 %v4088, 40
      %v4116 = vpop.permute.xlu0 %4115
      %4117 = vrot.lane.b32.xlu0 %v4089, 40
      %v4118 = vpop.permute.xlu0 %4117
      %4119 = vrot.lane.b32.xlu0 %v4090, 40
      %v4120 = vpop.permute.xlu0 %4119
      %4121 = vrot.lane.b32.xlu0 %v4091, 40
      %v4122 = vpop.permute.xlu0 %4121
      %4123 = vrot.lane.b32.xlu0 %v4092, 40
      %v4124 = vpop.permute.xlu0 %4123
      %vm4141 = vcmask 392512
      %4142 = vst.msk [vmem:[#allocation3] sm:$0xff] %vm4141, %v4094
      %4143 = vst.msk [vmem:[#allocation3 + $0x8] sm:$0xff] %vm4141, %v4096
      %4144 = vst.msk [vmem:[#allocation3 + $0x10] sm:$0xff] %vm4141, %v4098
      %4145 = vst.msk [vmem:[#allocation3 + $0x18] sm:$0xff] %vm4141, %v4100
      %4146 = vst.msk [vmem:[#allocation3 + $0x20] sm:$0xff] %vm4141, %v4102
      %4147 = vst.msk [vmem:[#allocation3 + $0x28] sm:$0xff] %vm4141, %v4104
      %4148 = vst.msk [vmem:[#allocation3 + $0x30] sm:$0xff] %vm4141, %v4106
      %4149 = vst.msk [vmem:[#allocation3 + $0x38] sm:$0xff] %vm4141, %v4108
      %4150 = vst.msk [vmem:[#allocation3 + $0x40] sm:$0xff] %vm4141, %v4110
      %4151 = vst.msk [vmem:[#allocation3 + $0x48] sm:$0xff] %vm4141, %v4112
      %4152 = vst.msk [vmem:[#allocation3 + $0x50] sm:$0xff] %vm4141, %v4114
      %4153 = vst.msk [vmem:[#allocation3 + $0x58] sm:$0xff] %vm4141, %v4116
      %4154 = vst.msk [vmem:[#allocation3 + $0x60] sm:$0xff] %vm4141, %v4118
      %4155 = vst.msk [vmem:[#allocation3 + $0x68] sm:$0xff] %vm4141, %v4120
      %4156 = vst.msk [vmem:[#allocation3 + $0x70] sm:$0xff] %vm4141, %v4122
      %4157 = vst.msk [vmem:[#allocation3 + $0x78] sm:$0xff] %vm4141, %v4124
      %s4158 = scalar_lea.vmem [#allocation2], 24
      %v4159 = vld [vmem:[%s4158] sm:$0xf]
      %v4160 = vld [vmem:[%s4158 + $0x4] sm:$0xf]
      %v4161 = vld [vmem:[%s4158 + $0xc] sm:$0xf]
      %v4162 = vld [vmem:[%s4158 + $0x10] sm:$0xf]
      %v4163 = vld [vmem:[%s4158 + $0x18] sm:$0xf]
      %v4164 = vld [vmem:[%s4158 + $0x1c] sm:$0xf]
      %v4165 = vld [vmem:[%s4158 + $0x24] sm:$0xf]
      %v4166 = vld [vmem:[%s4158 + $0x28] sm:$0xf]
      %v4167 = vld [vmem:[%s4158 + $0x30] sm:$0xf]
      %v4168 = vld [vmem:[%s4158 + $0x34] sm:$0xf]
      %v4169 = vld [vmem:[%s4158 + $0x3c] sm:$0xf]
      %v4170 = vld [vmem:[%s4158 + $0x40] sm:$0xf]
      %v4171 = vld [vmem:[%s4158 + $0x48] sm:$0xf]
      %v4172 = vld [vmem:[%s4158 + $0x4c] sm:$0xf]
      %v4173 = vld [vmem:[%s4158 + $0x54] sm:$0xf]
      %v4174 = vld [vmem:[%s4158 + $0x58] sm:$0xf]
      %v4175 = vld [vmem:[%s4158 + $0x60] sm:$0xf]
      %v4176 = vld [vmem:[%s4158 + $0x64] sm:$0xf]
      %v4177 = vld [vmem:[%s4158 + $0x6c] sm:$0xf]
      %v4178 = vld [vmem:[%s4158 + $0x70] sm:$0xf]
      %v4179 = vld [vmem:[%s4158 + $0x78] sm:$0xf]
      %v4180 = vld [vmem:[%s4158 + $0x7c] sm:$0xf]
      %v4181 = vld [vmem:[%s4158 + $0x84] sm:$0xf]
      %v4182 = vld [vmem:[%s4158 + $0x88] sm:$0xf]
      %v4183 = vld [vmem:[%s4158 + $0x90] sm:$0xf]
      %v4184 = vld [vmem:[%s4158 + $0x94] sm:$0xf]
      %v4185 = vld [vmem:[%s4158 + $0x9c] sm:$0xf]
      %v4186 = vld [vmem:[%s4158 + $0xa0] sm:$0xf]
      %v4187 = vld [vmem:[%s4158 + $0xa8] sm:$0xf]
      %v4188 = vld [vmem:[%s4158 + $0xac] sm:$0xf]
      %v4189 = vld [vmem:[%s4158 + $0xb4] sm:$0xf]
      %v4190 = vld [vmem:[%s4158 + $0xb8] sm:$0xf]
      %v4223 = vunpack.c.l.b16 %v4159
      %v4224 = vunpack.c.l.b16 %v4160
      %v4225 = vunpack.c.l.b16 %v4161
      %v4226 = vunpack.c.l.b16 %v4162
      %v4227 = vunpack.c.l.b16 %v4163
      %v4228 = vunpack.c.l.b16 %v4164
      %v4229 = vunpack.c.l.b16 %v4165
      %v4230 = vunpack.c.l.b16 %v4166
      %v4231 = vunpack.c.l.b16 %v4167
      %v4232 = vunpack.c.l.b16 %v4168
      %v4233 = vunpack.c.l.b16 %v4169
      %v4234 = vunpack.c.l.b16 %v4170
      %v4235 = vunpack.c.l.b16 %v4171
      %v4236 = vunpack.c.l.b16 %v4172
      %v4237 = vunpack.c.l.b16 %v4173
      %v4238 = vunpack.c.l.b16 %v4174
      %v4239 = vunpack.c.l.b16 %v4175
      %v4240 = vunpack.c.l.b16 %v4176
      %v4241 = vunpack.c.l.b16 %v4177
      %v4242 = vunpack.c.l.b16 %v4178
      %v4243 = vunpack.c.l.b16 %v4179
      %v4244 = vunpack.c.l.b16 %v4180
      %v4245 = vunpack.c.l.b16 %v4181
      %v4246 = vunpack.c.l.b16 %v4182
      %v4247 = vunpack.c.l.b16 %v4183
      %v4248 = vunpack.c.l.b16 %v4184
      %v4249 = vunpack.c.l.b16 %v4185
      %v4250 = vunpack.c.l.b16 %v4186
      %v4251 = vunpack.c.l.b16 %v4187
      %v4252 = vunpack.c.l.b16 %v4188
      %v4253 = vunpack.c.l.b16 %v4189
      %v4254 = vunpack.c.l.b16 %v4190
      %v4255 = vpack.c.b16 %v4224, %v4223
      %v4256 = vpack.c.b16 %v4226, %v4225
      %v4257 = vpack.c.b16 %v4228, %v4227
      %v4258 = vpack.c.b16 %v4230, %v4229
      %v4259 = vpack.c.b16 %v4232, %v4231
      %v4260 = vpack.c.b16 %v4234, %v4233
      %v4261 = vpack.c.b16 %v4236, %v4235
      %v4262 = vpack.c.b16 %v4238, %v4237
      %v4263 = vpack.c.b16 %v4240, %v4239
      %v4264 = vpack.c.b16 %v4242, %v4241
      %v4265 = vpack.c.b16 %v4244, %v4243
      %v4266 = vpack.c.b16 %v4246, %v4245
      %v4267 = vpack.c.b16 %v4248, %v4247
      %v4268 = vpack.c.b16 %v4250, %v4249
      %v4269 = vpack.c.b16 %v4252, %v4251
      %v4270 = vpack.c.b16 %v4254, %v4253
      %4271 = vrot.lane.b32.xlu0 %v4255, 48
      %v4272 = vpop.permute.xlu0 %4271
      %4273 = vrot.lane.b32.xlu0 %v4256, 48
      %v4274 = vpop.permute.xlu0 %4273
      %4275 = vrot.lane.b32.xlu0 %v4257, 48
      %v4276 = vpop.permute.xlu0 %4275
      %4277 = vrot.lane.b32.xlu0 %v4258, 48
      %v4278 = vpop.permute.xlu0 %4277
      %4279 = vrot.lane.b32.xlu0 %v4259, 48
      %v4280 = vpop.permute.xlu0 %4279
      %4281 = vrot.lane.b32.xlu0 %v4260, 48
      %v4282 = vpop.permute.xlu0 %4281
      %4283 = vrot.lane.b32.xlu0 %v4261, 48
      %v4284 = vpop.permute.xlu0 %4283
      %4285 = vrot.lane.b32.xlu0 %v4262, 48
      %v4286 = vpop.permute.xlu0 %4285
      %4287 = vrot.lane.b32.xlu0 %v4263, 48
      %v4288 = vpop.permute.xlu0 %4287
      %4289 = vrot.lane.b32.xlu0 %v4264, 48
      %v4290 = vpop.permute.xlu0 %4289
      %4291 = vrot.lane.b32.xlu0 %v4265, 48
      %v4292 = vpop.permute.xlu0 %4291
      %4293 = vrot.lane.b32.xlu0 %v4266, 48
      %v4294 = vpop.permute.xlu0 %4293
      %4295 = vrot.lane.b32.xlu0 %v4267, 48
      %v4296 = vpop.permute.xlu0 %4295
      %4297 = vrot.lane.b32.xlu0 %v4268, 48
      %v4298 = vpop.permute.xlu0 %4297
      %4299 = vrot.lane.b32.xlu0 %v4269, 48
      %v4300 = vpop.permute.xlu0 %4299
      %4301 = vrot.lane.b32.xlu0 %v4270, 48
      %v4302 = vpop.permute.xlu0 %4301
      %vm4319 = vcmask 458112
      %4320 = vst.msk [vmem:[#allocation3] sm:$0xff] %vm4319, %v4272
      %4321 = vst.msk [vmem:[#allocation3 + $0x8] sm:$0xff] %vm4319, %v4274
      %4322 = vst.msk [vmem:[#allocation3 + $0x10] sm:$0xff] %vm4319, %v4276
      %4323 = vst.msk [vmem:[#allocation3 + $0x18] sm:$0xff] %vm4319, %v4278
      %4324 = vst.msk [vmem:[#allocation3 + $0x20] sm:$0xff] %vm4319, %v4280
      %4325 = vst.msk [vmem:[#allocation3 + $0x28] sm:$0xff] %vm4319, %v4282
      %4326 = vst.msk [vmem:[#allocation3 + $0x30] sm:$0xff] %vm4319, %v4284
      %4327 = vst.msk [vmem:[#allocation3 + $0x38] sm:$0xff] %vm4319, %v4286
      %4328 = vst.msk [vmem:[#allocation3 + $0x40] sm:$0xff] %vm4319, %v4288
      %4329 = vst.msk [vmem:[#allocation3 + $0x48] sm:$0xff] %vm4319, %v4290
      %4330 = vst.msk [vmem:[#allocation3 + $0x50] sm:$0xff] %vm4319, %v4292
      %4331 = vst.msk [vmem:[#allocation3 + $0x58] sm:$0xff] %vm4319, %v4294
      %4332 = vst.msk [vmem:[#allocation3 + $0x60] sm:$0xff] %vm4319, %v4296
      %4333 = vst.msk [vmem:[#allocation3 + $0x68] sm:$0xff] %vm4319, %v4298
      %4334 = vst.msk [vmem:[#allocation3 + $0x70] sm:$0xff] %vm4319, %v4300
      %4335 = vst.msk [vmem:[#allocation3 + $0x78] sm:$0xff] %vm4319, %v4302
      %v4336 = vld [vmem:[%s4158] sm:$0xf]
      %v4337 = vld [vmem:[%s4158 + $0x4] sm:$0xf]
      %v4338 = vld [vmem:[%s4158 + $0x8] sm:$0x1]
      %v4339 = vld [vmem:[%s4158 + $0xc] sm:$0xf]
      %v4340 = vld [vmem:[%s4158 + $0x10] sm:$0xf]
      %v4341 = vld [vmem:[%s4158 + $0x14] sm:$0x1]
      %v4342 = vld [vmem:[%s4158 + $0x18] sm:$0xf]
      %v4343 = vld [vmem:[%s4158 + $0x1c] sm:$0xf]
      %v4344 = vld [vmem:[%s4158 + $0x20] sm:$0x1]
      %v4345 = vld [vmem:[%s4158 + $0x24] sm:$0xf]
      %v4346 = vld [vmem:[%s4158 + $0x28] sm:$0xf]
      %v4347 = vld [vmem:[%s4158 + $0x2c] sm:$0x1]
      %v4348 = vld [vmem:[%s4158 + $0x30] sm:$0xf]
      %v4349 = vld [vmem:[%s4158 + $0x34] sm:$0xf]
      %v4350 = vld [vmem:[%s4158 + $0x38] sm:$0x1]
      %v4351 = vld [vmem:[%s4158 + $0x3c] sm:$0xf]
      %v4352 = vld [vmem:[%s4158 + $0x40] sm:$0xf]
      %v4353 = vld [vmem:[%s4158 + $0x44] sm:$0x1]
      %v4354 = vld [vmem:[%s4158 + $0x48] sm:$0xf]
      %v4355 = vld [vmem:[%s4158 + $0x4c] sm:$0xf]
      %v4356 = vld [vmem:[%s4158 + $0x50] sm:$0x1]
      %v4357 = vld [vmem:[%s4158 + $0x54] sm:$0xf]
      %v4358 = vld [vmem:[%s4158 + $0x58] sm:$0xf]
      %v4359 = vld [vmem:[%s4158 + $0x5c] sm:$0x1]
      %v4360 = vld [vmem:[%s4158 + $0x60] sm:$0xf]
      %v4361 = vld [vmem:[%s4158 + $0x64] sm:$0xf]
      %v4362 = vld [vmem:[%s4158 + $0x68] sm:$0x1]
      %v4363 = vld [vmem:[%s4158 + $0x6c] sm:$0xf]
      %v4364 = vld [vmem:[%s4158 + $0x70] sm:$0xf]
      %v4365 = vld [vmem:[%s4158 + $0x74] sm:$0x1]
      %v4366 = vld [vmem:[%s4158 + $0x78] sm:$0xf]
      %v4367 = vld [vmem:[%s4158 + $0x7c] sm:$0xf]
      %v4368 = vld [vmem:[%s4158 + $0x80] sm:$0x1]
      %v4369 = vld [vmem:[%s4158 + $0x84] sm:$0xf]
      %v4370 = vld [vmem:[%s4158 + $0x88] sm:$0xf]
      %v4371 = vld [vmem:[%s4158 + $0x8c] sm:$0x1]
      %v4372 = vld [vmem:[%s4158 + $0x90] sm:$0xf]
      %v4373 = vld [vmem:[%s4158 + $0x94] sm:$0xf]
      %v4374 = vld [vmem:[%s4158 + $0x98] sm:$0x1]
      %v4375 = vld [vmem:[%s4158 + $0x9c] sm:$0xf]
      %v4376 = vld [vmem:[%s4158 + $0xa0] sm:$0xf]
      %v4377 = vld [vmem:[%s4158 + $0xa4] sm:$0x1]
      %v4378 = vld [vmem:[%s4158 + $0xa8] sm:$0xf]
      %v4379 = vld [vmem:[%s4158 + $0xac] sm:$0xf]
      %v4380 = vld [vmem:[%s4158 + $0xb0] sm:$0x1]
      %v4381 = vld [vmem:[%s4158 + $0xb4] sm:$0xf]
      %v4382 = vld [vmem:[%s4158 + $0xb8] sm:$0xf]
      %v4383 = vld [vmem:[%s4158 + $0xbc] sm:$0x1]
      %v4385 = vshrl.u32 %v4336, 16
      %v4387 = vrot.slane %v4385, 4
      %v4388 = vshll.u32 %v4336, 16
      %v4390 = vrot.slane %v4388, 5
      %v4391 = vor.u32 %v4387, %v4390
      %v4392 = vrot.slane %v4391, 4
      %v4394 = vshll.u32 %v4337, 16
      %v4396 = vrot.slane %v4394, 5
      %v4397 = vsel %vm2293, %v4392, %v4396
      %v4398 = vshrl.u32 %v4337, 16
      %v4400 = vrot.slane %v4398, 4
      %v4401 = vor.u32 %v4400, %v4396
      %v4402 = vrot.slane %v4401, 4
      %v4404 = vshll.u32 %v4338, 16
      %v4406 = vrot.slane %v4404, 5
      %v4407 = vsel %vm2293, %v4402, %v4406
      %v4409 = vshrl.u32 %v4339, 16
      %v4411 = vrot.slane %v4409, 4
      %v4412 = vshll.u32 %v4339, 16
      %v4414 = vrot.slane %v4412, 5
      %v4415 = vor.u32 %v4411, %v4414
      %v4416 = vrot.slane %v4415, 4
      %v4418 = vshll.u32 %v4340, 16
      %v4420 = vrot.slane %v4418, 5
      %v4421 = vsel %vm2293, %v4416, %v4420
      %v4422 = vshrl.u32 %v4340, 16
      %v4424 = vrot.slane %v4422, 4
      %v4425 = vor.u32 %v4424, %v4420
      %v4426 = vrot.slane %v4425, 4
      %v4428 = vshll.u32 %v4341, 16
      %v4430 = vrot.slane %v4428, 5
      %v4431 = vsel %vm2293, %v4426, %v4430
      %v4433 = vshrl.u32 %v4342, 16
      %v4435 = vrot.slane %v4433, 4
      %v4436 = vshll.u32 %v4342, 16
      %v4438 = vrot.slane %v4436, 5
      %v4439 = vor.u32 %v4435, %v4438
      %v4440 = vrot.slane %v4439, 4
      %v4442 = vshll.u32 %v4343, 16
      %v4444 = vrot.slane %v4442, 5
      %v4445 = vsel %vm2293, %v4440, %v4444
      %v4446 = vshrl.u32 %v4343, 16
      %v4448 = vrot.slane %v4446, 4
      %v4449 = vor.u32 %v4448, %v4444
      %v4450 = vrot.slane %v4449, 4
      %v4452 = vshll.u32 %v4344, 16
      %v4454 = vrot.slane %v4452, 5
      %v4455 = vsel %vm2293, %v4450, %v4454
      %v4457 = vshrl.u32 %v4345, 16
      %v4459 = vrot.slane %v4457, 4
      %v4460 = vshll.u32 %v4345, 16
      %v4462 = vrot.slane %v4460, 5
      %v4463 = vor.u32 %v4459, %v4462
      %v4464 = vrot.slane %v4463, 4
      %v4466 = vshll.u32 %v4346, 16
      %v4468 = vrot.slane %v4466, 5
      %v4469 = vsel %vm2293, %v4464, %v4468
      %v4470 = vshrl.u32 %v4346, 16
      %v4472 = vrot.slane %v4470, 4
      %v4473 = vor.u32 %v4472, %v4468
      %v4474 = vrot.slane %v4473, 4
      %v4476 = vshll.u32 %v4347, 16
      %v4478 = vrot.slane %v4476, 5
      %v4479 = vsel %vm2293, %v4474, %v4478
      %v4481 = vshrl.u32 %v4348, 16
      %v4483 = vrot.slane %v4481, 4
      %v4484 = vshll.u32 %v4348, 16
      %v4486 = vrot.slane %v4484, 5
      %v4487 = vor.u32 %v4483, %v4486
      %v4488 = vrot.slane %v4487, 4
      %v4490 = vshll.u32 %v4349, 16
      %v4492 = vrot.slane %v4490, 5
      %v4493 = vsel %vm2293, %v4488, %v4492
      %v4494 = vshrl.u32 %v4349, 16
      %v4496 = vrot.slane %v4494, 4
      %v4497 = vor.u32 %v4496, %v4492
      %v4498 = vrot.slane %v4497, 4
      %v4500 = vshll.u32 %v4350, 16
      %v4502 = vrot.slane %v4500, 5
      %v4503 = vsel %vm2293, %v4498, %v4502
      %v4505 = vshrl.u32 %v4351, 16
      %v4507 = vrot.slane %v4505, 4
      %v4508 = vshll.u32 %v4351, 16
      %v4510 = vrot.slane %v4508, 5
      %v4511 = vor.u32 %v4507, %v4510
      %v4512 = vrot.slane %v4511, 4
      %v4514 = vshll.u32 %v4352, 16
      %v4516 = vrot.slane %v4514, 5
      %v4517 = vsel %vm2293, %v4512, %v4516
      %v4518 = vshrl.u32 %v4352, 16
      %v4520 = vrot.slane %v4518, 4
      %v4521 = vor.u32 %v4520, %v4516
      %v4522 = vrot.slane %v4521, 4
      %v4524 = vshll.u32 %v4353, 16
      %v4526 = vrot.slane %v4524, 5
      %v4527 = vsel %vm2293, %v4522, %v4526
      %v4529 = vshrl.u32 %v4354, 16
      %v4531 = vrot.slane %v4529, 4
      %v4532 = vshll.u32 %v4354, 16
      %v4534 = vrot.slane %v4532, 5
      %v4535 = vor.u32 %v4531, %v4534
      %v4536 = vrot.slane %v4535, 4
      %v4538 = vshll.u32 %v4355, 16
      %v4540 = vrot.slane %v4538, 5
      %v4541 = vsel %vm2293, %v4536, %v4540
      %v4542 = vshrl.u32 %v4355, 16
      %v4544 = vrot.slane %v4542, 4
      %v4545 = vor.u32 %v4544, %v4540
      %v4546 = vrot.slane %v4545, 4
      %v4548 = vshll.u32 %v4356, 16
      %v4550 = vrot.slane %v4548, 5
      %v4551 = vsel %vm2293, %v4546, %v4550
      %v4553 = vshrl.u32 %v4357, 16
      %v4555 = vrot.slane %v4553, 4
      %v4556 = vshll.u32 %v4357, 16
      %v4558 = vrot.slane %v4556, 5
      %v4559 = vor.u32 %v4555, %v4558
      %v4560 = vrot.slane %v4559, 4
      %v4562 = vshll.u32 %v4358, 16
      %v4564 = vrot.slane %v4562, 5
      %v4565 = vsel %vm2293, %v4560, %v4564
      %v4566 = vshrl.u32 %v4358, 16
      %v4568 = vrot.slane %v4566, 4
      %v4569 = vor.u32 %v4568, %v4564
      %v4570 = vrot.slane %v4569, 4
      %v4572 = vshll.u32 %v4359, 16
      %v4574 = vrot.slane %v4572, 5
      %v4575 = vsel %vm2293, %v4570, %v4574
      %v4577 = vshrl.u32 %v4360, 16
      %v4579 = vrot.slane %v4577, 4
      %v4580 = vshll.u32 %v4360, 16
      %v4582 = vrot.slane %v4580, 5
      %v4583 = vor.u32 %v4579, %v4582
      %v4584 = vrot.slane %v4583, 4
      %v4586 = vshll.u32 %v4361, 16
      %v4588 = vrot.slane %v4586, 5
      %v4589 = vsel %vm2293, %v4584, %v4588
      %v4590 = vshrl.u32 %v4361, 16
      %v4592 = vrot.slane %v4590, 4
      %v4593 = vor.u32 %v4592, %v4588
      %v4594 = vrot.slane %v4593, 4
      %v4596 = vshll.u32 %v4362, 16
      %v4598 = vrot.slane %v4596, 5
      %v4599 = vsel %vm2293, %v4594, %v4598
      %v4601 = vshrl.u32 %v4363, 16
      %v4603 = vrot.slane %v4601, 4
      %v4604 = vshll.u32 %v4363, 16
      %v4606 = vrot.slane %v4604, 5
      %v4607 = vor.u32 %v4603, %v4606
      %v4608 = vrot.slane %v4607, 4
      %v4610 = vshll.u32 %v4364, 16
      %v4612 = vrot.slane %v4610, 5
      %v4613 = vsel %vm2293, %v4608, %v4612
      %v4614 = vshrl.u32 %v4364, 16
      %v4616 = vrot.slane %v4614, 4
      %v4617 = vor.u32 %v4616, %v4612
      %v4618 = vrot.slane %v4617, 4
      %v4620 = vshll.u32 %v4365, 16
      %v4622 = vrot.slane %v4620, 5
      %v4623 = vsel %vm2293, %v4618, %v4622
      %v4625 = vshrl.u32 %v4366, 16
      %v4627 = vrot.slane %v4625, 4
      %v4628 = vshll.u32 %v4366, 16
      %v4630 = vrot.slane %v4628, 5
      %v4631 = vor.u32 %v4627, %v4630
      %v4632 = vrot.slane %v4631, 4
      %v4634 = vshll.u32 %v4367, 16
      %v4636 = vrot.slane %v4634, 5
      %v4637 = vsel %vm2293, %v4632, %v4636
      %v4638 = vshrl.u32 %v4367, 16
      %v4640 = vrot.slane %v4638, 4
      %v4641 = vor.u32 %v4640, %v4636
      %v4642 = vrot.slane %v4641, 4
      %v4644 = vshll.u32 %v4368, 16
      %v4646 = vrot.slane %v4644, 5
      %v4647 = vsel %vm2293, %v4642, %v4646
      %v4649 = vshrl.u32 %v4369, 16
      %v4651 = vrot.slane %v4649, 4
      %v4652 = vshll.u32 %v4369, 16
      %v4654 = vrot.slane %v4652, 5
      %v4655 = vor.u32 %v4651, %v4654
      %v4656 = vrot.slane %v4655, 4
      %v4658 = vshll.u32 %v4370, 16
      %v4660 = vrot.slane %v4658, 5
      %v4661 = vsel %vm2293, %v4656, %v4660
      %v4662 = vshrl.u32 %v4370, 16
      %v4664 = vrot.slane %v4662, 4
      %v4665 = vor.u32 %v4664, %v4660
      %v4666 = vrot.slane %v4665, 4
      %v4668 = vshll.u32 %v4371, 16
      %v4670 = vrot.slane %v4668, 5
      %v4671 = vsel %vm2293, %v4666, %v4670
      %v4673 = vshrl.u32 %v4372, 16
      %v4675 = vrot.slane %v4673, 4
      %v4676 = vshll.u32 %v4372, 16
      %v4678 = vrot.slane %v4676, 5
      %v4679 = vor.u32 %v4675, %v4678
      %v4680 = vrot.slane %v4679, 4
      %v4682 = vshll.u32 %v4373, 16
      %v4684 = vrot.slane %v4682, 5
      %v4685 = vsel %vm2293, %v4680, %v4684
      %v4686 = vshrl.u32 %v4373, 16
      %v4688 = vrot.slane %v4686, 4
      %v4689 = vor.u32 %v4688, %v4684
      %v4690 = vrot.slane %v4689, 4
      %v4692 = vshll.u32 %v4374, 16
      %v4694 = vrot.slane %v4692, 5
      %v4695 = vsel %vm2293, %v4690, %v4694
      %v4697 = vshrl.u32 %v4375, 16
      %v4699 = vrot.slane %v4697, 4
      %v4700 = vshll.u32 %v4375, 16
      %v4702 = vrot.slane %v4700, 5
      %v4703 = vor.u32 %v4699, %v4702
      %v4704 = vrot.slane %v4703, 4
      %v4706 = vshll.u32 %v4376, 16
      %v4708 = vrot.slane %v4706, 5
      %v4709 = vsel %vm2293, %v4704, %v4708
      %v4710 = vshrl.u32 %v4376, 16
      %v4712 = vrot.slane %v4710, 4
      %v4713 = vor.u32 %v4712, %v4708
      %v4714 = vrot.slane %v4713, 4
      %v4716 = vshll.u32 %v4377, 16
      %v4718 = vrot.slane %v4716, 5
      %v4719 = vsel %vm2293, %v4714, %v4718
      %v4721 = vshrl.u32 %v4378, 16
      %v4723 = vrot.slane %v4721, 4
      %v4724 = vshll.u32 %v4378, 16
      %v4726 = vrot.slane %v4724, 5
      %v4727 = vor.u32 %v4723, %v4726
      %v4728 = vrot.slane %v4727, 4
      %v4730 = vshll.u32 %v4379, 16
      %v4732 = vrot.slane %v4730, 5
      %v4733 = vsel %vm2293, %v4728, %v4732
      %v4734 = vshrl.u32 %v4379, 16
      %v4736 = vrot.slane %v4734, 4
      %v4737 = vor.u32 %v4736, %v4732
      %v4738 = vrot.slane %v4737, 4
      %v4740 = vshll.u32 %v4380, 16
      %v4742 = vrot.slane %v4740, 5
      %v4743 = vsel %vm2293, %v4738, %v4742
      %v4745 = vshrl.u32 %v4381, 16
      %v4747 = vrot.slane %v4745, 4
      %v4748 = vshll.u32 %v4381, 16
      %v4750 = vrot.slane %v4748, 5
      %v4751 = vor.u32 %v4747, %v4750
      %v4752 = vrot.slane %v4751, 4
      %v4754 = vshll.u32 %v4382, 16
      %v4756 = vrot.slane %v4754, 5
      %v4757 = vsel %vm2293, %v4752, %v4756
      %v4758 = vshrl.u32 %v4382, 16
      %v4760 = vrot.slane %v4758, 4
      %v4761 = vor.u32 %v4760, %v4756
      %v4762 = vrot.slane %v4761, 4
      %v4764 = vshll.u32 %v4383, 16
      %v4766 = vrot.slane %v4764, 5
      %v4767 = vsel %vm2293, %v4762, %v4766
      %v4768 = vunpack.c.l.b16 %v4397
      %v4769 = vunpack.c.l.b16 %v4407
      %v4770 = vunpack.c.l.b16 %v4421
      %v4771 = vunpack.c.l.b16 %v4431
      %v4772 = vunpack.c.l.b16 %v4445
      %v4773 = vunpack.c.l.b16 %v4455
      %v4774 = vunpack.c.l.b16 %v4469
      %v4775 = vunpack.c.l.b16 %v4479
      %v4776 = vunpack.c.l.b16 %v4493
      %v4777 = vunpack.c.l.b16 %v4503
      %v4778 = vunpack.c.l.b16 %v4517
      %v4779 = vunpack.c.l.b16 %v4527
      %v4780 = vunpack.c.l.b16 %v4541
      %v4781 = vunpack.c.l.b16 %v4551
      %v4782 = vunpack.c.l.b16 %v4565
      %v4783 = vunpack.c.l.b16 %v4575
      %v4784 = vunpack.c.l.b16 %v4589
      %v4785 = vunpack.c.l.b16 %v4599
      %v4786 = vunpack.c.l.b16 %v4613
      %v4787 = vunpack.c.l.b16 %v4623
      %v4788 = vunpack.c.l.b16 %v4637
      %v4789 = vunpack.c.l.b16 %v4647
      %v4790 = vunpack.c.l.b16 %v4661
      %v4791 = vunpack.c.l.b16 %v4671
      %v4792 = vunpack.c.l.b16 %v4685
      %v4793 = vunpack.c.l.b16 %v4695
      %v4794 = vunpack.c.l.b16 %v4709
      %v4795 = vunpack.c.l.b16 %v4719
      %v4796 = vunpack.c.l.b16 %v4733
      %v4797 = vunpack.c.l.b16 %v4743
      %v4798 = vunpack.c.l.b16 %v4757
      %v4799 = vunpack.c.l.b16 %v4767
      %v4800 = vpack.c.b16 %v4769, %v4768
      %v4801 = vpack.c.b16 %v4771, %v4770
      %v4802 = vpack.c.b16 %v4773, %v4772
      %v4803 = vpack.c.b16 %v4775, %v4774
      %v4804 = vpack.c.b16 %v4777, %v4776
      %v4805 = vpack.c.b16 %v4779, %v4778
      %v4806 = vpack.c.b16 %v4781, %v4780
      %v4807 = vpack.c.b16 %v4783, %v4782
      %v4808 = vpack.c.b16 %v4785, %v4784
      %v4809 = vpack.c.b16 %v4787, %v4786
      %v4810 = vpack.c.b16 %v4789, %v4788
      %v4811 = vpack.c.b16 %v4791, %v4790
      %v4812 = vpack.c.b16 %v4793, %v4792
      %v4813 = vpack.c.b16 %v4795, %v4794
      %v4814 = vpack.c.b16 %v4797, %v4796
      %v4815 = vpack.c.b16 %v4799, %v4798
      %4816 = vrot.lane.b32.xlu0 %v4800, 56
      %v4817 = vpop.permute.xlu0 %4816
      %4818 = vrot.lane.b32.xlu0 %v4801, 56
      %v4819 = vpop.permute.xlu0 %4818
      %4820 = vrot.lane.b32.xlu0 %v4802, 56
      %v4821 = vpop.permute.xlu0 %4820
      %4822 = vrot.lane.b32.xlu0 %v4803, 56
      %v4823 = vpop.permute.xlu0 %4822
      %4824 = vrot.lane.b32.xlu0 %v4804, 56
      %v4825 = vpop.permute.xlu0 %4824
      %4826 = vrot.lane.b32.xlu0 %v4805, 56
      %v4827 = vpop.permute.xlu0 %4826
      %4828 = vrot.lane.b32.xlu0 %v4806, 56
      %v4829 = vpop.permute.xlu0 %4828
      %4830 = vrot.lane.b32.xlu0 %v4807, 56
      %v4831 = vpop.permute.xlu0 %4830
      %4832 = vrot.lane.b32.xlu0 %v4808, 56
      %v4833 = vpop.permute.xlu0 %4832
      %4834 = vrot.lane.b32.xlu0 %v4809, 56
      %v4835 = vpop.permute.xlu0 %4834
      %4836 = vrot.lane.b32.xlu0 %v4810, 56
      %v4837 = vpop.permute.xlu0 %4836
      %4838 = vrot.lane.b32.xlu0 %v4811, 56
      %v4839 = vpop.permute.xlu0 %4838
      %4840 = vrot.lane.b32.xlu0 %v4812, 56
      %v4841 = vpop.permute.xlu0 %4840
      %4842 = vrot.lane.b32.xlu0 %v4813, 56
      %v4843 = vpop.permute.xlu0 %4842
      %4844 = vrot.lane.b32.xlu0 %v4814, 56
      %v4845 = vpop.permute.xlu0 %4844
      %4846 = vrot.lane.b32.xlu0 %v4815, 56
      %v4847 = vpop.permute.xlu0 %4846
      %vm4864 = vcmask 523712
      %4865 = vst.msk [vmem:[#allocation3] sm:$0xff] %vm4864, %v4817
      %4866 = vst.msk [vmem:[#allocation3 + $0x8] sm:$0xff] %vm4864, %v4819
      %4867 = vst.msk [vmem:[#allocation3 + $0x10] sm:$0xff] %vm4864, %v4821
      %4868 = vst.msk [vmem:[#allocation3 + $0x18] sm:$0xff] %vm4864, %v4823
      %4869 = vst.msk [vmem:[#allocation3 + $0x20] sm:$0xff] %vm4864, %v4825
      %4870 = vst.msk [vmem:[#allocation3 + $0x28] sm:$0xff] %vm4864, %v4827
      %4871 = vst.msk [vmem:[#allocation3 + $0x30] sm:$0xff] %vm4864, %v4829
      %4872 = vst.msk [vmem:[#allocation3 + $0x38] sm:$0xff] %vm4864, %v4831
      %4873 = vst.msk [vmem:[#allocation3 + $0x40] sm:$0xff] %vm4864, %v4833
      %4874 = vst.msk [vmem:[#allocation3 + $0x48] sm:$0xff] %vm4864, %v4835
      %4875 = vst.msk [vmem:[#allocation3 + $0x50] sm:$0xff] %vm4864, %v4837
      %4876 = vst.msk [vmem:[#allocation3 + $0x58] sm:$0xff] %vm4864, %v4839
      %4877 = vst.msk [vmem:[#allocation3 + $0x60] sm:$0xff] %vm4864, %v4841
      %4878 = vst.msk [vmem:[#allocation3 + $0x68] sm:$0xff] %vm4864, %v4843
      %4879 = vst.msk [vmem:[#allocation3 + $0x70] sm:$0xff] %vm4864, %v4845
      %4880 = vst.msk [vmem:[#allocation3 + $0x78] sm:$0xff] %vm4864, %v4847
      %v4881 = vld [vmem:[%s4158] sm:$0xe]
      %v4882 = vld [vmem:[%s4158 + $0x4] sm:$0xf]
      %v4883 = vld [vmem:[%s4158 + $0x8] sm:$0x1]
      %v4884 = vld [vmem:[%s4158 + $0xc] sm:$0xe]
      %v4885 = vld [vmem:[%s4158 + $0x10] sm:$0xf]
      %v4886 = vld [vmem:[%s4158 + $0x14] sm:$0x1]
      %v4887 = vld [vmem:[%s4158 + $0x18] sm:$0xe]
      %v4888 = vld [vmem:[%s4158 + $0x1c] sm:$0xf]
      %v4889 = vld [vmem:[%s4158 + $0x20] sm:$0x1]
      %v4890 = vld [vmem:[%s4158 + $0x24] sm:$0xe]
      %v4891 = vld [vmem:[%s4158 + $0x28] sm:$0xf]
      %v4892 = vld [vmem:[%s4158 + $0x2c] sm:$0x1]
      %v4893 = vld [vmem:[%s4158 + $0x30] sm:$0xe]
      %v4894 = vld [vmem:[%s4158 + $0x34] sm:$0xf]
      %v4895 = vld [vmem:[%s4158 + $0x38] sm:$0x1]
      %v4896 = vld [vmem:[%s4158 + $0x3c] sm:$0xe]
      %v4897 = vld [vmem:[%s4158 + $0x40] sm:$0xf]
      %v4898 = vld [vmem:[%s4158 + $0x44] sm:$0x1]
      %v4899 = vld [vmem:[%s4158 + $0x48] sm:$0xe]
      %v4900 = vld [vmem:[%s4158 + $0x4c] sm:$0xf]
      %v4901 = vld [vmem:[%s4158 + $0x50] sm:$0x1]
      %v4902 = vld [vmem:[%s4158 + $0x54] sm:$0xe]
      %v4903 = vld [vmem:[%s4158 + $0x58] sm:$0xf]
      %v4904 = vld [vmem:[%s4158 + $0x5c] sm:$0x1]
      %v4905 = vld [vmem:[%s4158 + $0x60] sm:$0xe]
      %v4906 = vld [vmem:[%s4158 + $0x64] sm:$0xf]
      %v4907 = vld [vmem:[%s4158 + $0x68] sm:$0x1]
      %v4908 = vld [vmem:[%s4158 + $0x6c] sm:$0xe]
      %v4909 = vld [vmem:[%s4158 + $0x70] sm:$0xf]
      %v4910 = vld [vmem:[%s4158 + $0x74] sm:$0x1]
      %v4911 = vld [vmem:[%s4158 + $0x78] sm:$0xe]
      %v4912 = vld [vmem:[%s4158 + $0x7c] sm:$0xf]
      %v4913 = vld [vmem:[%s4158 + $0x80] sm:$0x1]
      %v4914 = vld [vmem:[%s4158 + $0x84] sm:$0xe]
      %v4915 = vld [vmem:[%s4158 + $0x88] sm:$0xf]
      %v4916 = vld [vmem:[%s4158 + $0x8c] sm:$0x1]
      %v4917 = vld [vmem:[%s4158 + $0x90] sm:$0xe]
      %v4918 = vld [vmem:[%s4158 + $0x94] sm:$0xf]
      %v4919 = vld [vmem:[%s4158 + $0x98] sm:$0x1]
      %v4920 = vld [vmem:[%s4158 + $0x9c] sm:$0xe]
      %v4921 = vld [vmem:[%s4158 + $0xa0] sm:$0xf]
      %v4922 = vld [vmem:[%s4158 + $0xa4] sm:$0x1]
      %v4923 = vld [vmem:[%s4158 + $0xa8] sm:$0xe]
      %v4924 = vld [vmem:[%s4158 + $0xac] sm:$0xf]
      %v4925 = vld [vmem:[%s4158 + $0xb0] sm:$0x1]
      %v4926 = vld [vmem:[%s4158 + $0xb4] sm:$0xe]
      %v4927 = vld [vmem:[%s4158 + $0xb8] sm:$0xf]
      %v4928 = vld [vmem:[%s4158 + $0xbc] sm:$0x1]
      %v4977 = vrot.slane %v4881, 5
      %v4978 = vrot.slane %v4977, 4
      %v4979 = vrot.slane %v4882, 5
      %v4980 = vsel %vm2889, %v4978, %v4979
      %v4981 = vrot.slane %v4979, 4
      %v4982 = vrot.slane %v4883, 5
      %v4983 = vsel %vm2889, %v4981, %v4982
      %v4984 = vrot.slane %v4884, 5
      %v4985 = vrot.slane %v4984, 4
      %v4986 = vrot.slane %v4885, 5
      %v4987 = vsel %vm2889, %v4985, %v4986
      %v4988 = vrot.slane %v4986, 4
      %v4989 = vrot.slane %v4886, 5
      %v4990 = vsel %vm2889, %v4988, %v4989
      %v4991 = vrot.slane %v4887, 5
      %v4992 = vrot.slane %v4991, 4
      %v4993 = vrot.slane %v4888, 5
      %v4994 = vsel %vm2889, %v4992, %v4993
      %v4995 = vrot.slane %v4993, 4
      %v4996 = vrot.slane %v4889, 5
      %v4997 = vsel %vm2889, %v4995, %v4996
      %v4998 = vrot.slane %v4890, 5
      %v4999 = vrot.slane %v4998, 4
      %v5000 = vrot.slane %v4891, 5
      %v5001 = vsel %vm2889, %v4999, %v5000
      %v5002 = vrot.slane %v5000, 4
      %v5003 = vrot.slane %v4892, 5
      %v5004 = vsel %vm2889, %v5002, %v5003
      %v5005 = vrot.slane %v4893, 5
      %v5006 = vrot.slane %v5005, 4
      %v5007 = vrot.slane %v4894, 5
      %v5008 = vsel %vm2889, %v5006, %v5007
      %v5009 = vrot.slane %v5007, 4
      %v5010 = vrot.slane %v4895, 5
      %v5011 = vsel %vm2889, %v5009, %v5010
      %v5012 = vrot.slane %v4896, 5
      %v5013 = vrot.slane %v5012, 4
      %v5014 = vrot.slane %v4897, 5
      %v5015 = vsel %vm2889, %v5013, %v5014
      %v5016 = vrot.slane %v5014, 4
      %v5017 = vrot.slane %v4898, 5
      %v5018 = vsel %vm2889, %v5016, %v5017
      %v5019 = vrot.slane %v4899, 5
      %v5020 = vrot.slane %v5019, 4
      %v5021 = vrot.slane %v4900, 5
      %v5022 = vsel %vm2889, %v5020, %v5021
      %v5023 = vrot.slane %v5021, 4
      %v5024 = vrot.slane %v4901, 5
      %v5025 = vsel %vm2889, %v5023, %v5024
      %v5026 = vrot.slane %v4902, 5
      %v5027 = vrot.slane %v5026, 4
      %v5028 = vrot.slane %v4903, 5
      %v5029 = vsel %vm2889, %v5027, %v5028
      %v5030 = vrot.slane %v5028, 4
      %v5031 = vrot.slane %v4904, 5
      %v5032 = vsel %vm2889, %v5030, %v5031
      %v5033 = vrot.slane %v4905, 5
      %v5034 = vrot.slane %v5033, 4
      %v5035 = vrot.slane %v4906, 5
      %v5036 = vsel %vm2889, %v5034, %v5035
      %v5037 = vrot.slane %v5035, 4
      %v5038 = vrot.slane %v4907, 5
      %v5039 = vsel %vm2889, %v5037, %v5038
      %v5040 = vrot.slane %v4908, 5
      %v5041 = vrot.slane %v5040, 4
      %v5042 = vrot.slane %v4909, 5
      %v5043 = vsel %vm2889, %v5041, %v5042
      %v5044 = vrot.slane %v5042, 4
      %v5045 = vrot.slane %v4910, 5
      %v5046 = vsel %vm2889, %v5044, %v5045
      %v5047 = vrot.slane %v4911, 5
      %v5048 = vrot.slane %v5047, 4
      %v5049 = vrot.slane %v4912, 5
      %v5050 = vsel %vm2889, %v5048, %v5049
      %v5051 = vrot.slane %v5049, 4
      %v5052 = vrot.slane %v4913, 5
      %v5053 = vsel %vm2889, %v5051, %v5052
      %v5054 = vrot.slane %v4914, 5
      %v5055 = vrot.slane %v5054, 4
      %v5056 = vrot.slane %v4915, 5
      %v5057 = vsel %vm2889, %v5055, %v5056
      %v5058 = vrot.slane %v5056, 4
      %v5059 = vrot.slane %v4916, 5
      %v5060 = vsel %vm2889, %v5058, %v5059
      %v5061 = vrot.slane %v4917, 5
      %v5062 = vrot.slane %v5061, 4
      %v5063 = vrot.slane %v4918, 5
      %v5064 = vsel %vm2889, %v5062, %v5063
      %v5065 = vrot.slane %v5063, 4
      %v5066 = vrot.slane %v4919, 5
      %v5067 = vsel %vm2889, %v5065, %v5066
      %v5068 = vrot.slane %v4920, 5
      %v5069 = vrot.slane %v5068, 4
      %v5070 = vrot.slane %v4921, 5
      %v5071 = vsel %vm2889, %v5069, %v5070
      %v5072 = vrot.slane %v5070, 4
      %v5073 = vrot.slane %v4922, 5
      %v5074 = vsel %vm2889, %v5072, %v5073
      %v5075 = vrot.slane %v4923, 5
      %v5076 = vrot.slane %v5075, 4
      %v5077 = vrot.slane %v4924, 5
      %v5078 = vsel %vm2889, %v5076, %v5077
      %v5079 = vrot.slane %v5077, 4
      %v5080 = vrot.slane %v4925, 5
      %v5081 = vsel %vm2889, %v5079, %v5080
      %v5082 = vrot.slane %v4926, 5
      %v5083 = vrot.slane %v5082, 4
      %v5084 = vrot.slane %v4927, 5
      %v5085 = vsel %vm2889, %v5083, %v5084
      %v5086 = vrot.slane %v5084, 4
      %v5087 = vrot.slane %v4928, 5
      %v5088 = vsel %vm2889, %v5086, %v5087
      %v5089 = vunpack.c.l.b16 %v4980
      %v5090 = vunpack.c.l.b16 %v4983
      %v5091 = vunpack.c.l.b16 %v4987
      %v5092 = vunpack.c.l.b16 %v4990
      %v5093 = vunpack.c.l.b16 %v4994
      %v5094 = vunpack.c.l.b16 %v4997
      %v5095 = vunpack.c.l.b16 %v5001
      %v5096 = vunpack.c.l.b16 %v5004
      %v5097 = vunpack.c.l.b16 %v5008
      %v5098 = vunpack.c.l.b16 %v5011
      %v5099 = vunpack.c.l.b16 %v5015
      %v5100 = vunpack.c.l.b16 %v5018
      %v5101 = vunpack.c.l.b16 %v5022
      %v5102 = vunpack.c.l.b16 %v5025
      %v5103 = vunpack.c.l.b16 %v5029
      %v5104 = vunpack.c.l.b16 %v5032
      %v5105 = vunpack.c.l.b16 %v5036
      %v5106 = vunpack.c.l.b16 %v5039
      %v5107 = vunpack.c.l.b16 %v5043
      %v5108 = vunpack.c.l.b16 %v5046
      %v5109 = vunpack.c.l.b16 %v5050
      %v5110 = vunpack.c.l.b16 %v5053
      %v5111 = vunpack.c.l.b16 %v5057
      %v5112 = vunpack.c.l.b16 %v5060
      %v5113 = vunpack.c.l.b16 %v5064
      %v5114 = vunpack.c.l.b16 %v5067
      %v5115 = vunpack.c.l.b16 %v5071
      %v5116 = vunpack.c.l.b16 %v5074
      %v5117 = vunpack.c.l.b16 %v5078
      %v5118 = vunpack.c.l.b16 %v5081
      %v5119 = vunpack.c.l.b16 %v5085
      %v5120 = vunpack.c.l.b16 %v5088
      %v5121 = vpack.c.b16 %v5090, %v5089
      %v5122 = vpack.c.b16 %v5092, %v5091
      %v5123 = vpack.c.b16 %v5094, %v5093
      %v5124 = vpack.c.b16 %v5096, %v5095
      %v5125 = vpack.c.b16 %v5098, %v5097
      %v5126 = vpack.c.b16 %v5100, %v5099
      %v5127 = vpack.c.b16 %v5102, %v5101
      %v5128 = vpack.c.b16 %v5104, %v5103
      %v5129 = vpack.c.b16 %v5106, %v5105
      %v5130 = vpack.c.b16 %v5108, %v5107
      %v5131 = vpack.c.b16 %v5110, %v5109
      %v5132 = vpack.c.b16 %v5112, %v5111
      %v5133 = vpack.c.b16 %v5114, %v5113
      %v5134 = vpack.c.b16 %v5116, %v5115
      %v5135 = vpack.c.b16 %v5118, %v5117
      %v5136 = vpack.c.b16 %v5120, %v5119
      %5137 = vrot.lane.b32.xlu0 %v5121, 64
      %v5138 = vpop.permute.xlu0 %5137
      %5139 = vrot.lane.b32.xlu0 %v5122, 64
      %v5140 = vpop.permute.xlu0 %5139
      %5141 = vrot.lane.b32.xlu0 %v5123, 64
      %v5142 = vpop.permute.xlu0 %5141
      %5143 = vrot.lane.b32.xlu0 %v5124, 64
      %v5144 = vpop.permute.xlu0 %5143
      %5145 = vrot.lane.b32.xlu0 %v5125, 64
      %v5146 = vpop.permute.xlu0 %5145
      %5147 = vrot.lane.b32.xlu0 %v5126, 64
      %v5148 = vpop.permute.xlu0 %5147
      %5149 = vrot.lane.b32.xlu0 %v5127, 64
      %v5150 = vpop.permute.xlu0 %5149
      %5151 = vrot.lane.b32.xlu0 %v5128, 64
      %v5152 = vpop.permute.xlu0 %5151
      %5153 = vrot.lane.b32.xlu0 %v5129, 64
      %v5154 = vpop.permute.xlu0 %5153
      %5155 = vrot.lane.b32.xlu0 %v5130, 64
      %v5156 = vpop.permute.xlu0 %5155
      %5157 = vrot.lane.b32.xlu0 %v5131, 64
      %v5158 = vpop.permute.xlu0 %5157
      %5159 = vrot.lane.b32.xlu0 %v5132, 64
      %v5160 = vpop.permute.xlu0 %5159
      %5161 = vrot.lane.b32.xlu0 %v5133, 64
      %v5162 = vpop.permute.xlu0 %5161
      %5163 = vrot.lane.b32.xlu0 %v5134, 64
      %v5164 = vpop.permute.xlu0 %5163
      %5165 = vrot.lane.b32.xlu0 %v5135, 64
      %v5166 = vpop.permute.xlu0 %5165
      %5167 = vrot.lane.b32.xlu0 %v5136, 64
      %v5168 = vpop.permute.xlu0 %5167
      %vm5185 = vcmask 589312
      %5186 = vst.msk [vmem:[#allocation3] sm:$0xff] %vm5185, %v5138
      %5187 = vst.msk [vmem:[#allocation3 + $0x8] sm:$0xff] %vm5185, %v5140
      %5188 = vst.msk [vmem:[#allocation3 + $0x10] sm:$0xff] %vm5185, %v5142
      %5189 = vst.msk [vmem:[#allocation3 + $0x18] sm:$0xff] %vm5185, %v5144
      %5190 = vst.msk [vmem:[#allocation3 + $0x20] sm:$0xff] %vm5185, %v5146
      %5191 = vst.msk [vmem:[#allocation3 + $0x28] sm:$0xff] %vm5185, %v5148
      %5192 = vst.msk [vmem:[#allocation3 + $0x30] sm:$0xff] %vm5185, %v5150
      %5193 = vst.msk [vmem:[#allocation3 + $0x38] sm:$0xff] %vm5185, %v5152
      %5194 = vst.msk [vmem:[#allocation3 + $0x40] sm:$0xff] %vm5185, %v5154
      %5195 = vst.msk [vmem:[#allocation3 + $0x48] sm:$0xff] %vm5185, %v5156
      %5196 = vst.msk [vmem:[#allocation3 + $0x50] sm:$0xff] %vm5185, %v5158
      %5197 = vst.msk [vmem:[#allocation3 + $0x58] sm:$0xff] %vm5185, %v5160
      %5198 = vst.msk [vmem:[#allocation3 + $0x60] sm:$0xff] %vm5185, %v5162
      %5199 = vst.msk [vmem:[#allocation3 + $0x68] sm:$0xff] %vm5185, %v5164
      %5200 = vst.msk [vmem:[#allocation3 + $0x70] sm:$0xff] %vm5185, %v5166
      %5201 = vst.msk [vmem:[#allocation3 + $0x78] sm:$0xff] %vm5185, %v5168
      %v5202 = vld [vmem:[#allocation3] sm:$0xff]
      %v5203 = vld [vmem:[#allocation3 + $0x8] sm:$0xff]
      %v5204 = vld [vmem:[#allocation3 + $0x10] sm:$0xff]
      %v5205 = vld [vmem:[#allocation3 + $0x18] sm:$0xff]
      %v5206 = vld [vmem:[#allocation3 + $0x20] sm:$0xff]
      %v5207 = vld [vmem:[#allocation3 + $0x28] sm:$0xff]
      %v5208 = vld [vmem:[#allocation3 + $0x30] sm:$0xff]
      %v5209 = vld [vmem:[#allocation3 + $0x38] sm:$0xff]
      %v5210 = vld [vmem:[#allocation3 + $0x40] sm:$0xff]
      %v5211 = vld [vmem:[#allocation3 + $0x48] sm:$0xff]
      %v5212 = vld [vmem:[#allocation3 + $0x50] sm:$0xff]
      %v5213 = vld [vmem:[#allocation3 + $0x58] sm:$0xff]
      %v5214 = vld [vmem:[#allocation3 + $0x60] sm:$0xff]
      %v5215 = vld [vmem:[#allocation3 + $0x68] sm:$0xff]
      %v5216 = vld [vmem:[#allocation3 + $0x70] sm:$0xff]
      %v5217 = vld [vmem:[#allocation3 + $0x78] sm:$0xff]
      %v5218 = vld [vmem:[%s3] sm:$0xf]
      %v5219 = vld [vmem:[%s3 + $0x4] sm:$0xf]
      %v5220 = vld [vmem:[%s3 + $0x8] sm:$0xf]
      %v5221 = vld [vmem:[%s3 + $0xc] sm:$0xf]
      %v5222 = vld [vmem:[%s3 + $0x10] sm:$0xf]
      %v5223 = vld [vmem:[%s3 + $0x14] sm:$0xf]
      %v5224 = vld [vmem:[%s3 + $0x18] sm:$0xf]
      %v5225 = vld [vmem:[%s3 + $0x1c] sm:$0xf]
      %v5226 = vld [vmem:[%s3 + $0x20] sm:$0xf]
      %v5236 = vunpack.c.l.b16 %v5218
      %v5237 = vunpack.c.l.b16 %v5219
      %v5238 = vunpack.c.l.b16 %v5220
      %v5239 = vunpack.c.l.b16 %v5221
      %v5240 = vunpack.c.l.b16 %v5222
      %v5241 = vunpack.c.l.b16 %v5223
      %v5242 = vunpack.c.l.b16 %v5224
      %v5243 = vunpack.c.l.b16 %v5225
      %v5244 = vunpack.c.l.b16 %v5226
      %v5245 = vpack.c.b16 %v5237, %v5236
      %v5246 = vpack.c.b16 %v5239, %v5238
      %v5247 = vpack.c.b16 %v5241, %v5240
      %v5248 = vpack.c.b16 %v5243, %v5242
      %v5249 = vpack.c.b16 %v5244, %v5244
      %vm5254 = vcmask 588800
      %v5256 = vsel %vm5254, %v5202, 0
      %v5259 = vsel %vm5254, %v5203, 0
      %v5262 = vsel %vm5254, %v5204, 0
      %v5265 = vsel %vm5254, %v5205, 0
      %v5268 = vsel %vm5254, %v5206, 0
      %v5271 = vsel %vm5254, %v5207, 0
      %v5274 = vsel %vm5254, %v5208, 0
      %v5277 = vsel %vm5254, %v5209, 0
      %v5280 = vsel %vm5254, %v5210, 0
      %v5283 = vsel %vm5254, %v5211, 0
      %v5286 = vsel %vm5254, %v5212, 0
      %v5289 = vsel %vm5254, %v5213, 0
      %v5292 = vsel %vm5254, %v5214, 0
      %v5295 = vsel %vm5254, %v5215, 0
      %v5298 = vsel %vm5254, %v5216, 0
      %v5301 = vsel %vm5254, %v5217, 0
      %vm5303 = vcmask 1043456
      %v5305 = vsel %vm5303, %v5249, 0
      %5307 = vmatprep.subr.bf16.mxu0 0
      %5308 = vmatpush1.bf16.msra.mxu0 %v5245
      %5309 = vmatprep.subr.bf16.mxu0 0
      %5310 = vmatpush1.bf16.msra.mxu0 %v5246
      %5311 = vmatprep.subr.bf16.mxu0 0
      %5312 = vmatpush1.bf16.msra.mxu0 %v5247
      %5313 = vmatprep.subr.bf16.mxu0 0
      %5314 = vmatpush1.bf16.msra.mxu0 %v5248
      %5315 = vmatprep.subr.bf16.mxu0 0
      %5316 = vmatpush1.bf16.msra.mxu0 %v5305
      %5317 = vmatprep.subr.bf16.mxu0 0
      %5318 = vmatpush1.bf16.msra.mxu0 0
      %5319 = vmatprep.subr.bf16.mxu0 0
      %5320 = vmatpush1.bf16.msra.mxu0 0
      %5321 = vmatprep.subr.bf16.mxu0 0
      %5322 = vmatpush1.bf16.msra.mxu0 0
      %5323 = vmatprep.subr.bf16.mxu0 0
      %5324 = vmatpush1.bf16.msra.mxu0 0
      %5325 = vmatprep.subr.bf16.mxu0 0
      %5326 = vmatpush1.bf16.msra.mxu0 0
      %5327 = vmatprep.subr.bf16.mxu0 0
      %5328 = vmatpush1.bf16.msra.mxu0 0
      %5329 = vmatprep.subr.bf16.mxu0 0
      %5330 = vmatpush1.bf16.msra.mxu0 0
      %5331 = vmatprep.subr.bf16.mxu0 0
      %5332 = vmatpush1.bf16.msra.mxu0 0
      %5333 = vmatprep.subr.bf16.mxu0 0
      %5334 = vmatpush1.bf16.msra.mxu0 0
      %5335 = vmatprep.subr.bf16.mxu0 0
      %5336 = vmatpush1.bf16.msra.mxu0 0
      %5337 = vmatprep.subr.bf16.mxu0 0
      %5338 = vmatpush1.bf16.msra.mxu0 0
      %5339 = vmatprep.mubr.bf16.mxu0 0
      %5340 = vmatmul.mubr.bf16.gmra.mrb[0].mxu0 %v5256
      %v5341 = vpop.f32.mrb[0].mxu0
      %v5342 = vadd.f32 0.0, %v5341
      %v5343 = vpop.f32.mrb[0].mxu0
      %v5344 = vpop.f32.mrb[0].mxu0
      %v5345 = vadd.f32 0.0, %v5344
      %v5346 = vpop.f32.mrb[0].mxu0
      %5347 = vmatprep.mubr.bf16.mxu0 0
      %5348 = vmatmul.mubr.bf16.gmra.mrb[0].mxu0 %v5259
      %v5349 = vpop.f32.mrb[0].mxu0
      %v5350 = vadd.f32 0.0, %v5349
      %v5351 = vpop.f32.mrb[0].mxu0
      %v5352 = vpop.f32.mrb[0].mxu0
      %v5353 = vadd.f32 0.0, %v5352
      %v5354 = vpop.f32.mrb[0].mxu0
      %5355 = vmatprep.mubr.bf16.mxu0 0
      %5356 = vmatmul.mubr.bf16.gmra.mrb[0].mxu0 %v5262
      %v5357 = vpop.f32.mrb[0].mxu0
      %v5358 = vadd.f32 0.0, %v5357
      %v5359 = vpop.f32.mrb[0].mxu0
      %v5360 = vpop.f32.mrb[0].mxu0
      %v5361 = vadd.f32 0.0, %v5360
      %v5362 = vpop.f32.mrb[0].mxu0
      %5363 = vmatprep.mubr.bf16.mxu0 0
      %5364 = vmatmul.mubr.bf16.gmra.mrb[0].mxu0 %v5265
      %v5365 = vpop.f32.mrb[0].mxu0
      %v5366 = vadd.f32 0.0, %v5365
      %v5367 = vpop.f32.mrb[0].mxu0
      %v5368 = vpop.f32.mrb[0].mxu0
      %v5369 = vadd.f32 0.0, %v5368
      %v5370 = vpop.f32.mrb[0].mxu0
      %5371 = vmatprep.mubr.bf16.mxu0 0
      %5372 = vmatmul.mubr.bf16.gmra.mrb[0].mxu0 %v5268
      %v5373 = vpop.f32.mrb[0].mxu0
      %v5374 = vadd.f32 0.0, %v5373
      %v5375 = vpop.f32.mrb[0].mxu0
      %v5376 = vpop.f32.mrb[0].mxu0
      %v5377 = vadd.f32 0.0, %v5376
      %v5378 = vpop.f32.mrb[0].mxu0
      %5379 = vmatprep.mubr.bf16.mxu0 0
      %5380 = vmatmul.mubr.bf16.gmra.mrb[0].mxu0 %v5271
      %v5381 = vpop.f32.mrb[0].mxu0
      %v5382 = vadd.f32 0.0, %v5381
      %v5383 = vpop.f32.mrb[0].mxu0
      %v5384 = vpop.f32.mrb[0].mxu0
      %v5385 = vadd.f32 0.0, %v5384
      %v5386 = vpop.f32.mrb[0].mxu0
      %5387 = vmatprep.mubr.bf16.mxu0 0
      %5388 = vmatmul.mubr.bf16.gmra.mrb[0].mxu0 %v5274
      %v5389 = vpop.f32.mrb[0].mxu0
      %v5390 = vadd.f32 0.0, %v5389
      %v5391 = vpop.f32.mrb[0].mxu0
      %v5392 = vpop.f32.mrb[0].mxu0
      %v5393 = vadd.f32 0.0, %v5392
      %v5394 = vpop.f32.mrb[0].mxu0
      %5395 = vmatprep.mubr.bf16.mxu0 0
      %5396 = vmatmul.mubr.bf16.gmra.mrb[0].mxu0 %v5277
      %v5397 = vpop.f32.mrb[0].mxu0
      %v5398 = vadd.f32 0.0, %v5397
      %v5399 = vpop.f32.mrb[0].mxu0
      %v5400 = vpop.f32.mrb[0].mxu0
      %v5401 = vadd.f32 0.0, %v5400
      %v5402 = vpop.f32.mrb[0].mxu0
      %5403 = vmatprep.mubr.bf16.mxu0 0
      %5404 = vmatmul.mubr.bf16.gmra.mrb[0].mxu0 %v5280
      %v5405 = vpop.f32.mrb[0].mxu0
      %v5406 = vadd.f32 0.0, %v5405
      %v5407 = vpop.f32.mrb[0].mxu0
      %v5408 = vpop.f32.mrb[0].mxu0
      %v5409 = vadd.f32 0.0, %v5408
      %v5410 = vpop.f32.mrb[0].mxu0
      %5411 = vmatprep.mubr.bf16.mxu0 0
      %5412 = vmatmul.mubr.bf16.gmra.mrb[0].mxu0 %v5283
      %v5413 = vpop.f32.mrb[0].mxu0
      %v5414 = vadd.f32 0.0, %v5413
      %v5415 = vpop.f32.mrb[0].mxu0
      %v5416 = vpop.f32.mrb[0].mxu0
      %v5417 = vadd.f32 0.0, %v5416
      %v5418 = vpop.f32.mrb[0].mxu0
      %5419 = vmatprep.mubr.bf16.mxu0 0
      %5420 = vmatmul.mubr.bf16.gmra.mrb[0].mxu0 %v5286
      %v5421 = vpop.f32.mrb[0].mxu0
      %v5422 = vadd.f32 0.0, %v5421
      %v5423 = vpop.f32.mrb[0].mxu0
      %v5424 = vpop.f32.mrb[0].mxu0
      %v5425 = vadd.f32 0.0, %v5424
      %v5426 = vpop.f32.mrb[0].mxu0
      %5427 = vmatprep.mubr.bf16.mxu0 0
      %5428 = vmatmul.mubr.bf16.gmra.mrb[0].mxu0 %v5289
      %v5429 = vpop.f32.mrb[0].mxu0
      %v5430 = vadd.f32 0.0, %v5429
      %v5431 = vpop.f32.mrb[0].mxu0
      %v5432 = vpop.f32.mrb[0].mxu0
      %v5433 = vadd.f32 0.0, %v5432
      %v5434 = vpop.f32.mrb[0].mxu0
      %5435 = vmatprep.mubr.bf16.mxu0 0
      %5436 = vmatmul.mubr.bf16.gmra.mrb[0].mxu0 %v5292
      %v5437 = vpop.f32.mrb[0].mxu0
      %v5438 = vadd.f32 0.0, %v5437
      %v5439 = vpop.f32.mrb[0].mxu0
      %v5440 = vpop.f32.mrb[0].mxu0
      %v5441 = vadd.f32 0.0, %v5440
      %v5442 = vpop.f32.mrb[0].mxu0
      %5443 = vmatprep.mubr.bf16.mxu0 0
      %5444 = vmatmul.mubr.bf16.gmra.mrb[0].mxu0 %v5295
      %v5445 = vpop.f32.mrb[0].mxu0
      %v5446 = vadd.f32 0.0, %v5445
      %v5447 = vpop.f32.mrb[0].mxu0
      %v5448 = vpop.f32.mrb[0].mxu0
      %v5449 = vadd.f32 0.0, %v5448
      %v5450 = vpop.f32.mrb[0].mxu0
      %5451 = vmatprep.mubr.bf16.mxu0 0
      %5452 = vmatmul.mubr.bf16.gmra.mrb[0].mxu0 %v5298
      %v5453 = vpop.f32.mrb[0].mxu0
      %v5454 = vadd.f32 0.0, %v5453
      %v5455 = vpop.f32.mrb[0].mxu0
      %v5456 = vpop.f32.mrb[0].mxu0
      %v5457 = vadd.f32 0.0, %v5456
      %v5458 = vpop.f32.mrb[0].mxu0
      %5459 = vmatprep.mubr.bf16.mxu0 0
      %5460 = vmatmul.mubr.bf16.gmra.mrb[0].mxu0 %v5301
      %v5461 = vpop.f32.mrb[0].mxu0
      %v5462 = vadd.f32 0.0, %v5461
      %v5463 = vpop.f32.mrb[0].mxu0
      %v5464 = vpop.f32.mrb[0].mxu0
      %v5465 = vadd.f32 0.0, %v5464
      %v5466 = vpop.f32.mrb[0].mxu0
      %5467 = vdwg.mxu0
      %v5484 = vrot.slane %v5350, 7
      %vm5485 = vcmask 1041409
      %v5486 = vsel %vm5485, %v5484, %v5342
      %v5487 = vrot.slane %v5358, 6
      %vm5488 = vcmask 1042434
      %v5489 = vsel %vm5488, %v5487, %v5486
      %v5490 = vrot.slane %v5366, 5
      %vm5491 = vcmask 1043459
      %v5492 = vsel %vm5491, %v5490, %v5489
      %v5493 = vrot.slane %v5374, 4
      %vm5494 = vcmask 1044484
      %v5495 = vsel %vm5494, %v5493, %v5492
      %v5496 = vrot.slane %v5382, 3
      %vm5497 = vcmask 1045509
      %v5498 = vsel %vm5497, %v5496, %v5495
      %v5499 = vrot.slane %v5390, 2
      %vm5500 = vcmask 1046534
      %v5501 = vsel %vm5500, %v5499, %v5498
      %v5502 = vrot.slane %v5398, 1
      %vm5503 = vcmask 1047559
      %v5504 = vsel %vm5503, %v5502, %v5501
      %v5505 = vrot.slane %v5414, 7
      %v5506 = vsel %vm5485, %v5505, %v5406
      %v5507 = vrot.slane %v5422, 6
      %v5508 = vsel %vm5488, %v5507, %v5506
      %v5509 = vrot.slane %v5430, 5
      %v5510 = vsel %vm5491, %v5509, %v5508
      %v5511 = vrot.slane %v5438, 4
      %v5512 = vsel %vm5494, %v5511, %v5510
      %v5513 = vrot.slane %v5446, 3
      %v5514 = vsel %vm5497, %v5513, %v5512
      %v5515 = vrot.slane %v5454, 2
      %v5516 = vsel %vm5500, %v5515, %v5514
      %v5517 = vrot.slane %v5462, 1
      %v5518 = vsel %vm5503, %v5517, %v5516
      %5521 = vst.msk [vmem:[%s233] sm:$0xff] %vm2227, %v5504
      %5522 = vst.msk [vmem:[%s233 + $0x8] sm:$0xff] %vm2227, %v5518
      %v5523 = vsel %vm5488, %v5484, %v5342
      %v5524 = vsel %vm5491, %v5487, %v5523
      %v5525 = vsel %vm5494, %v5490, %v5524
      %v5526 = vsel %vm5497, %v5493, %v5525
      %v5527 = vsel %vm5500, %v5496, %v5526
      %v5528 = vsel %vm5503, %v5499, %v5527
      %v5529 = vsel %vm5485, %v5406, %v5502
      %v5530 = vsel %vm5488, %v5505, %v5529
      %v5531 = vsel %vm5491, %v5507, %v5530
      %v5532 = vsel %vm5494, %v5509, %v5531
      %v5533 = vsel %vm5497, %v5511, %v5532
      %v5534 = vsel %vm5500, %v5513, %v5533
      %v5535 = vsel %vm5503, %v5515, %v5534
      %5536 = vrot.lane.b32.xlu0 %v5528, 8
      %v5537 = vpop.permute.xlu0 %5536
      %5538 = vrot.lane.b32.xlu0 %v5535, 8
      %v5539 = vpop.permute.xlu0 %5538
      %5540 = vrot.lane.b32.xlu0 %v5517, 8
      %v5541 = vpop.permute.xlu0 %5540
      %vm5545 = vcmask 130113
      %5546 = vst.msk [vmem:[%s233 - $0x1] sm:$0xfe] %vm5545, %v5537
      %5547 = vst.msk [vmem:[%s233 + $0x7] sm:$0xff] %vm2774, %v5539
      %vm5548 = vcmask 122944
      %5549 = vst.msk [vmem:[%s233 + $0xf] sm:$0x1] %vm5548, %v5541
      %v5550 = vsel %vm5491, %v5484, %v5342
      %v5551 = vsel %vm5494, %v5487, %v5550
      %v5552 = vsel %vm5497, %v5490, %v5551
      %v5553 = vsel %vm5500, %v5493, %v5552
      %v5554 = vsel %vm5503, %v5496, %v5553
      %v5555 = vsel %vm5485, %v5502, %v5499
      %v5556 = vsel %vm5488, %v5406, %v5555
      %v5557 = vsel %vm5491, %v5505, %v5556
      %v5558 = vsel %vm5494, %v5507, %v5557
      %v5559 = vsel %vm5497, %v5509, %v5558
      %v5560 = vsel %vm5500, %v5511, %v5559
      %v5561 = vsel %vm5503, %v5513, %v5560
      %v5562 = vsel %vm5485, %v5517, %v5515
      %5563 = vrot.lane.b32.xlu0 %v5554, 16
      %v5564 = vpop.permute.xlu0 %5563
      %5565 = vrot.lane.b32.xlu0 %v5561, 16
      %v5566 = vpop.permute.xlu0 %5565
      %5567 = vrot.lane.b32.xlu0 %v5562, 16
      %v5568 = vpop.permute.xlu0 %5567
      %vm5572 = vcmask 195714
      %5573 = vst.msk [vmem:[%s233 - $0x2] sm:$0xfc] %vm5572, %v5564
      %5574 = vst.msk [vmem:[%s233 + $0x6] sm:$0xff] %vm3098, %v5566
      %vm5575 = vcmask 189568
      %5576 = vst.msk [vmem:[%s233 + $0xe] sm:$0x3] %vm5575, %v5568
      %v5577 = vsel %vm5494, %v5484, %v5342
      %v5578 = vsel %vm5497, %v5487, %v5577
      %v5579 = vsel %vm5500, %v5490, %v5578
      %v5580 = vsel %vm5503, %v5493, %v5579
      %v5581 = vsel %vm5485, %v5499, %v5496
      %v5582 = vsel %vm5488, %v5502, %v5581
      %v5583 = vsel %vm5491, %v5406, %v5582
      %v5584 = vsel %vm5494, %v5505, %v5583
      %v5585 = vsel %vm5497, %v5507, %v5584
      %v5586 = vsel %vm5500, %v5509, %v5585
      %v5587 = vsel %vm5503, %v5511, %v5586
      %v5588 = vsel %vm5485, %v5515, %v5513
      %v5589 = vsel %vm5488, %v5517, %v5588
      %5590 = vrot.lane.b32.xlu0 %v5580, 24
      %v5591 = vpop.permute.xlu0 %5590
      %5592 = vrot.lane.b32.xlu0 %v5587, 24
      %v5593 = vpop.permute.xlu0 %5592
      %5594 = vrot.lane.b32.xlu0 %v5589, 24
      %v5595 = vpop.permute.xlu0 %5594
      %vm5599 = vcmask 261315
      %5600 = vst.msk [vmem:[%s233 - $0x3] sm:$0xf8] %vm5599, %v5591
      %5601 = vst.msk [vmem:[%s233 + $0x5] sm:$0xff] %vm3275, %v5593
      %vm5602 = vcmask 256192
      %5603 = vst.msk [vmem:[%s233 + $0xd] sm:$0x7] %vm5602, %v5595
      %v5604 = vsel %vm5497, %v5484, %v5342
      %v5605 = vsel %vm5500, %v5487, %v5604
      %v5606 = vsel %vm5503, %v5490, %v5605
      %v5607 = vsel %vm5485, %v5496, %v5493
      %v5608 = vsel %vm5488, %v5499, %v5607
      %v5609 = vsel %vm5491, %v5502, %v5608
      %v5610 = vsel %vm5494, %v5406, %v5609
      %v5611 = vsel %vm5497, %v5505, %v5610
      %v5612 = vsel %vm5500, %v5507, %v5611
      %v5613 = vsel %vm5503, %v5509, %v5612
      %v5614 = vsel %vm5485, %v5513, %v5511
      %v5615 = vsel %vm5488, %v5515, %v5614
      %v5616 = vsel %vm5491, %v5517, %v5615
      %5617 = vrot.lane.b32.xlu0 %v5606, 32
      %v5618 = vpop.permute.xlu0 %5617
      %5619 = vrot.lane.b32.xlu0 %v5613, 32
      %v5620 = vpop.permute.xlu0 %5619
      %5621 = vrot.lane.b32.xlu0 %v5616, 32
      %v5622 = vpop.permute.xlu0 %5621
      %vm5626 = vcmask 326916
      %5627 = vst.msk [vmem:[%s233 - $0x4] sm:$0xf0] %vm5626, %v5618
      %5628 = vst.msk [vmem:[%s233 + $0x4] sm:$0xff] %vm3820, %v5620
      %vm5629 = vcmask 322816
      %5630 = vst.msk [vmem:[%s233 + $0xc] sm:$0xf] %vm5629, %v5622
      %v5631 = vsel %vm5500, %v5484, %v5342
      %v5632 = vsel %vm5503, %v5487, %v5631
      %v5633 = vsel %vm5485, %v5493, %v5490
      %v5634 = vsel %vm5488, %v5496, %v5633
      %v5635 = vsel %vm5491, %v5499, %v5634
      %v5636 = vsel %vm5494, %v5502, %v5635
      %v5637 = vsel %vm5497, %v5406, %v5636
      %v5638 = vsel %vm5500, %v5505, %v5637
      %v5639 = vsel %vm5503, %v5507, %v5638
      %v5640 = vsel %vm5485, %v5511, %v5509
      %v5641 = vsel %vm5488, %v5513, %v5640
      %v5642 = vsel %vm5491, %v5515, %v5641
      %v5643 = vsel %vm5494, %v5517, %v5642
      %5644 = vrot.lane.b32.xlu0 %v5632, 40
      %v5645 = vpop.permute.xlu0 %5644
      %5646 = vrot.lane.b32.xlu0 %v5639, 40
      %v5647 = vpop.permute.xlu0 %5646
      %5648 = vrot.lane.b32.xlu0 %v5643, 40
      %v5649 = vpop.permute.xlu0 %5648
      %vm5653 = vcmask 392517
      %5654 = vst.msk [vmem:[%s233 - $0x5] sm:$0xe0] %vm5653, %v5645
      %5655 = vst.msk [vmem:[%s233 + $0x3] sm:$0xff] %vm4141, %v5647
      %vm5656 = vcmask 389440
      %5657 = vst.msk [vmem:[%s233 + $0xb] sm:$0x1f] %vm5656, %v5649
      %v5658 = vsel %vm5503, %v5484, %v5342
      %v5659 = vsel %vm5485, %v5490, %v5487
      %v5660 = vsel %vm5488, %v5493, %v5659
      %v5661 = vsel %vm5491, %v5496, %v5660
      %v5662 = vsel %vm5494, %v5499, %v5661
      %v5663 = vsel %vm5497, %v5502, %v5662
      %v5664 = vsel %vm5500, %v5406, %v5663
      %v5665 = vsel %vm5503, %v5505, %v5664
      %v5666 = vsel %vm5485, %v5509, %v5507
      %v5667 = vsel %vm5488, %v5511, %v5666
      %v5668 = vsel %vm5491, %v5513, %v5667
      %v5669 = vsel %vm5494, %v5515, %v5668
      %v5670 = vsel %vm5497, %v5517, %v5669
      %5671 = vrot.lane.b32.xlu0 %v5658, 48
      %v5672 = vpop.permute.xlu0 %5671
      %5673 = vrot.lane.b32.xlu0 %v5665, 48
      %v5674 = vpop.permute.xlu0 %5673
      %5675 = vrot.lane.b32.xlu0 %v5670, 48
      %v5676 = vpop.permute.xlu0 %5675
      %vm5680 = vcmask 458118
      %5681 = vst.msk [vmem:[%s233 - $0x6] sm:$0xc0] %vm5680, %v5672
      %5682 = vst.msk [vmem:[%s233 + $0x2] sm:$0xff] %vm4319, %v5674
      %vm5683 = vcmask 456064
      %5684 = vst.msk [vmem:[%s233 + $0xa] sm:$0x3f] %vm5683, %v5676
      %v5685 = vsel %vm5485, %v5487, %v5484
      %v5686 = vsel %vm5488, %v5490, %v5685
      %v5687 = vsel %vm5491, %v5493, %v5686
      %v5688 = vsel %vm5494, %v5496, %v5687
      %v5689 = vsel %vm5497, %v5499, %v5688
      %v5690 = vsel %vm5500, %v5502, %v5689
      %v5691 = vsel %vm5503, %v5406, %v5690
      %v5692 = vsel %vm5485, %v5507, %v5505
      %v5693 = vsel %vm5488, %v5509, %v5692
      %v5694 = vsel %vm5491, %v5511, %v5693
      %v5695 = vsel %vm5494, %v5513, %v5694
      %v5696 = vsel %vm5497, %v5515, %v5695
      %v5697 = vsel %vm5500, %v5517, %v5696
      %5698 = vrot.lane.b32.xlu0 %v5342, 56
      %v5699 = vpop.permute.xlu0 %5698
      %5700 = vrot.lane.b32.xlu0 %v5691, 56
      %v5701 = vpop.permute.xlu0 %5700
      %5702 = vrot.lane.b32.xlu0 %v5697, 56
      %v5703 = vpop.permute.xlu0 %5702
      %vm5707 = vcmask 523719
      %5708 = vst.msk [vmem:[%s233 - $0x7] sm:$0x80] %vm5707, %v5699
      %5709 = vst.msk [vmem:[%s233 + $0x1] sm:$0xff] %vm4864, %v5701
      %vm5710 = vcmask 522688
      %5711 = vst.msk [vmem:[%s233 + $0x9] sm:$0x7f] %vm5710, %v5703
      %v5728 = vrot.slane %v5353, 7
      %v5729 = vsel %vm5485, %v5728, %v5345
      %v5730 = vrot.slane %v5361, 6
      %v5731 = vsel %vm5488, %v5730, %v5729
      %v5732 = vrot.slane %v5369, 5
      %v5733 = vsel %vm5491, %v5732, %v5731
      %v5734 = vrot.slane %v5377, 4
      %v5735 = vsel %vm5494, %v5734, %v5733
      %v5736 = vrot.slane %v5385, 3
      %v5737 = vsel %vm5497, %v5736, %v5735
      %v5738 = vrot.slane %v5393, 2
      %v5739 = vsel %vm5500, %v5738, %v5737
      %v5740 = vrot.slane %v5401, 1
      %v5741 = vsel %vm5503, %v5740, %v5739
      %v5742 = vrot.slane %v5417, 7
      %v5743 = vsel %vm5485, %v5742, %v5409
      %v5744 = vrot.slane %v5425, 6
      %v5745 = vsel %vm5488, %v5744, %v5743
      %v5746 = vrot.slane %v5433, 5
      %v5747 = vsel %vm5491, %v5746, %v5745
      %v5748 = vrot.slane %v5441, 4
      %v5749 = vsel %vm5494, %v5748, %v5747
      %v5750 = vrot.slane %v5449, 3
      %v5751 = vsel %vm5497, %v5750, %v5749
      %v5752 = vrot.slane %v5457, 2
      %v5753 = vsel %vm5500, %v5752, %v5751
      %v5754 = vrot.slane %v5465, 1
      %v5755 = vsel %vm5503, %v5754, %v5753
      %5756 = vrot.lane.b32.xlu0 %v5741, 64
      %v5757 = vpop.permute.xlu0 %5756
      %5758 = vrot.lane.b32.xlu0 %v5755, 64
      %v5759 = vpop.permute.xlu0 %5758
      %5762 = vst.msk [vmem:[%s233] sm:$0xff] %vm5185, %v5757
      %5763 = vst.msk [vmem:[%s233 + $0x8] sm:$0xff] %vm5185, %v5759
      %v5764 = vsel %vm5488, %v5728, %v5345
      %v5765 = vsel %vm5491, %v5730, %v5764
      %v5766 = vsel %vm5494, %v5732, %v5765
      %v5767 = vsel %vm5497, %v5734, %v5766
      %v5768 = vsel %vm5500, %v5736, %v5767
      %v5769 = vsel %vm5503, %v5738, %v5768
      %v5770 = vsel %vm5485, %v5409, %v5740
      %v5771 = vsel %vm5488, %v5742, %v5770
      %v5772 = vsel %vm5491, %v5744, %v5771
      %v5773 = vsel %vm5494, %v5746, %v5772
      %v5774 = vsel %vm5497, %v5748, %v5773
      %v5775 = vsel %vm5500, %v5750, %v5774
      %v5776 = vsel %vm5503, %v5752, %v5775
      %5777 = vrot.lane.b32.xlu0 %v5769, 72
      %v5778 = vpop.permute.xlu0 %5777
      %5779 = vrot.lane.b32.xlu0 %v5776, 72
      %v5780 = vpop.permute.xlu0 %5779
      %5781 = vrot.lane.b32.xlu0 %v5754, 72
      %v5782 = vpop.permute.xlu0 %5781
      %vm5786 = vcmask 654913
      %5787 = vst.msk [vmem:[%s233 - $0x1] sm:$0xfe] %vm5786, %v5778
      %vm5788 = vcmask 654912
      %5789 = vst.msk [vmem:[%s233 + $0x7] sm:$0xff] %vm5788, %v5780
      %vm5790 = vcmask 647744
      %5791 = vst.msk [vmem:[%s233 + $0xf] sm:$0x1] %vm5790, %v5782
      %v5792 = vsel %vm5491, %v5728, %v5345
      %v5793 = vsel %vm5494, %v5730, %v5792
      %v5794 = vsel %vm5497, %v5732, %v5793
      %v5795 = vsel %vm5500, %v5734, %v5794
      %v5796 = vsel %vm5503, %v5736, %v5795
      %v5797 = vsel %vm5485, %v5740, %v5738
      %v5798 = vsel %vm5488, %v5409, %v5797
      %v5799 = vsel %vm5491, %v5742, %v5798
      %v5800 = vsel %vm5494, %v5744, %v5799
      %v5801 = vsel %vm5497, %v5746, %v5800
      %v5802 = vsel %vm5500, %v5748, %v5801
      %v5803 = vsel %vm5503, %v5750, %v5802
      %v5804 = vsel %vm5485, %v5754, %v5752
      %5805 = vrot.lane.b32.xlu0 %v5796, 80
      %v5806 = vpop.permute.xlu0 %5805
      %5807 = vrot.lane.b32.xlu0 %v5803, 80
      %v5808 = vpop.permute.xlu0 %5807
      %5809 = vrot.lane.b32.xlu0 %v5804, 80
      %v5810 = vpop.permute.xlu0 %5809
      %vm5814 = vcmask 720514
      %5815 = vst.msk [vmem:[%s233 - $0x2] sm:$0xfc] %vm5814, %v5806
      %vm5816 = vcmask 720512
      %5817 = vst.msk [vmem:[%s233 + $0x6] sm:$0xff] %vm5816, %v5808
      %vm5818 = vcmask 714368
      %5819 = vst.msk [vmem:[%s233 + $0xe] sm:$0x3] %vm5818, %v5810
      %v5820 = vsel %vm5494, %v5728, %v5345
      %v5821 = vsel %vm5497, %v5730, %v5820
      %v5822 = vsel %vm5500, %v5732, %v5821
      %v5823 = vsel %vm5503, %v5734, %v5822
      %v5824 = vsel %vm5485, %v5738, %v5736
      %v5825 = vsel %vm5488, %v5740, %v5824
      %v5826 = vsel %vm5491, %v5409, %v5825
      %v5827 = vsel %vm5494, %v5742, %v5826
      %v5828 = vsel %vm5497, %v5744, %v5827
      %v5829 = vsel %vm5500, %v5746, %v5828
      %v5830 = vsel %vm5503, %v5748, %v5829
      %v5831 = vsel %vm5485, %v5752, %v5750
      %v5832 = vsel %vm5488, %v5754, %v5831
      %5833 = vrot.lane.b32.xlu0 %v5823, 88
      %v5834 = vpop.permute.xlu0 %5833
      %5835 = vrot.lane.b32.xlu0 %v5830, 88
      %v5836 = vpop.permute.xlu0 %5835
      %5837 = vrot.lane.b32.xlu0 %v5832, 88
      %v5838 = vpop.permute.xlu0 %5837
      %vm5842 = vcmask 786115
      %5843 = vst.msk [vmem:[%s233 - $0x3] sm:$0xf8] %vm5842, %v5834
      %vm5844 = vcmask 786112
      %5845 = vst.msk [vmem:[%s233 + $0x5] sm:$0xff] %vm5844, %v5836
      %vm5846 = vcmask 780992
      %5847 = vst.msk [vmem:[%s233 + $0xd] sm:$0x7] %vm5846, %v5838
      %v5848 = vsel %vm5497, %v5728, %v5345
      %v5849 = vsel %vm5500, %v5730, %v5848
      %v5850 = vsel %vm5503, %v5732, %v5849
      %v5851 = vsel %vm5485, %v5736, %v5734
      %v5852 = vsel %vm5488, %v5738, %v5851
      %v5853 = vsel %vm5491, %v5740, %v5852
      %v5854 = vsel %vm5494, %v5409, %v5853
      %v5855 = vsel %vm5497, %v5742, %v5854
      %v5856 = vsel %vm5500, %v5744, %v5855
      %v5857 = vsel %vm5503, %v5746, %v5856
      %v5858 = vsel %vm5485, %v5750, %v5748
      %v5859 = vsel %vm5488, %v5752, %v5858
      %v5860 = vsel %vm5491, %v5754, %v5859
      %5861 = vrot.lane.b32.xlu0 %v5850, 96
      %v5862 = vpop.permute.xlu0 %5861
      %5863 = vrot.lane.b32.xlu0 %v5857, 96
      %v5864 = vpop.permute.xlu0 %5863
      %5865 = vrot.lane.b32.xlu0 %v5860, 96
      %v5866 = vpop.permute.xlu0 %5865
      %vm5870 = vcmask 851716
      %5871 = vst.msk [vmem:[%s233 - $0x4] sm:$0xf0] %vm5870, %v5862
      %vm5872 = vcmask 851712
      %5873 = vst.msk [vmem:[%s233 + $0x4] sm:$0xff] %vm5872, %v5864
      %vm5874 = vcmask 847616
      %5875 = vst.msk [vmem:[%s233 + $0xc] sm:$0xf] %vm5874, %v5866
      %v5876 = vsel %vm5500, %v5728, %v5345
      %v5877 = vsel %vm5503, %v5730, %v5876
      %v5878 = vsel %vm5485, %v5734, %v5732
      %v5879 = vsel %vm5488, %v5736, %v5878
      %v5880 = vsel %vm5491, %v5738, %v5879
      %v5881 = vsel %vm5494, %v5740, %v5880
      %v5882 = vsel %vm5497, %v5409, %v5881
      %v5883 = vsel %vm5500, %v5742, %v5882
      %v5884 = vsel %vm5503, %v5744, %v5883
      %v5885 = vsel %vm5485, %v5748, %v5746
      %v5886 = vsel %vm5488, %v5750, %v5885
      %v5887 = vsel %vm5491, %v5752, %v5886
      %v5888 = vsel %vm5494, %v5754, %v5887
      %5889 = vrot.lane.b32.xlu0 %v5877, 104
      %v5890 = vpop.permute.xlu0 %5889
      %5891 = vrot.lane.b32.xlu0 %v5884, 104
      %v5892 = vpop.permute.xlu0 %5891
      %5893 = vrot.lane.b32.xlu0 %v5888, 104
      %v5894 = vpop.permute.xlu0 %5893
      %vm5898 = vcmask 917317
      %5899 = vst.msk [vmem:[%s233 - $0x5] sm:$0xe0] %vm5898, %v5890
      %vm5900 = vcmask 917312
      %5901 = vst.msk [vmem:[%s233 + $0x3] sm:$0xff] %vm5900, %v5892
      %vm5902 = vcmask 914240
      %5903 = vst.msk [vmem:[%s233 + $0xb] sm:$0x1f] %vm5902, %v5894
      %v5904 = vsel %vm5503, %v5728, %v5345
      %v5905 = vsel %vm5485, %v5732, %v5730
      %v5906 = vsel %vm5488, %v5734, %v5905
      %v5907 = vsel %vm5491, %v5736, %v5906
      %v5908 = vsel %vm5494, %v5738, %v5907
      %v5909 = vsel %vm5497, %v5740, %v5908
      %v5910 = vsel %vm5500, %v5409, %v5909
      %v5911 = vsel %vm5503, %v5742, %v5910
      %v5912 = vsel %vm5485, %v5746, %v5744
      %v5913 = vsel %vm5488, %v5748, %v5912
      %v5914 = vsel %vm5491, %v5750, %v5913
      %v5915 = vsel %vm5494, %v5752, %v5914
      %v5916 = vsel %vm5497, %v5754, %v5915
      %5917 = vrot.lane.b32.xlu0 %v5904, 112
      %v5918 = vpop.permute.xlu0 %5917
      %5919 = vrot.lane.b32.xlu0 %v5911, 112
      %v5920 = vpop.permute.xlu0 %5919
      %5921 = vrot.lane.b32.xlu0 %v5916, 112
      %v5922 = vpop.permute.xlu0 %5921
      %vm5926 = vcmask 982918
      %5927 = vst.msk [vmem:[%s233 - $0x6] sm:$0xc0] %vm5926, %v5918
      %vm5928 = vcmask 982912
      %5929 = vst.msk [vmem:[%s233 + $0x2] sm:$0xff] %vm5928, %v5920
      %vm5930 = vcmask 980864
      %5931 = vst.msk [vmem:[%s233 + $0xa] sm:$0x3f] %vm5930, %v5922
      %v5932 = vsel %vm5485, %v5730, %v5728
      %v5933 = vsel %vm5488, %v5732, %v5932
      %v5934 = vsel %vm5491, %v5734, %v5933
      %v5935 = vsel %vm5494, %v5736, %v5934
      %v5936 = vsel %vm5497, %v5738, %v5935
      %v5937 = vsel %vm5500, %v5740, %v5936
      %v5938 = vsel %vm5503, %v5409, %v5937
      %v5939 = vsel %vm5485, %v5744, %v5742
      %v5940 = vsel %vm5488, %v5746, %v5939
      %v5941 = vsel %vm5491, %v5748, %v5940
      %v5942 = vsel %vm5494, %v5750, %v5941
      %v5943 = vsel %vm5497, %v5752, %v5942
      %v5944 = vsel %vm5500, %v5754, %v5943
      %5945 = vrot.lane.b32.xlu0 %v5345, 120
      %v5946 = vpop.permute.xlu0 %5945
      %5947 = vrot.lane.b32.xlu0 %v5938, 120
      %v5948 = vpop.permute.xlu0 %5947
      %5949 = vrot.lane.b32.xlu0 %v5944, 120
      %v5950 = vpop.permute.xlu0 %5949
      %vm5954 = vcmask 1048519
      %5955 = vst.msk [vmem:[%s233 - $0x7] sm:$0x80] %vm5954, %v5946
      %vm5956 = vcmask 1048512
      %5957 = vst.msk [vmem:[%s233 + $0x1] sm:$0xff] %vm5956, %v5948
      %vm5958 = vcmask 1047488
      %5959 = vst.msk [vmem:[%s233 + $0x9] sm:$0x7f] %vm5958, %v5950
      %v5960 = vsel %vm2227, %v5342, 0.0
      %v5961 = vsel %vm2227, %v5345, 0.0
      %v5962 = vadd.f32 %v5960, %v5961
      %v5963 = vsel %vm2227, %v5350, 0.0
      %v5964 = vadd.f32 %v5962, %v5963
      %v5965 = vsel %vm2227, %v5353, 0.0
      %v5966 = vadd.f32 %v5964, %v5965
      %v5967 = vsel %vm2227, %v5358, 0.0
      %v5968 = vadd.f32 %v5966, %v5967
      %v5969 = vsel %vm2227, %v5361, 0.0
      %v5970 = vadd.f32 %v5968, %v5969
      %v5971 = vsel %vm2227, %v5366, 0.0
      %v5972 = vadd.f32 %v5970, %v5971
      %v5973 = vsel %vm2227, %v5369, 0.0
      %v5974 = vadd.f32 %v5972, %v5973
      %v5975 = vsel %vm2227, %v5374, 0.0
      %v5976 = vadd.f32 %v5974, %v5975
      %v5977 = vsel %vm2227, %v5377, 0.0
      %v5978 = vadd.f32 %v5976, %v5977
      %v5979 = vsel %vm2227, %v5382, 0.0
      %v5980 = vadd.f32 %v5978, %v5979
      %v5981 = vsel %vm2227, %v5385, 0.0
      %v5982 = vadd.f32 %v5980, %v5981
      %v5983 = vsel %vm2227, %v5390, 0.0
      %v5984 = vadd.f32 %v5982, %v5983
      %v5985 = vsel %vm2227, %v5393, 0.0
      %v5986 = vadd.f32 %v5984, %v5985
      %v5987 = vsel %vm2227, %v5398, 0.0
      %v5988 = vadd.f32 %v5986, %v5987
      %v5989 = vsel %vm2227, %v5401, 0.0
      %v5990 = vadd.f32 %v5988, %v5989
      %v5991 = vsel %vm2227, %v5406, 0.0
      %v5992 = vadd.f32 %v5990, %v5991
      %v5993 = vsel %vm2227, %v5409, 0.0
      %v5994 = vadd.f32 %v5992, %v5993
      %v5995 = vsel %vm2227, %v5414, 0.0
      %v5996 = vadd.f32 %v5994, %v5995
      %v5997 = vsel %vm2227, %v5417, 0.0
      %v5998 = vadd.f32 %v5996, %v5997
      %v5999 = vsel %vm2227, %v5422, 0.0
      %v6000 = vadd.f32 %v5998, %v5999
      %v6001 = vsel %vm2227, %v5425, 0.0
      %v6002 = vadd.f32 %v6000, %v6001
      %v6003 = vsel %vm2227, %v5430, 0.0
      %v6004 = vadd.f32 %v6002, %v6003
      %v6005 = vsel %vm2227, %v5433, 0.0
      %v6006 = vadd.f32 %v6004, %v6005
      %v6007 = vsel %vm2227, %v5438, 0.0
      %v6008 = vadd.f32 %v6006, %v6007
      %v6009 = vsel %vm2227, %v5441, 0.0
      %v6010 = vadd.f32 %v6008, %v6009
      %v6011 = vsel %vm2227, %v5446, 0.0
      %v6012 = vadd.f32 %v6010, %v6011
      %v6013 = vsel %vm2227, %v5449, 0.0
      %v6014 = vadd.f32 %v6012, %v6013
      %v6015 = vsel %vm2227, %v5454, 0.0
      %v6016 = vadd.f32 %v6014, %v6015
      %v6017 = vsel %vm2227, %v5457, 0.0
      %v6018 = vadd.f32 %v6016, %v6017
      %v6019 = vsel %vm2227, %v5462, 0.0
      %v6020 = vadd.f32 %v6018, %v6019
      %v6021 = vsel %vm2227, %v5465, 0.0
      %v6022 = vadd.f32 %v6020, %v6021
      %v6023 = vrot.slane %v6022, 4
      %v6024 = vadd.f32 %v6022, %v6023
      %v6025 = vrot.slane %v6024, 2
      %v6026 = vadd.f32 %v6024, %v6025
      %v6027 = vrot.slane %v6026, 1
      %v6028 = vadd.f32 %v6026, %v6027
      %v6029 = vmul.f32 %v5342, %v5342
      %v6030 = vmul.f32 %v5345, %v5345
      %v6031 = vmul.f32 %v5350, %v5350
      %v6032 = vmul.f32 %v5353, %v5353
      %v6033 = vmul.f32 %v5358, %v5358
      %v6034 = vmul.f32 %v5361, %v5361
      %v6035 = vmul.f32 %v5366, %v5366
      %v6036 = vmul.f32 %v5369, %v5369
      %v6037 = vmul.f32 %v5374, %v5374
      %v6038 = vmul.f32 %v5377, %v5377
      %v6039 = vmul.f32 %v5382, %v5382
      %v6040 = vmul.f32 %v5385, %v5385
      %v6041 = vmul.f32 %v5390, %v5390
      %v6042 = vmul.f32 %v5393, %v5393
      %v6043 = vmul.f32 %v5398, %v5398
      %v6044 = vmul.f32 %v5401, %v5401
      %v6045 = vmul.f32 %v5406, %v5406
      %v6046 = vmul.f32 %v5409, %v5409
      %v6047 = vmul.f32 %v5414, %v5414
      %v6048 = vmul.f32 %v5417, %v5417
      %v6049 = vmul.f32 %v5422, %v5422
      %v6050 = vmul.f32 %v5425, %v5425
      %v6051 = vmul.f32 %v5430, %v5430
      %v6052 = vmul.f32 %v5433, %v5433
      %v6053 = vmul.f32 %v5438, %v5438
      %v6054 = vmul.f32 %v5441, %v5441
      %v6055 = vmul.f32 %v5446, %v5446
      %v6056 = vmul.f32 %v5449, %v5449
      %v6057 = vmul.f32 %v5454, %v5454
      %v6058 = vmul.f32 %v5457, %v5457
      %v6059 = vmul.f32 %v5462, %v5462
      %v6060 = vmul.f32 %v5465, %v5465
      %v6061 = vsel %vm2227, %v6029, 0.0
      %v6062 = vsel %vm2227, %v6030, 0.0
      %v6063 = vadd.f32 %v6061, %v6062
      %v6064 = vsel %vm2227, %v6031, 0.0
      %v6065 = vadd.f32 %v6063, %v6064
      %v6066 = vsel %vm2227, %v6032, 0.0
      %v6067 = vadd.f32 %v6065, %v6066
      %v6068 = vsel %vm2227, %v6033, 0.0
      %v6069 = vadd.f32 %v6067, %v6068
      %v6070 = vsel %vm2227, %v6034, 0.0
      %v6071 = vadd.f32 %v6069, %v6070
      %v6072 = vsel %vm2227, %v6035, 0.0
      %v6073 = vadd.f32 %v6071, %v6072
      %v6074 = vsel %vm2227, %v6036, 0.0
      %v6075 = vadd.f32 %v6073, %v6074
      %v6076 = vsel %vm2227, %v6037, 0.0
      %v6077 = vadd.f32 %v6075, %v6076
      %v6078 = vsel %vm2227, %v6038, 0.0
      %v6079 = vadd.f32 %v6077, %v6078
      %v6080 = vsel %vm2227, %v6039, 0.0
      %v6081 = vadd.f32 %v6079, %v6080
      %v6082 = vsel %vm2227, %v6040, 0.0
      %v6083 = vadd.f32 %v6081, %v6082
      %v6084 = vsel %vm2227, %v6041, 0.0
      %v6085 = vadd.f32 %v6083, %v6084
      %v6086 = vsel %vm2227, %v6042, 0.0
      %v6087 = vadd.f32 %v6085, %v6086
      %v6088 = vsel %vm2227, %v6043, 0.0
      %v6089 = vadd.f32 %v6087, %v6088
      %v6090 = vsel %vm2227, %v6044, 0.0
      %v6091 = vadd.f32 %v6089, %v6090
      %v6092 = vsel %vm2227, %v6045, 0.0
      %v6093 = vadd.f32 %v6091, %v6092
      %v6094 = vsel %vm2227, %v6046, 0.0
      %v6095 = vadd.f32 %v6093, %v6094
      %v6096 = vsel %vm2227, %v6047, 0.0
      %v6097 = vadd.f32 %v6095, %v6096
      %v6098 = vsel %vm2227, %v6048, 0.0
      %v6099 = vadd.f32 %v6097, %v6098
      %v6100 = vsel %vm2227, %v6049, 0.0
      %v6101 = vadd.f32 %v6099, %v6100
      %v6102 = vsel %vm2227, %v6050, 0.0
      %v6103 = vadd.f32 %v6101, %v6102
      %v6104 = vsel %vm2227, %v6051, 0.0
      %v6105 = vadd.f32 %v6103, %v6104
      %v6106 = vsel %vm2227, %v6052, 0.0
      %v6107 = vadd.f32 %v6105, %v6106
      %v6108 = vsel %vm2227, %v6053, 0.0
      %v6109 = vadd.f32 %v6107, %v6108
      %v6110 = vsel %vm2227, %v6054, 0.0
      %v6111 = vadd.f32 %v6109, %v6110
      %v6112 = vsel %vm2227, %v6055, 0.0
      %v6113 = vadd.f32 %v6111, %v6112
      %v6114 = vsel %vm2227, %v6056, 0.0
      %v6115 = vadd.f32 %v6113, %v6114
      %v6116 = vsel %vm2227, %v6057, 0.0
      %v6117 = vadd.f32 %v6115, %v6116
      %v6118 = vsel %vm2227, %v6058, 0.0
      %v6119 = vadd.f32 %v6117, %v6118
      %v6120 = vsel %vm2227, %v6059, 0.0
      %v6121 = vadd.f32 %v6119, %v6120
      %v6122 = vsel %vm2227, %v6060, 0.0
      %v6123 = vadd.f32 %v6121, %v6122
      %v6124 = vrot.slane %v6123, 4
      %v6125 = vadd.f32 %v6123, %v6124
      %v6126 = vrot.slane %v6125, 2
      %v6127 = vadd.f32 %v6125, %v6126
      %v6128 = vrot.slane %v6127, 1
      %v6129 = vadd.f32 %v6127, %v6128
      %vm6130 = vcmask 1040384
      %v6131 = vsel %vm6130, %v6028, %v6129
      %vm6132 = vcmask 58368
      %6133 = vst.msk [vmem:[%s238] sm:$0x3] %vm6132, %v6131
      %s6134 = smul.u32 2, %s17
      %p6135 = scmp.lt.s32.totalorder %s6134, 3
      %s6136 = scalar_select %p6135, %s6134, 3
      %s6137 = smul.addr %s6136, 8
      %s6138 = scalar_lea.vmem %s4, %s6137
      %p6139 = scmp.lt.s32.totalorder %s17, 1
      %s6140 = scalar_select %p6139, %s17, 1
      %s6141 = smul.addr %s6140, 2
      %s6142 = scalar_lea.vmem %s5, %s6141
      // Predicated region
      $region37: #{conv_block_forward.4} parent=35 // pred_check
        %p6143 = pneg %p124
      $region38: #{conv_block_forward.4} parent=35 // pred_check_branch
        %6145 = sbr.rel (%p6143) target = $region40
      $region39: #{conv_block_forward.4} parent=35 // pred_region
        %s6146 = smul.u32 2, %s17
      $region40: #{conv_block_forward.4} parent=35 // pred_fallthru
        _
      // Predicated region
      $region41: #{conv_block_forward.4} parent=35 // pred_check
        %p6147 = pneg %p150
      $region42: #{conv_block_forward.4} parent=35 // pred_check_branch
        %6149 = sbr.rel (%p6147) target = $region44
      $region43: #{conv_block_forward.4} parent=35 // pred_region
        _
      $region44: #{conv_block_forward.4} parent=35 // pred_fallthru
        _
    $region36: #{conv_block_forward.4} parent=5 // pred_fallthru
      _
    %p6150 = scmp.le.s32.totalorder 2, %s12
    // Predicated region
    $region45: #{conv_block_forward.4} parent=5 // pred_check
      %p6151 = pneg %p6150
    $region46: #{conv_block_forward.4} parent=5 // pred_check_branch
      %6153 = sbr.rel (%p6151) target = $region48
    $region47: #{conv_block_forward.4} parent=5 // pred_region
      %s6154 = ssub.s32 %s12, 2
      // Predicated region
      $region49: #{conv_block_forward.4} parent=47 // pred_check
        %p6155 = pneg %p130
      $region50: #{conv_block_forward.4} parent=47 // pred_check_branch
        %6157 = sbr.rel (%p6155) target = $region52
      $region51: #{conv_block_forward.4} parent=47 // pred_region
        %s6158 = smul.u32 2, %s18
        %p6159 = scmp.lt.s32.totalorder %s6158, 3
        %s6160 = scalar_select %p6159, %s6158, 3
        %s6161 = smul.addr %s6160, 8
        %s6162 = scalar_lea.vmem %s4, %s6161
      $region52: #{conv_block_forward.4} parent=47 // pred_fallthru
        _
      // Predicated region
      $region53: #{conv_block_forward.4} parent=47 // pred_check
        %p6163 = pneg %p156
      $region54: #{conv_block_forward.4} parent=47 // pred_check_branch
        %6165 = sbr.rel (%p6163) target = $region56
      $region55: #{conv_block_forward.4} parent=47 // pred_region
        %p6166 = scmp.lt.s32.totalorder %s18, 1
        %s6167 = scalar_select %p6166, %s18, 1
        %s6168 = smul.addr %s6167, 2
        %s6169 = scalar_lea.vmem %s5, %s6168
      $region56: #{conv_block_forward.4} parent=47 // pred_fallthru
        _
    $region48: #{conv_block_forward.4} parent=5 // pred_fallthru
      _
  $region6: #{conv_block_forward.4} parent=0 // loop_footer
    %s16 = sadd.s32 1, %s12
  $region7: #{conv_block_forward.4} parent=0 // loop_footer_branch
    %11 = sbr.rel target = $region3
  $region8: #{conv_block_forward.4} parent=0 // loop_exit
    _

</llo_original>
